<compile_context>
chip_gen: v5e
topology: v5e:2x2
jax: 0.10.0
libtpu: 0.0.40
codegen_flags: <defaults>
</compile_context>

<pallas_src>
import jax
import jax.numpy as jnp
from jax.experimental import pallas as pl
from jax.experimental.pallas import tpu as pltpu

EPS = 1e-5  # nn.BatchNorm2d default eps


def resblock_kernel(xpad_ref, w1_ref, g1_ref, be1_ref,
                    w2_ref, g2_ref, be2_ref, o_ref):
    B, Hp, Wp, C = xpad_ref.shape
    H, W = Hp - 2, Wp - 2
    N = B * H * W
    inv_n = jnp.float32(1.0 / N)

    # ---- conv1: im2col -> single (N, 9C) x (9C, C) MXU matmul ----
    taps = []
    center = None
    for dy in range(3):
        for dx in range(3):
            t = xpad_ref[:, dy:dy + H, dx:dx + W, :].reshape(N, C)
            if dy == 1 and dx == 1:
                center = t                    # == original x; reused as residual
            taps.append(t)
    patch1 = jnp.concatenate(taps, axis=1)    # (N, 9C) f32
    acc1 = jnp.dot(patch1.astype(jnp.bfloat16), w1_ref[...],
                   preferred_element_type=jnp.float32)          # (N, C) f32
    # conv bias intentionally omitted: a per-channel constant is cancelled
    # exactly by the batch-mean subtraction of training-mode BatchNorm.

    # ---- bn1 (training-mode batch stats, single pass) + ReLU ----
    mean1 = jnp.sum(acc1, axis=0, keepdims=True) * inv_n
    var1 = jnp.sum(acc1 * acc1, axis=0, keepdims=True) * inv_n - mean1 * mean1
    scale1 = g1_ref[...] * jax.lax.rsqrt(var1 + EPS)
    shift1 = be1_ref[...] - mean1 * scale1
    act1 = jnp.maximum(acc1 * scale1 + shift1, 0.0)             # (N, C)

    # ---- zero-pad act1 as values (no zeroed scratch, no double write) ----
    a = act1.reshape(B, H, W, C)
    zr = jnp.zeros((B, 1, W, C), jnp.float32)
    a = jnp.concatenate([zr, a, zr], axis=1)                    # (B, H+2, W,   C)
    zc = jnp.zeros((B, Hp, 1, C), jnp.float32)
    a = jnp.concatenate([zc, a, zc], axis=2)                    # (B, H+2, W+2, C)

    # ---- conv2: im2col -> single MXU matmul ----
    taps2 = [a[:, dy:dy + H, dx:dx + W, :].reshape(N, C)
             for dy in range(3) for dx in range(3)]
    patch2 = jnp.concatenate(taps2, axis=1)                     # (N, 9C) f32
    acc2 = jnp.dot(patch2.astype(jnp.bfloat16), w2_ref[...],
                   preferred_element_type=jnp.float32)          # (N, C) f32

    # ---- bn2 + residual + ReLU ----
    mean2 = jnp.sum(acc2, axis=0, keepdims=True) * inv_n
    var2 = jnp.sum(acc2 * acc2, axis=0, keepdims=True) * inv_n - mean2 * mean2
    scale2 = g2_ref[...] * jax.lax.rsqrt(var2 + EPS)
    shift2 = be2_ref[...] - mean2 * scale2
    out = jnp.maximum(acc2 * scale2 + shift2 + center, 0.0)
    o_ref[...] = out.astype(o_ref.dtype)


def resblock_forward(x_nchw, params):
    """x_nchw: (B, C, H, W) float32, matching the PyTorch module's input."""
    w1, _cb1, g1, be1, w2, _cb2, g2, be2 = params   # conv biases unused (cancel under BN)
    B, C, H, W = x_nchw.shape
    N = B * H * W

    # NCHW -> NHWC, pad spatial dims by 1 (conv padding=1) outside the kernel.
    x = jnp.transpose(x_nchw, (0, 2, 3, 1)).astype(jnp.float32)
    xpad = jnp.pad(x, ((0, 0), (1, 1), (1, 1), (0, 0)))

    # (Cout, Cin, 3, 3) -> (9*Cin, Cout), rows ordered (dy, dx, cin) to match
    # the kernel's tap concatenation; bf16 for the MXU.
    def prep_w(w):
        return jnp.transpose(w, (2, 3, 1, 0)).reshape(9 * C, C).astype(jnp.bfloat16)

    row = lambda v: v.reshape(1, C).astype(jnp.float32)

    def full(shape):
        return pl.BlockSpec(shape, lambda i, _nd=len(shape): (0,) * _nd)

    out_flat = pl.pallas_call(
        resblock_kernel,
        out_shape=jax.ShapeDtypeStruct((N, C), jnp.float32),
        grid=(1,),
        in_specs=[full((B, H + 2, W + 2, C)),
                  full((9 * C, C)), full((1, C)), full((1, C)),
                  full((9 * C, C)), full((1, C)), full((1, C))],
        out_specs=full((N, C)),
        compiler_params=pltpu.CompilerParams(
            dimension_semantics=("arbitrary",)),
    )(xpad, prep_w(w1), row(g1), row(be1), prep_w(w2), row(g2), row(be2))

    out_nhwc = out_flat.reshape(B, H, W, C)
    return jnp.transpose(out_nhwc, (0, 3, 1, 2))


def resblock_ref(x_nchw, params):
    """Pure-JAX f32 reference (same math as the PyTorch forward, training mode)."""
    w1, cb1, g1, be1, w2, cb2, g2, be2 = params

    def conv(x, w, b):
        y = jax.lax.conv_general_dilated(
            x, w, window_strides=(1, 1), padding=((1, 1), (1, 1)),
            dimension_numbers=('NCHW', 'OIHW', 'NCHW'))
        return y + b[None, :, None, None]

    def bn(x, g, be):
        mean = jnp.mean(x, axis=(0, 2, 3), keepdims=True)
        var = jnp.mean((x - mean) ** 2, axis=(0, 2, 3), keepdims=True)
        return (g[None, :, None, None] * (x - mean) * jax.lax.rsqrt(var + EPS)
                + be[None, :, None, None])

    out = jax.nn.relu(bn(conv(x_nchw, w1, cb1), g1, be1))
    out = bn(conv(out, w2, cb2), g2, be2)
    return jax.nn.relu(out + x_nchw)


if __name__ == "__main__":
    B, C, H, W = 2, 32, 16, 16
    key = jax.random.PRNGKey(0)
    keys = jax.random.split(key, 9)
    x = jax.random.normal(keys[0], (B, C, H, W), jnp.float32)

    # deterministic synthetic parameters (shapes from nn.Conv2d / nn.BatchNorm2d)
    w1 = 0.1 * jax.random.normal(keys[1], (C, C, 3, 3), jnp.float32)
    cb1 = 0.1 * jax.random.normal(keys[2], (C,), jnp.float32)
    g1 = 1.0 + 0.1 * jax.random.normal(keys[3], (C,), jnp.float32)
    be1 = 0.1 * jax.random.normal(keys[4], (C,), jnp.float32)
    w2 = 0.1 * jax.random.normal(keys[5], (C, C, 3, 3), jnp.float32)
    cb2 = 0.1 * jax.random.normal(keys[6], (C,), jnp.float32)
    g2 = 1.0 + 0.1 * jax.random.normal(keys[7], (C,), jnp.float32)
    be2 = 0.1 * jax.random.normal(keys[8], (C,), jnp.float32)
    params = (w1, cb1, g1, be1, w2, cb2, g2, be2)

    out = jax.block_until_ready(resblock_forward(x, params))
    ref = jax.block_until_ready(resblock_ref(x, params))

    assert out.shape == x.shape, (out.shape, x.shape)
    # Tolerance relaxed vs the pure-f32 version: the kernel feeds the MXU with
    # bf16 operands (f32 accumulation) through two convs + two BatchNorms.
    max_err = float(jnp.max(jnp.abs(out - ref)))
    assert jnp.allclose(out, ref, atol=5e-2, rtol=5e-2), f"max_err={max_err}"
    print("KERNEL_OK")
</pallas_src>

<mosaic_0001>
module attributes {stable_mosaic.version = 11 : i64} {
  func.func @resblock_kernel(%arg0: i32, %arg1: memref<2x18x18x32xf32, #tpu.memory_space<vmem>>, %arg2: memref<288x32xbf16, #tpu.memory_space<vmem>>, %arg3: memref<1x32xf32, #tpu.memory_space<vmem>>, %arg4: memref<1x32xf32, #tpu.memory_space<vmem>>, %arg5: memref<288x32xbf16, #tpu.memory_space<vmem>>, %arg6: memref<1x32xf32, #tpu.memory_space<vmem>>, %arg7: memref<1x32xf32, #tpu.memory_space<vmem>>, %arg8: memref<512x32xf32, #tpu.memory_space<vmem>>) attributes {dimension_semantics = [#tpu.dimension_semantics<arbitrary>], iteration_bounds = array<i64: 1>, scalar_prefetch = 0 : i64, scratch_operands = 0 : i64, tpu.core_type = #tpu.core_type<tc>, window_params = [{pipeline_mode = #tpu.pipeline_mode<synchronous>, transform_indices = @transform_0, window_bounds = array<i64: 2, 18, 18, 32>}, {pipeline_mode = #tpu.pipeline_mode<synchronous>, transform_indices = @transform_1, window_bounds = array<i64: 288, 32>}, {pipeline_mode = #tpu.pipeline_mode<synchronous>, transform_indices = @transform_2, window_bounds = array<i64: 1, 32>}, {pipeline_mode = #tpu.pipeline_mode<synchronous>, transform_indices = @transform_3, window_bounds = array<i64: 1, 32>}, {pipeline_mode = #tpu.pipeline_mode<synchronous>, transform_indices = @transform_4, window_bounds = array<i64: 288, 32>}, {pipeline_mode = #tpu.pipeline_mode<synchronous>, transform_indices = @transform_5, window_bounds = array<i64: 1, 32>}, {pipeline_mode = #tpu.pipeline_mode<synchronous>, transform_indices = @transform_6, window_bounds = array<i64: 1, 32>}, {pipeline_mode = #tpu.pipeline_mode<synchronous>, transform_indices = @transform_7, window_bounds = array<i64: 512, 32>}]} {
    %c0 = arith.constant 0 : index
    %c0_0 = arith.constant 0 : index
    %c0_1 = arith.constant 0 : index
    %c0_2 = arith.constant 0 : index
    %0 = vector.load %arg1[%c0, %c0_0, %c0_1, %c0_2] : memref<2x18x18x32xf32, #tpu.memory_space<vmem>>, vector<2x16x16x32xf32>
    %1 = vector.shape_cast %0 : vector<2x16x16x32xf32> to vector<512x32xf32>
    %c0_3 = arith.constant 0 : index
    %c0_4 = arith.constant 0 : index
    %c1 = arith.constant 1 : index
    %c0_5 = arith.constant 0 : index
    %2 = vector.load %arg1[%c0_3, %c0_4, %c1, %c0_5] : memref<2x18x18x32xf32, #tpu.memory_space<vmem>>, vector<2x16x16x32xf32>
    %3 = vector.shape_cast %2 : vector<2x16x16x32xf32> to vector<512x32xf32>
    %c0_6 = arith.constant 0 : index
    %c0_7 = arith.constant 0 : index
    %c2 = arith.constant 2 : index
    %c0_8 = arith.constant 0 : index
    %4 = vector.load %arg1[%c0_6, %c0_7, %c2, %c0_8] : memref<2x18x18x32xf32, #tpu.memory_space<vmem>>, vector<2x16x16x32xf32>
    %5 = vector.shape_cast %4 : vector<2x16x16x32xf32> to vector<512x32xf32>
    %c0_9 = arith.constant 0 : index
    %c1_10 = arith.constant 1 : index
    %c0_11 = arith.constant 0 : index
    %c0_12 = arith.constant 0 : index
    %6 = vector.load %arg1[%c0_9, %c1_10, %c0_11, %c0_12] : memref<2x18x18x32xf32, #tpu.memory_space<vmem>>, vector<2x16x16x32xf32>
    %7 = vector.shape_cast %6 : vector<2x16x16x32xf32> to vector<512x32xf32>
    %c0_13 = arith.constant 0 : index
    %c1_14 = arith.constant 1 : index
    %c1_15 = arith.constant 1 : index
    %c0_16 = arith.constant 0 : index
    %8 = vector.load %arg1[%c0_13, %c1_14, %c1_15, %c0_16] : memref<2x18x18x32xf32, #tpu.memory_space<vmem>>, vector<2x16x16x32xf32>
    %9 = vector.shape_cast %8 : vector<2x16x16x32xf32> to vector<512x32xf32>
    %c0_17 = arith.constant 0 : index
    %c1_18 = arith.constant 1 : index
    %c2_19 = arith.constant 2 : index
    %c0_20 = arith.constant 0 : index
    %10 = vector.load %arg1[%c0_17, %c1_18, %c2_19, %c0_20] : memref<2x18x18x32xf32, #tpu.memory_space<vmem>>, vector<2x16x16x32xf32>
    %11 = vector.shape_cast %10 : vector<2x16x16x32xf32> to vector<512x32xf32>
    %c0_21 = arith.constant 0 : index
    %c2_22 = arith.constant 2 : index
    %c0_23 = arith.constant 0 : index
    %c0_24 = arith.constant 0 : index
    %12 = vector.load %arg1[%c0_21, %c2_22, %c0_23, %c0_24] : memref<2x18x18x32xf32, #tpu.memory_space<vmem>>, vector<2x16x16x32xf32>
    %13 = vector.shape_cast %12 : vector<2x16x16x32xf32> to vector<512x32xf32>
    %c0_25 = arith.constant 0 : index
    %c2_26 = arith.constant 2 : index
    %c1_27 = arith.constant 1 : index
    %c0_28 = arith.constant 0 : index
    %14 = vector.load %arg1[%c0_25, %c2_26, %c1_27, %c0_28] : memref<2x18x18x32xf32, #tpu.memory_space<vmem>>, vector<2x16x16x32xf32>
    %15 = vector.shape_cast %14 : vector<2x16x16x32xf32> to vector<512x32xf32>
    %c0_29 = arith.constant 0 : index
    %c2_30 = arith.constant 2 : index
    %c2_31 = arith.constant 2 : index
    %c0_32 = arith.constant 0 : index
    %16 = vector.load %arg1[%c0_29, %c2_30, %c2_31, %c0_32] : memref<2x18x18x32xf32, #tpu.memory_space<vmem>>, vector<2x16x16x32xf32>
    %17 = vector.shape_cast %16 : vector<2x16x16x32xf32> to vector<512x32xf32>
    %18 = tpu.concatenate %1, %3, %5, %7, %9, %11, %13, %15, %17 in 1 : vector<512x32xf32>, vector<512x32xf32>, vector<512x32xf32>, vector<512x32xf32>, vector<512x32xf32>, vector<512x32xf32>, vector<512x32xf32>, vector<512x32xf32>, vector<512x32xf32> -> vector<512x288xf32>
    %19 = arith.truncf %18 : vector<512x288xf32> to vector<512x288xbf16>
    %c0_33 = arith.constant 0 : index
    %c0_34 = arith.constant 0 : index
    %20 = vector.load %arg2[%c0_33, %c0_34] : memref<288x32xbf16, #tpu.memory_space<vmem>>, vector<288x32xbf16>
    %cst = arith.constant dense<0.000000e+00> : vector<512x32xf32>
    %21 = tpu.matmul %19, %20, %cst {dimension_numbers = #tpu.dot_dimension_numbers<[1], [0], [0], [1], [0, 0, 1, 1], [], []>} : vector<512x288xbf16>, vector<288x32xbf16>, vector<512x32xf32> -> vector<512x32xf32>
    %cst_35 = arith.constant dense<0.000000e+00> : vector<32xf32>
    %22 = vector.multi_reduction <add>, %21, %cst_35 [0] : vector<512x32xf32> to vector<32xf32>
    %23 = vector.shape_cast %22 : vector<32xf32> to vector<1x32xf32>
    %cst_36 = arith.constant 0.001953125 : f32
    %24 = vector.broadcast %cst_36 : f32 to vector<1x32xf32>
    %25 = arith.mulf %23, %24 : vector<1x32xf32>
    %26 = arith.mulf %21, %21 : vector<512x32xf32>
    %cst_37 = arith.constant dense<0.000000e+00> : vector<32xf32>
    %27 = vector.multi_reduction <add>, %26, %cst_37 [0] : vector<512x32xf32> to vector<32xf32>
    %28 = vector.shape_cast %27 : vector<32xf32> to vector<1x32xf32>
    %cst_38 = arith.constant 0.001953125 : f32
    %29 = vector.broadcast %cst_38 : f32 to vector<1x32xf32>
    %30 = arith.mulf %28, %29 : vector<1x32xf32>
    %31 = arith.mulf %25, %25 : vector<1x32xf32>
    %32 = arith.subf %30, %31 : vector<1x32xf32>
    %c0_39 = arith.constant 0 : index
    %c0_40 = arith.constant 0 : index
    %33 = vector.load %arg3[%c0_39, %c0_40] : memref<1x32xf32, #tpu.memory_space<vmem>>, vector<1x32xf32>
    %cst_41 = arith.constant 9.99999974E-6 : f32
    %34 = vector.broadcast %cst_41 : f32 to vector<1x32xf32>
    %35 = arith.addf %32, %34 : vector<1x32xf32>
    %36 = math.rsqrt %35 : vector<1x32xf32>
    %37 = arith.mulf %33, %36 : vector<1x32xf32>
    %c0_42 = arith.constant 0 : index
    %c0_43 = arith.constant 0 : index
    %38 = vector.load %arg4[%c0_42, %c0_43] : memref<1x32xf32, #tpu.memory_space<vmem>>, vector<1x32xf32>
    %39 = arith.mulf %25, %37 : vector<1x32xf32>
    %40 = arith.subf %38, %39 : vector<1x32xf32>
    %41 = vector.broadcast %37 : vector<1x32xf32> to vector<512x32xf32>
    %42 = arith.mulf %21, %41 : vector<512x32xf32>
    %43 = vector.broadcast %40 : vector<1x32xf32> to vector<512x32xf32>
    %44 = arith.addf %42, %43 : vector<512x32xf32>
    %cst_44 = arith.constant 0.000000e+00 : f32
    %45 = vector.broadcast %cst_44 : f32 to vector<512x32xf32>
    %46 = arith.maximumf %44, %45 : vector<512x32xf32>
    %47 = vector.shape_cast %46 : vector<512x32xf32> to vector<2x16x16x32xf32>
    %cst_45 = arith.constant 0.000000e+00 : f32
    %48 = vector.broadcast %cst_45 : f32 to vector<2x1x16x32xf32>
    %49 = tpu.concatenate %48, %47, %48 in 1 : vector<2x1x16x32xf32>, vector<2x16x16x32xf32>, vector<2x1x16x32xf32> -> vector<2x18x16x32xf32>
    %cst_46 = arith.constant 0.000000e+00 : f32
    %50 = vector.broadcast %cst_46 : f32 to vector<2x18x1x32xf32>
    %51 = tpu.concatenate %50, %49, %50 in 2 : vector<2x18x1x32xf32>, vector<2x18x16x32xf32>, vector<2x18x1x32xf32> -> vector<2x18x18x32xf32>
    %52 = vector.extract_strided_slice %51 {offsets = [0, 0, 0, 0], sizes = [2, 16, 16, 32], strides = [1, 1, 1, 1]} : vector<2x18x18x32xf32> to vector<2x16x16x32xf32>
    %53 = vector.shape_cast %52 : vector<2x16x16x32xf32> to vector<512x32xf32>
    %54 = vector.extract_strided_slice %51 {offsets = [0, 0, 1, 0], sizes = [2, 16, 16, 32], strides = [1, 1, 1, 1]} : vector<2x18x18x32xf32> to vector<2x16x16x32xf32>
    %55 = vector.shape_cast %54 : vector<2x16x16x32xf32> to vector<512x32xf32>
    %56 = vector.extract_strided_slice %51 {offsets = [0, 0, 2, 0], sizes = [2, 16, 16, 32], strides = [1, 1, 1, 1]} : vector<2x18x18x32xf32> to vector<2x16x16x32xf32>
    %57 = vector.shape_cast %56 : vector<2x16x16x32xf32> to vector<512x32xf32>
    %58 = vector.extract_strided_slice %51 {offsets = [0, 1, 0, 0], sizes = [2, 16, 16, 32], strides = [1, 1, 1, 1]} : vector<2x18x18x32xf32> to vector<2x16x16x32xf32>
    %59 = vector.shape_cast %58 : vector<2x16x16x32xf32> to vector<512x32xf32>
    %60 = vector.extract_strided_slice %51 {offsets = [0, 1, 1, 0], sizes = [2, 16, 16, 32], strides = [1, 1, 1, 1]} : vector<2x18x18x32xf32> to vector<2x16x16x32xf32>
    %61 = vector.shape_cast %60 : vector<2x16x16x32xf32> to vector<512x32xf32>
    %62 = vector.extract_strided_slice %51 {offsets = [0, 1, 2, 0], sizes = [2, 16, 16, 32], strides = [1, 1, 1, 1]} : vector<2x18x18x32xf32> to vector<2x16x16x32xf32>
    %63 = vector.shape_cast %62 : vector<2x16x16x32xf32> to vector<512x32xf32>
    %64 = vector.extract_strided_slice %51 {offsets = [0, 2, 0, 0], sizes = [2, 16, 16, 32], strides = [1, 1, 1, 1]} : vector<2x18x18x32xf32> to vector<2x16x16x32xf32>
    %65 = vector.shape_cast %64 : vector<2x16x16x32xf32> to vector<512x32xf32>
    %66 = vector.extract_strided_slice %51 {offsets = [0, 2, 1, 0], sizes = [2, 16, 16, 32], strides = [1, 1, 1, 1]} : vector<2x18x18x32xf32> to vector<2x16x16x32xf32>
    %67 = vector.shape_cast %66 : vector<2x16x16x32xf32> to vector<512x32xf32>
    %68 = vector.extract_strided_slice %51 {offsets = [0, 2, 2, 0], sizes = [2, 16, 16, 32], strides = [1, 1, 1, 1]} : vector<2x18x18x32xf32> to vector<2x16x16x32xf32>
    %69 = vector.shape_cast %68 : vector<2x16x16x32xf32> to vector<512x32xf32>
    %70 = tpu.concatenate %53, %55, %57, %59, %61, %63, %65, %67, %69 in 1 : vector<512x32xf32>, vector<512x32xf32>, vector<512x32xf32>, vector<512x32xf32>, vector<512x32xf32>, vector<512x32xf32>, vector<512x32xf32>, vector<512x32xf32>, vector<512x32xf32> -> vector<512x288xf32>
    %71 = arith.truncf %70 : vector<512x288xf32> to vector<512x288xbf16>
    %c0_47 = arith.constant 0 : index
    %c0_48 = arith.constant 0 : index
    %72 = vector.load %arg5[%c0_47, %c0_48] : memref<288x32xbf16, #tpu.memory_space<vmem>>, vector<288x32xbf16>
    %cst_49 = arith.constant dense<0.000000e+00> : vector<512x32xf32>
    %73 = tpu.matmul %71, %72, %cst_49 {dimension_numbers = #tpu.dot_dimension_numbers<[1], [0], [0], [1], [0, 0, 1, 1], [], []>} : vector<512x288xbf16>, vector<288x32xbf16>, vector<512x32xf32> -> vector<512x32xf32>
    %cst_50 = arith.constant dense<0.000000e+00> : vector<32xf32>
    %74 = vector.multi_reduction <add>, %73, %cst_50 [0] : vector<512x32xf32> to vector<32xf32>
    %75 = vector.shape_cast %74 : vector<32xf32> to vector<1x32xf32>
    %cst_51 = arith.constant 0.001953125 : f32
    %76 = vector.broadcast %cst_51 : f32 to vector<1x32xf32>
    %77 = arith.mulf %75, %76 : vector<1x32xf32>
    %78 = arith.mulf %73, %73 : vector<512x32xf32>
    %cst_52 = arith.constant dense<0.000000e+00> : vector<32xf32>
    %79 = vector.multi_reduction <add>, %78, %cst_52 [0] : vector<512x32xf32> to vector<32xf32>
    %80 = vector.shape_cast %79 : vector<32xf32> to vector<1x32xf32>
    %cst_53 = arith.constant 0.001953125 : f32
    %81 = vector.broadcast %cst_53 : f32 to vector<1x32xf32>
    %82 = arith.mulf %80, %81 : vector<1x32xf32>
    %83 = arith.mulf %77, %77 : vector<1x32xf32>
    %84 = arith.subf %82, %83 : vector<1x32xf32>
    %c0_54 = arith.constant 0 : index
    %c0_55 = arith.constant 0 : index
    %85 = vector.load %arg6[%c0_54, %c0_55] : memref<1x32xf32, #tpu.memory_space<vmem>>, vector<1x32xf32>
    %cst_56 = arith.constant 9.99999974E-6 : f32
    %86 = vector.broadcast %cst_56 : f32 to vector<1x32xf32>
    %87 = arith.addf %84, %86 : vector<1x32xf32>
    %88 = math.rsqrt %87 : vector<1x32xf32>
    %89 = arith.mulf %85, %88 : vector<1x32xf32>
    %c0_57 = arith.constant 0 : index
    %c0_58 = arith.constant 0 : index
    %90 = vector.load %arg7[%c0_57, %c0_58] : memref<1x32xf32, #tpu.memory_space<vmem>>, vector<1x32xf32>
    %91 = arith.mulf %77, %89 : vector<1x32xf32>
    %92 = arith.subf %90, %91 : vector<1x32xf32>
    %93 = vector.broadcast %89 : vector<1x32xf32> to vector<512x32xf32>
    %94 = arith.mulf %73, %93 : vector<512x32xf32>
    %95 = vector.broadcast %92 : vector<1x32xf32> to vector<512x32xf32>
    %96 = arith.addf %94, %95 : vector<512x32xf32>
    %97 = arith.addf %96, %9 : vector<512x32xf32>
    %cst_59 = arith.constant 0.000000e+00 : f32
    %98 = vector.broadcast %cst_59 : f32 to vector<512x32xf32>
    %99 = arith.maximumf %97, %98 : vector<512x32xf32>
    %c0_60 = arith.constant 0 : index
    %c0_61 = arith.constant 0 : index
    %100 = vector.load %arg8[%c0_60, %c0_61] : memref<512x32xf32, #tpu.memory_space<vmem>>, vector<512x32xf32>
    tpu.vector_store %arg8[%c0_60, %c0_61], %99 {strides = array<i32>} : memref<512x32xf32, #tpu.memory_space<vmem>>, vector<512x32xf32>,
    return
  }
  func.func @transform_0(%arg0: i32) -> (i32, i32, i32, i32) {
    %c0_i32 = arith.constant 0 : i32
    %c0_i32_0 = arith.constant 0 : i32
    %c0_i32_1 = arith.constant 0 : i32
    %c0_i32_2 = arith.constant 0 : i32
    %c0_i32_3 = arith.constant 0 : i32
    return %c0_i32, %c0_i32_0, %c0_i32_1, %c0_i32_2 : i32, i32, i32, i32
  }
  func.func @transform_1(%arg0: i32) -> (i32, i32) {
    %c0_i32 = arith.constant 0 : i32
    %c0_i32_0 = arith.constant 0 : i32
    %c0_i32_1 = arith.constant 0 : i32
    return %c0_i32, %c0_i32_0 : i32, i32
  }
  func.func @transform_2(%arg0: i32) -> (i32, i32) {
    %c0_i32 = arith.constant 0 : i32
    %c0_i32_0 = arith.constant 0 : i32
    %c0_i32_1 = arith.constant 0 : i32
    return %c0_i32, %c0_i32_0 : i32, i32
  }
  func.func @transform_3(%arg0: i32) -> (i32, i32) {
    %c0_i32 = arith.constant 0 : i32
    %c0_i32_0 = arith.constant 0 : i32
    %c0_i32_1 = arith.constant 0 : i32
    return %c0_i32, %c0_i32_0 : i32, i32
  }
  func.func @transform_4(%arg0: i32) -> (i32, i32) {
    %c0_i32 = arith.constant 0 : i32
    %c0_i32_0 = arith.constant 0 : i32
    %c0_i32_1 = arith.constant 0 : i32
    return %c0_i32, %c0_i32_0 : i32, i32
  }
  func.func @transform_5(%arg0: i32) -> (i32, i32) {
    %c0_i32 = arith.constant 0 : i32
    %c0_i32_0 = arith.constant 0 : i32
    %c0_i32_1 = arith.constant 0 : i32
    return %c0_i32, %c0_i32_0 : i32, i32
  }
  func.func @transform_6(%arg0: i32) -> (i32, i32) {
    %c0_i32 = arith.constant 0 : i32
    %c0_i32_0 = arith.constant 0 : i32
    %c0_i32_1 = arith.constant 0 : i32
    return %c0_i32, %c0_i32_0 : i32, i32
  }
  func.func @transform_7(%arg0: i32) -> (i32, i32) {
    %c0_i32 = arith.constant 0 : i32
    %c0_i32_0 = arith.constant 0 : i32
    %c0_i32_1 = arith.constant 0 : i32
    return %c0_i32, %c0_i32_0 : i32, i32
  }
}

</mosaic_0001>

<llo_original>
// kernel: tpu_custom_call.1
$region0: #{tpu_custom_call.1}
  #allocation0 [shape = 'u32[]', space=smem, size = 0x4, offset = 0x4, fixed_abs, tag = 'smem constant byte address 0x4 - core index']
  #allocation1 [shape = 'u32[72,128]{1,0:T(1,128)}', space=vmem, size = 0x9000, scoped, tag = 'internal scratch']
  %s0 = inlined_call_operand.vmem [shape: f32[2,18,18,32], index: 0, kind: input, shape index: {}]
  %s1 = inlined_call_operand.vmem [shape: bf16[288,32], index: 1, kind: input, shape index: {}]
  %s2 = inlined_call_operand.vmem [shape: f32[1,32], index: 2, kind: input, shape index: {}]
  %s3 = inlined_call_operand.vmem [shape: f32[1,32], index: 3, kind: input, shape index: {}]
  %s4 = inlined_call_operand.vmem [shape: bf16[288,32], index: 4, kind: input, shape index: {}]
  %s5 = inlined_call_operand.vmem [shape: f32[1,32], index: 5, kind: input, shape index: {}]
  %s6 = inlined_call_operand.vmem [shape: f32[1,32], index: 6, kind: input, shape index: {}]
  %s7 = inlined_call_operand.vmem [shape: f32[512,32], index: 7, kind: output, shape index: {}]
  %s8 = sld [smem:[#allocation0]]
  $region38: #{tpu_custom_call.1} parent=0
    _
  %s10 = ssub.s32 1, %s8
  %s11 = scalar_select 0, %s10, %s8
  // Predicated region
  $region2: #{tpu_custom_call.1} parent=0 // pred_check
    _
  $region3: #{tpu_custom_call.1} parent=0 // pred_check_branch
    %13 = sbr.rel (0) target = $region5
  $region4: #{tpu_custom_call.1} parent=0 // pred_region
    _
  $region5: #{tpu_custom_call.1} parent=0 // pred_fallthru
    _
  // Predicated region
  $region6: #{tpu_custom_call.1} parent=0 // pred_check
    _
  $region7: #{tpu_custom_call.1} parent=0 // pred_check_branch
    %15 = sbr.rel (0) target = $region9
  $region8: #{tpu_custom_call.1} parent=0 // pred_region
    _
  $region9: #{tpu_custom_call.1} parent=0 // pred_fallthru
    _
  // Predicated region
  $region10: #{tpu_custom_call.1} parent=0 // pred_check
    _
  $region11: #{tpu_custom_call.1} parent=0 // pred_check_branch
    %17 = sbr.rel (0) target = $region13
  $region12: #{tpu_custom_call.1} parent=0 // pred_region
    _
  $region13: #{tpu_custom_call.1} parent=0 // pred_fallthru
    _
  // Predicated region
  $region14: #{tpu_custom_call.1} parent=0 // pred_check
    _
  $region15: #{tpu_custom_call.1} parent=0 // pred_check_branch
    %19 = sbr.rel (0) target = $region17
  $region16: #{tpu_custom_call.1} parent=0 // pred_region
    _
  $region17: #{tpu_custom_call.1} parent=0 // pred_fallthru
    _
  // Predicated region
  $region18: #{tpu_custom_call.1} parent=0 // pred_check
    _
  $region19: #{tpu_custom_call.1} parent=0 // pred_check_branch
    %21 = sbr.rel (0) target = $region21
  $region20: #{tpu_custom_call.1} parent=0 // pred_region
    _
  $region21: #{tpu_custom_call.1} parent=0 // pred_fallthru
    _
  // Predicated region
  $region22: #{tpu_custom_call.1} parent=0 // pred_check
    _
  $region23: #{tpu_custom_call.1} parent=0 // pred_check_branch
    %23 = sbr.rel (0) target = $region25
  $region24: #{tpu_custom_call.1} parent=0 // pred_region
    _
  $region25: #{tpu_custom_call.1} parent=0 // pred_fallthru
    _
  // Predicated region
  $region26: #{tpu_custom_call.1} parent=0 // pred_check
    _
  $region27: #{tpu_custom_call.1} parent=0 // pred_check_branch
    %25 = sbr.rel (0) target = $region29
  $region28: #{tpu_custom_call.1} parent=0 // pred_region
    _
  $region29: #{tpu_custom_call.1} parent=0 // pred_fallthru
    _
  %v27 = vld [vmem:[%s0] sm:$0xff]
  %v28 = vld [vmem:[%s0 + $0x8] sm:$0xff]
  %v29 = vld [vmem:[%s0 + $0x18] sm:$0xff]
  %v30 = vld [vmem:[%s0 + $0x20] sm:$0xff]
  %v31 = vld [vmem:[%s0 + $0x30] sm:$0xff]
  %v32 = vld [vmem:[%s0 + $0x38] sm:$0xff]
  %v33 = vld [vmem:[%s0 + $0x48] sm:$0xff]
  %v34 = vld [vmem:[%s0 + $0x50] sm:$0xff]
  %v35 = vld [vmem:[%s0 + $0x60] sm:$0xff]
  %v36 = vld [vmem:[%s0 + $0x68] sm:$0xff]
  %v37 = vld [vmem:[%s0 + $0x78] sm:$0xff]
  %v38 = vld [vmem:[%s0 + $0x80] sm:$0xff]
  %v39 = vld [vmem:[%s0 + $0x90] sm:$0xff]
  %v40 = vld [vmem:[%s0 + $0x98] sm:$0xff]
  %v41 = vld [vmem:[%s0 + $0xa8] sm:$0xff]
  %v42 = vld [vmem:[%s0 + $0xb0] sm:$0xff]
  %v43 = vld [vmem:[%s0 + $0xc0] sm:$0xff]
  %v44 = vld [vmem:[%s0 + $0xc8] sm:$0xff]
  %v45 = vld [vmem:[%s0 + $0xd8] sm:$0xff]
  %v46 = vld [vmem:[%s0 + $0xe0] sm:$0xff]
  %v47 = vld [vmem:[%s0 + $0xf0] sm:$0xff]
  %v48 = vld [vmem:[%s0 + $0xf8] sm:$0xff]
  %v49 = vld [vmem:[%s0 + $0x108] sm:$0xff]
  %v50 = vld [vmem:[%s0 + $0x110] sm:$0xff]
  %v51 = vld [vmem:[%s0 + $0x120] sm:$0xff]
  %v52 = vld [vmem:[%s0 + $0x128] sm:$0xff]
  %v53 = vld [vmem:[%s0 + $0x138] sm:$0xff]
  %v54 = vld [vmem:[%s0 + $0x140] sm:$0xff]
  %v55 = vld [vmem:[%s0 + $0x150] sm:$0xff]
  %v56 = vld [vmem:[%s0 + $0x158] sm:$0xff]
  %v57 = vld [vmem:[%s0 + $0x168] sm:$0xff]
  %v58 = vld [vmem:[%s0 + $0x170] sm:$0xff]
  %v59 = vld [vmem:[%s0 + $0x1b0] sm:$0xff]
  %v60 = vld [vmem:[%s0 + $0x1b8] sm:$0xff]
  %v61 = vld [vmem:[%s0 + $0x1c8] sm:$0xff]
  %v62 = vld [vmem:[%s0 + $0x1d0] sm:$0xff]
  %v63 = vld [vmem:[%s0 + $0x1e0] sm:$0xff]
  %v64 = vld [vmem:[%s0 + $0x1e8] sm:$0xff]
  %v65 = vld [vmem:[%s0 + $0x1f8] sm:$0xff]
  %v66 = vld [vmem:[%s0 + $0x200] sm:$0xff]
  %v67 = vld [vmem:[%s0 + $0x210] sm:$0xff]
  %v68 = vld [vmem:[%s0 + $0x218] sm:$0xff]
  %v69 = vld [vmem:[%s0 + $0x228] sm:$0xff]
  %v70 = vld [vmem:[%s0 + $0x230] sm:$0xff]
  %v71 = vld [vmem:[%s0 + $0x240] sm:$0xff]
  %v72 = vld [vmem:[%s0 + $0x248] sm:$0xff]
  %v73 = vld [vmem:[%s0 + $0x258] sm:$0xff]
  %v74 = vld [vmem:[%s0 + $0x260] sm:$0xff]
  %v75 = vld [vmem:[%s0 + $0x270] sm:$0xff]
  %v76 = vld [vmem:[%s0 + $0x278] sm:$0xff]
  %v77 = vld [vmem:[%s0 + $0x288] sm:$0xff]
  %v78 = vld [vmem:[%s0 + $0x290] sm:$0xff]
  %v79 = vld [vmem:[%s0 + $0x2a0] sm:$0xff]
  %v80 = vld [vmem:[%s0 + $0x2a8] sm:$0xff]
  %v81 = vld [vmem:[%s0 + $0x2b8] sm:$0xff]
  %v82 = vld [vmem:[%s0 + $0x2c0] sm:$0xff]
  %v83 = vld [vmem:[%s0 + $0x2d0] sm:$0xff]
  %v84 = vld [vmem:[%s0 + $0x2d8] sm:$0xff]
  %v85 = vld [vmem:[%s0 + $0x2e8] sm:$0xff]
  %v86 = vld [vmem:[%s0 + $0x2f0] sm:$0xff]
  %v87 = vld [vmem:[%s0 + $0x300] sm:$0xff]
  %v88 = vld [vmem:[%s0 + $0x308] sm:$0xff]
  %v89 = vld [vmem:[%s0 + $0x318] sm:$0xff]
  %v90 = vld [vmem:[%s0 + $0x320] sm:$0xff]
  %v91 = vld [vmem:[%s0 + $0x1] sm:$0xff]
  %v92 = vld [vmem:[%s0 + $0x9] sm:$0xff]
  %v93 = vld [vmem:[%s0 + $0x19] sm:$0xff]
  %v94 = vld [vmem:[%s0 + $0x21] sm:$0xff]
  %v95 = vld [vmem:[%s0 + $0x31] sm:$0xff]
  %v96 = vld [vmem:[%s0 + $0x39] sm:$0xff]
  %v97 = vld [vmem:[%s0 + $0x49] sm:$0xff]
  %v98 = vld [vmem:[%s0 + $0x51] sm:$0xff]
  %v99 = vld [vmem:[%s0 + $0x61] sm:$0xff]
  %v100 = vld [vmem:[%s0 + $0x69] sm:$0xff]
  %v101 = vld [vmem:[%s0 + $0x79] sm:$0xff]
  %v102 = vld [vmem:[%s0 + $0x81] sm:$0xff]
  %v103 = vld [vmem:[%s0 + $0x91] sm:$0xff]
  %v104 = vld [vmem:[%s0 + $0x99] sm:$0xff]
  %v105 = vld [vmem:[%s0 + $0xa9] sm:$0xff]
  %v106 = vld [vmem:[%s0 + $0xb1] sm:$0xff]
  %v107 = vld [vmem:[%s0 + $0xc1] sm:$0xff]
  %v108 = vld [vmem:[%s0 + $0xc9] sm:$0xff]
  %v109 = vld [vmem:[%s0 + $0xd9] sm:$0xff]
  %v110 = vld [vmem:[%s0 + $0xe1] sm:$0xff]
  %v111 = vld [vmem:[%s0 + $0xf1] sm:$0xff]
  %v112 = vld [vmem:[%s0 + $0xf9] sm:$0xff]
  %v113 = vld [vmem:[%s0 + $0x109] sm:$0xff]
  %v114 = vld [vmem:[%s0 + $0x111] sm:$0xff]
  %v115 = vld [vmem:[%s0 + $0x121] sm:$0xff]
  %v116 = vld [vmem:[%s0 + $0x129] sm:$0xff]
  %v117 = vld [vmem:[%s0 + $0x139] sm:$0xff]
  %v118 = vld [vmem:[%s0 + $0x141] sm:$0xff]
  %v119 = vld [vmem:[%s0 + $0x151] sm:$0xff]
  %v120 = vld [vmem:[%s0 + $0x159] sm:$0xff]
  %v121 = vld [vmem:[%s0 + $0x169] sm:$0xff]
  %v122 = vld [vmem:[%s0 + $0x171] sm:$0xff]
  %v123 = vld [vmem:[%s0 + $0x1b1] sm:$0xff]
  %v124 = vld [vmem:[%s0 + $0x1b9] sm:$0xff]
  %v125 = vld [vmem:[%s0 + $0x1c9] sm:$0xff]
  %v126 = vld [vmem:[%s0 + $0x1d1] sm:$0xff]
  %v127 = vld [vmem:[%s0 + $0x1e1] sm:$0xff]
  %v128 = vld [vmem:[%s0 + $0x1e9] sm:$0xff]
  %v129 = vld [vmem:[%s0 + $0x1f9] sm:$0xff]
  %v130 = vld [vmem:[%s0 + $0x201] sm:$0xff]
  %v131 = vld [vmem:[%s0 + $0x211] sm:$0xff]
  %v132 = vld [vmem:[%s0 + $0x219] sm:$0xff]
  %v133 = vld [vmem:[%s0 + $0x229] sm:$0xff]
  %v134 = vld [vmem:[%s0 + $0x231] sm:$0xff]
  %v135 = vld [vmem:[%s0 + $0x241] sm:$0xff]
  %v136 = vld [vmem:[%s0 + $0x249] sm:$0xff]
  %v137 = vld [vmem:[%s0 + $0x259] sm:$0xff]
  %v138 = vld [vmem:[%s0 + $0x261] sm:$0xff]
  %v139 = vld [vmem:[%s0 + $0x271] sm:$0xff]
  %v140 = vld [vmem:[%s0 + $0x279] sm:$0xff]
  %v141 = vld [vmem:[%s0 + $0x289] sm:$0xff]
  %v142 = vld [vmem:[%s0 + $0x291] sm:$0xff]
  %v143 = vld [vmem:[%s0 + $0x2a1] sm:$0xff]
  %v144 = vld [vmem:[%s0 + $0x2a9] sm:$0xff]
  %v145 = vld [vmem:[%s0 + $0x2b9] sm:$0xff]
  %v146 = vld [vmem:[%s0 + $0x2c1] sm:$0xff]
  %v147 = vld [vmem:[%s0 + $0x2d1] sm:$0xff]
  %v148 = vld [vmem:[%s0 + $0x2d9] sm:$0xff]
  %v149 = vld [vmem:[%s0 + $0x2e9] sm:$0xff]
  %v150 = vld [vmem:[%s0 + $0x2f1] sm:$0xff]
  %v151 = vld [vmem:[%s0 + $0x301] sm:$0xff]
  %v152 = vld [vmem:[%s0 + $0x309] sm:$0xff]
  %v153 = vld [vmem:[%s0 + $0x319] sm:$0xff]
  %v154 = vld [vmem:[%s0 + $0x321] sm:$0xff]
  %v155 = vld [vmem:[%s0 + $0x2] sm:$0xff]
  %v156 = vld [vmem:[%s0 + $0xa] sm:$0xff]
  %v157 = vld [vmem:[%s0 + $0x1a] sm:$0xff]
  %v158 = vld [vmem:[%s0 + $0x22] sm:$0xff]
  %v159 = vld [vmem:[%s0 + $0x32] sm:$0xff]
  %v160 = vld [vmem:[%s0 + $0x3a] sm:$0xff]
  %v161 = vld [vmem:[%s0 + $0x4a] sm:$0xff]
  %v162 = vld [vmem:[%s0 + $0x52] sm:$0xff]
  %v163 = vld [vmem:[%s0 + $0x62] sm:$0xff]
  %v164 = vld [vmem:[%s0 + $0x6a] sm:$0xff]
  %v165 = vld [vmem:[%s0 + $0x7a] sm:$0xff]
  %v166 = vld [vmem:[%s0 + $0x82] sm:$0xff]
  %v167 = vld [vmem:[%s0 + $0x92] sm:$0xff]
  %v168 = vld [vmem:[%s0 + $0x9a] sm:$0xff]
  %v169 = vld [vmem:[%s0 + $0xaa] sm:$0xff]
  %v170 = vld [vmem:[%s0 + $0xb2] sm:$0xff]
  %v171 = vld [vmem:[%s0 + $0xc2] sm:$0xff]
  %v172 = vld [vmem:[%s0 + $0xca] sm:$0xff]
  %v173 = vld [vmem:[%s0 + $0xda] sm:$0xff]
  %v174 = vld [vmem:[%s0 + $0xe2] sm:$0xff]
  %v175 = vld [vmem:[%s0 + $0xf2] sm:$0xff]
  %v176 = vld [vmem:[%s0 + $0xfa] sm:$0xff]
  %v177 = vld [vmem:[%s0 + $0x10a] sm:$0xff]
  %v178 = vld [vmem:[%s0 + $0x112] sm:$0xff]
  %v179 = vld [vmem:[%s0 + $0x122] sm:$0xff]
  %v180 = vld [vmem:[%s0 + $0x12a] sm:$0xff]
  %v181 = vld [vmem:[%s0 + $0x13a] sm:$0xff]
  %v182 = vld [vmem:[%s0 + $0x142] sm:$0xff]
  %v183 = vld [vmem:[%s0 + $0x152] sm:$0xff]
  %v184 = vld [vmem:[%s0 + $0x15a] sm:$0xff]
  %v185 = vld [vmem:[%s0 + $0x16a] sm:$0xff]
  %v186 = vld [vmem:[%s0 + $0x172] sm:$0xff]
  %v187 = vld [vmem:[%s0 + $0x1b2] sm:$0xff]
  %v188 = vld [vmem:[%s0 + $0x1ba] sm:$0xff]
  %v189 = vld [vmem:[%s0 + $0x1ca] sm:$0xff]
  %v190 = vld [vmem:[%s0 + $0x1d2] sm:$0xff]
  %v191 = vld [vmem:[%s0 + $0x1e2] sm:$0xff]
  %v192 = vld [vmem:[%s0 + $0x1ea] sm:$0xff]
  %v193 = vld [vmem:[%s0 + $0x1fa] sm:$0xff]
  %v194 = vld [vmem:[%s0 + $0x202] sm:$0xff]
  %v195 = vld [vmem:[%s0 + $0x212] sm:$0xff]
  %v196 = vld [vmem:[%s0 + $0x21a] sm:$0xff]
  %v197 = vld [vmem:[%s0 + $0x22a] sm:$0xff]
  %v198 = vld [vmem:[%s0 + $0x232] sm:$0xff]
  %v199 = vld [vmem:[%s0 + $0x242] sm:$0xff]
  %v200 = vld [vmem:[%s0 + $0x24a] sm:$0xff]
  %v201 = vld [vmem:[%s0 + $0x25a] sm:$0xff]
  %v202 = vld [vmem:[%s0 + $0x262] sm:$0xff]
  %v203 = vld [vmem:[%s0 + $0x272] sm:$0xff]
  %v204 = vld [vmem:[%s0 + $0x27a] sm:$0xff]
  %v205 = vld [vmem:[%s0 + $0x28a] sm:$0xff]
  %v206 = vld [vmem:[%s0 + $0x292] sm:$0xff]
  %v207 = vld [vmem:[%s0 + $0x2a2] sm:$0xff]
  %v208 = vld [vmem:[%s0 + $0x2aa] sm:$0xff]
  %v209 = vld [vmem:[%s0 + $0x2ba] sm:$0xff]
  %v210 = vld [vmem:[%s0 + $0x2c2] sm:$0xff]
  %v211 = vld [vmem:[%s0 + $0x2d2] sm:$0xff]
  %v212 = vld [vmem:[%s0 + $0x2da] sm:$0xff]
  %v213 = vld [vmem:[%s0 + $0x2ea] sm:$0xff]
  %v214 = vld [vmem:[%s0 + $0x2f2] sm:$0xff]
  %v215 = vld [vmem:[%s0 + $0x302] sm:$0xff]
  %v216 = vld [vmem:[%s0 + $0x30a] sm:$0xff]
  %v217 = vld [vmem:[%s0 + $0x31a] sm:$0xff]
  %v218 = vld [vmem:[%s0 + $0x322] sm:$0xff]
  %s219 = scalar_lea.vmem %s0, 24
  %v220 = vld [vmem:[%s219] sm:$0xff]
  %v221 = vld [vmem:[%s219 + $0x8] sm:$0xff]
  %v222 = vld [vmem:[%s219 + $0x18] sm:$0xff]
  %v223 = vld [vmem:[%s219 + $0x20] sm:$0xff]
  %v224 = vld [vmem:[%s219 + $0x30] sm:$0xff]
  %v225 = vld [vmem:[%s219 + $0x38] sm:$0xff]
  %v226 = vld [vmem:[%s219 + $0x48] sm:$0xff]
  %v227 = vld [vmem:[%s219 + $0x50] sm:$0xff]
  %v228 = vld [vmem:[%s219 + $0x60] sm:$0xff]
  %v229 = vld [vmem:[%s219 + $0x68] sm:$0xff]
  %v230 = vld [vmem:[%s219 + $0x78] sm:$0xff]
  %v231 = vld [vmem:[%s219 + $0x80] sm:$0xff]
  %v232 = vld [vmem:[%s219 + $0x90] sm:$0xff]
  %v233 = vld [vmem:[%s219 + $0x98] sm:$0xff]
  %v234 = vld [vmem:[%s219 + $0xa8] sm:$0xff]
  %v235 = vld [vmem:[%s219 + $0xb0] sm:$0xff]
  %v236 = vld [vmem:[%s219 + $0xc0] sm:$0xff]
  %v237 = vld [vmem:[%s219 + $0xc8] sm:$0xff]
  %v238 = vld [vmem:[%s219 + $0xd8] sm:$0xff]
  %v239 = vld [vmem:[%s219 + $0xe0] sm:$0xff]
  %v240 = vld [vmem:[%s219 + $0xf0] sm:$0xff]
  %v241 = vld [vmem:[%s219 + $0xf8] sm:$0xff]
  %v242 = vld [vmem:[%s219 + $0x108] sm:$0xff]
  %v243 = vld [vmem:[%s219 + $0x110] sm:$0xff]
  %v244 = vld [vmem:[%s219 + $0x120] sm:$0xff]
  %v245 = vld [vmem:[%s219 + $0x128] sm:$0xff]
  %v246 = vld [vmem:[%s219 + $0x138] sm:$0xff]
  %v247 = vld [vmem:[%s219 + $0x140] sm:$0xff]
  %v248 = vld [vmem:[%s219 + $0x150] sm:$0xff]
  %v249 = vld [vmem:[%s219 + $0x158] sm:$0xff]
  %v250 = vld [vmem:[%s219 + $0x168] sm:$0xff]
  %v251 = vld [vmem:[%s219 + $0x170] sm:$0xff]
  %v252 = vld [vmem:[%s219 + $0x1b0] sm:$0xff]
  %v253 = vld [vmem:[%s219 + $0x1b8] sm:$0xff]
  %v254 = vld [vmem:[%s219 + $0x1c8] sm:$0xff]
  %v255 = vld [vmem:[%s219 + $0x1d0] sm:$0xff]
  %v256 = vld [vmem:[%s219 + $0x1e0] sm:$0xff]
  %v257 = vld [vmem:[%s219 + $0x1e8] sm:$0xff]
  %v258 = vld [vmem:[%s219 + $0x1f8] sm:$0xff]
  %v259 = vld [vmem:[%s219 + $0x200] sm:$0xff]
  %v260 = vld [vmem:[%s219 + $0x210] sm:$0xff]
  %v261 = vld [vmem:[%s219 + $0x218] sm:$0xff]
  %v262 = vld [vmem:[%s219 + $0x228] sm:$0xff]
  %v263 = vld [vmem:[%s219 + $0x230] sm:$0xff]
  %v264 = vld [vmem:[%s219 + $0x240] sm:$0xff]
  %v265 = vld [vmem:[%s219 + $0x248] sm:$0xff]
  %v266 = vld [vmem:[%s219 + $0x258] sm:$0xff]
  %v267 = vld [vmem:[%s219 + $0x260] sm:$0xff]
  %v268 = vld [vmem:[%s219 + $0x270] sm:$0xff]
  %v269 = vld [vmem:[%s219 + $0x278] sm:$0xff]
  %v270 = vld [vmem:[%s219 + $0x288] sm:$0xff]
  %v271 = vld [vmem:[%s219 + $0x290] sm:$0xff]
  %v272 = vld [vmem:[%s219 + $0x2a0] sm:$0xff]
  %v273 = vld [vmem:[%s219 + $0x2a8] sm:$0xff]
  %v274 = vld [vmem:[%s219 + $0x2b8] sm:$0xff]
  %v275 = vld [vmem:[%s219 + $0x2c0] sm:$0xff]
  %v276 = vld [vmem:[%s219 + $0x2d0] sm:$0xff]
  %v277 = vld [vmem:[%s219 + $0x2d8] sm:$0xff]
  %v278 = vld [vmem:[%s219 + $0x2e8] sm:$0xff]
  %v279 = vld [vmem:[%s219 + $0x2f0] sm:$0xff]
  %v280 = vld [vmem:[%s219 + $0x300] sm:$0xff]
  %v281 = vld [vmem:[%s219 + $0x308] sm:$0xff]
  %v282 = vld [vmem:[%s219 + $0x318] sm:$0xff]
  %v283 = vld [vmem:[%s219 + $0x320] sm:$0xff]
  %v284 = vld [vmem:[%s219 + $0x1] sm:$0xff]
  %v285 = vld [vmem:[%s219 + $0x9] sm:$0xff]
  %v286 = vld [vmem:[%s219 + $0x19] sm:$0xff]
  %v287 = vld [vmem:[%s219 + $0x21] sm:$0xff]
  %v288 = vld [vmem:[%s219 + $0x31] sm:$0xff]
  %v289 = vld [vmem:[%s219 + $0x39] sm:$0xff]
  %v290 = vld [vmem:[%s219 + $0x49] sm:$0xff]
  %v291 = vld [vmem:[%s219 + $0x51] sm:$0xff]
  %v292 = vld [vmem:[%s219 + $0x61] sm:$0xff]
  %v293 = vld [vmem:[%s219 + $0x69] sm:$0xff]
  %v294 = vld [vmem:[%s219 + $0x79] sm:$0xff]
  %v295 = vld [vmem:[%s219 + $0x81] sm:$0xff]
  %v296 = vld [vmem:[%s219 + $0x91] sm:$0xff]
  %v297 = vld [vmem:[%s219 + $0x99] sm:$0xff]
  %v298 = vld [vmem:[%s219 + $0xa9] sm:$0xff]
  %v299 = vld [vmem:[%s219 + $0xb1] sm:$0xff]
  %v300 = vld [vmem:[%s219 + $0xc1] sm:$0xff]
  %v301 = vld [vmem:[%s219 + $0xc9] sm:$0xff]
  %v302 = vld [vmem:[%s219 + $0xd9] sm:$0xff]
  %v303 = vld [vmem:[%s219 + $0xe1] sm:$0xff]
  %v304 = vld [vmem:[%s219 + $0xf1] sm:$0xff]
  %v305 = vld [vmem:[%s219 + $0xf9] sm:$0xff]
  %v306 = vld [vmem:[%s219 + $0x109] sm:$0xff]
  %v307 = vld [vmem:[%s219 + $0x111] sm:$0xff]
  %v308 = vld [vmem:[%s219 + $0x121] sm:$0xff]
  %v309 = vld [vmem:[%s219 + $0x129] sm:$0xff]
  %v310 = vld [vmem:[%s219 + $0x139] sm:$0xff]
  %v311 = vld [vmem:[%s219 + $0x141] sm:$0xff]
  %v312 = vld [vmem:[%s219 + $0x151] sm:$0xff]
  %v313 = vld [vmem:[%s219 + $0x159] sm:$0xff]
  %v314 = vld [vmem:[%s219 + $0x169] sm:$0xff]
  %v315 = vld [vmem:[%s219 + $0x171] sm:$0xff]
  %v316 = vld [vmem:[%s219 + $0x1b1] sm:$0xff]
  %v317 = vld [vmem:[%s219 + $0x1b9] sm:$0xff]
  %v318 = vld [vmem:[%s219 + $0x1c9] sm:$0xff]
  %v319 = vld [vmem:[%s219 + $0x1d1] sm:$0xff]
  %v320 = vld [vmem:[%s219 + $0x1e1] sm:$0xff]
  %v321 = vld [vmem:[%s219 + $0x1e9] sm:$0xff]
  %v322 = vld [vmem:[%s219 + $0x1f9] sm:$0xff]
  %v323 = vld [vmem:[%s219 + $0x201] sm:$0xff]
  %v324 = vld [vmem:[%s219 + $0x211] sm:$0xff]
  %v325 = vld [vmem:[%s219 + $0x219] sm:$0xff]
  %v326 = vld [vmem:[%s219 + $0x229] sm:$0xff]
  %v327 = vld [vmem:[%s219 + $0x231] sm:$0xff]
  %v328 = vld [vmem:[%s219 + $0x241] sm:$0xff]
  %v329 = vld [vmem:[%s219 + $0x249] sm:$0xff]
  %v330 = vld [vmem:[%s219 + $0x259] sm:$0xff]
  %v331 = vld [vmem:[%s219 + $0x261] sm:$0xff]
  %v332 = vld [vmem:[%s219 + $0x271] sm:$0xff]
  %v333 = vld [vmem:[%s219 + $0x279] sm:$0xff]
  %v334 = vld [vmem:[%s219 + $0x289] sm:$0xff]
  %v335 = vld [vmem:[%s219 + $0x291] sm:$0xff]
  %v336 = vld [vmem:[%s219 + $0x2a1] sm:$0xff]
  %v337 = vld [vmem:[%s219 + $0x2a9] sm:$0xff]
  %v338 = vld [vmem:[%s219 + $0x2b9] sm:$0xff]
  %v339 = vld [vmem:[%s219 + $0x2c1] sm:$0xff]
  %v340 = vld [vmem:[%s219 + $0x2d1] sm:$0xff]
  %v341 = vld [vmem:[%s219 + $0x2d9] sm:$0xff]
  %v342 = vld [vmem:[%s219 + $0x2e9] sm:$0xff]
  %v343 = vld [vmem:[%s219 + $0x2f1] sm:$0xff]
  %v344 = vld [vmem:[%s219 + $0x301] sm:$0xff]
  %v345 = vld [vmem:[%s219 + $0x309] sm:$0xff]
  %v346 = vld [vmem:[%s219 + $0x319] sm:$0xff]
  %v347 = vld [vmem:[%s219 + $0x321] sm:$0xff]
  %v348 = vld [vmem:[%s219 + $0x2] sm:$0xff]
  %v349 = vld [vmem:[%s219 + $0xa] sm:$0xff]
  %v350 = vld [vmem:[%s219 + $0x1a] sm:$0xff]
  %v351 = vld [vmem:[%s219 + $0x22] sm:$0xff]
  %v352 = vld [vmem:[%s219 + $0x32] sm:$0xff]
  %v353 = vld [vmem:[%s219 + $0x3a] sm:$0xff]
  %v354 = vld [vmem:[%s219 + $0x4a] sm:$0xff]
  %v355 = vld [vmem:[%s219 + $0x52] sm:$0xff]
  %v356 = vld [vmem:[%s219 + $0x62] sm:$0xff]
  %v357 = vld [vmem:[%s219 + $0x6a] sm:$0xff]
  %v358 = vld [vmem:[%s219 + $0x7a] sm:$0xff]
  %v359 = vld [vmem:[%s219 + $0x82] sm:$0xff]
  %v360 = vld [vmem:[%s219 + $0x92] sm:$0xff]
  %v361 = vld [vmem:[%s219 + $0x9a] sm:$0xff]
  %v362 = vld [vmem:[%s219 + $0xaa] sm:$0xff]
  %v363 = vld [vmem:[%s219 + $0xb2] sm:$0xff]
  %v364 = vld [vmem:[%s219 + $0xc2] sm:$0xff]
  %v365 = vld [vmem:[%s219 + $0xca] sm:$0xff]
  %v366 = vld [vmem:[%s219 + $0xda] sm:$0xff]
  %v367 = vld [vmem:[%s219 + $0xe2] sm:$0xff]
  %v368 = vld [vmem:[%s219 + $0xf2] sm:$0xff]
  %v369 = vld [vmem:[%s219 + $0xfa] sm:$0xff]
  %v370 = vld [vmem:[%s219 + $0x10a] sm:$0xff]
  %v371 = vld [vmem:[%s219 + $0x112] sm:$0xff]
  %v372 = vld [vmem:[%s219 + $0x122] sm:$0xff]
  %v373 = vld [vmem:[%s219 + $0x12a] sm:$0xff]
  %v374 = vld [vmem:[%s219 + $0x13a] sm:$0xff]
  %v375 = vld [vmem:[%s219 + $0x142] sm:$0xff]
  %v376 = vld [vmem:[%s219 + $0x152] sm:$0xff]
  %v377 = vld [vmem:[%s219 + $0x15a] sm:$0xff]
  %v378 = vld [vmem:[%s219 + $0x16a] sm:$0xff]
  %v379 = vld [vmem:[%s219 + $0x172] sm:$0xff]
  %v380 = vld [vmem:[%s219 + $0x1b2] sm:$0xff]
  %v381 = vld [vmem:[%s219 + $0x1ba] sm:$0xff]
  %v382 = vld [vmem:[%s219 + $0x1ca] sm:$0xff]
  %v383 = vld [vmem:[%s219 + $0x1d2] sm:$0xff]
  %v384 = vld [vmem:[%s219 + $0x1e2] sm:$0xff]
  %v385 = vld [vmem:[%s219 + $0x1ea] sm:$0xff]
  %v386 = vld [vmem:[%s219 + $0x1fa] sm:$0xff]
  %v387 = vld [vmem:[%s219 + $0x202] sm:$0xff]
  %v388 = vld [vmem:[%s219 + $0x212] sm:$0xff]
  %v389 = vld [vmem:[%s219 + $0x21a] sm:$0xff]
  %v390 = vld [vmem:[%s219 + $0x22a] sm:$0xff]
  %v391 = vld [vmem:[%s219 + $0x232] sm:$0xff]
  %v392 = vld [vmem:[%s219 + $0x242] sm:$0xff]
  %v393 = vld [vmem:[%s219 + $0x24a] sm:$0xff]
  %v394 = vld [vmem:[%s219 + $0x25a] sm:$0xff]
  %v395 = vld [vmem:[%s219 + $0x262] sm:$0xff]
  %v396 = vld [vmem:[%s219 + $0x272] sm:$0xff]
  %v397 = vld [vmem:[%s219 + $0x27a] sm:$0xff]
  %v398 = vld [vmem:[%s219 + $0x28a] sm:$0xff]
  %v399 = vld [vmem:[%s219 + $0x292] sm:$0xff]
  %v400 = vld [vmem:[%s219 + $0x2a2] sm:$0xff]
  %v401 = vld [vmem:[%s219 + $0x2aa] sm:$0xff]
  %v402 = vld [vmem:[%s219 + $0x2ba] sm:$0xff]
  %v403 = vld [vmem:[%s219 + $0x2c2] sm:$0xff]
  %v404 = vld [vmem:[%s219 + $0x2d2] sm:$0xff]
  %v405 = vld [vmem:[%s219 + $0x2da] sm:$0xff]
  %v406 = vld [vmem:[%s219 + $0x2ea] sm:$0xff]
  %v407 = vld [vmem:[%s219 + $0x2f2] sm:$0xff]
  %v408 = vld [vmem:[%s219 + $0x302] sm:$0xff]
  %v409 = vld [vmem:[%s219 + $0x30a] sm:$0xff]
  %v410 = vld [vmem:[%s219 + $0x31a] sm:$0xff]
  %v411 = vld [vmem:[%s219 + $0x322] sm:$0xff]
  %s412 = scalar_lea.vmem %s0, 48
  %v413 = vld [vmem:[%s412] sm:$0xff]
  %v414 = vld [vmem:[%s412 + $0x8] sm:$0xff]
  %v415 = vld [vmem:[%s412 + $0x18] sm:$0xff]
  %v416 = vld [vmem:[%s412 + $0x20] sm:$0xff]
  %v417 = vld [vmem:[%s412 + $0x30] sm:$0xff]
  %v418 = vld [vmem:[%s412 + $0x38] sm:$0xff]
  %v419 = vld [vmem:[%s412 + $0x48] sm:$0xff]
  %v420 = vld [vmem:[%s412 + $0x50] sm:$0xff]
  %v421 = vld [vmem:[%s412 + $0x60] sm:$0xff]
  %v422 = vld [vmem:[%s412 + $0x68] sm:$0xff]
  %v423 = vld [vmem:[%s412 + $0x78] sm:$0xff]
  %v424 = vld [vmem:[%s412 + $0x80] sm:$0xff]
  %v425 = vld [vmem:[%s412 + $0x90] sm:$0xff]
  %v426 = vld [vmem:[%s412 + $0x98] sm:$0xff]
  %v427 = vld [vmem:[%s412 + $0xa8] sm:$0xff]
  %v428 = vld [vmem:[%s412 + $0xb0] sm:$0xff]
  %v429 = vld [vmem:[%s412 + $0xc0] sm:$0xff]
  %v430 = vld [vmem:[%s412 + $0xc8] sm:$0xff]
  %v431 = vld [vmem:[%s412 + $0xd8] sm:$0xff]
  %v432 = vld [vmem:[%s412 + $0xe0] sm:$0xff]
  %v433 = vld [vmem:[%s412 + $0xf0] sm:$0xff]
  %v434 = vld [vmem:[%s412 + $0xf8] sm:$0xff]
  %v435 = vld [vmem:[%s412 + $0x108] sm:$0xff]
  %v436 = vld [vmem:[%s412 + $0x110] sm:$0xff]
  %v437 = vld [vmem:[%s412 + $0x120] sm:$0xff]
  %v438 = vld [vmem:[%s412 + $0x128] sm:$0xff]
  %v439 = vld [vmem:[%s412 + $0x138] sm:$0xff]
  %v440 = vld [vmem:[%s412 + $0x140] sm:$0xff]
  %v441 = vld [vmem:[%s412 + $0x150] sm:$0xff]
  %v442 = vld [vmem:[%s412 + $0x158] sm:$0xff]
  %v443 = vld [vmem:[%s412 + $0x168] sm:$0xff]
  %v444 = vld [vmem:[%s412 + $0x170] sm:$0xff]
  %v445 = vld [vmem:[%s412 + $0x1b0] sm:$0xff]
  %v446 = vld [vmem:[%s412 + $0x1b8] sm:$0xff]
  %v447 = vld [vmem:[%s412 + $0x1c8] sm:$0xff]
  %v448 = vld [vmem:[%s412 + $0x1d0] sm:$0xff]
  %v449 = vld [vmem:[%s412 + $0x1e0] sm:$0xff]
  %v450 = vld [vmem:[%s412 + $0x1e8] sm:$0xff]
  %v451 = vld [vmem:[%s412 + $0x1f8] sm:$0xff]
  %v452 = vld [vmem:[%s412 + $0x200] sm:$0xff]
  %v453 = vld [vmem:[%s412 + $0x210] sm:$0xff]
  %v454 = vld [vmem:[%s412 + $0x218] sm:$0xff]
  %v455 = vld [vmem:[%s412 + $0x228] sm:$0xff]
  %v456 = vld [vmem:[%s412 + $0x230] sm:$0xff]
  %v457 = vld [vmem:[%s412 + $0x240] sm:$0xff]
  %v458 = vld [vmem:[%s412 + $0x248] sm:$0xff]
  %v459 = vld [vmem:[%s412 + $0x258] sm:$0xff]
  %v460 = vld [vmem:[%s412 + $0x260] sm:$0xff]
  %v461 = vld [vmem:[%s412 + $0x270] sm:$0xff]
  %v462 = vld [vmem:[%s412 + $0x278] sm:$0xff]
  %v463 = vld [vmem:[%s412 + $0x288] sm:$0xff]
  %v464 = vld [vmem:[%s412 + $0x290] sm:$0xff]
  %v465 = vld [vmem:[%s412 + $0x2a0] sm:$0xff]
  %v466 = vld [vmem:[%s412 + $0x2a8] sm:$0xff]
  %v467 = vld [vmem:[%s412 + $0x2b8] sm:$0xff]
  %v468 = vld [vmem:[%s412 + $0x2c0] sm:$0xff]
  %v469 = vld [vmem:[%s412 + $0x2d0] sm:$0xff]
  %v470 = vld [vmem:[%s412 + $0x2d8] sm:$0xff]
  %v471 = vld [vmem:[%s412 + $0x2e8] sm:$0xff]
  %v472 = vld [vmem:[%s412 + $0x2f0] sm:$0xff]
  %v473 = vld [vmem:[%s412 + $0x300] sm:$0xff]
  %v474 = vld [vmem:[%s412 + $0x308] sm:$0xff]
  %v475 = vld [vmem:[%s412 + $0x318] sm:$0xff]
  %v476 = vld [vmem:[%s412 + $0x320] sm:$0xff]
  %v477 = vld [vmem:[%s412 + $0x1] sm:$0xff]
  %v478 = vld [vmem:[%s412 + $0x9] sm:$0xff]
  %v479 = vld [vmem:[%s412 + $0x19] sm:$0xff]
  %v480 = vld [vmem:[%s412 + $0x21] sm:$0xff]
  %v481 = vld [vmem:[%s412 + $0x31] sm:$0xff]
  %v482 = vld [vmem:[%s412 + $0x39] sm:$0xff]
  %v483 = vld [vmem:[%s412 + $0x49] sm:$0xff]
  %v484 = vld [vmem:[%s412 + $0x51] sm:$0xff]
  %v485 = vld [vmem:[%s412 + $0x61] sm:$0xff]
  %v486 = vld [vmem:[%s412 + $0x69] sm:$0xff]
  %v487 = vld [vmem:[%s412 + $0x79] sm:$0xff]
  %v488 = vld [vmem:[%s412 + $0x81] sm:$0xff]
  %v489 = vld [vmem:[%s412 + $0x91] sm:$0xff]
  %v490 = vld [vmem:[%s412 + $0x99] sm:$0xff]
  %v491 = vld [vmem:[%s412 + $0xa9] sm:$0xff]
  %v492 = vld [vmem:[%s412 + $0xb1] sm:$0xff]
  %v493 = vld [vmem:[%s412 + $0xc1] sm:$0xff]
  %v494 = vld [vmem:[%s412 + $0xc9] sm:$0xff]
  %v495 = vld [vmem:[%s412 + $0xd9] sm:$0xff]
  %v496 = vld [vmem:[%s412 + $0xe1] sm:$0xff]
  %v497 = vld [vmem:[%s412 + $0xf1] sm:$0xff]
  %v498 = vld [vmem:[%s412 + $0xf9] sm:$0xff]
  %v499 = vld [vmem:[%s412 + $0x109] sm:$0xff]
  %v500 = vld [vmem:[%s412 + $0x111] sm:$0xff]
  %v501 = vld [vmem:[%s412 + $0x121] sm:$0xff]
  %v502 = vld [vmem:[%s412 + $0x129] sm:$0xff]
  %v503 = vld [vmem:[%s412 + $0x139] sm:$0xff]
  %v504 = vld [vmem:[%s412 + $0x141] sm:$0xff]
  %v505 = vld [vmem:[%s412 + $0x151] sm:$0xff]
  %v506 = vld [vmem:[%s412 + $0x159] sm:$0xff]
  %v507 = vld [vmem:[%s412 + $0x169] sm:$0xff]
  %v508 = vld [vmem:[%s412 + $0x171] sm:$0xff]
  %v509 = vld [vmem:[%s412 + $0x1b1] sm:$0xff]
  %v510 = vld [vmem:[%s412 + $0x1b9] sm:$0xff]
  %v511 = vld [vmem:[%s412 + $0x1c9] sm:$0xff]
  %v512 = vld [vmem:[%s412 + $0x1d1] sm:$0xff]
  %v513 = vld [vmem:[%s412 + $0x1e1] sm:$0xff]
  %v514 = vld [vmem:[%s412 + $0x1e9] sm:$0xff]
  %v515 = vld [vmem:[%s412 + $0x1f9] sm:$0xff]
  %v516 = vld [vmem:[%s412 + $0x201] sm:$0xff]
  %v517 = vld [vmem:[%s412 + $0x211] sm:$0xff]
  %v518 = vld [vmem:[%s412 + $0x219] sm:$0xff]
  %v519 = vld [vmem:[%s412 + $0x229] sm:$0xff]
  %v520 = vld [vmem:[%s412 + $0x231] sm:$0xff]
  %v521 = vld [vmem:[%s412 + $0x241] sm:$0xff]
  %v522 = vld [vmem:[%s412 + $0x249] sm:$0xff]
  %v523 = vld [vmem:[%s412 + $0x259] sm:$0xff]
  %v524 = vld [vmem:[%s412 + $0x261] sm:$0xff]
  %v525 = vld [vmem:[%s412 + $0x271] sm:$0xff]
  %v526 = vld [vmem:[%s412 + $0x279] sm:$0xff]
  %v527 = vld [vmem:[%s412 + $0x289] sm:$0xff]
  %v528 = vld [vmem:[%s412 + $0x291] sm:$0xff]
  %v529 = vld [vmem:[%s412 + $0x2a1] sm:$0xff]
  %v530 = vld [vmem:[%s412 + $0x2a9] sm:$0xff]
  %v531 = vld [vmem:[%s412 + $0x2b9] sm:$0xff]
  %v532 = vld [vmem:[%s412 + $0x2c1] sm:$0xff]
  %v533 = vld [vmem:[%s412 + $0x2d1] sm:$0xff]
  %v534 = vld [vmem:[%s412 + $0x2d9] sm:$0xff]
  %v535 = vld [vmem:[%s412 + $0x2e9] sm:$0xff]
  %v536 = vld [vmem:[%s412 + $0x2f1] sm:$0xff]
  %v537 = vld [vmem:[%s412 + $0x301] sm:$0xff]
  %v538 = vld [vmem:[%s412 + $0x309] sm:$0xff]
  %v539 = vld [vmem:[%s412 + $0x319] sm:$0xff]
  %v540 = vld [vmem:[%s412 + $0x321] sm:$0xff]
  %v541 = vld [vmem:[%s412 + $0x2] sm:$0xff]
  %v542 = vld [vmem:[%s412 + $0xa] sm:$0xff]
  %v543 = vld [vmem:[%s412 + $0x1a] sm:$0xff]
  %v544 = vld [vmem:[%s412 + $0x22] sm:$0xff]
  %v545 = vld [vmem:[%s412 + $0x32] sm:$0xff]
  %v546 = vld [vmem:[%s412 + $0x3a] sm:$0xff]
  %v547 = vld [vmem:[%s412 + $0x4a] sm:$0xff]
  %v548 = vld [vmem:[%s412 + $0x52] sm:$0xff]
  %v549 = vld [vmem:[%s412 + $0x62] sm:$0xff]
  %v550 = vld [vmem:[%s412 + $0x6a] sm:$0xff]
  %v551 = vld [vmem:[%s412 + $0x7a] sm:$0xff]
  %v552 = vld [vmem:[%s412 + $0x82] sm:$0xff]
  %v553 = vld [vmem:[%s412 + $0x92] sm:$0xff]
  %v554 = vld [vmem:[%s412 + $0x9a] sm:$0xff]
  %v555 = vld [vmem:[%s412 + $0xaa] sm:$0xff]
  %v556 = vld [vmem:[%s412 + $0xb2] sm:$0xff]
  %v557 = vld [vmem:[%s412 + $0xc2] sm:$0xff]
  %v558 = vld [vmem:[%s412 + $0xca] sm:$0xff]
  %v559 = vld [vmem:[%s412 + $0xda] sm:$0xff]
  %v560 = vld [vmem:[%s412 + $0xe2] sm:$0xff]
  %v561 = vld [vmem:[%s412 + $0xf2] sm:$0xff]
  %v562 = vld [vmem:[%s412 + $0xfa] sm:$0xff]
  %v563 = vld [vmem:[%s412 + $0x10a] sm:$0xff]
  %v564 = vld [vmem:[%s412 + $0x112] sm:$0xff]
  %v565 = vld [vmem:[%s412 + $0x122] sm:$0xff]
  %v566 = vld [vmem:[%s412 + $0x12a] sm:$0xff]
  %v567 = vld [vmem:[%s412 + $0x13a] sm:$0xff]
  %v568 = vld [vmem:[%s412 + $0x142] sm:$0xff]
  %v569 = vld [vmem:[%s412 + $0x152] sm:$0xff]
  %v570 = vld [vmem:[%s412 + $0x15a] sm:$0xff]
  %v571 = vld [vmem:[%s412 + $0x16a] sm:$0xff]
  %v572 = vld [vmem:[%s412 + $0x172] sm:$0xff]
  %v573 = vld [vmem:[%s412 + $0x1b2] sm:$0xff]
  %v574 = vld [vmem:[%s412 + $0x1ba] sm:$0xff]
  %v575 = vld [vmem:[%s412 + $0x1ca] sm:$0xff]
  %v576 = vld [vmem:[%s412 + $0x1d2] sm:$0xff]
  %v577 = vld [vmem:[%s412 + $0x1e2] sm:$0xff]
  %v578 = vld [vmem:[%s412 + $0x1ea] sm:$0xff]
  %v579 = vld [vmem:[%s412 + $0x1fa] sm:$0xff]
  %v580 = vld [vmem:[%s412 + $0x202] sm:$0xff]
  %v581 = vld [vmem:[%s412 + $0x212] sm:$0xff]
  %v582 = vld [vmem:[%s412 + $0x21a] sm:$0xff]
  %v583 = vld [vmem:[%s412 + $0x22a] sm:$0xff]
  %v584 = vld [vmem:[%s412 + $0x232] sm:$0xff]
  %v585 = vld [vmem:[%s412 + $0x242] sm:$0xff]
  %v586 = vld [vmem:[%s412 + $0x24a] sm:$0xff]
  %v587 = vld [vmem:[%s412 + $0x25a] sm:$0xff]
  %v588 = vld [vmem:[%s412 + $0x262] sm:$0xff]
  %v589 = vld [vmem:[%s412 + $0x272] sm:$0xff]
  %v590 = vld [vmem:[%s412 + $0x27a] sm:$0xff]
  %v591 = vld [vmem:[%s412 + $0x28a] sm:$0xff]
  %v592 = vld [vmem:[%s412 + $0x292] sm:$0xff]
  %v593 = vld [vmem:[%s412 + $0x2a2] sm:$0xff]
  %v594 = vld [vmem:[%s412 + $0x2aa] sm:$0xff]
  %v595 = vld [vmem:[%s412 + $0x2ba] sm:$0xff]
  %v596 = vld [vmem:[%s412 + $0x2c2] sm:$0xff]
  %v597 = vld [vmem:[%s412 + $0x2d2] sm:$0xff]
  %v598 = vld [vmem:[%s412 + $0x2da] sm:$0xff]
  %v599 = vld [vmem:[%s412 + $0x2ea] sm:$0xff]
  %v600 = vld [vmem:[%s412 + $0x2f2] sm:$0xff]
  %v601 = vld [vmem:[%s412 + $0x302] sm:$0xff]
  %v602 = vld [vmem:[%s412 + $0x30a] sm:$0xff]
  %v603 = vld [vmem:[%s412 + $0x31a] sm:$0xff]
  %v604 = vld [vmem:[%s412 + $0x322] sm:$0xff]
  %669 = vrot.lane.b32.xlu0 %v91, 32
  %v670 = vpop.permute.xlu0 %669
  %671 = vrot.lane.b32.xlu0 %v92, 32
  %v672 = vpop.permute.xlu0 %671
  %673 = vrot.lane.b32.xlu0 %v93, 32
  %v674 = vpop.permute.xlu0 %673
  %675 = vrot.lane.b32.xlu0 %v94, 32
  %v676 = vpop.permute.xlu0 %675
  %677 = vrot.lane.b32.xlu0 %v95, 32
  %v678 = vpop.permute.xlu0 %677
  %679 = vrot.lane.b32.xlu0 %v96, 32
  %v680 = vpop.permute.xlu0 %679
  %681 = vrot.lane.b32.xlu0 %v97, 32
  %v682 = vpop.permute.xlu0 %681
  %683 = vrot.lane.b32.xlu0 %v98, 32
  %v684 = vpop.permute.xlu0 %683
  %685 = vrot.lane.b32.xlu0 %v99, 32
  %v686 = vpop.permute.xlu0 %685
  %687 = vrot.lane.b32.xlu0 %v100, 32
  %v688 = vpop.permute.xlu0 %687
  %689 = vrot.lane.b32.xlu0 %v101, 32
  %v690 = vpop.permute.xlu0 %689
  %691 = vrot.lane.b32.xlu0 %v102, 32
  %v692 = vpop.permute.xlu0 %691
  %693 = vrot.lane.b32.xlu0 %v103, 32
  %v694 = vpop.permute.xlu0 %693
  %695 = vrot.lane.b32.xlu0 %v104, 32
  %v696 = vpop.permute.xlu0 %695
  %697 = vrot.lane.b32.xlu0 %v105, 32
  %v698 = vpop.permute.xlu0 %697
  %699 = vrot.lane.b32.xlu0 %v106, 32
  %v700 = vpop.permute.xlu0 %699
  %701 = vrot.lane.b32.xlu0 %v107, 32
  %v702 = vpop.permute.xlu0 %701
  %703 = vrot.lane.b32.xlu0 %v108, 32
  %v704 = vpop.permute.xlu0 %703
  %705 = vrot.lane.b32.xlu0 %v109, 32
  %v706 = vpop.permute.xlu0 %705
  %707 = vrot.lane.b32.xlu0 %v110, 32
  %v708 = vpop.permute.xlu0 %707
  %709 = vrot.lane.b32.xlu0 %v111, 32
  %v710 = vpop.permute.xlu0 %709
  %711 = vrot.lane.b32.xlu0 %v112, 32
  %v712 = vpop.permute.xlu0 %711
  %713 = vrot.lane.b32.xlu0 %v113, 32
  %v714 = vpop.permute.xlu0 %713
  %715 = vrot.lane.b32.xlu0 %v114, 32
  %v716 = vpop.permute.xlu0 %715
  %717 = vrot.lane.b32.xlu0 %v115, 32
  %v718 = vpop.permute.xlu0 %717
  %719 = vrot.lane.b32.xlu0 %v116, 32
  %v720 = vpop.permute.xlu0 %719
  %721 = vrot.lane.b32.xlu0 %v117, 32
  %v722 = vpop.permute.xlu0 %721
  %723 = vrot.lane.b32.xlu0 %v118, 32
  %v724 = vpop.permute.xlu0 %723
  %725 = vrot.lane.b32.xlu0 %v119, 32
  %v726 = vpop.permute.xlu0 %725
  %727 = vrot.lane.b32.xlu0 %v120, 32
  %v728 = vpop.permute.xlu0 %727
  %729 = vrot.lane.b32.xlu0 %v121, 32
  %v730 = vpop.permute.xlu0 %729
  %731 = vrot.lane.b32.xlu0 %v122, 32
  %v732 = vpop.permute.xlu0 %731
  %733 = vrot.lane.b32.xlu0 %v123, 32
  %v734 = vpop.permute.xlu0 %733
  %735 = vrot.lane.b32.xlu0 %v124, 32
  %v736 = vpop.permute.xlu0 %735
  %737 = vrot.lane.b32.xlu0 %v125, 32
  %v738 = vpop.permute.xlu0 %737
  %739 = vrot.lane.b32.xlu0 %v126, 32
  %v740 = vpop.permute.xlu0 %739
  %741 = vrot.lane.b32.xlu0 %v127, 32
  %v742 = vpop.permute.xlu0 %741
  %743 = vrot.lane.b32.xlu0 %v128, 32
  %v744 = vpop.permute.xlu0 %743
  %745 = vrot.lane.b32.xlu0 %v129, 32
  %v746 = vpop.permute.xlu0 %745
  %747 = vrot.lane.b32.xlu0 %v130, 32
  %v748 = vpop.permute.xlu0 %747
  %749 = vrot.lane.b32.xlu0 %v131, 32
  %v750 = vpop.permute.xlu0 %749
  %751 = vrot.lane.b32.xlu0 %v132, 32
  %v752 = vpop.permute.xlu0 %751
  %753 = vrot.lane.b32.xlu0 %v133, 32
  %v754 = vpop.permute.xlu0 %753
  %755 = vrot.lane.b32.xlu0 %v134, 32
  %v756 = vpop.permute.xlu0 %755
  %757 = vrot.lane.b32.xlu0 %v135, 32
  %v758 = vpop.permute.xlu0 %757
  %759 = vrot.lane.b32.xlu0 %v136, 32
  %v760 = vpop.permute.xlu0 %759
  %761 = vrot.lane.b32.xlu0 %v137, 32
  %v762 = vpop.permute.xlu0 %761
  %763 = vrot.lane.b32.xlu0 %v138, 32
  %v764 = vpop.permute.xlu0 %763
  %765 = vrot.lane.b32.xlu0 %v139, 32
  %v766 = vpop.permute.xlu0 %765
  %767 = vrot.lane.b32.xlu0 %v140, 32
  %v768 = vpop.permute.xlu0 %767
  %769 = vrot.lane.b32.xlu0 %v141, 32
  %v770 = vpop.permute.xlu0 %769
  %771 = vrot.lane.b32.xlu0 %v142, 32
  %v772 = vpop.permute.xlu0 %771
  %773 = vrot.lane.b32.xlu0 %v143, 32
  %v774 = vpop.permute.xlu0 %773
  %775 = vrot.lane.b32.xlu0 %v144, 32
  %v776 = vpop.permute.xlu0 %775
  %777 = vrot.lane.b32.xlu0 %v145, 32
  %v778 = vpop.permute.xlu0 %777
  %779 = vrot.lane.b32.xlu0 %v146, 32
  %v780 = vpop.permute.xlu0 %779
  %781 = vrot.lane.b32.xlu0 %v147, 32
  %v782 = vpop.permute.xlu0 %781
  %783 = vrot.lane.b32.xlu0 %v148, 32
  %v784 = vpop.permute.xlu0 %783
  %785 = vrot.lane.b32.xlu0 %v149, 32
  %v786 = vpop.permute.xlu0 %785
  %787 = vrot.lane.b32.xlu0 %v150, 32
  %v788 = vpop.permute.xlu0 %787
  %789 = vrot.lane.b32.xlu0 %v151, 32
  %v790 = vpop.permute.xlu0 %789
  %791 = vrot.lane.b32.xlu0 %v152, 32
  %v792 = vpop.permute.xlu0 %791
  %793 = vrot.lane.b32.xlu0 %v153, 32
  %v794 = vpop.permute.xlu0 %793
  %795 = vrot.lane.b32.xlu0 %v154, 32
  %v796 = vpop.permute.xlu0 %795
  %925 = vrot.lane.b32.xlu0 %v155, 64
  %v926 = vpop.permute.xlu0 %925
  %927 = vrot.lane.b32.xlu0 %v156, 64
  %v928 = vpop.permute.xlu0 %927
  %929 = vrot.lane.b32.xlu0 %v157, 64
  %v930 = vpop.permute.xlu0 %929
  %931 = vrot.lane.b32.xlu0 %v158, 64
  %v932 = vpop.permute.xlu0 %931
  %933 = vrot.lane.b32.xlu0 %v159, 64
  %v934 = vpop.permute.xlu0 %933
  %935 = vrot.lane.b32.xlu0 %v160, 64
  %v936 = vpop.permute.xlu0 %935
  %937 = vrot.lane.b32.xlu0 %v161, 64
  %v938 = vpop.permute.xlu0 %937
  %939 = vrot.lane.b32.xlu0 %v162, 64
  %v940 = vpop.permute.xlu0 %939
  %941 = vrot.lane.b32.xlu0 %v163, 64
  %v942 = vpop.permute.xlu0 %941
  %943 = vrot.lane.b32.xlu0 %v164, 64
  %v944 = vpop.permute.xlu0 %943
  %945 = vrot.lane.b32.xlu0 %v165, 64
  %v946 = vpop.permute.xlu0 %945
  %947 = vrot.lane.b32.xlu0 %v166, 64
  %v948 = vpop.permute.xlu0 %947
  %949 = vrot.lane.b32.xlu0 %v167, 64
  %v950 = vpop.permute.xlu0 %949
  %951 = vrot.lane.b32.xlu0 %v168, 64
  %v952 = vpop.permute.xlu0 %951
  %953 = vrot.lane.b32.xlu0 %v169, 64
  %v954 = vpop.permute.xlu0 %953
  %955 = vrot.lane.b32.xlu0 %v170, 64
  %v956 = vpop.permute.xlu0 %955
  %957 = vrot.lane.b32.xlu0 %v171, 64
  %v958 = vpop.permute.xlu0 %957
  %959 = vrot.lane.b32.xlu0 %v172, 64
  %v960 = vpop.permute.xlu0 %959
  %961 = vrot.lane.b32.xlu0 %v173, 64
  %v962 = vpop.permute.xlu0 %961
  %963 = vrot.lane.b32.xlu0 %v174, 64
  %v964 = vpop.permute.xlu0 %963
  %965 = vrot.lane.b32.xlu0 %v175, 64
  %v966 = vpop.permute.xlu0 %965
  %967 = vrot.lane.b32.xlu0 %v176, 64
  %v968 = vpop.permute.xlu0 %967
  %969 = vrot.lane.b32.xlu0 %v177, 64
  %v970 = vpop.permute.xlu0 %969
  %971 = vrot.lane.b32.xlu0 %v178, 64
  %v972 = vpop.permute.xlu0 %971
  %973 = vrot.lane.b32.xlu0 %v179, 64
  %v974 = vpop.permute.xlu0 %973
  %975 = vrot.lane.b32.xlu0 %v180, 64
  %v976 = vpop.permute.xlu0 %975
  %977 = vrot.lane.b32.xlu0 %v181, 64
  %v978 = vpop.permute.xlu0 %977
  %979 = vrot.lane.b32.xlu0 %v182, 64
  %v980 = vpop.permute.xlu0 %979
  %981 = vrot.lane.b32.xlu0 %v183, 64
  %v982 = vpop.permute.xlu0 %981
  %983 = vrot.lane.b32.xlu0 %v184, 64
  %v984 = vpop.permute.xlu0 %983
  %985 = vrot.lane.b32.xlu0 %v185, 64
  %v986 = vpop.permute.xlu0 %985
  %987 = vrot.lane.b32.xlu0 %v186, 64
  %v988 = vpop.permute.xlu0 %987
  %989 = vrot.lane.b32.xlu0 %v187, 64
  %v990 = vpop.permute.xlu0 %989
  %991 = vrot.lane.b32.xlu0 %v188, 64
  %v992 = vpop.permute.xlu0 %991
  %993 = vrot.lane.b32.xlu0 %v189, 64
  %v994 = vpop.permute.xlu0 %993
  %995 = vrot.lane.b32.xlu0 %v190, 64
  %v996 = vpop.permute.xlu0 %995
  %997 = vrot.lane.b32.xlu0 %v191, 64
  %v998 = vpop.permute.xlu0 %997
  %999 = vrot.lane.b32.xlu0 %v192, 64
  %v1000 = vpop.permute.xlu0 %999
  %1001 = vrot.lane.b32.xlu0 %v193, 64
  %v1002 = vpop.permute.xlu0 %1001
  %1003 = vrot.lane.b32.xlu0 %v194, 64
  %v1004 = vpop.permute.xlu0 %1003
  %1005 = vrot.lane.b32.xlu0 %v195, 64
  %v1006 = vpop.permute.xlu0 %1005
  %1007 = vrot.lane.b32.xlu0 %v196, 64
  %v1008 = vpop.permute.xlu0 %1007
  %1009 = vrot.lane.b32.xlu0 %v197, 64
  %v1010 = vpop.permute.xlu0 %1009
  %1011 = vrot.lane.b32.xlu0 %v198, 64
  %v1012 = vpop.permute.xlu0 %1011
  %1013 = vrot.lane.b32.xlu0 %v199, 64
  %v1014 = vpop.permute.xlu0 %1013
  %1015 = vrot.lane.b32.xlu0 %v200, 64
  %v1016 = vpop.permute.xlu0 %1015
  %1017 = vrot.lane.b32.xlu0 %v201, 64
  %v1018 = vpop.permute.xlu0 %1017
  %1019 = vrot.lane.b32.xlu0 %v202, 64
  %v1020 = vpop.permute.xlu0 %1019
  %1021 = vrot.lane.b32.xlu0 %v203, 64
  %v1022 = vpop.permute.xlu0 %1021
  %1023 = vrot.lane.b32.xlu0 %v204, 64
  %v1024 = vpop.permute.xlu0 %1023
  %1025 = vrot.lane.b32.xlu0 %v205, 64
  %v1026 = vpop.permute.xlu0 %1025
  %1027 = vrot.lane.b32.xlu0 %v206, 64
  %v1028 = vpop.permute.xlu0 %1027
  %1029 = vrot.lane.b32.xlu0 %v207, 64
  %v1030 = vpop.permute.xlu0 %1029
  %1031 = vrot.lane.b32.xlu0 %v208, 64
  %v1032 = vpop.permute.xlu0 %1031
  %1033 = vrot.lane.b32.xlu0 %v209, 64
  %v1034 = vpop.permute.xlu0 %1033
  %1035 = vrot.lane.b32.xlu0 %v210, 64
  %v1036 = vpop.permute.xlu0 %1035
  %1037 = vrot.lane.b32.xlu0 %v211, 64
  %v1038 = vpop.permute.xlu0 %1037
  %1039 = vrot.lane.b32.xlu0 %v212, 64
  %v1040 = vpop.permute.xlu0 %1039
  %1041 = vrot.lane.b32.xlu0 %v213, 64
  %v1042 = vpop.permute.xlu0 %1041
  %1043 = vrot.lane.b32.xlu0 %v214, 64
  %v1044 = vpop.permute.xlu0 %1043
  %1045 = vrot.lane.b32.xlu0 %v215, 64
  %v1046 = vpop.permute.xlu0 %1045
  %1047 = vrot.lane.b32.xlu0 %v216, 64
  %v1048 = vpop.permute.xlu0 %1047
  %1049 = vrot.lane.b32.xlu0 %v217, 64
  %v1050 = vpop.permute.xlu0 %1049
  %1051 = vrot.lane.b32.xlu0 %v218, 64
  %v1052 = vpop.permute.xlu0 %1051
  %1181 = vrot.lane.b32.xlu0 %v220, 96
  %v1182 = vpop.permute.xlu0 %1181
  %1183 = vrot.lane.b32.xlu0 %v221, 96
  %v1184 = vpop.permute.xlu0 %1183
  %1185 = vrot.lane.b32.xlu0 %v222, 96
  %v1186 = vpop.permute.xlu0 %1185
  %1187 = vrot.lane.b32.xlu0 %v223, 96
  %v1188 = vpop.permute.xlu0 %1187
  %1189 = vrot.lane.b32.xlu0 %v224, 96
  %v1190 = vpop.permute.xlu0 %1189
  %1191 = vrot.lane.b32.xlu0 %v225, 96
  %v1192 = vpop.permute.xlu0 %1191
  %1193 = vrot.lane.b32.xlu0 %v226, 96
  %v1194 = vpop.permute.xlu0 %1193
  %1195 = vrot.lane.b32.xlu0 %v227, 96
  %v1196 = vpop.permute.xlu0 %1195
  %1197 = vrot.lane.b32.xlu0 %v228, 96
  %v1198 = vpop.permute.xlu0 %1197
  %1199 = vrot.lane.b32.xlu0 %v229, 96
  %v1200 = vpop.permute.xlu0 %1199
  %1201 = vrot.lane.b32.xlu0 %v230, 96
  %v1202 = vpop.permute.xlu0 %1201
  %1203 = vrot.lane.b32.xlu0 %v231, 96
  %v1204 = vpop.permute.xlu0 %1203
  %1205 = vrot.lane.b32.xlu0 %v232, 96
  %v1206 = vpop.permute.xlu0 %1205
  %1207 = vrot.lane.b32.xlu0 %v233, 96
  %v1208 = vpop.permute.xlu0 %1207
  %1209 = vrot.lane.b32.xlu0 %v234, 96
  %v1210 = vpop.permute.xlu0 %1209
  %1211 = vrot.lane.b32.xlu0 %v235, 96
  %v1212 = vpop.permute.xlu0 %1211
  %1213 = vrot.lane.b32.xlu0 %v236, 96
  %v1214 = vpop.permute.xlu0 %1213
  %1215 = vrot.lane.b32.xlu0 %v237, 96
  %v1216 = vpop.permute.xlu0 %1215
  %1217 = vrot.lane.b32.xlu0 %v238, 96
  %v1218 = vpop.permute.xlu0 %1217
  %1219 = vrot.lane.b32.xlu0 %v239, 96
  %v1220 = vpop.permute.xlu0 %1219
  %1221 = vrot.lane.b32.xlu0 %v240, 96
  %v1222 = vpop.permute.xlu0 %1221
  %1223 = vrot.lane.b32.xlu0 %v241, 96
  %v1224 = vpop.permute.xlu0 %1223
  %1225 = vrot.lane.b32.xlu0 %v242, 96
  %v1226 = vpop.permute.xlu0 %1225
  %1227 = vrot.lane.b32.xlu0 %v243, 96
  %v1228 = vpop.permute.xlu0 %1227
  %1229 = vrot.lane.b32.xlu0 %v244, 96
  %v1230 = vpop.permute.xlu0 %1229
  %1231 = vrot.lane.b32.xlu0 %v245, 96
  %v1232 = vpop.permute.xlu0 %1231
  %1233 = vrot.lane.b32.xlu0 %v246, 96
  %v1234 = vpop.permute.xlu0 %1233
  %1235 = vrot.lane.b32.xlu0 %v247, 96
  %v1236 = vpop.permute.xlu0 %1235
  %1237 = vrot.lane.b32.xlu0 %v248, 96
  %v1238 = vpop.permute.xlu0 %1237
  %1239 = vrot.lane.b32.xlu0 %v249, 96
  %v1240 = vpop.permute.xlu0 %1239
  %1241 = vrot.lane.b32.xlu0 %v250, 96
  %v1242 = vpop.permute.xlu0 %1241
  %1243 = vrot.lane.b32.xlu0 %v251, 96
  %v1244 = vpop.permute.xlu0 %1243
  %1245 = vrot.lane.b32.xlu0 %v252, 96
  %v1246 = vpop.permute.xlu0 %1245
  %1247 = vrot.lane.b32.xlu0 %v253, 96
  %v1248 = vpop.permute.xlu0 %1247
  %1249 = vrot.lane.b32.xlu0 %v254, 96
  %v1250 = vpop.permute.xlu0 %1249
  %1251 = vrot.lane.b32.xlu0 %v255, 96
  %v1252 = vpop.permute.xlu0 %1251
  %1253 = vrot.lane.b32.xlu0 %v256, 96
  %v1254 = vpop.permute.xlu0 %1253
  %1255 = vrot.lane.b32.xlu0 %v257, 96
  %v1256 = vpop.permute.xlu0 %1255
  %1257 = vrot.lane.b32.xlu0 %v258, 96
  %v1258 = vpop.permute.xlu0 %1257
  %1259 = vrot.lane.b32.xlu0 %v259, 96
  %v1260 = vpop.permute.xlu0 %1259
  %1261 = vrot.lane.b32.xlu0 %v260, 96
  %v1262 = vpop.permute.xlu0 %1261
  %1263 = vrot.lane.b32.xlu0 %v261, 96
  %v1264 = vpop.permute.xlu0 %1263
  %1265 = vrot.lane.b32.xlu0 %v262, 96
  %v1266 = vpop.permute.xlu0 %1265
  %1267 = vrot.lane.b32.xlu0 %v263, 96
  %v1268 = vpop.permute.xlu0 %1267
  %1269 = vrot.lane.b32.xlu0 %v264, 96
  %v1270 = vpop.permute.xlu0 %1269
  %1271 = vrot.lane.b32.xlu0 %v265, 96
  %v1272 = vpop.permute.xlu0 %1271
  %1273 = vrot.lane.b32.xlu0 %v266, 96
  %v1274 = vpop.permute.xlu0 %1273
  %1275 = vrot.lane.b32.xlu0 %v267, 96
  %v1276 = vpop.permute.xlu0 %1275
  %1277 = vrot.lane.b32.xlu0 %v268, 96
  %v1278 = vpop.permute.xlu0 %1277
  %1279 = vrot.lane.b32.xlu0 %v269, 96
  %v1280 = vpop.permute.xlu0 %1279
  %1281 = vrot.lane.b32.xlu0 %v270, 96
  %v1282 = vpop.permute.xlu0 %1281
  %1283 = vrot.lane.b32.xlu0 %v271, 96
  %v1284 = vpop.permute.xlu0 %1283
  %1285 = vrot.lane.b32.xlu0 %v272, 96
  %v1286 = vpop.permute.xlu0 %1285
  %1287 = vrot.lane.b32.xlu0 %v273, 96
  %v1288 = vpop.permute.xlu0 %1287
  %1289 = vrot.lane.b32.xlu0 %v274, 96
  %v1290 = vpop.permute.xlu0 %1289
  %1291 = vrot.lane.b32.xlu0 %v275, 96
  %v1292 = vpop.permute.xlu0 %1291
  %1293 = vrot.lane.b32.xlu0 %v276, 96
  %v1294 = vpop.permute.xlu0 %1293
  %1295 = vrot.lane.b32.xlu0 %v277, 96
  %v1296 = vpop.permute.xlu0 %1295
  %1297 = vrot.lane.b32.xlu0 %v278, 96
  %v1298 = vpop.permute.xlu0 %1297
  %1299 = vrot.lane.b32.xlu0 %v279, 96
  %v1300 = vpop.permute.xlu0 %1299
  %1301 = vrot.lane.b32.xlu0 %v280, 96
  %v1302 = vpop.permute.xlu0 %1301
  %1303 = vrot.lane.b32.xlu0 %v281, 96
  %v1304 = vpop.permute.xlu0 %1303
  %1305 = vrot.lane.b32.xlu0 %v282, 96
  %v1306 = vpop.permute.xlu0 %1305
  %1307 = vrot.lane.b32.xlu0 %v283, 96
  %v1308 = vpop.permute.xlu0 %1307
  %1437 = vrot.lane.b32.xlu0 %v348, 32
  %v1438 = vpop.permute.xlu0 %1437
  %1439 = vrot.lane.b32.xlu0 %v349, 32
  %v1440 = vpop.permute.xlu0 %1439
  %1441 = vrot.lane.b32.xlu0 %v350, 32
  %v1442 = vpop.permute.xlu0 %1441
  %1443 = vrot.lane.b32.xlu0 %v351, 32
  %v1444 = vpop.permute.xlu0 %1443
  %1445 = vrot.lane.b32.xlu0 %v352, 32
  %v1446 = vpop.permute.xlu0 %1445
  %1447 = vrot.lane.b32.xlu0 %v353, 32
  %v1448 = vpop.permute.xlu0 %1447
  %1449 = vrot.lane.b32.xlu0 %v354, 32
  %v1450 = vpop.permute.xlu0 %1449
  %1451 = vrot.lane.b32.xlu0 %v355, 32
  %v1452 = vpop.permute.xlu0 %1451
  %1453 = vrot.lane.b32.xlu0 %v356, 32
  %v1454 = vpop.permute.xlu0 %1453
  %1455 = vrot.lane.b32.xlu0 %v357, 32
  %v1456 = vpop.permute.xlu0 %1455
  %1457 = vrot.lane.b32.xlu0 %v358, 32
  %v1458 = vpop.permute.xlu0 %1457
  %1459 = vrot.lane.b32.xlu0 %v359, 32
  %v1460 = vpop.permute.xlu0 %1459
  %1461 = vrot.lane.b32.xlu0 %v360, 32
  %v1462 = vpop.permute.xlu0 %1461
  %1463 = vrot.lane.b32.xlu0 %v361, 32
  %v1464 = vpop.permute.xlu0 %1463
  %1465 = vrot.lane.b32.xlu0 %v362, 32
  %v1466 = vpop.permute.xlu0 %1465
  %1467 = vrot.lane.b32.xlu0 %v363, 32
  %v1468 = vpop.permute.xlu0 %1467
  %1469 = vrot.lane.b32.xlu0 %v364, 32
  %v1470 = vpop.permute.xlu0 %1469
  %1471 = vrot.lane.b32.xlu0 %v365, 32
  %v1472 = vpop.permute.xlu0 %1471
  %1473 = vrot.lane.b32.xlu0 %v366, 32
  %v1474 = vpop.permute.xlu0 %1473
  %1475 = vrot.lane.b32.xlu0 %v367, 32
  %v1476 = vpop.permute.xlu0 %1475
  %1477 = vrot.lane.b32.xlu0 %v368, 32
  %v1478 = vpop.permute.xlu0 %1477
  %1479 = vrot.lane.b32.xlu0 %v369, 32
  %v1480 = vpop.permute.xlu0 %1479
  %1481 = vrot.lane.b32.xlu0 %v370, 32
  %v1482 = vpop.permute.xlu0 %1481
  %1483 = vrot.lane.b32.xlu0 %v371, 32
  %v1484 = vpop.permute.xlu0 %1483
  %1485 = vrot.lane.b32.xlu0 %v372, 32
  %v1486 = vpop.permute.xlu0 %1485
  %1487 = vrot.lane.b32.xlu0 %v373, 32
  %v1488 = vpop.permute.xlu0 %1487
  %1489 = vrot.lane.b32.xlu0 %v374, 32
  %v1490 = vpop.permute.xlu0 %1489
  %1491 = vrot.lane.b32.xlu0 %v375, 32
  %v1492 = vpop.permute.xlu0 %1491
  %1493 = vrot.lane.b32.xlu0 %v376, 32
  %v1494 = vpop.permute.xlu0 %1493
  %1495 = vrot.lane.b32.xlu0 %v377, 32
  %v1496 = vpop.permute.xlu0 %1495
  %1497 = vrot.lane.b32.xlu0 %v378, 32
  %v1498 = vpop.permute.xlu0 %1497
  %1499 = vrot.lane.b32.xlu0 %v379, 32
  %v1500 = vpop.permute.xlu0 %1499
  %1501 = vrot.lane.b32.xlu0 %v380, 32
  %v1502 = vpop.permute.xlu0 %1501
  %1503 = vrot.lane.b32.xlu0 %v381, 32
  %v1504 = vpop.permute.xlu0 %1503
  %1505 = vrot.lane.b32.xlu0 %v382, 32
  %v1506 = vpop.permute.xlu0 %1505
  %1507 = vrot.lane.b32.xlu0 %v383, 32
  %v1508 = vpop.permute.xlu0 %1507
  %1509 = vrot.lane.b32.xlu0 %v384, 32
  %v1510 = vpop.permute.xlu0 %1509
  %1511 = vrot.lane.b32.xlu0 %v385, 32
  %v1512 = vpop.permute.xlu0 %1511
  %1513 = vrot.lane.b32.xlu0 %v386, 32
  %v1514 = vpop.permute.xlu0 %1513
  %1515 = vrot.lane.b32.xlu0 %v387, 32
  %v1516 = vpop.permute.xlu0 %1515
  %1517 = vrot.lane.b32.xlu0 %v388, 32
  %v1518 = vpop.permute.xlu0 %1517
  %1519 = vrot.lane.b32.xlu0 %v389, 32
  %v1520 = vpop.permute.xlu0 %1519
  %1521 = vrot.lane.b32.xlu0 %v390, 32
  %v1522 = vpop.permute.xlu0 %1521
  %1523 = vrot.lane.b32.xlu0 %v391, 32
  %v1524 = vpop.permute.xlu0 %1523
  %1525 = vrot.lane.b32.xlu0 %v392, 32
  %v1526 = vpop.permute.xlu0 %1525
  %1527 = vrot.lane.b32.xlu0 %v393, 32
  %v1528 = vpop.permute.xlu0 %1527
  %1529 = vrot.lane.b32.xlu0 %v394, 32
  %v1530 = vpop.permute.xlu0 %1529
  %1531 = vrot.lane.b32.xlu0 %v395, 32
  %v1532 = vpop.permute.xlu0 %1531
  %1533 = vrot.lane.b32.xlu0 %v396, 32
  %v1534 = vpop.permute.xlu0 %1533
  %1535 = vrot.lane.b32.xlu0 %v397, 32
  %v1536 = vpop.permute.xlu0 %1535
  %1537 = vrot.lane.b32.xlu0 %v398, 32
  %v1538 = vpop.permute.xlu0 %1537
  %1539 = vrot.lane.b32.xlu0 %v399, 32
  %v1540 = vpop.permute.xlu0 %1539
  %1541 = vrot.lane.b32.xlu0 %v400, 32
  %v1542 = vpop.permute.xlu0 %1541
  %1543 = vrot.lane.b32.xlu0 %v401, 32
  %v1544 = vpop.permute.xlu0 %1543
  %1545 = vrot.lane.b32.xlu0 %v402, 32
  %v1546 = vpop.permute.xlu0 %1545
  %1547 = vrot.lane.b32.xlu0 %v403, 32
  %v1548 = vpop.permute.xlu0 %1547
  %1549 = vrot.lane.b32.xlu0 %v404, 32
  %v1550 = vpop.permute.xlu0 %1549
  %1551 = vrot.lane.b32.xlu0 %v405, 32
  %v1552 = vpop.permute.xlu0 %1551
  %1553 = vrot.lane.b32.xlu0 %v406, 32
  %v1554 = vpop.permute.xlu0 %1553
  %1555 = vrot.lane.b32.xlu0 %v407, 32
  %v1556 = vpop.permute.xlu0 %1555
  %1557 = vrot.lane.b32.xlu0 %v408, 32
  %v1558 = vpop.permute.xlu0 %1557
  %1559 = vrot.lane.b32.xlu0 %v409, 32
  %v1560 = vpop.permute.xlu0 %1559
  %1561 = vrot.lane.b32.xlu0 %v410, 32
  %v1562 = vpop.permute.xlu0 %1561
  %1563 = vrot.lane.b32.xlu0 %v411, 32
  %v1564 = vpop.permute.xlu0 %1563
  %1693 = vrot.lane.b32.xlu0 %v413, 64
  %v1694 = vpop.permute.xlu0 %1693
  %1695 = vrot.lane.b32.xlu0 %v414, 64
  %v1696 = vpop.permute.xlu0 %1695
  %1697 = vrot.lane.b32.xlu0 %v415, 64
  %v1698 = vpop.permute.xlu0 %1697
  %1699 = vrot.lane.b32.xlu0 %v416, 64
  %v1700 = vpop.permute.xlu0 %1699
  %1701 = vrot.lane.b32.xlu0 %v417, 64
  %v1702 = vpop.permute.xlu0 %1701
  %1703 = vrot.lane.b32.xlu0 %v418, 64
  %v1704 = vpop.permute.xlu0 %1703
  %1705 = vrot.lane.b32.xlu0 %v419, 64
  %v1706 = vpop.permute.xlu0 %1705
  %1707 = vrot.lane.b32.xlu0 %v420, 64
  %v1708 = vpop.permute.xlu0 %1707
  %1709 = vrot.lane.b32.xlu0 %v421, 64
  %v1710 = vpop.permute.xlu0 %1709
  %1711 = vrot.lane.b32.xlu0 %v422, 64
  %v1712 = vpop.permute.xlu0 %1711
  %1713 = vrot.lane.b32.xlu0 %v423, 64
  %v1714 = vpop.permute.xlu0 %1713
  %1715 = vrot.lane.b32.xlu0 %v424, 64
  %v1716 = vpop.permute.xlu0 %1715
  %1717 = vrot.lane.b32.xlu0 %v425, 64
  %v1718 = vpop.permute.xlu0 %1717
  %1719 = vrot.lane.b32.xlu0 %v426, 64
  %v1720 = vpop.permute.xlu0 %1719
  %1721 = vrot.lane.b32.xlu0 %v427, 64
  %v1722 = vpop.permute.xlu0 %1721
  %1723 = vrot.lane.b32.xlu0 %v428, 64
  %v1724 = vpop.permute.xlu0 %1723
  %1725 = vrot.lane.b32.xlu0 %v429, 64
  %v1726 = vpop.permute.xlu0 %1725
  %1727 = vrot.lane.b32.xlu0 %v430, 64
  %v1728 = vpop.permute.xlu0 %1727
  %1729 = vrot.lane.b32.xlu0 %v431, 64
  %v1730 = vpop.permute.xlu0 %1729
  %1731 = vrot.lane.b32.xlu0 %v432, 64
  %v1732 = vpop.permute.xlu0 %1731
  %1733 = vrot.lane.b32.xlu0 %v433, 64
  %v1734 = vpop.permute.xlu0 %1733
  %1735 = vrot.lane.b32.xlu0 %v434, 64
  %v1736 = vpop.permute.xlu0 %1735
  %1737 = vrot.lane.b32.xlu0 %v435, 64
  %v1738 = vpop.permute.xlu0 %1737
  %1739 = vrot.lane.b32.xlu0 %v436, 64
  %v1740 = vpop.permute.xlu0 %1739
  %1741 = vrot.lane.b32.xlu0 %v437, 64
  %v1742 = vpop.permute.xlu0 %1741
  %1743 = vrot.lane.b32.xlu0 %v438, 64
  %v1744 = vpop.permute.xlu0 %1743
  %1745 = vrot.lane.b32.xlu0 %v439, 64
  %v1746 = vpop.permute.xlu0 %1745
  %1747 = vrot.lane.b32.xlu0 %v440, 64
  %v1748 = vpop.permute.xlu0 %1747
  %1749 = vrot.lane.b32.xlu0 %v441, 64
  %v1750 = vpop.permute.xlu0 %1749
  %1751 = vrot.lane.b32.xlu0 %v442, 64
  %v1752 = vpop.permute.xlu0 %1751
  %1753 = vrot.lane.b32.xlu0 %v443, 64
  %v1754 = vpop.permute.xlu0 %1753
  %1755 = vrot.lane.b32.xlu0 %v444, 64
  %v1756 = vpop.permute.xlu0 %1755
  %1757 = vrot.lane.b32.xlu0 %v445, 64
  %v1758 = vpop.permute.xlu0 %1757
  %1759 = vrot.lane.b32.xlu0 %v446, 64
  %v1760 = vpop.permute.xlu0 %1759
  %1761 = vrot.lane.b32.xlu0 %v447, 64
  %v1762 = vpop.permute.xlu0 %1761
  %1763 = vrot.lane.b32.xlu0 %v448, 64
  %v1764 = vpop.permute.xlu0 %1763
  %1765 = vrot.lane.b32.xlu0 %v449, 64
  %v1766 = vpop.permute.xlu0 %1765
  %1767 = vrot.lane.b32.xlu0 %v450, 64
  %v1768 = vpop.permute.xlu0 %1767
  %1769 = vrot.lane.b32.xlu0 %v451, 64
  %v1770 = vpop.permute.xlu0 %1769
  %1771 = vrot.lane.b32.xlu0 %v452, 64
  %v1772 = vpop.permute.xlu0 %1771
  %1773 = vrot.lane.b32.xlu0 %v453, 64
  %v1774 = vpop.permute.xlu0 %1773
  %1775 = vrot.lane.b32.xlu0 %v454, 64
  %v1776 = vpop.permute.xlu0 %1775
  %1777 = vrot.lane.b32.xlu0 %v455, 64
  %v1778 = vpop.permute.xlu0 %1777
  %1779 = vrot.lane.b32.xlu0 %v456, 64
  %v1780 = vpop.permute.xlu0 %1779
  %1781 = vrot.lane.b32.xlu0 %v457, 64
  %v1782 = vpop.permute.xlu0 %1781
  %1783 = vrot.lane.b32.xlu0 %v458, 64
  %v1784 = vpop.permute.xlu0 %1783
  %1785 = vrot.lane.b32.xlu0 %v459, 64
  %v1786 = vpop.permute.xlu0 %1785
  %1787 = vrot.lane.b32.xlu0 %v460, 64
  %v1788 = vpop.permute.xlu0 %1787
  %1789 = vrot.lane.b32.xlu0 %v461, 64
  %v1790 = vpop.permute.xlu0 %1789
  %1791 = vrot.lane.b32.xlu0 %v462, 64
  %v1792 = vpop.permute.xlu0 %1791
  %1793 = vrot.lane.b32.xlu0 %v463, 64
  %v1794 = vpop.permute.xlu0 %1793
  %1795 = vrot.lane.b32.xlu0 %v464, 64
  %v1796 = vpop.permute.xlu0 %1795
  %1797 = vrot.lane.b32.xlu0 %v465, 64
  %v1798 = vpop.permute.xlu0 %1797
  %1799 = vrot.lane.b32.xlu0 %v466, 64
  %v1800 = vpop.permute.xlu0 %1799
  %1801 = vrot.lane.b32.xlu0 %v467, 64
  %v1802 = vpop.permute.xlu0 %1801
  %1803 = vrot.lane.b32.xlu0 %v468, 64
  %v1804 = vpop.permute.xlu0 %1803
  %1805 = vrot.lane.b32.xlu0 %v469, 64
  %v1806 = vpop.permute.xlu0 %1805
  %1807 = vrot.lane.b32.xlu0 %v470, 64
  %v1808 = vpop.permute.xlu0 %1807
  %1809 = vrot.lane.b32.xlu0 %v471, 64
  %v1810 = vpop.permute.xlu0 %1809
  %1811 = vrot.lane.b32.xlu0 %v472, 64
  %v1812 = vpop.permute.xlu0 %1811
  %1813 = vrot.lane.b32.xlu0 %v473, 64
  %v1814 = vpop.permute.xlu0 %1813
  %1815 = vrot.lane.b32.xlu0 %v474, 64
  %v1816 = vpop.permute.xlu0 %1815
  %1817 = vrot.lane.b32.xlu0 %v475, 64
  %v1818 = vpop.permute.xlu0 %1817
  %1819 = vrot.lane.b32.xlu0 %v476, 64
  %v1820 = vpop.permute.xlu0 %1819
  %1949 = vrot.lane.b32.xlu0 %v477, 96
  %v1950 = vpop.permute.xlu0 %1949
  %1951 = vrot.lane.b32.xlu0 %v478, 96
  %v1952 = vpop.permute.xlu0 %1951
  %1953 = vrot.lane.b32.xlu0 %v479, 96
  %v1954 = vpop.permute.xlu0 %1953
  %1955 = vrot.lane.b32.xlu0 %v480, 96
  %v1956 = vpop.permute.xlu0 %1955
  %1957 = vrot.lane.b32.xlu0 %v481, 96
  %v1958 = vpop.permute.xlu0 %1957
  %1959 = vrot.lane.b32.xlu0 %v482, 96
  %v1960 = vpop.permute.xlu0 %1959
  %1961 = vrot.lane.b32.xlu0 %v483, 96
  %v1962 = vpop.permute.xlu0 %1961
  %1963 = vrot.lane.b32.xlu0 %v484, 96
  %v1964 = vpop.permute.xlu0 %1963
  %1965 = vrot.lane.b32.xlu0 %v485, 96
  %v1966 = vpop.permute.xlu0 %1965
  %1967 = vrot.lane.b32.xlu0 %v486, 96
  %v1968 = vpop.permute.xlu0 %1967
  %1969 = vrot.lane.b32.xlu0 %v487, 96
  %v1970 = vpop.permute.xlu0 %1969
  %1971 = vrot.lane.b32.xlu0 %v488, 96
  %v1972 = vpop.permute.xlu0 %1971
  %1973 = vrot.lane.b32.xlu0 %v489, 96
  %v1974 = vpop.permute.xlu0 %1973
  %1975 = vrot.lane.b32.xlu0 %v490, 96
  %v1976 = vpop.permute.xlu0 %1975
  %1977 = vrot.lane.b32.xlu0 %v491, 96
  %v1978 = vpop.permute.xlu0 %1977
  %1979 = vrot.lane.b32.xlu0 %v492, 96
  %v1980 = vpop.permute.xlu0 %1979
  %1981 = vrot.lane.b32.xlu0 %v493, 96
  %v1982 = vpop.permute.xlu0 %1981
  %1983 = vrot.lane.b32.xlu0 %v494, 96
  %v1984 = vpop.permute.xlu0 %1983
  %1985 = vrot.lane.b32.xlu0 %v495, 96
  %v1986 = vpop.permute.xlu0 %1985
  %1987 = vrot.lane.b32.xlu0 %v496, 96
  %v1988 = vpop.permute.xlu0 %1987
  %1989 = vrot.lane.b32.xlu0 %v497, 96
  %v1990 = vpop.permute.xlu0 %1989
  %1991 = vrot.lane.b32.xlu0 %v498, 96
  %v1992 = vpop.permute.xlu0 %1991
  %1993 = vrot.lane.b32.xlu0 %v499, 96
  %v1994 = vpop.permute.xlu0 %1993
  %1995 = vrot.lane.b32.xlu0 %v500, 96
  %v1996 = vpop.permute.xlu0 %1995
  %1997 = vrot.lane.b32.xlu0 %v501, 96
  %v1998 = vpop.permute.xlu0 %1997
  %1999 = vrot.lane.b32.xlu0 %v502, 96
  %v2000 = vpop.permute.xlu0 %1999
  %2001 = vrot.lane.b32.xlu0 %v503, 96
  %v2002 = vpop.permute.xlu0 %2001
  %2003 = vrot.lane.b32.xlu0 %v504, 96
  %v2004 = vpop.permute.xlu0 %2003
  %2005 = vrot.lane.b32.xlu0 %v505, 96
  %v2006 = vpop.permute.xlu0 %2005
  %2007 = vrot.lane.b32.xlu0 %v506, 96
  %v2008 = vpop.permute.xlu0 %2007
  %2009 = vrot.lane.b32.xlu0 %v507, 96
  %v2010 = vpop.permute.xlu0 %2009
  %2011 = vrot.lane.b32.xlu0 %v508, 96
  %v2012 = vpop.permute.xlu0 %2011
  %2013 = vrot.lane.b32.xlu0 %v509, 96
  %v2014 = vpop.permute.xlu0 %2013
  %2015 = vrot.lane.b32.xlu0 %v510, 96
  %v2016 = vpop.permute.xlu0 %2015
  %2017 = vrot.lane.b32.xlu0 %v511, 96
  %v2018 = vpop.permute.xlu0 %2017
  %2019 = vrot.lane.b32.xlu0 %v512, 96
  %v2020 = vpop.permute.xlu0 %2019
  %2021 = vrot.lane.b32.xlu0 %v513, 96
  %v2022 = vpop.permute.xlu0 %2021
  %2023 = vrot.lane.b32.xlu0 %v514, 96
  %v2024 = vpop.permute.xlu0 %2023
  %2025 = vrot.lane.b32.xlu0 %v515, 96
  %v2026 = vpop.permute.xlu0 %2025
  %2027 = vrot.lane.b32.xlu0 %v516, 96
  %v2028 = vpop.permute.xlu0 %2027
  %2029 = vrot.lane.b32.xlu0 %v517, 96
  %v2030 = vpop.permute.xlu0 %2029
  %2031 = vrot.lane.b32.xlu0 %v518, 96
  %v2032 = vpop.permute.xlu0 %2031
  %2033 = vrot.lane.b32.xlu0 %v519, 96
  %v2034 = vpop.permute.xlu0 %2033
  %2035 = vrot.lane.b32.xlu0 %v520, 96
  %v2036 = vpop.permute.xlu0 %2035
  %2037 = vrot.lane.b32.xlu0 %v521, 96
  %v2038 = vpop.permute.xlu0 %2037
  %2039 = vrot.lane.b32.xlu0 %v522, 96
  %v2040 = vpop.permute.xlu0 %2039
  %2041 = vrot.lane.b32.xlu0 %v523, 96
  %v2042 = vpop.permute.xlu0 %2041
  %2043 = vrot.lane.b32.xlu0 %v524, 96
  %v2044 = vpop.permute.xlu0 %2043
  %2045 = vrot.lane.b32.xlu0 %v525, 96
  %v2046 = vpop.permute.xlu0 %2045
  %2047 = vrot.lane.b32.xlu0 %v526, 96
  %v2048 = vpop.permute.xlu0 %2047
  %2049 = vrot.lane.b32.xlu0 %v527, 96
  %v2050 = vpop.permute.xlu0 %2049
  %2051 = vrot.lane.b32.xlu0 %v528, 96
  %v2052 = vpop.permute.xlu0 %2051
  %2053 = vrot.lane.b32.xlu0 %v529, 96
  %v2054 = vpop.permute.xlu0 %2053
  %2055 = vrot.lane.b32.xlu0 %v530, 96
  %v2056 = vpop.permute.xlu0 %2055
  %2057 = vrot.lane.b32.xlu0 %v531, 96
  %v2058 = vpop.permute.xlu0 %2057
  %2059 = vrot.lane.b32.xlu0 %v532, 96
  %v2060 = vpop.permute.xlu0 %2059
  %2061 = vrot.lane.b32.xlu0 %v533, 96
  %v2062 = vpop.permute.xlu0 %2061
  %2063 = vrot.lane.b32.xlu0 %v534, 96
  %v2064 = vpop.permute.xlu0 %2063
  %2065 = vrot.lane.b32.xlu0 %v535, 96
  %v2066 = vpop.permute.xlu0 %2065
  %2067 = vrot.lane.b32.xlu0 %v536, 96
  %v2068 = vpop.permute.xlu0 %2067
  %2069 = vrot.lane.b32.xlu0 %v537, 96
  %v2070 = vpop.permute.xlu0 %2069
  %2071 = vrot.lane.b32.xlu0 %v538, 96
  %v2072 = vpop.permute.xlu0 %2071
  %2073 = vrot.lane.b32.xlu0 %v539, 96
  %v2074 = vpop.permute.xlu0 %2073
  %2075 = vrot.lane.b32.xlu0 %v540, 96
  %v2076 = vpop.permute.xlu0 %2075
  %vm2141 = vcmask 261120
  %v2142 = vsel %vm2141, %v27, %v670
  %v2143 = vsel %vm2141, %v28, %v672
  %v2144 = vsel %vm2141, %v29, %v674
  %v2145 = vsel %vm2141, %v30, %v676
  %v2146 = vsel %vm2141, %v31, %v678
  %v2147 = vsel %vm2141, %v32, %v680
  %v2148 = vsel %vm2141, %v33, %v682
  %v2149 = vsel %vm2141, %v34, %v684
  %v2150 = vsel %vm2141, %v35, %v686
  %v2151 = vsel %vm2141, %v36, %v688
  %v2152 = vsel %vm2141, %v37, %v690
  %v2153 = vsel %vm2141, %v38, %v692
  %v2154 = vsel %vm2141, %v39, %v694
  %v2155 = vsel %vm2141, %v40, %v696
  %v2156 = vsel %vm2141, %v41, %v698
  %v2157 = vsel %vm2141, %v42, %v700
  %v2158 = vsel %vm2141, %v43, %v702
  %v2159 = vsel %vm2141, %v44, %v704
  %v2160 = vsel %vm2141, %v45, %v706
  %v2161 = vsel %vm2141, %v46, %v708
  %v2162 = vsel %vm2141, %v47, %v710
  %v2163 = vsel %vm2141, %v48, %v712
  %v2164 = vsel %vm2141, %v49, %v714
  %v2165 = vsel %vm2141, %v50, %v716
  %v2166 = vsel %vm2141, %v51, %v718
  %v2167 = vsel %vm2141, %v52, %v720
  %v2168 = vsel %vm2141, %v53, %v722
  %v2169 = vsel %vm2141, %v54, %v724
  %v2170 = vsel %vm2141, %v55, %v726
  %v2171 = vsel %vm2141, %v56, %v728
  %v2172 = vsel %vm2141, %v57, %v730
  %v2173 = vsel %vm2141, %v58, %v732
  %v2174 = vsel %vm2141, %v59, %v734
  %v2175 = vsel %vm2141, %v60, %v736
  %v2176 = vsel %vm2141, %v61, %v738
  %v2177 = vsel %vm2141, %v62, %v740
  %v2178 = vsel %vm2141, %v63, %v742
  %v2179 = vsel %vm2141, %v64, %v744
  %v2180 = vsel %vm2141, %v65, %v746
  %v2181 = vsel %vm2141, %v66, %v748
  %v2182 = vsel %vm2141, %v67, %v750
  %v2183 = vsel %vm2141, %v68, %v752
  %v2184 = vsel %vm2141, %v69, %v754
  %v2185 = vsel %vm2141, %v70, %v756
  %v2186 = vsel %vm2141, %v71, %v758
  %v2187 = vsel %vm2141, %v72, %v760
  %v2188 = vsel %vm2141, %v73, %v762
  %v2189 = vsel %vm2141, %v74, %v764
  %v2190 = vsel %vm2141, %v75, %v766
  %v2191 = vsel %vm2141, %v76, %v768
  %v2192 = vsel %vm2141, %v77, %v770
  %v2193 = vsel %vm2141, %v78, %v772
  %v2194 = vsel %vm2141, %v79, %v774
  %v2195 = vsel %vm2141, %v80, %v776
  %v2196 = vsel %vm2141, %v81, %v778
  %v2197 = vsel %vm2141, %v82, %v780
  %v2198 = vsel %vm2141, %v83, %v782
  %v2199 = vsel %vm2141, %v84, %v784
  %v2200 = vsel %vm2141, %v85, %v786
  %v2201 = vsel %vm2141, %v86, %v788
  %v2202 = vsel %vm2141, %v87, %v790
  %v2203 = vsel %vm2141, %v88, %v792
  %v2204 = vsel %vm2141, %v89, %v794
  %v2205 = vsel %vm2141, %v90, %v796
  %vm2206 = vcmask 523264
  %v2207 = vsel %vm2206, %v2142, %v926
  %v2208 = vsel %vm2206, %v2143, %v928
  %v2209 = vsel %vm2206, %v2144, %v930
  %v2210 = vsel %vm2206, %v2145, %v932
  %v2211 = vsel %vm2206, %v2146, %v934
  %v2212 = vsel %vm2206, %v2147, %v936
  %v2213 = vsel %vm2206, %v2148, %v938
  %v2214 = vsel %vm2206, %v2149, %v940
  %v2215 = vsel %vm2206, %v2150, %v942
  %v2216 = vsel %vm2206, %v2151, %v944
  %v2217 = vsel %vm2206, %v2152, %v946
  %v2218 = vsel %vm2206, %v2153, %v948
  %v2219 = vsel %vm2206, %v2154, %v950
  %v2220 = vsel %vm2206, %v2155, %v952
  %v2221 = vsel %vm2206, %v2156, %v954
  %v2222 = vsel %vm2206, %v2157, %v956
  %v2223 = vsel %vm2206, %v2158, %v958
  %v2224 = vsel %vm2206, %v2159, %v960
  %v2225 = vsel %vm2206, %v2160, %v962
  %v2226 = vsel %vm2206, %v2161, %v964
  %v2227 = vsel %vm2206, %v2162, %v966
  %v2228 = vsel %vm2206, %v2163, %v968
  %v2229 = vsel %vm2206, %v2164, %v970
  %v2230 = vsel %vm2206, %v2165, %v972
  %v2231 = vsel %vm2206, %v2166, %v974
  %v2232 = vsel %vm2206, %v2167, %v976
  %v2233 = vsel %vm2206, %v2168, %v978
  %v2234 = vsel %vm2206, %v2169, %v980
  %v2235 = vsel %vm2206, %v2170, %v982
  %v2236 = vsel %vm2206, %v2171, %v984
  %v2237 = vsel %vm2206, %v2172, %v986
  %v2238 = vsel %vm2206, %v2173, %v988
  %v2239 = vsel %vm2206, %v2174, %v990
  %v2240 = vsel %vm2206, %v2175, %v992
  %v2241 = vsel %vm2206, %v2176, %v994
  %v2242 = vsel %vm2206, %v2177, %v996
  %v2243 = vsel %vm2206, %v2178, %v998
  %v2244 = vsel %vm2206, %v2179, %v1000
  %v2245 = vsel %vm2206, %v2180, %v1002
  %v2246 = vsel %vm2206, %v2181, %v1004
  %v2247 = vsel %vm2206, %v2182, %v1006
  %v2248 = vsel %vm2206, %v2183, %v1008
  %v2249 = vsel %vm2206, %v2184, %v1010
  %v2250 = vsel %vm2206, %v2185, %v1012
  %v2251 = vsel %vm2206, %v2186, %v1014
  %v2252 = vsel %vm2206, %v2187, %v1016
  %v2253 = vsel %vm2206, %v2188, %v1018
  %v2254 = vsel %vm2206, %v2189, %v1020
  %v2255 = vsel %vm2206, %v2190, %v1022
  %v2256 = vsel %vm2206, %v2191, %v1024
  %v2257 = vsel %vm2206, %v2192, %v1026
  %v2258 = vsel %vm2206, %v2193, %v1028
  %v2259 = vsel %vm2206, %v2194, %v1030
  %v2260 = vsel %vm2206, %v2195, %v1032
  %v2261 = vsel %vm2206, %v2196, %v1034
  %v2262 = vsel %vm2206, %v2197, %v1036
  %v2263 = vsel %vm2206, %v2198, %v1038
  %v2264 = vsel %vm2206, %v2199, %v1040
  %v2265 = vsel %vm2206, %v2200, %v1042
  %v2266 = vsel %vm2206, %v2201, %v1044
  %v2267 = vsel %vm2206, %v2202, %v1046
  %v2268 = vsel %vm2206, %v2203, %v1048
  %v2269 = vsel %vm2206, %v2204, %v1050
  %v2270 = vsel %vm2206, %v2205, %v1052
  %vm2271 = vcmask 785408
  %v2272 = vsel %vm2271, %v2207, %v1182
  %v2273 = vsel %vm2271, %v2208, %v1184
  %v2274 = vsel %vm2271, %v2209, %v1186
  %v2275 = vsel %vm2271, %v2210, %v1188
  %v2276 = vsel %vm2271, %v2211, %v1190
  %v2277 = vsel %vm2271, %v2212, %v1192
  %v2278 = vsel %vm2271, %v2213, %v1194
  %v2279 = vsel %vm2271, %v2214, %v1196
  %v2280 = vsel %vm2271, %v2215, %v1198
  %v2281 = vsel %vm2271, %v2216, %v1200
  %v2282 = vsel %vm2271, %v2217, %v1202
  %v2283 = vsel %vm2271, %v2218, %v1204
  %v2284 = vsel %vm2271, %v2219, %v1206
  %v2285 = vsel %vm2271, %v2220, %v1208
  %v2286 = vsel %vm2271, %v2221, %v1210
  %v2287 = vsel %vm2271, %v2222, %v1212
  %v2288 = vsel %vm2271, %v2223, %v1214
  %v2289 = vsel %vm2271, %v2224, %v1216
  %v2290 = vsel %vm2271, %v2225, %v1218
  %v2291 = vsel %vm2271, %v2226, %v1220
  %v2292 = vsel %vm2271, %v2227, %v1222
  %v2293 = vsel %vm2271, %v2228, %v1224
  %v2294 = vsel %vm2271, %v2229, %v1226
  %v2295 = vsel %vm2271, %v2230, %v1228
  %v2296 = vsel %vm2271, %v2231, %v1230
  %v2297 = vsel %vm2271, %v2232, %v1232
  %v2298 = vsel %vm2271, %v2233, %v1234
  %v2299 = vsel %vm2271, %v2234, %v1236
  %v2300 = vsel %vm2271, %v2235, %v1238
  %v2301 = vsel %vm2271, %v2236, %v1240
  %v2302 = vsel %vm2271, %v2237, %v1242
  %v2303 = vsel %vm2271, %v2238, %v1244
  %v2304 = vsel %vm2271, %v2239, %v1246
  %v2305 = vsel %vm2271, %v2240, %v1248
  %v2306 = vsel %vm2271, %v2241, %v1250
  %v2307 = vsel %vm2271, %v2242, %v1252
  %v2308 = vsel %vm2271, %v2243, %v1254
  %v2309 = vsel %vm2271, %v2244, %v1256
  %v2310 = vsel %vm2271, %v2245, %v1258
  %v2311 = vsel %vm2271, %v2246, %v1260
  %v2312 = vsel %vm2271, %v2247, %v1262
  %v2313 = vsel %vm2271, %v2248, %v1264
  %v2314 = vsel %vm2271, %v2249, %v1266
  %v2315 = vsel %vm2271, %v2250, %v1268
  %v2316 = vsel %vm2271, %v2251, %v1270
  %v2317 = vsel %vm2271, %v2252, %v1272
  %v2318 = vsel %vm2271, %v2253, %v1274
  %v2319 = vsel %vm2271, %v2254, %v1276
  %v2320 = vsel %vm2271, %v2255, %v1278
  %v2321 = vsel %vm2271, %v2256, %v1280
  %v2322 = vsel %vm2271, %v2257, %v1282
  %v2323 = vsel %vm2271, %v2258, %v1284
  %v2324 = vsel %vm2271, %v2259, %v1286
  %v2325 = vsel %vm2271, %v2260, %v1288
  %v2326 = vsel %vm2271, %v2261, %v1290
  %v2327 = vsel %vm2271, %v2262, %v1292
  %v2328 = vsel %vm2271, %v2263, %v1294
  %v2329 = vsel %vm2271, %v2264, %v1296
  %v2330 = vsel %vm2271, %v2265, %v1298
  %v2331 = vsel %vm2271, %v2266, %v1300
  %v2332 = vsel %vm2271, %v2267, %v1302
  %v2333 = vsel %vm2271, %v2268, %v1304
  %v2334 = vsel %vm2271, %v2269, %v1306
  %v2335 = vsel %vm2271, %v2270, %v1308
  %v2336 = vsel %vm2141, %v284, %v1438
  %v2337 = vsel %vm2141, %v285, %v1440
  %v2338 = vsel %vm2141, %v286, %v1442
  %v2339 = vsel %vm2141, %v287, %v1444
  %v2340 = vsel %vm2141, %v288, %v1446
  %v2341 = vsel %vm2141, %v289, %v1448
  %v2342 = vsel %vm2141, %v290, %v1450
  %v2343 = vsel %vm2141, %v291, %v1452
  %v2344 = vsel %vm2141, %v292, %v1454
  %v2345 = vsel %vm2141, %v293, %v1456
  %v2346 = vsel %vm2141, %v294, %v1458
  %v2347 = vsel %vm2141, %v295, %v1460
  %v2348 = vsel %vm2141, %v296, %v1462
  %v2349 = vsel %vm2141, %v297, %v1464
  %v2350 = vsel %vm2141, %v298, %v1466
  %v2351 = vsel %vm2141, %v299, %v1468
  %v2352 = vsel %vm2141, %v300, %v1470
  %v2353 = vsel %vm2141, %v301, %v1472
  %v2354 = vsel %vm2141, %v302, %v1474
  %v2355 = vsel %vm2141, %v303, %v1476
  %v2356 = vsel %vm2141, %v304, %v1478
  %v2357 = vsel %vm2141, %v305, %v1480
  %v2358 = vsel %vm2141, %v306, %v1482
  %v2359 = vsel %vm2141, %v307, %v1484
  %v2360 = vsel %vm2141, %v308, %v1486
  %v2361 = vsel %vm2141, %v309, %v1488
  %v2362 = vsel %vm2141, %v310, %v1490
  %v2363 = vsel %vm2141, %v311, %v1492
  %v2364 = vsel %vm2141, %v312, %v1494
  %v2365 = vsel %vm2141, %v313, %v1496
  %v2366 = vsel %vm2141, %v314, %v1498
  %v2367 = vsel %vm2141, %v315, %v1500
  %v2368 = vsel %vm2141, %v316, %v1502
  %v2369 = vsel %vm2141, %v317, %v1504
  %v2370 = vsel %vm2141, %v318, %v1506
  %v2371 = vsel %vm2141, %v319, %v1508
  %v2372 = vsel %vm2141, %v320, %v1510
  %v2373 = vsel %vm2141, %v321, %v1512
  %v2374 = vsel %vm2141, %v322, %v1514
  %v2375 = vsel %vm2141, %v323, %v1516
  %v2376 = vsel %vm2141, %v324, %v1518
  %v2377 = vsel %vm2141, %v325, %v1520
  %v2378 = vsel %vm2141, %v326, %v1522
  %v2379 = vsel %vm2141, %v327, %v1524
  %v2380 = vsel %vm2141, %v328, %v1526
  %v2381 = vsel %vm2141, %v329, %v1528
  %v2382 = vsel %vm2141, %v330, %v1530
  %v2383 = vsel %vm2141, %v331, %v1532
  %v2384 = vsel %vm2141, %v332, %v1534
  %v2385 = vsel %vm2141, %v333, %v1536
  %v2386 = vsel %vm2141, %v334, %v1538
  %v2387 = vsel %vm2141, %v335, %v1540
  %v2388 = vsel %vm2141, %v336, %v1542
  %v2389 = vsel %vm2141, %v337, %v1544
  %v2390 = vsel %vm2141, %v338, %v1546
  %v2391 = vsel %vm2141, %v339, %v1548
  %v2392 = vsel %vm2141, %v340, %v1550
  %v2393 = vsel %vm2141, %v341, %v1552
  %v2394 = vsel %vm2141, %v342, %v1554
  %v2395 = vsel %vm2141, %v343, %v1556
  %v2396 = vsel %vm2141, %v344, %v1558
  %v2397 = vsel %vm2141, %v345, %v1560
  %v2398 = vsel %vm2141, %v346, %v1562
  %v2399 = vsel %vm2141, %v347, %v1564
  %v2400 = vsel %vm2206, %v2336, %v1694
  %v2401 = vsel %vm2206, %v2337, %v1696
  %v2402 = vsel %vm2206, %v2338, %v1698
  %v2403 = vsel %vm2206, %v2339, %v1700
  %v2404 = vsel %vm2206, %v2340, %v1702
  %v2405 = vsel %vm2206, %v2341, %v1704
  %v2406 = vsel %vm2206, %v2342, %v1706
  %v2407 = vsel %vm2206, %v2343, %v1708
  %v2408 = vsel %vm2206, %v2344, %v1710
  %v2409 = vsel %vm2206, %v2345, %v1712
  %v2410 = vsel %vm2206, %v2346, %v1714
  %v2411 = vsel %vm2206, %v2347, %v1716
  %v2412 = vsel %vm2206, %v2348, %v1718
  %v2413 = vsel %vm2206, %v2349, %v1720
  %v2414 = vsel %vm2206, %v2350, %v1722
  %v2415 = vsel %vm2206, %v2351, %v1724
  %v2416 = vsel %vm2206, %v2352, %v1726
  %v2417 = vsel %vm2206, %v2353, %v1728
  %v2418 = vsel %vm2206, %v2354, %v1730
  %v2419 = vsel %vm2206, %v2355, %v1732
  %v2420 = vsel %vm2206, %v2356, %v1734
  %v2421 = vsel %vm2206, %v2357, %v1736
  %v2422 = vsel %vm2206, %v2358, %v1738
  %v2423 = vsel %vm2206, %v2359, %v1740
  %v2424 = vsel %vm2206, %v2360, %v1742
  %v2425 = vsel %vm2206, %v2361, %v1744
  %v2426 = vsel %vm2206, %v2362, %v1746
  %v2427 = vsel %vm2206, %v2363, %v1748
  %v2428 = vsel %vm2206, %v2364, %v1750
  %v2429 = vsel %vm2206, %v2365, %v1752
  %v2430 = vsel %vm2206, %v2366, %v1754
  %v2431 = vsel %vm2206, %v2367, %v1756
  %v2432 = vsel %vm2206, %v2368, %v1758
  %v2433 = vsel %vm2206, %v2369, %v1760
  %v2434 = vsel %vm2206, %v2370, %v1762
  %v2435 = vsel %vm2206, %v2371, %v1764
  %v2436 = vsel %vm2206, %v2372, %v1766
  %v2437 = vsel %vm2206, %v2373, %v1768
  %v2438 = vsel %vm2206, %v2374, %v1770
  %v2439 = vsel %vm2206, %v2375, %v1772
  %v2440 = vsel %vm2206, %v2376, %v1774
  %v2441 = vsel %vm2206, %v2377, %v1776
  %v2442 = vsel %vm2206, %v2378, %v1778
  %v2443 = vsel %vm2206, %v2379, %v1780
  %v2444 = vsel %vm2206, %v2380, %v1782
  %v2445 = vsel %vm2206, %v2381, %v1784
  %v2446 = vsel %vm2206, %v2382, %v1786
  %v2447 = vsel %vm2206, %v2383, %v1788
  %v2448 = vsel %vm2206, %v2384, %v1790
  %v2449 = vsel %vm2206, %v2385, %v1792
  %v2450 = vsel %vm2206, %v2386, %v1794
  %v2451 = vsel %vm2206, %v2387, %v1796
  %v2452 = vsel %vm2206, %v2388, %v1798
  %v2453 = vsel %vm2206, %v2389, %v1800
  %v2454 = vsel %vm2206, %v2390, %v1802
  %v2455 = vsel %vm2206, %v2391, %v1804
  %v2456 = vsel %vm2206, %v2392, %v1806
  %v2457 = vsel %vm2206, %v2393, %v1808
  %v2458 = vsel %vm2206, %v2394, %v1810
  %v2459 = vsel %vm2206, %v2395, %v1812
  %v2460 = vsel %vm2206, %v2396, %v1814
  %v2461 = vsel %vm2206, %v2397, %v1816
  %v2462 = vsel %vm2206, %v2398, %v1818
  %v2463 = vsel %vm2206, %v2399, %v1820
  %v2464 = vsel %vm2271, %v2400, %v1950
  %v2465 = vsel %vm2271, %v2401, %v1952
  %v2466 = vsel %vm2271, %v2402, %v1954
  %v2467 = vsel %vm2271, %v2403, %v1956
  %v2468 = vsel %vm2271, %v2404, %v1958
  %v2469 = vsel %vm2271, %v2405, %v1960
  %v2470 = vsel %vm2271, %v2406, %v1962
  %v2471 = vsel %vm2271, %v2407, %v1964
  %v2472 = vsel %vm2271, %v2408, %v1966
  %v2473 = vsel %vm2271, %v2409, %v1968
  %v2474 = vsel %vm2271, %v2410, %v1970
  %v2475 = vsel %vm2271, %v2411, %v1972
  %v2476 = vsel %vm2271, %v2412, %v1974
  %v2477 = vsel %vm2271, %v2413, %v1976
  %v2478 = vsel %vm2271, %v2414, %v1978
  %v2479 = vsel %vm2271, %v2415, %v1980
  %v2480 = vsel %vm2271, %v2416, %v1982
  %v2481 = vsel %vm2271, %v2417, %v1984
  %v2482 = vsel %vm2271, %v2418, %v1986
  %v2483 = vsel %vm2271, %v2419, %v1988
  %v2484 = vsel %vm2271, %v2420, %v1990
  %v2485 = vsel %vm2271, %v2421, %v1992
  %v2486 = vsel %vm2271, %v2422, %v1994
  %v2487 = vsel %vm2271, %v2423, %v1996
  %v2488 = vsel %vm2271, %v2424, %v1998
  %v2489 = vsel %vm2271, %v2425, %v2000
  %v2490 = vsel %vm2271, %v2426, %v2002
  %v2491 = vsel %vm2271, %v2427, %v2004
  %v2492 = vsel %vm2271, %v2428, %v2006
  %v2493 = vsel %vm2271, %v2429, %v2008
  %v2494 = vsel %vm2271, %v2430, %v2010
  %v2495 = vsel %vm2271, %v2431, %v2012
  %v2496 = vsel %vm2271, %v2432, %v2014
  %v2497 = vsel %vm2271, %v2433, %v2016
  %v2498 = vsel %vm2271, %v2434, %v2018
  %v2499 = vsel %vm2271, %v2435, %v2020
  %v2500 = vsel %vm2271, %v2436, %v2022
  %v2501 = vsel %vm2271, %v2437, %v2024
  %v2502 = vsel %vm2271, %v2438, %v2026
  %v2503 = vsel %vm2271, %v2439, %v2028
  %v2504 = vsel %vm2271, %v2440, %v2030
  %v2505 = vsel %vm2271, %v2441, %v2032
  %v2506 = vsel %vm2271, %v2442, %v2034
  %v2507 = vsel %vm2271, %v2443, %v2036
  %v2508 = vsel %vm2271, %v2444, %v2038
  %v2509 = vsel %vm2271, %v2445, %v2040
  %v2510 = vsel %vm2271, %v2446, %v2042
  %v2511 = vsel %vm2271, %v2447, %v2044
  %v2512 = vsel %vm2271, %v2448, %v2046
  %v2513 = vsel %vm2271, %v2449, %v2048
  %v2514 = vsel %vm2271, %v2450, %v2050
  %v2515 = vsel %vm2271, %v2451, %v2052
  %v2516 = vsel %vm2271, %v2452, %v2054
  %v2517 = vsel %vm2271, %v2453, %v2056
  %v2518 = vsel %vm2271, %v2454, %v2058
  %v2519 = vsel %vm2271, %v2455, %v2060
  %v2520 = vsel %vm2271, %v2456, %v2062
  %v2521 = vsel %vm2271, %v2457, %v2064
  %v2522 = vsel %vm2271, %v2458, %v2066
  %v2523 = vsel %vm2271, %v2459, %v2068
  %v2524 = vsel %vm2271, %v2460, %v2070
  %v2525 = vsel %vm2271, %v2461, %v2072
  %v2526 = vsel %vm2271, %v2462, %v2074
  %v2527 = vsel %vm2271, %v2463, %v2076
  %v2528 = vpack.c.bf16 %v2273, %v2272
  %v2529 = vpack.c.bf16 %v2465, %v2464
  %v2530 = vpack.c.bf16 %v542, %v541
  %v2531 = vpack.c.bf16 %v2275, %v2274
  %v2532 = vpack.c.bf16 %v2467, %v2466
  %v2533 = vpack.c.bf16 %v544, %v543
  %v2534 = vpack.c.bf16 %v2277, %v2276
  %v2535 = vpack.c.bf16 %v2469, %v2468
  %v2536 = vpack.c.bf16 %v546, %v545
  %v2537 = vpack.c.bf16 %v2279, %v2278
  %v2538 = vpack.c.bf16 %v2471, %v2470
  %v2539 = vpack.c.bf16 %v548, %v547
  %v2540 = vpack.c.bf16 %v2281, %v2280
  %v2541 = vpack.c.bf16 %v2473, %v2472
  %v2542 = vpack.c.bf16 %v550, %v549
  %v2543 = vpack.c.bf16 %v2283, %v2282
  %v2544 = vpack.c.bf16 %v2475, %v2474
  %v2545 = vpack.c.bf16 %v552, %v551
  %v2546 = vpack.c.bf16 %v2285, %v2284
  %v2547 = vpack.c.bf16 %v2477, %v2476
  %v2548 = vpack.c.bf16 %v554, %v553
  %v2549 = vpack.c.bf16 %v2287, %v2286
  %v2550 = vpack.c.bf16 %v2479, %v2478
  %v2551 = vpack.c.bf16 %v556, %v555
  %v2552 = vpack.c.bf16 %v2289, %v2288
  %v2553 = vpack.c.bf16 %v2481, %v2480
  %v2554 = vpack.c.bf16 %v558, %v557
  %v2555 = vpack.c.bf16 %v2291, %v2290
  %v2556 = vpack.c.bf16 %v2483, %v2482
  %v2557 = vpack.c.bf16 %v560, %v559
  %v2558 = vpack.c.bf16 %v2293, %v2292
  %v2559 = vpack.c.bf16 %v2485, %v2484
  %v2560 = vpack.c.bf16 %v562, %v561
  %v2561 = vpack.c.bf16 %v2295, %v2294
  %v2562 = vpack.c.bf16 %v2487, %v2486
  %v2563 = vpack.c.bf16 %v564, %v563
  %v2564 = vpack.c.bf16 %v2297, %v2296
  %v2565 = vpack.c.bf16 %v2489, %v2488
  %v2566 = vpack.c.bf16 %v566, %v565
  %v2567 = vpack.c.bf16 %v2299, %v2298
  %v2568 = vpack.c.bf16 %v2491, %v2490
  %v2569 = vpack.c.bf16 %v568, %v567
  %v2570 = vpack.c.bf16 %v2301, %v2300
  %v2571 = vpack.c.bf16 %v2493, %v2492
  %v2572 = vpack.c.bf16 %v570, %v569
  %v2573 = vpack.c.bf16 %v2303, %v2302
  %v2574 = vpack.c.bf16 %v2495, %v2494
  %v2575 = vpack.c.bf16 %v572, %v571
  %v2576 = vpack.c.bf16 %v2305, %v2304
  %v2577 = vpack.c.bf16 %v2497, %v2496
  %v2578 = vpack.c.bf16 %v574, %v573
  %v2579 = vpack.c.bf16 %v2307, %v2306
  %v2580 = vpack.c.bf16 %v2499, %v2498
  %v2581 = vpack.c.bf16 %v576, %v575
  %v2582 = vpack.c.bf16 %v2309, %v2308
  %v2583 = vpack.c.bf16 %v2501, %v2500
  %v2584 = vpack.c.bf16 %v578, %v577
  %v2585 = vpack.c.bf16 %v2311, %v2310
  %v2586 = vpack.c.bf16 %v2503, %v2502
  %v2587 = vpack.c.bf16 %v580, %v579
  %v2588 = vpack.c.bf16 %v2313, %v2312
  %v2589 = vpack.c.bf16 %v2505, %v2504
  %v2590 = vpack.c.bf16 %v582, %v581
  %v2591 = vpack.c.bf16 %v2315, %v2314
  %v2592 = vpack.c.bf16 %v2507, %v2506
  %v2593 = vpack.c.bf16 %v584, %v583
  %v2594 = vpack.c.bf16 %v2317, %v2316
  %v2595 = vpack.c.bf16 %v2509, %v2508
  %v2596 = vpack.c.bf16 %v586, %v585
  %v2597 = vpack.c.bf16 %v2319, %v2318
  %v2598 = vpack.c.bf16 %v2511, %v2510
  %v2599 = vpack.c.bf16 %v588, %v587
  %v2600 = vpack.c.bf16 %v2321, %v2320
  %v2601 = vpack.c.bf16 %v2513, %v2512
  %v2602 = vpack.c.bf16 %v590, %v589
  %v2603 = vpack.c.bf16 %v2323, %v2322
  %v2604 = vpack.c.bf16 %v2515, %v2514
  %v2605 = vpack.c.bf16 %v592, %v591
  %v2606 = vpack.c.bf16 %v2325, %v2324
  %v2607 = vpack.c.bf16 %v2517, %v2516
  %v2608 = vpack.c.bf16 %v594, %v593
  %v2609 = vpack.c.bf16 %v2327, %v2326
  %v2610 = vpack.c.bf16 %v2519, %v2518
  %v2611 = vpack.c.bf16 %v596, %v595
  %v2612 = vpack.c.bf16 %v2329, %v2328
  %v2613 = vpack.c.bf16 %v2521, %v2520
  %v2614 = vpack.c.bf16 %v598, %v597
  %v2615 = vpack.c.bf16 %v2331, %v2330
  %v2616 = vpack.c.bf16 %v2523, %v2522
  %v2617 = vpack.c.bf16 %v600, %v599
  %v2618 = vpack.c.bf16 %v2333, %v2332
  %v2619 = vpack.c.bf16 %v2525, %v2524
  %v2620 = vpack.c.bf16 %v602, %v601
  %v2621 = vpack.c.bf16 %v2335, %v2334
  %v2622 = vpack.c.bf16 %v2527, %v2526
  %v2623 = vpack.c.bf16 %v604, %v603
  %v2624 = vld [vmem:[%s1] sm:$0xf]
  %v2625 = vld [vmem:[%s1 + $0x4] sm:$0xf]
  %v2626 = vld [vmem:[%s1 + $0x8] sm:$0xf]
  %v2627 = vld [vmem:[%s1 + $0xc] sm:$0xf]
  %v2628 = vld [vmem:[%s1 + $0x10] sm:$0xf]
  %v2629 = vld [vmem:[%s1 + $0x14] sm:$0xf]
  %v2630 = vld [vmem:[%s1 + $0x18] sm:$0xf]
  %v2631 = vld [vmem:[%s1 + $0x1c] sm:$0xf]
  %v2632 = vld [vmem:[%s1 + $0x20] sm:$0xf]
  %v2633 = vld [vmem:[%s1 + $0x24] sm:$0xf]
  %v2634 = vld [vmem:[%s1 + $0x28] sm:$0xf]
  %v2635 = vld [vmem:[%s1 + $0x2c] sm:$0xf]
  %v2636 = vld [vmem:[%s1 + $0x30] sm:$0xf]
  %v2637 = vld [vmem:[%s1 + $0x34] sm:$0xf]
  %v2638 = vld [vmem:[%s1 + $0x38] sm:$0xf]
  %v2639 = vld [vmem:[%s1 + $0x3c] sm:$0xf]
  %v2640 = vld [vmem:[%s1 + $0x40] sm:$0xf]
  %v2641 = vld [vmem:[%s1 + $0x44] sm:$0xf]
  %v2642 = vld [vmem:[%s1 + $0x48] sm:$0xf]
  %v2643 = vld [vmem:[%s1 + $0x4c] sm:$0xf]
  %v2644 = vld [vmem:[%s1 + $0x50] sm:$0xf]
  %v2645 = vld [vmem:[%s1 + $0x54] sm:$0xf]
  %v2646 = vld [vmem:[%s1 + $0x58] sm:$0xf]
  %v2647 = vld [vmem:[%s1 + $0x5c] sm:$0xf]
  %v2648 = vld [vmem:[%s1 + $0x60] sm:$0xf]
  %v2649 = vld [vmem:[%s1 + $0x64] sm:$0xf]
  %v2650 = vld [vmem:[%s1 + $0x68] sm:$0xf]
  %v2651 = vld [vmem:[%s1 + $0x6c] sm:$0xf]
  %v2652 = vld [vmem:[%s1 + $0x70] sm:$0xf]
  %v2653 = vld [vmem:[%s1 + $0x74] sm:$0xf]
  %v2654 = vld [vmem:[%s1 + $0x78] sm:$0xf]
  %v2655 = vld [vmem:[%s1 + $0x7c] sm:$0xf]
  %v2656 = vld [vmem:[%s1 + $0x80] sm:$0xf]
  %v2657 = vld [vmem:[%s1 + $0x84] sm:$0xf]
  %v2658 = vld [vmem:[%s1 + $0x88] sm:$0xf]
  %v2659 = vld [vmem:[%s1 + $0x8c] sm:$0xf]
  %v2696 = vunpack.c.l.b16 %v2624
  %v2697 = vunpack.c.l.b16 %v2625
  %v2698 = vunpack.c.l.b16 %v2626
  %v2699 = vunpack.c.l.b16 %v2627
  %v2700 = vunpack.c.l.b16 %v2628
  %v2701 = vunpack.c.l.b16 %v2629
  %v2702 = vunpack.c.l.b16 %v2630
  %v2703 = vunpack.c.l.b16 %v2631
  %v2704 = vunpack.c.l.b16 %v2632
  %v2705 = vunpack.c.l.b16 %v2633
  %v2706 = vunpack.c.l.b16 %v2634
  %v2707 = vunpack.c.l.b16 %v2635
  %v2708 = vunpack.c.l.b16 %v2636
  %v2709 = vunpack.c.l.b16 %v2637
  %v2710 = vunpack.c.l.b16 %v2638
  %v2711 = vunpack.c.l.b16 %v2639
  %v2712 = vunpack.c.l.b16 %v2640
  %v2713 = vunpack.c.l.b16 %v2641
  %v2714 = vunpack.c.l.b16 %v2642
  %v2715 = vunpack.c.l.b16 %v2643
  %v2716 = vunpack.c.l.b16 %v2644
  %v2717 = vunpack.c.l.b16 %v2645
  %v2718 = vunpack.c.l.b16 %v2646
  %v2719 = vunpack.c.l.b16 %v2647
  %v2720 = vunpack.c.l.b16 %v2648
  %v2721 = vunpack.c.l.b16 %v2649
  %v2722 = vunpack.c.l.b16 %v2650
  %v2723 = vunpack.c.l.b16 %v2651
  %v2724 = vunpack.c.l.b16 %v2652
  %v2725 = vunpack.c.l.b16 %v2653
  %v2726 = vunpack.c.l.b16 %v2654
  %v2727 = vunpack.c.l.b16 %v2655
  %v2728 = vunpack.c.l.b16 %v2656
  %v2729 = vunpack.c.l.b16 %v2657
  %v2730 = vunpack.c.l.b16 %v2658
  %v2731 = vunpack.c.l.b16 %v2659
  %v2732 = vpack.c.b16 %v2697, %v2696
  %v2733 = vpack.c.b16 %v2699, %v2698
  %v2734 = vpack.c.b16 %v2701, %v2700
  %v2735 = vpack.c.b16 %v2703, %v2702
  %v2736 = vpack.c.b16 %v2705, %v2704
  %v2737 = vpack.c.b16 %v2707, %v2706
  %v2738 = vpack.c.b16 %v2709, %v2708
  %v2739 = vpack.c.b16 %v2711, %v2710
  %v2740 = vpack.c.b16 %v2713, %v2712
  %v2741 = vpack.c.b16 %v2715, %v2714
  %v2742 = vpack.c.b16 %v2717, %v2716
  %v2743 = vpack.c.b16 %v2719, %v2718
  %v2744 = vpack.c.b16 %v2721, %v2720
  %v2745 = vpack.c.b16 %v2723, %v2722
  %v2746 = vpack.c.b16 %v2725, %v2724
  %v2747 = vpack.c.b16 %v2727, %v2726
  %v2748 = vpack.c.b16 %v2729, %v2728
  %v2749 = vpack.c.b16 %v2731, %v2730
  %v2769 = vsel %vm2141, %v2530, 0
  %v2772 = vsel %vm2141, %v2533, 0
  %v2775 = vsel %vm2141, %v2536, 0
  %v2778 = vsel %vm2141, %v2539, 0
  %v2781 = vsel %vm2141, %v2542, 0
  %v2784 = vsel %vm2141, %v2545, 0
  %v2787 = vsel %vm2141, %v2548, 0
  %v2790 = vsel %vm2141, %v2551, 0
  %v2793 = vsel %vm2141, %v2554, 0
  %v2796 = vsel %vm2141, %v2557, 0
  %v2799 = vsel %vm2141, %v2560, 0
  %v2802 = vsel %vm2141, %v2563, 0
  %v2805 = vsel %vm2141, %v2566, 0
  %v2808 = vsel %vm2141, %v2569, 0
  %v2811 = vsel %vm2141, %v2572, 0
  %v2814 = vsel %vm2141, %v2575, 0
  %v2817 = vsel %vm2141, %v2578, 0
  %v2820 = vsel %vm2141, %v2581, 0
  %v2823 = vsel %vm2141, %v2584, 0
  %v2826 = vsel %vm2141, %v2587, 0
  %v2829 = vsel %vm2141, %v2590, 0
  %v2832 = vsel %vm2141, %v2593, 0
  %v2835 = vsel %vm2141, %v2596, 0
  %v2838 = vsel %vm2141, %v2599, 0
  %v2841 = vsel %vm2141, %v2602, 0
  %v2844 = vsel %vm2141, %v2605, 0
  %v2847 = vsel %vm2141, %v2608, 0
  %v2850 = vsel %vm2141, %v2611, 0
  %v2853 = vsel %vm2141, %v2614, 0
  %v2856 = vsel %vm2141, %v2617, 0
  %v2859 = vsel %vm2141, %v2620, 0
  %v2862 = vsel %vm2141, %v2623, 0
  %2864 = vmatpush.bf16.msra.mxu0 %v2739
  %2865 = vmatpush.bf16.msra.mxu0 %v2738
  %2866 = vmatpush.bf16.msra.mxu0 %v2737
  %2867 = vmatpush.bf16.msra.mxu0 %v2736
  %2868 = vmatpush.bf16.msra.mxu0 %v2735
  %2869 = vmatpush.bf16.msra.mxu0 %v2734
  %2870 = vmatpush.bf16.msra.mxu0 %v2733
  %2871 = vmatpush.bf16.msra.mxu0 %v2732
  %2872 = vmatmul.bf16.gmra.mxu0 %v2528
  %v2873 = vpop.f32.mrf.mxu0
  %v2874 = vadd.f32 0.0, %v2873
  %v2875 = vpop.f32.mrf.mxu0
  %v2876 = vadd.f32 0.0, %v2875
  %2877 = vmatmul.bf16.gmra.mxu0 %v2531
  %v2878 = vpop.f32.mrf.mxu0
  %v2879 = vadd.f32 0.0, %v2878
  %v2880 = vpop.f32.mrf.mxu0
  %v2881 = vadd.f32 0.0, %v2880
  %2882 = vmatmul.bf16.gmra.mxu0 %v2534
  %v2883 = vpop.f32.mrf.mxu0
  %v2884 = vadd.f32 0.0, %v2883
  %v2885 = vpop.f32.mrf.mxu0
  %v2886 = vadd.f32 0.0, %v2885
  %2887 = vmatmul.bf16.gmra.mxu0 %v2537
  %v2888 = vpop.f32.mrf.mxu0
  %v2889 = vadd.f32 0.0, %v2888
  %v2890 = vpop.f32.mrf.mxu0
  %v2891 = vadd.f32 0.0, %v2890
  %2892 = vmatmul.bf16.gmra.mxu0 %v2540
  %v2893 = vpop.f32.mrf.mxu0
  %v2894 = vadd.f32 0.0, %v2893
  %v2895 = vpop.f32.mrf.mxu0
  %v2896 = vadd.f32 0.0, %v2895
  %2897 = vmatmul.bf16.gmra.mxu0 %v2543
  %v2898 = vpop.f32.mrf.mxu0
  %v2899 = vadd.f32 0.0, %v2898
  %v2900 = vpop.f32.mrf.mxu0
  %v2901 = vadd.f32 0.0, %v2900
  %2902 = vmatmul.bf16.gmra.mxu0 %v2546
  %v2903 = vpop.f32.mrf.mxu0
  %v2904 = vadd.f32 0.0, %v2903
  %v2905 = vpop.f32.mrf.mxu0
  %v2906 = vadd.f32 0.0, %v2905
  %2907 = vmatmul.bf16.gmra.mxu0 %v2549
  %v2908 = vpop.f32.mrf.mxu0
  %v2909 = vadd.f32 0.0, %v2908
  %v2910 = vpop.f32.mrf.mxu0
  %v2911 = vadd.f32 0.0, %v2910
  %2912 = vmatmul.bf16.gmra.mxu0 %v2552
  %v2913 = vpop.f32.mrf.mxu0
  %v2914 = vadd.f32 0.0, %v2913
  %v2915 = vpop.f32.mrf.mxu0
  %v2916 = vadd.f32 0.0, %v2915
  %2917 = vmatmul.bf16.gmra.mxu0 %v2555
  %v2918 = vpop.f32.mrf.mxu0
  %v2919 = vadd.f32 0.0, %v2918
  %v2920 = vpop.f32.mrf.mxu0
  %v2921 = vadd.f32 0.0, %v2920
  %2922 = vmatmul.bf16.gmra.mxu0 %v2558
  %v2923 = vpop.f32.mrf.mxu0
  %v2924 = vadd.f32 0.0, %v2923
  %v2925 = vpop.f32.mrf.mxu0
  %v2926 = vadd.f32 0.0, %v2925
  %2927 = vmatmul.bf16.gmra.mxu0 %v2561
  %v2928 = vpop.f32.mrf.mxu0
  %v2929 = vadd.f32 0.0, %v2928
  %v2930 = vpop.f32.mrf.mxu0
  %v2931 = vadd.f32 0.0, %v2930
  %2932 = vmatmul.bf16.gmra.mxu0 %v2564
  %v2933 = vpop.f32.mrf.mxu0
  %v2934 = vadd.f32 0.0, %v2933
  %v2935 = vpop.f32.mrf.mxu0
  %v2936 = vadd.f32 0.0, %v2935
  %2937 = vmatmul.bf16.gmra.mxu0 %v2567
  %v2938 = vpop.f32.mrf.mxu0
  %v2939 = vadd.f32 0.0, %v2938
  %v2940 = vpop.f32.mrf.mxu0
  %v2941 = vadd.f32 0.0, %v2940
  %2942 = vmatmul.bf16.gmra.mxu0 %v2570
  %v2943 = vpop.f32.mrf.mxu0
  %v2944 = vadd.f32 0.0, %v2943
  %v2945 = vpop.f32.mrf.mxu0
  %v2946 = vadd.f32 0.0, %v2945
  %2947 = vmatmul.bf16.gmra.mxu0 %v2573
  %v2948 = vpop.f32.mrf.mxu0
  %v2949 = vadd.f32 0.0, %v2948
  %v2950 = vpop.f32.mrf.mxu0
  %v2951 = vadd.f32 0.0, %v2950
  %2952 = vmatmul.bf16.gmra.mxu0 %v2576
  %v2953 = vpop.f32.mrf.mxu0
  %v2954 = vadd.f32 0.0, %v2953
  %v2955 = vpop.f32.mrf.mxu0
  %v2956 = vadd.f32 0.0, %v2955
  %2957 = vmatmul.bf16.gmra.mxu0 %v2579
  %v2958 = vpop.f32.mrf.mxu0
  %v2959 = vadd.f32 0.0, %v2958
  %v2960 = vpop.f32.mrf.mxu0
  %v2961 = vadd.f32 0.0, %v2960
  %2962 = vmatmul.bf16.gmra.mxu0 %v2582
  %v2963 = vpop.f32.mrf.mxu0
  %v2964 = vadd.f32 0.0, %v2963
  %v2965 = vpop.f32.mrf.mxu0
  %v2966 = vadd.f32 0.0, %v2965
  %2967 = vmatmul.bf16.gmra.mxu0 %v2585
  %v2968 = vpop.f32.mrf.mxu0
  %v2969 = vadd.f32 0.0, %v2968
  %v2970 = vpop.f32.mrf.mxu0
  %v2971 = vadd.f32 0.0, %v2970
  %2972 = vmatmul.bf16.gmra.mxu0 %v2588
  %v2973 = vpop.f32.mrf.mxu0
  %v2974 = vadd.f32 0.0, %v2973
  %v2975 = vpop.f32.mrf.mxu0
  %v2976 = vadd.f32 0.0, %v2975
  %2977 = vmatmul.bf16.gmra.mxu0 %v2591
  %v2978 = vpop.f32.mrf.mxu0
  %v2979 = vadd.f32 0.0, %v2978
  %v2980 = vpop.f32.mrf.mxu0
  %v2981 = vadd.f32 0.0, %v2980
  %2982 = vmatmul.bf16.gmra.mxu0 %v2594
  %v2983 = vpop.f32.mrf.mxu0
  %v2984 = vadd.f32 0.0, %v2983
  %v2985 = vpop.f32.mrf.mxu0
  %v2986 = vadd.f32 0.0, %v2985
  %2987 = vmatmul.bf16.gmra.mxu0 %v2597
  %v2988 = vpop.f32.mrf.mxu0
  %v2989 = vadd.f32 0.0, %v2988
  %v2990 = vpop.f32.mrf.mxu0
  %v2991 = vadd.f32 0.0, %v2990
  %2992 = vmatmul.bf16.gmra.mxu0 %v2600
  %v2993 = vpop.f32.mrf.mxu0
  %v2994 = vadd.f32 0.0, %v2993
  %v2995 = vpop.f32.mrf.mxu0
  %v2996 = vadd.f32 0.0, %v2995
  %2997 = vmatmul.bf16.gmra.mxu0 %v2603
  %v2998 = vpop.f32.mrf.mxu0
  %v2999 = vadd.f32 0.0, %v2998
  %v3000 = vpop.f32.mrf.mxu0
  %v3001 = vadd.f32 0.0, %v3000
  %3002 = vmatmul.bf16.gmra.mxu0 %v2606
  %v3003 = vpop.f32.mrf.mxu0
  %v3004 = vadd.f32 0.0, %v3003
  %v3005 = vpop.f32.mrf.mxu0
  %v3006 = vadd.f32 0.0, %v3005
  %3007 = vmatmul.bf16.gmra.mxu0 %v2609
  %v3008 = vpop.f32.mrf.mxu0
  %v3009 = vadd.f32 0.0, %v3008
  %v3010 = vpop.f32.mrf.mxu0
  %v3011 = vadd.f32 0.0, %v3010
  %3012 = vmatmul.bf16.gmra.mxu0 %v2612
  %v3013 = vpop.f32.mrf.mxu0
  %v3014 = vadd.f32 0.0, %v3013
  %v3015 = vpop.f32.mrf.mxu0
  %v3016 = vadd.f32 0.0, %v3015
  %3017 = vmatmul.bf16.gmra.mxu0 %v2615
  %v3018 = vpop.f32.mrf.mxu0
  %v3019 = vadd.f32 0.0, %v3018
  %v3020 = vpop.f32.mrf.mxu0
  %v3021 = vadd.f32 0.0, %v3020
  %3022 = vmatmul.bf16.gmra.mxu0 %v2618
  %v3023 = vpop.f32.mrf.mxu0
  %v3024 = vadd.f32 0.0, %v3023
  %v3025 = vpop.f32.mrf.mxu0
  %v3026 = vadd.f32 0.0, %v3025
  %3027 = vmatmul.bf16.gmra.mxu0 %v2621
  %v3028 = vpop.f32.mrf.mxu0
  %v3029 = vadd.f32 0.0, %v3028
  %v3030 = vpop.f32.mrf.mxu0
  %v3031 = vadd.f32 0.0, %v3030
  %3032 = vdwg.mxu0
  %3033 = vmatpush.bf16.msra.mxu0 %v2747
  %3034 = vmatpush.bf16.msra.mxu0 %v2746
  %3035 = vmatpush.bf16.msra.mxu0 %v2745
  %3036 = vmatpush.bf16.msra.mxu0 %v2744
  %3037 = vmatpush.bf16.msra.mxu0 %v2743
  %3038 = vmatpush.bf16.msra.mxu0 %v2742
  %3039 = vmatpush.bf16.msra.mxu0 %v2741
  %3040 = vmatpush.bf16.msra.mxu0 %v2740
  %3041 = vmatmul.bf16.gmra.mxu0 %v2529
  %v3042 = vpop.f32.mrf.mxu0
  %v3043 = vadd.f32 %v2874, %v3042
  %v3044 = vpop.f32.mrf.mxu0
  %v3045 = vadd.f32 %v2876, %v3044
  %3046 = vmatmul.bf16.gmra.mxu0 %v2532
  %v3047 = vpop.f32.mrf.mxu0
  %v3048 = vadd.f32 %v2879, %v3047
  %v3049 = vpop.f32.mrf.mxu0
  %v3050 = vadd.f32 %v2881, %v3049
  %3051 = vmatmul.bf16.gmra.mxu0 %v2535
  %v3052 = vpop.f32.mrf.mxu0
  %v3053 = vadd.f32 %v2884, %v3052
  %v3054 = vpop.f32.mrf.mxu0
  %v3055 = vadd.f32 %v2886, %v3054
  %3056 = vmatmul.bf16.gmra.mxu0 %v2538
  %v3057 = vpop.f32.mrf.mxu0
  %v3058 = vadd.f32 %v2889, %v3057
  %v3059 = vpop.f32.mrf.mxu0
  %v3060 = vadd.f32 %v2891, %v3059
  %3061 = vmatmul.bf16.gmra.mxu0 %v2541
  %v3062 = vpop.f32.mrf.mxu0
  %v3063 = vadd.f32 %v2894, %v3062
  %v3064 = vpop.f32.mrf.mxu0
  %v3065 = vadd.f32 %v2896, %v3064
  %3066 = vmatmul.bf16.gmra.mxu0 %v2544
  %v3067 = vpop.f32.mrf.mxu0
  %v3068 = vadd.f32 %v2899, %v3067
  %v3069 = vpop.f32.mrf.mxu0
  %v3070 = vadd.f32 %v2901, %v3069
  %3071 = vmatmul.bf16.gmra.mxu0 %v2547
  %v3072 = vpop.f32.mrf.mxu0
  %v3073 = vadd.f32 %v2904, %v3072
  %v3074 = vpop.f32.mrf.mxu0
  %v3075 = vadd.f32 %v2906, %v3074
  %3076 = vmatmul.bf16.gmra.mxu0 %v2550
  %v3077 = vpop.f32.mrf.mxu0
  %v3078 = vadd.f32 %v2909, %v3077
  %v3079 = vpop.f32.mrf.mxu0
  %v3080 = vadd.f32 %v2911, %v3079
  %3081 = vmatmul.bf16.gmra.mxu0 %v2553
  %v3082 = vpop.f32.mrf.mxu0
  %v3083 = vadd.f32 %v2914, %v3082
  %v3084 = vpop.f32.mrf.mxu0
  %v3085 = vadd.f32 %v2916, %v3084
  %3086 = vmatmul.bf16.gmra.mxu0 %v2556
  %v3087 = vpop.f32.mrf.mxu0
  %v3088 = vadd.f32 %v2919, %v3087
  %v3089 = vpop.f32.mrf.mxu0
  %v3090 = vadd.f32 %v2921, %v3089
  %3091 = vmatmul.bf16.gmra.mxu0 %v2559
  %v3092 = vpop.f32.mrf.mxu0
  %v3093 = vadd.f32 %v2924, %v3092
  %v3094 = vpop.f32.mrf.mxu0
  %v3095 = vadd.f32 %v2926, %v3094
  %3096 = vmatmul.bf16.gmra.mxu0 %v2562
  %v3097 = vpop.f32.mrf.mxu0
  %v3098 = vadd.f32 %v2929, %v3097
  %v3099 = vpop.f32.mrf.mxu0
  %v3100 = vadd.f32 %v2931, %v3099
  %3101 = vmatmul.bf16.gmra.mxu0 %v2565
  %v3102 = vpop.f32.mrf.mxu0
  %v3103 = vadd.f32 %v2934, %v3102
  %v3104 = vpop.f32.mrf.mxu0
  %v3105 = vadd.f32 %v2936, %v3104
  %3106 = vmatmul.bf16.gmra.mxu0 %v2568
  %v3107 = vpop.f32.mrf.mxu0
  %v3108 = vadd.f32 %v2939, %v3107
  %v3109 = vpop.f32.mrf.mxu0
  %v3110 = vadd.f32 %v2941, %v3109
  %3111 = vmatmul.bf16.gmra.mxu0 %v2571
  %v3112 = vpop.f32.mrf.mxu0
  %v3113 = vadd.f32 %v2944, %v3112
  %v3114 = vpop.f32.mrf.mxu0
  %v3115 = vadd.f32 %v2946, %v3114
  %3116 = vmatmul.bf16.gmra.mxu0 %v2574
  %v3117 = vpop.f32.mrf.mxu0
  %v3118 = vadd.f32 %v2949, %v3117
  %v3119 = vpop.f32.mrf.mxu0
  %v3120 = vadd.f32 %v2951, %v3119
  %3121 = vmatmul.bf16.gmra.mxu0 %v2577
  %v3122 = vpop.f32.mrf.mxu0
  %v3123 = vadd.f32 %v2954, %v3122
  %v3124 = vpop.f32.mrf.mxu0
  %v3125 = vadd.f32 %v2956, %v3124
  %3126 = vmatmul.bf16.gmra.mxu0 %v2580
  %v3127 = vpop.f32.mrf.mxu0
  %v3128 = vadd.f32 %v2959, %v3127
  %v3129 = vpop.f32.mrf.mxu0
  %v3130 = vadd.f32 %v2961, %v3129
  %3131 = vmatmul.bf16.gmra.mxu0 %v2583
  %v3132 = vpop.f32.mrf.mxu0
  %v3133 = vadd.f32 %v2964, %v3132
  %v3134 = vpop.f32.mrf.mxu0
  %v3135 = vadd.f32 %v2966, %v3134
  %3136 = vmatmul.bf16.gmra.mxu0 %v2586
  %v3137 = vpop.f32.mrf.mxu0
  %v3138 = vadd.f32 %v2969, %v3137
  %v3139 = vpop.f32.mrf.mxu0
  %v3140 = vadd.f32 %v2971, %v3139
  %3141 = vmatmul.bf16.gmra.mxu0 %v2589
  %v3142 = vpop.f32.mrf.mxu0
  %v3143 = vadd.f32 %v2974, %v3142
  %v3144 = vpop.f32.mrf.mxu0
  %v3145 = vadd.f32 %v2976, %v3144
  %3146 = vmatmul.bf16.gmra.mxu0 %v2592
  %v3147 = vpop.f32.mrf.mxu0
  %v3148 = vadd.f32 %v2979, %v3147
  %v3149 = vpop.f32.mrf.mxu0
  %v3150 = vadd.f32 %v2981, %v3149
  %3151 = vmatmul.bf16.gmra.mxu0 %v2595
  %v3152 = vpop.f32.mrf.mxu0
  %v3153 = vadd.f32 %v2984, %v3152
  %v3154 = vpop.f32.mrf.mxu0
  %v3155 = vadd.f32 %v2986, %v3154
  %3156 = vmatmul.bf16.gmra.mxu0 %v2598
  %v3157 = vpop.f32.mrf.mxu0
  %v3158 = vadd.f32 %v2989, %v3157
  %v3159 = vpop.f32.mrf.mxu0
  %v3160 = vadd.f32 %v2991, %v3159
  %3161 = vmatmul.bf16.gmra.mxu0 %v2601
  %v3162 = vpop.f32.mrf.mxu0
  %v3163 = vadd.f32 %v2994, %v3162
  %v3164 = vpop.f32.mrf.mxu0
  %v3165 = vadd.f32 %v2996, %v3164
  %3166 = vmatmul.bf16.gmra.mxu0 %v2604
  %v3167 = vpop.f32.mrf.mxu0
  %v3168 = vadd.f32 %v2999, %v3167
  %v3169 = vpop.f32.mrf.mxu0
  %v3170 = vadd.f32 %v3001, %v3169
  %3171 = vmatmul.bf16.gmra.mxu0 %v2607
  %v3172 = vpop.f32.mrf.mxu0
  %v3173 = vadd.f32 %v3004, %v3172
  %v3174 = vpop.f32.mrf.mxu0
  %v3175 = vadd.f32 %v3006, %v3174
  %3176 = vmatmul.bf16.gmra.mxu0 %v2610
  %v3177 = vpop.f32.mrf.mxu0
  %v3178 = vadd.f32 %v3009, %v3177
  %v3179 = vpop.f32.mrf.mxu0
  %v3180 = vadd.f32 %v3011, %v3179
  %3181 = vmatmul.bf16.gmra.mxu0 %v2613
  %v3182 = vpop.f32.mrf.mxu0
  %v3183 = vadd.f32 %v3014, %v3182
  %v3184 = vpop.f32.mrf.mxu0
  %v3185 = vadd.f32 %v3016, %v3184
  %3186 = vmatmul.bf16.gmra.mxu0 %v2616
  %v3187 = vpop.f32.mrf.mxu0
  %v3188 = vadd.f32 %v3019, %v3187
  %v3189 = vpop.f32.mrf.mxu0
  %v3190 = vadd.f32 %v3021, %v3189
  %3191 = vmatmul.bf16.gmra.mxu0 %v2619
  %v3192 = vpop.f32.mrf.mxu0
  %v3193 = vadd.f32 %v3024, %v3192
  %v3194 = vpop.f32.mrf.mxu0
  %v3195 = vadd.f32 %v3026, %v3194
  %3196 = vmatmul.bf16.gmra.mxu0 %v2622
  %v3197 = vpop.f32.mrf.mxu0
  %v3198 = vadd.f32 %v3029, %v3197
  %v3199 = vpop.f32.mrf.mxu0
  %v3200 = vadd.f32 %v3031, %v3199
  %3201 = vdwg.mxu0
  %3202 = vmatpush.bf16.msra.mxu0 0
  %3203 = vmatpush.bf16.msra.mxu0 0
  %3204 = vmatpush.bf16.msra.mxu0 0
  %3205 = vmatpush.bf16.msra.mxu0 0
  %3206 = vmatpush.bf16.msra.mxu0 0
  %3207 = vmatpush.bf16.msra.mxu0 0
  %3208 = vmatpush.bf16.msra.mxu0 %v2749
  %3209 = vmatpush.bf16.msra.mxu0 %v2748
  %3210 = vmatmul.bf16.gmra.mxu0 %v2769
  %v3211 = vpop.f32.mrf.mxu0
  %v3212 = vadd.f32 %v3043, %v3211
  %v3213 = vpop.f32.mrf.mxu0
  %v3214 = vadd.f32 %v3045, %v3213
  %3215 = vmatmul.bf16.gmra.mxu0 %v2772
  %v3216 = vpop.f32.mrf.mxu0
  %v3217 = vadd.f32 %v3048, %v3216
  %v3218 = vpop.f32.mrf.mxu0
  %v3219 = vadd.f32 %v3050, %v3218
  %3220 = vmatmul.bf16.gmra.mxu0 %v2775
  %v3221 = vpop.f32.mrf.mxu0
  %v3222 = vadd.f32 %v3053, %v3221
  %v3223 = vpop.f32.mrf.mxu0
  %v3224 = vadd.f32 %v3055, %v3223
  %3225 = vmatmul.bf16.gmra.mxu0 %v2778
  %v3226 = vpop.f32.mrf.mxu0
  %v3227 = vadd.f32 %v3058, %v3226
  %v3228 = vpop.f32.mrf.mxu0
  %v3229 = vadd.f32 %v3060, %v3228
  %3230 = vmatmul.bf16.gmra.mxu0 %v2781
  %v3231 = vpop.f32.mrf.mxu0
  %v3232 = vadd.f32 %v3063, %v3231
  %v3233 = vpop.f32.mrf.mxu0
  %v3234 = vadd.f32 %v3065, %v3233
  %3235 = vmatmul.bf16.gmra.mxu0 %v2784
  %v3236 = vpop.f32.mrf.mxu0
  %v3237 = vadd.f32 %v3068, %v3236
  %v3238 = vpop.f32.mrf.mxu0
  %v3239 = vadd.f32 %v3070, %v3238
  %3240 = vmatmul.bf16.gmra.mxu0 %v2787
  %v3241 = vpop.f32.mrf.mxu0
  %v3242 = vadd.f32 %v3073, %v3241
  %v3243 = vpop.f32.mrf.mxu0
  %v3244 = vadd.f32 %v3075, %v3243
  %3245 = vmatmul.bf16.gmra.mxu0 %v2790
  %v3246 = vpop.f32.mrf.mxu0
  %v3247 = vadd.f32 %v3078, %v3246
  %v3248 = vpop.f32.mrf.mxu0
  %v3249 = vadd.f32 %v3080, %v3248
  %3250 = vmatmul.bf16.gmra.mxu0 %v2793
  %v3251 = vpop.f32.mrf.mxu0
  %v3252 = vadd.f32 %v3083, %v3251
  %v3253 = vpop.f32.mrf.mxu0
  %v3254 = vadd.f32 %v3085, %v3253
  %3255 = vmatmul.bf16.gmra.mxu0 %v2796
  %v3256 = vpop.f32.mrf.mxu0
  %v3257 = vadd.f32 %v3088, %v3256
  %v3258 = vpop.f32.mrf.mxu0
  %v3259 = vadd.f32 %v3090, %v3258
  %3260 = vmatmul.bf16.gmra.mxu0 %v2799
  %v3261 = vpop.f32.mrf.mxu0
  %v3262 = vadd.f32 %v3093, %v3261
  %v3263 = vpop.f32.mrf.mxu0
  %v3264 = vadd.f32 %v3095, %v3263
  %3265 = vmatmul.bf16.gmra.mxu0 %v2802
  %v3266 = vpop.f32.mrf.mxu0
  %v3267 = vadd.f32 %v3098, %v3266
  %v3268 = vpop.f32.mrf.mxu0
  %v3269 = vadd.f32 %v3100, %v3268
  %3270 = vmatmul.bf16.gmra.mxu0 %v2805
  %v3271 = vpop.f32.mrf.mxu0
  %v3272 = vadd.f32 %v3103, %v3271
  %v3273 = vpop.f32.mrf.mxu0
  %v3274 = vadd.f32 %v3105, %v3273
  %3275 = vmatmul.bf16.gmra.mxu0 %v2808
  %v3276 = vpop.f32.mrf.mxu0
  %v3277 = vadd.f32 %v3108, %v3276
  %v3278 = vpop.f32.mrf.mxu0
  %v3279 = vadd.f32 %v3110, %v3278
  %3280 = vmatmul.bf16.gmra.mxu0 %v2811
  %v3281 = vpop.f32.mrf.mxu0
  %v3282 = vadd.f32 %v3113, %v3281
  %v3283 = vpop.f32.mrf.mxu0
  %v3284 = vadd.f32 %v3115, %v3283
  %3285 = vmatmul.bf16.gmra.mxu0 %v2814
  %v3286 = vpop.f32.mrf.mxu0
  %v3287 = vadd.f32 %v3118, %v3286
  %v3288 = vpop.f32.mrf.mxu0
  %v3289 = vadd.f32 %v3120, %v3288
  %3290 = vmatmul.bf16.gmra.mxu0 %v2817
  %v3291 = vpop.f32.mrf.mxu0
  %v3292 = vadd.f32 %v3123, %v3291
  %v3293 = vpop.f32.mrf.mxu0
  %v3294 = vadd.f32 %v3125, %v3293
  %3295 = vmatmul.bf16.gmra.mxu0 %v2820
  %v3296 = vpop.f32.mrf.mxu0
  %v3297 = vadd.f32 %v3128, %v3296
  %v3298 = vpop.f32.mrf.mxu0
  %v3299 = vadd.f32 %v3130, %v3298
  %3300 = vmatmul.bf16.gmra.mxu0 %v2823
  %v3301 = vpop.f32.mrf.mxu0
  %v3302 = vadd.f32 %v3133, %v3301
  %v3303 = vpop.f32.mrf.mxu0
  %v3304 = vadd.f32 %v3135, %v3303
  %3305 = vmatmul.bf16.gmra.mxu0 %v2826
  %v3306 = vpop.f32.mrf.mxu0
  %v3307 = vadd.f32 %v3138, %v3306
  %v3308 = vpop.f32.mrf.mxu0
  %v3309 = vadd.f32 %v3140, %v3308
  %3310 = vmatmul.bf16.gmra.mxu0 %v2829
  %v3311 = vpop.f32.mrf.mxu0
  %v3312 = vadd.f32 %v3143, %v3311
  %v3313 = vpop.f32.mrf.mxu0
  %v3314 = vadd.f32 %v3145, %v3313
  %3315 = vmatmul.bf16.gmra.mxu0 %v2832
  %v3316 = vpop.f32.mrf.mxu0
  %v3317 = vadd.f32 %v3148, %v3316
  %v3318 = vpop.f32.mrf.mxu0
  %v3319 = vadd.f32 %v3150, %v3318
  %3320 = vmatmul.bf16.gmra.mxu0 %v2835
  %v3321 = vpop.f32.mrf.mxu0
  %v3322 = vadd.f32 %v3153, %v3321
  %v3323 = vpop.f32.mrf.mxu0
  %v3324 = vadd.f32 %v3155, %v3323
  %3325 = vmatmul.bf16.gmra.mxu0 %v2838
  %v3326 = vpop.f32.mrf.mxu0
  %v3327 = vadd.f32 %v3158, %v3326
  %v3328 = vpop.f32.mrf.mxu0
  %v3329 = vadd.f32 %v3160, %v3328
  %3330 = vmatmul.bf16.gmra.mxu0 %v2841
  %v3331 = vpop.f32.mrf.mxu0
  %v3332 = vadd.f32 %v3163, %v3331
  %v3333 = vpop.f32.mrf.mxu0
  %v3334 = vadd.f32 %v3165, %v3333
  %3335 = vmatmul.bf16.gmra.mxu0 %v2844
  %v3336 = vpop.f32.mrf.mxu0
  %v3337 = vadd.f32 %v3168, %v3336
  %v3338 = vpop.f32.mrf.mxu0
  %v3339 = vadd.f32 %v3170, %v3338
  %3340 = vmatmul.bf16.gmra.mxu0 %v2847
  %v3341 = vpop.f32.mrf.mxu0
  %v3342 = vadd.f32 %v3173, %v3341
  %v3343 = vpop.f32.mrf.mxu0
  %v3344 = vadd.f32 %v3175, %v3343
  %3345 = vmatmul.bf16.gmra.mxu0 %v2850
  %v3346 = vpop.f32.mrf.mxu0
  %v3347 = vadd.f32 %v3178, %v3346
  %v3348 = vpop.f32.mrf.mxu0
  %v3349 = vadd.f32 %v3180, %v3348
  %3350 = vmatmul.bf16.gmra.mxu0 %v2853
  %v3351 = vpop.f32.mrf.mxu0
  %v3352 = vadd.f32 %v3183, %v3351
  %v3353 = vpop.f32.mrf.mxu0
  %v3354 = vadd.f32 %v3185, %v3353
  %3355 = vmatmul.bf16.gmra.mxu0 %v2856
  %v3356 = vpop.f32.mrf.mxu0
  %v3357 = vadd.f32 %v3188, %v3356
  %v3358 = vpop.f32.mrf.mxu0
  %v3359 = vadd.f32 %v3190, %v3358
  %3360 = vmatmul.bf16.gmra.mxu0 %v2859
  %v3361 = vpop.f32.mrf.mxu0
  %v3362 = vadd.f32 %v3193, %v3361
  %v3363 = vpop.f32.mrf.mxu0
  %v3364 = vadd.f32 %v3195, %v3363
  %3365 = vmatmul.bf16.gmra.mxu0 %v2862
  %v3366 = vpop.f32.mrf.mxu0
  %v3367 = vadd.f32 %v3198, %v3366
  %v3368 = vpop.f32.mrf.mxu0
  %v3369 = vadd.f32 %v3200, %v3368
  %3370 = vdwg.mxu0
  %v3371 = vsel %vm2141, %v3212, 0.0
  %v3372 = vsel %vm2141, %v3214, 0.0
  %v3373 = vadd.f32 %v3371, %v3372
  %v3374 = vsel %vm2141, %v3217, 0.0
  %v3375 = vadd.f32 %v3373, %v3374
  %v3376 = vsel %vm2141, %v3219, 0.0
  %v3377 = vadd.f32 %v3375, %v3376
  %v3378 = vsel %vm2141, %v3222, 0.0
  %v3379 = vadd.f32 %v3377, %v3378
  %v3380 = vsel %vm2141, %v3224, 0.0
  %v3381 = vadd.f32 %v3379, %v3380
  %v3382 = vsel %vm2141, %v3227, 0.0
  %v3383 = vadd.f32 %v3381, %v3382
  %v3384 = vsel %vm2141, %v3229, 0.0
  %v3385 = vadd.f32 %v3383, %v3384
  %v3386 = vsel %vm2141, %v3232, 0.0
  %v3387 = vadd.f32 %v3385, %v3386
  %v3388 = vsel %vm2141, %v3234, 0.0
  %v3389 = vadd.f32 %v3387, %v3388
  %v3390 = vsel %vm2141, %v3237, 0.0
  %v3391 = vadd.f32 %v3389, %v3390
  %v3392 = vsel %vm2141, %v3239, 0.0
  %v3393 = vadd.f32 %v3391, %v3392
  %v3394 = vsel %vm2141, %v3242, 0.0
  %v3395 = vadd.f32 %v3393, %v3394
  %v3396 = vsel %vm2141, %v3244, 0.0
  %v3397 = vadd.f32 %v3395, %v3396
  %v3398 = vsel %vm2141, %v3247, 0.0
  %v3399 = vadd.f32 %v3397, %v3398
  %v3400 = vsel %vm2141, %v3249, 0.0
  %v3401 = vadd.f32 %v3399, %v3400
  %v3402 = vsel %vm2141, %v3252, 0.0
  %v3403 = vadd.f32 %v3401, %v3402
  %v3404 = vsel %vm2141, %v3254, 0.0
  %v3405 = vadd.f32 %v3403, %v3404
  %v3406 = vsel %vm2141, %v3257, 0.0
  %v3407 = vadd.f32 %v3405, %v3406
  %v3408 = vsel %vm2141, %v3259, 0.0
  %v3409 = vadd.f32 %v3407, %v3408
  %v3410 = vsel %vm2141, %v3262, 0.0
  %v3411 = vadd.f32 %v3409, %v3410
  %v3412 = vsel %vm2141, %v3264, 0.0
  %v3413 = vadd.f32 %v3411, %v3412
  %v3414 = vsel %vm2141, %v3267, 0.0
  %v3415 = vadd.f32 %v3413, %v3414
  %v3416 = vsel %vm2141, %v3269, 0.0
  %v3417 = vadd.f32 %v3415, %v3416
  %v3418 = vsel %vm2141, %v3272, 0.0
  %v3419 = vadd.f32 %v3417, %v3418
  %v3420 = vsel %vm2141, %v3274, 0.0
  %v3421 = vadd.f32 %v3419, %v3420
  %v3422 = vsel %vm2141, %v3277, 0.0
  %v3423 = vadd.f32 %v3421, %v3422
  %v3424 = vsel %vm2141, %v3279, 0.0
  %v3425 = vadd.f32 %v3423, %v3424
  %v3426 = vsel %vm2141, %v3282, 0.0
  %v3427 = vadd.f32 %v3425, %v3426
  %v3428 = vsel %vm2141, %v3284, 0.0
  %v3429 = vadd.f32 %v3427, %v3428
  %v3430 = vsel %vm2141, %v3287, 0.0
  %v3431 = vadd.f32 %v3429, %v3430
  %v3432 = vsel %vm2141, %v3289, 0.0
  %v3433 = vadd.f32 %v3431, %v3432
  %v3434 = vsel %vm2141, %v3292, 0.0
  %v3435 = vadd.f32 %v3433, %v3434
  %v3436 = vsel %vm2141, %v3294, 0.0
  %v3437 = vadd.f32 %v3435, %v3436
  %v3438 = vsel %vm2141, %v3297, 0.0
  %v3439 = vadd.f32 %v3437, %v3438
  %v3440 = vsel %vm2141, %v3299, 0.0
  %v3441 = vadd.f32 %v3439, %v3440
  %v3442 = vsel %vm2141, %v3302, 0.0
  %v3443 = vadd.f32 %v3441, %v3442
  %v3444 = vsel %vm2141, %v3304, 0.0
  %v3445 = vadd.f32 %v3443, %v3444
  %v3446 = vsel %vm2141, %v3307, 0.0
  %v3447 = vadd.f32 %v3445, %v3446
  %v3448 = vsel %vm2141, %v3309, 0.0
  %v3449 = vadd.f32 %v3447, %v3448
  %v3450 = vsel %vm2141, %v3312, 0.0
  %v3451 = vadd.f32 %v3449, %v3450
  %v3452 = vsel %vm2141, %v3314, 0.0
  %v3453 = vadd.f32 %v3451, %v3452
  %v3454 = vsel %vm2141, %v3317, 0.0
  %v3455 = vadd.f32 %v3453, %v3454
  %v3456 = vsel %vm2141, %v3319, 0.0
  %v3457 = vadd.f32 %v3455, %v3456
  %v3458 = vsel %vm2141, %v3322, 0.0
  %v3459 = vadd.f32 %v3457, %v3458
  %v3460 = vsel %vm2141, %v3324, 0.0
  %v3461 = vadd.f32 %v3459, %v3460
  %v3462 = vsel %vm2141, %v3327, 0.0
  %v3463 = vadd.f32 %v3461, %v3462
  %v3464 = vsel %vm2141, %v3329, 0.0
  %v3465 = vadd.f32 %v3463, %v3464
  %v3466 = vsel %vm2141, %v3332, 0.0
  %v3467 = vadd.f32 %v3465, %v3466
  %v3468 = vsel %vm2141, %v3334, 0.0
  %v3469 = vadd.f32 %v3467, %v3468
  %v3470 = vsel %vm2141, %v3337, 0.0
  %v3471 = vadd.f32 %v3469, %v3470
  %v3472 = vsel %vm2141, %v3339, 0.0
  %v3473 = vadd.f32 %v3471, %v3472
  %v3474 = vsel %vm2141, %v3342, 0.0
  %v3475 = vadd.f32 %v3473, %v3474
  %v3476 = vsel %vm2141, %v3344, 0.0
  %v3477 = vadd.f32 %v3475, %v3476
  %v3478 = vsel %vm2141, %v3347, 0.0
  %v3479 = vadd.f32 %v3477, %v3478
  %v3480 = vsel %vm2141, %v3349, 0.0
  %v3481 = vadd.f32 %v3479, %v3480
  %v3482 = vsel %vm2141, %v3352, 0.0
  %v3483 = vadd.f32 %v3481, %v3482
  %v3484 = vsel %vm2141, %v3354, 0.0
  %v3485 = vadd.f32 %v3483, %v3484
  %v3486 = vsel %vm2141, %v3357, 0.0
  %v3487 = vadd.f32 %v3485, %v3486
  %v3488 = vsel %vm2141, %v3359, 0.0
  %v3489 = vadd.f32 %v3487, %v3488
  %v3490 = vsel %vm2141, %v3362, 0.0
  %v3491 = vadd.f32 %v3489, %v3490
  %v3492 = vsel %vm2141, %v3364, 0.0
  %v3493 = vadd.f32 %v3491, %v3492
  %v3494 = vsel %vm2141, %v3367, 0.0
  %v3495 = vadd.f32 %v3493, %v3494
  %v3496 = vsel %vm2141, %v3369, 0.0
  %v3497 = vadd.f32 %v3495, %v3496
  %v3498 = vrot.slane %v3497, 4
  %v3499 = vadd.f32 %v3497, %v3498
  %v3500 = vrot.slane %v3499, 2
  %v3501 = vadd.f32 %v3499, %v3500
  %v3502 = vrot.slane %v3501, 1
  %v3503 = vadd.f32 %v3501, %v3502
  %v3504 = vmul.f32 %v3503, 0.001953125
  %v3505 = vmul.f32 %v3212, %v3212
  %v3506 = vmul.f32 %v3214, %v3214
  %v3507 = vmul.f32 %v3217, %v3217
  %v3508 = vmul.f32 %v3219, %v3219
  %v3509 = vmul.f32 %v3222, %v3222
  %v3510 = vmul.f32 %v3224, %v3224
  %v3511 = vmul.f32 %v3227, %v3227
  %v3512 = vmul.f32 %v3229, %v3229
  %v3513 = vmul.f32 %v3232, %v3232
  %v3514 = vmul.f32 %v3234, %v3234
  %v3515 = vmul.f32 %v3237, %v3237
  %v3516 = vmul.f32 %v3239, %v3239
  %v3517 = vmul.f32 %v3242, %v3242
  %v3518 = vmul.f32 %v3244, %v3244
  %v3519 = vmul.f32 %v3247, %v3247
  %v3520 = vmul.f32 %v3249, %v3249
  %v3521 = vmul.f32 %v3252, %v3252
  %v3522 = vmul.f32 %v3254, %v3254
  %v3523 = vmul.f32 %v3257, %v3257
  %v3524 = vmul.f32 %v3259, %v3259
  %v3525 = vmul.f32 %v3262, %v3262
  %v3526 = vmul.f32 %v3264, %v3264
  %v3527 = vmul.f32 %v3267, %v3267
  %v3528 = vmul.f32 %v3269, %v3269
  %v3529 = vmul.f32 %v3272, %v3272
  %v3530 = vmul.f32 %v3274, %v3274
  %v3531 = vmul.f32 %v3277, %v3277
  %v3532 = vmul.f32 %v3279, %v3279
  %v3533 = vmul.f32 %v3282, %v3282
  %v3534 = vmul.f32 %v3284, %v3284
  %v3535 = vmul.f32 %v3287, %v3287
  %v3536 = vmul.f32 %v3289, %v3289
  %v3537 = vmul.f32 %v3292, %v3292
  %v3538 = vmul.f32 %v3294, %v3294
  %v3539 = vmul.f32 %v3297, %v3297
  %v3540 = vmul.f32 %v3299, %v3299
  %v3541 = vmul.f32 %v3302, %v3302
  %v3542 = vmul.f32 %v3304, %v3304
  %v3543 = vmul.f32 %v3307, %v3307
  %v3544 = vmul.f32 %v3309, %v3309
  %v3545 = vmul.f32 %v3312, %v3312
  %v3546 = vmul.f32 %v3314, %v3314
  %v3547 = vmul.f32 %v3317, %v3317
  %v3548 = vmul.f32 %v3319, %v3319
  %v3549 = vmul.f32 %v3322, %v3322
  %v3550 = vmul.f32 %v3324, %v3324
  %v3551 = vmul.f32 %v3327, %v3327
  %v3552 = vmul.f32 %v3329, %v3329
  %v3553 = vmul.f32 %v3332, %v3332
  %v3554 = vmul.f32 %v3334, %v3334
  %v3555 = vmul.f32 %v3337, %v3337
  %v3556 = vmul.f32 %v3339, %v3339
  %v3557 = vmul.f32 %v3342, %v3342
  %v3558 = vmul.f32 %v3344, %v3344
  %v3559 = vmul.f32 %v3347, %v3347
  %v3560 = vmul.f32 %v3349, %v3349
  %v3561 = vmul.f32 %v3352, %v3352
  %v3562 = vmul.f32 %v3354, %v3354
  %v3563 = vmul.f32 %v3357, %v3357
  %v3564 = vmul.f32 %v3359, %v3359
  %v3565 = vmul.f32 %v3362, %v3362
  %v3566 = vmul.f32 %v3364, %v3364
  %v3567 = vmul.f32 %v3367, %v3367
  %v3568 = vmul.f32 %v3369, %v3369
  %v3569 = vsel %vm2141, %v3505, 0.0
  %v3570 = vsel %vm2141, %v3506, 0.0
  %v3571 = vadd.f32 %v3569, %v3570
  %v3572 = vsel %vm2141, %v3507, 0.0
  %v3573 = vadd.f32 %v3571, %v3572
  %v3574 = vsel %vm2141, %v3508, 0.0
  %v3575 = vadd.f32 %v3573, %v3574
  %v3576 = vsel %vm2141, %v3509, 0.0
  %v3577 = vadd.f32 %v3575, %v3576
  %v3578 = vsel %vm2141, %v3510, 0.0
  %v3579 = vadd.f32 %v3577, %v3578
  %v3580 = vsel %vm2141, %v3511, 0.0
  %v3581 = vadd.f32 %v3579, %v3580
  %v3582 = vsel %vm2141, %v3512, 0.0
  %v3583 = vadd.f32 %v3581, %v3582
  %v3584 = vsel %vm2141, %v3513, 0.0
  %v3585 = vadd.f32 %v3583, %v3584
  %v3586 = vsel %vm2141, %v3514, 0.0
  %v3587 = vadd.f32 %v3585, %v3586
  %v3588 = vsel %vm2141, %v3515, 0.0
  %v3589 = vadd.f32 %v3587, %v3588
  %v3590 = vsel %vm2141, %v3516, 0.0
  %v3591 = vadd.f32 %v3589, %v3590
  %v3592 = vsel %vm2141, %v3517, 0.0
  %v3593 = vadd.f32 %v3591, %v3592
  %v3594 = vsel %vm2141, %v3518, 0.0
  %v3595 = vadd.f32 %v3593, %v3594
  %v3596 = vsel %vm2141, %v3519, 0.0
  %v3597 = vadd.f32 %v3595, %v3596
  %v3598 = vsel %vm2141, %v3520, 0.0
  %v3599 = vadd.f32 %v3597, %v3598
  %v3600 = vsel %vm2141, %v3521, 0.0
  %v3601 = vadd.f32 %v3599, %v3600
  %v3602 = vsel %vm2141, %v3522, 0.0
  %v3603 = vadd.f32 %v3601, %v3602
  %v3604 = vsel %vm2141, %v3523, 0.0
  %v3605 = vadd.f32 %v3603, %v3604
  %v3606 = vsel %vm2141, %v3524, 0.0
  %v3607 = vadd.f32 %v3605, %v3606
  %v3608 = vsel %vm2141, %v3525, 0.0
  %v3609 = vadd.f32 %v3607, %v3608
  %v3610 = vsel %vm2141, %v3526, 0.0
  %v3611 = vadd.f32 %v3609, %v3610
  %v3612 = vsel %vm2141, %v3527, 0.0
  %v3613 = vadd.f32 %v3611, %v3612
  %v3614 = vsel %vm2141, %v3528, 0.0
  %v3615 = vadd.f32 %v3613, %v3614
  %v3616 = vsel %vm2141, %v3529, 0.0
  %v3617 = vadd.f32 %v3615, %v3616
  %v3618 = vsel %vm2141, %v3530, 0.0
  %v3619 = vadd.f32 %v3617, %v3618
  %v3620 = vsel %vm2141, %v3531, 0.0
  %v3621 = vadd.f32 %v3619, %v3620
  %v3622 = vsel %vm2141, %v3532, 0.0
  %v3623 = vadd.f32 %v3621, %v3622
  %v3624 = vsel %vm2141, %v3533, 0.0
  %v3625 = vadd.f32 %v3623, %v3624
  %v3626 = vsel %vm2141, %v3534, 0.0
  %v3627 = vadd.f32 %v3625, %v3626
  %v3628 = vsel %vm2141, %v3535, 0.0
  %v3629 = vadd.f32 %v3627, %v3628
  %v3630 = vsel %vm2141, %v3536, 0.0
  %v3631 = vadd.f32 %v3629, %v3630
  %v3632 = vsel %vm2141, %v3537, 0.0
  %v3633 = vadd.f32 %v3631, %v3632
  %v3634 = vsel %vm2141, %v3538, 0.0
  %v3635 = vadd.f32 %v3633, %v3634
  %v3636 = vsel %vm2141, %v3539, 0.0
  %v3637 = vadd.f32 %v3635, %v3636
  %v3638 = vsel %vm2141, %v3540, 0.0
  %v3639 = vadd.f32 %v3637, %v3638
  %v3640 = vsel %vm2141, %v3541, 0.0
  %v3641 = vadd.f32 %v3639, %v3640
  %v3642 = vsel %vm2141, %v3542, 0.0
  %v3643 = vadd.f32 %v3641, %v3642
  %v3644 = vsel %vm2141, %v3543, 0.0
  %v3645 = vadd.f32 %v3643, %v3644
  %v3646 = vsel %vm2141, %v3544, 0.0
  %v3647 = vadd.f32 %v3645, %v3646
  %v3648 = vsel %vm2141, %v3545, 0.0
  %v3649 = vadd.f32 %v3647, %v3648
  %v3650 = vsel %vm2141, %v3546, 0.0
  %v3651 = vadd.f32 %v3649, %v3650
  %v3652 = vsel %vm2141, %v3547, 0.0
  %v3653 = vadd.f32 %v3651, %v3652
  %v3654 = vsel %vm2141, %v3548, 0.0
  %v3655 = vadd.f32 %v3653, %v3654
  %v3656 = vsel %vm2141, %v3549, 0.0
  %v3657 = vadd.f32 %v3655, %v3656
  %v3658 = vsel %vm2141, %v3550, 0.0
  %v3659 = vadd.f32 %v3657, %v3658
  %v3660 = vsel %vm2141, %v3551, 0.0
  %v3661 = vadd.f32 %v3659, %v3660
  %v3662 = vsel %vm2141, %v3552, 0.0
  %v3663 = vadd.f32 %v3661, %v3662
  %v3664 = vsel %vm2141, %v3553, 0.0
  %v3665 = vadd.f32 %v3663, %v3664
  %v3666 = vsel %vm2141, %v3554, 0.0
  %v3667 = vadd.f32 %v3665, %v3666
  %v3668 = vsel %vm2141, %v3555, 0.0
  %v3669 = vadd.f32 %v3667, %v3668
  %v3670 = vsel %vm2141, %v3556, 0.0
  %v3671 = vadd.f32 %v3669, %v3670
  %v3672 = vsel %vm2141, %v3557, 0.0
  %v3673 = vadd.f32 %v3671, %v3672
  %v3674 = vsel %vm2141, %v3558, 0.0
  %v3675 = vadd.f32 %v3673, %v3674
  %v3676 = vsel %vm2141, %v3559, 0.0
  %v3677 = vadd.f32 %v3675, %v3676
  %v3678 = vsel %vm2141, %v3560, 0.0
  %v3679 = vadd.f32 %v3677, %v3678
  %v3680 = vsel %vm2141, %v3561, 0.0
  %v3681 = vadd.f32 %v3679, %v3680
  %v3682 = vsel %vm2141, %v3562, 0.0
  %v3683 = vadd.f32 %v3681, %v3682
  %v3684 = vsel %vm2141, %v3563, 0.0
  %v3685 = vadd.f32 %v3683, %v3684
  %v3686 = vsel %vm2141, %v3564, 0.0
  %v3687 = vadd.f32 %v3685, %v3686
  %v3688 = vsel %vm2141, %v3565, 0.0
  %v3689 = vadd.f32 %v3687, %v3688
  %v3690 = vsel %vm2141, %v3566, 0.0
  %v3691 = vadd.f32 %v3689, %v3690
  %v3692 = vsel %vm2141, %v3567, 0.0
  %v3693 = vadd.f32 %v3691, %v3692
  %v3694 = vsel %vm2141, %v3568, 0.0
  %v3695 = vadd.f32 %v3693, %v3694
  %v3696 = vrot.slane %v3695, 4
  %v3697 = vadd.f32 %v3695, %v3696
  %v3698 = vrot.slane %v3697, 2
  %v3699 = vadd.f32 %v3697, %v3698
  %v3700 = vrot.slane %v3699, 1
  %v3701 = vadd.f32 %v3699, %v3700
  %v3702 = vmul.f32 %v3701, 0.001953125
  %v3703 = vmul.f32 %v3504, %v3504
  %v3704 = vsub.f32 %v3702, %v3703
  %v3705 = vld [vmem:[%s2] sm:$0x1]
  %v3706 = vadd.f32 %v3704, 1e-05
  %v3707 = vrsqrt.pop %v3706
  %v3708 = vmul.f32 %v3707, %v3706
  %v3709 = vmul.f32 %v3708, %v3707
  %v3710 = vmul.f32 0.5, %v3709
  %v3711 = vsub.f32 1.5, %v3710
  %v3712 = vmul.f32 %v3707, %v3711
  %vm3713 = vweird.f32 %v3706
  %vm3714 = vweird.f32 %v3707
  %vm3715 = vmor %vm3713, %vm3714
  %v3716 = vsel %vm3715, %v3707, %v3712
  %v3717 = vmul.f32 %v3705, %v3716
  %v3718 = vld [vmem:[%s3] sm:$0x1]
  %v3719 = vmul.f32 %v3504, %v3717
  %v3720 = vsub.f32 %v3718, %v3719
  %v3722 = vperm.slane %v3717, 0
  %v3724 = vmul.f32 %v3212, %v3722
  %v3725 = vmul.f32 %v3214, %v3722
  %v3726 = vmul.f32 %v3217, %v3722
  %v3727 = vmul.f32 %v3219, %v3722
  %v3728 = vmul.f32 %v3222, %v3722
  %v3729 = vmul.f32 %v3224, %v3722
  %v3730 = vmul.f32 %v3227, %v3722
  %v3731 = vmul.f32 %v3229, %v3722
  %v3732 = vmul.f32 %v3232, %v3722
  %v3733 = vmul.f32 %v3234, %v3722
  %v3734 = vmul.f32 %v3237, %v3722
  %v3735 = vmul.f32 %v3239, %v3722
  %v3736 = vmul.f32 %v3242, %v3722
  %v3737 = vmul.f32 %v3244, %v3722
  %v3738 = vmul.f32 %v3247, %v3722
  %v3739 = vmul.f32 %v3249, %v3722
  %v3740 = vmul.f32 %v3252, %v3722
  %v3741 = vmul.f32 %v3254, %v3722
  %v3742 = vmul.f32 %v3257, %v3722
  %v3743 = vmul.f32 %v3259, %v3722
  %v3744 = vmul.f32 %v3262, %v3722
  %v3745 = vmul.f32 %v3264, %v3722
  %v3746 = vmul.f32 %v3267, %v3722
  %v3747 = vmul.f32 %v3269, %v3722
  %v3748 = vmul.f32 %v3272, %v3722
  %v3749 = vmul.f32 %v3274, %v3722
  %v3750 = vmul.f32 %v3277, %v3722
  %v3751 = vmul.f32 %v3279, %v3722
  %v3752 = vmul.f32 %v3282, %v3722
  %v3753 = vmul.f32 %v3284, %v3722
  %v3754 = vmul.f32 %v3287, %v3722
  %v3755 = vmul.f32 %v3289, %v3722
  %v3756 = vmul.f32 %v3292, %v3722
  %v3757 = vmul.f32 %v3294, %v3722
  %v3758 = vmul.f32 %v3297, %v3722
  %v3759 = vmul.f32 %v3299, %v3722
  %v3760 = vmul.f32 %v3302, %v3722
  %v3761 = vmul.f32 %v3304, %v3722
  %v3762 = vmul.f32 %v3307, %v3722
  %v3763 = vmul.f32 %v3309, %v3722
  %v3764 = vmul.f32 %v3312, %v3722
  %v3765 = vmul.f32 %v3314, %v3722
  %v3766 = vmul.f32 %v3317, %v3722
  %v3767 = vmul.f32 %v3319, %v3722
  %v3768 = vmul.f32 %v3322, %v3722
  %v3769 = vmul.f32 %v3324, %v3722
  %v3770 = vmul.f32 %v3327, %v3722
  %v3771 = vmul.f32 %v3329, %v3722
  %v3772 = vmul.f32 %v3332, %v3722
  %v3773 = vmul.f32 %v3334, %v3722
  %v3774 = vmul.f32 %v3337, %v3722
  %v3775 = vmul.f32 %v3339, %v3722
  %v3776 = vmul.f32 %v3342, %v3722
  %v3777 = vmul.f32 %v3344, %v3722
  %v3778 = vmul.f32 %v3347, %v3722
  %v3779 = vmul.f32 %v3349, %v3722
  %v3780 = vmul.f32 %v3352, %v3722
  %v3781 = vmul.f32 %v3354, %v3722
  %v3782 = vmul.f32 %v3357, %v3722
  %v3783 = vmul.f32 %v3359, %v3722
  %v3784 = vmul.f32 %v3362, %v3722
  %v3785 = vmul.f32 %v3364, %v3722
  %v3786 = vmul.f32 %v3367, %v3722
  %v3787 = vmul.f32 %v3369, %v3722
  %v3789 = vperm.slane %v3720, 0
  %v3791 = vadd.f32 %v3724, %v3789
  %v3792 = vadd.f32 %v3725, %v3789
  %v3793 = vadd.f32 %v3726, %v3789
  %v3794 = vadd.f32 %v3727, %v3789
  %v3795 = vadd.f32 %v3728, %v3789
  %v3796 = vadd.f32 %v3729, %v3789
  %v3797 = vadd.f32 %v3730, %v3789
  %v3798 = vadd.f32 %v3731, %v3789
  %v3799 = vadd.f32 %v3732, %v3789
  %v3800 = vadd.f32 %v3733, %v3789
  %v3801 = vadd.f32 %v3734, %v3789
  %v3802 = vadd.f32 %v3735, %v3789
  %v3803 = vadd.f32 %v3736, %v3789
  %v3804 = vadd.f32 %v3737, %v3789
  %v3805 = vadd.f32 %v3738, %v3789
  %v3806 = vadd.f32 %v3739, %v3789
  %v3807 = vadd.f32 %v3740, %v3789
  %v3808 = vadd.f32 %v3741, %v3789
  %v3809 = vadd.f32 %v3742, %v3789
  %v3810 = vadd.f32 %v3743, %v3789
  %v3811 = vadd.f32 %v3744, %v3789
  %v3812 = vadd.f32 %v3745, %v3789
  %v3813 = vadd.f32 %v3746, %v3789
  %v3814 = vadd.f32 %v3747, %v3789
  %v3815 = vadd.f32 %v3748, %v3789
  %v3816 = vadd.f32 %v3749, %v3789
  %v3817 = vadd.f32 %v3750, %v3789
  %v3818 = vadd.f32 %v3751, %v3789
  %v3819 = vadd.f32 %v3752, %v3789
  %v3820 = vadd.f32 %v3753, %v3789
  %v3821 = vadd.f32 %v3754, %v3789
  %v3822 = vadd.f32 %v3755, %v3789
  %v3823 = vadd.f32 %v3756, %v3789
  %v3824 = vadd.f32 %v3757, %v3789
  %v3825 = vadd.f32 %v3758, %v3789
  %v3826 = vadd.f32 %v3759, %v3789
  %v3827 = vadd.f32 %v3760, %v3789
  %v3828 = vadd.f32 %v3761, %v3789
  %v3829 = vadd.f32 %v3762, %v3789
  %v3830 = vadd.f32 %v3763, %v3789
  %v3831 = vadd.f32 %v3764, %v3789
  %v3832 = vadd.f32 %v3765, %v3789
  %v3833 = vadd.f32 %v3766, %v3789
  %v3834 = vadd.f32 %v3767, %v3789
  %v3835 = vadd.f32 %v3768, %v3789
  %v3836 = vadd.f32 %v3769, %v3789
  %v3837 = vadd.f32 %v3770, %v3789
  %v3838 = vadd.f32 %v3771, %v3789
  %v3839 = vadd.f32 %v3772, %v3789
  %v3840 = vadd.f32 %v3773, %v3789
  %v3841 = vadd.f32 %v3774, %v3789
  %v3842 = vadd.f32 %v3775, %v3789
  %v3843 = vadd.f32 %v3776, %v3789
  %v3844 = vadd.f32 %v3777, %v3789
  %v3845 = vadd.f32 %v3778, %v3789
  %v3846 = vadd.f32 %v3779, %v3789
  %v3847 = vadd.f32 %v3780, %v3789
  %v3848 = vadd.f32 %v3781, %v3789
  %v3849 = vadd.f32 %v3782, %v3789
  %v3850 = vadd.f32 %v3783, %v3789
  %v3851 = vadd.f32 %v3784, %v3789
  %v3852 = vadd.f32 %v3785, %v3789
  %v3853 = vadd.f32 %v3786, %v3789
  %v3854 = vadd.f32 %v3787, %v3789
  %v3855 = vmax.f32 %v3791, 0.0
  %v3856 = vmax.f32 %v3792, 0.0
  %v3857 = vmax.f32 %v3793, 0.0
  %v3858 = vmax.f32 %v3794, 0.0
  %v3859 = vmax.f32 %v3795, 0.0
  %v3860 = vmax.f32 %v3796, 0.0
  %v3861 = vmax.f32 %v3797, 0.0
  %v3862 = vmax.f32 %v3798, 0.0
  %v3863 = vmax.f32 %v3799, 0.0
  %v3864 = vmax.f32 %v3800, 0.0
  %v3865 = vmax.f32 %v3801, 0.0
  %v3866 = vmax.f32 %v3802, 0.0
  %v3867 = vmax.f32 %v3803, 0.0
  %v3868 = vmax.f32 %v3804, 0.0
  %v3869 = vmax.f32 %v3805, 0.0
  %v3870 = vmax.f32 %v3806, 0.0
  %v3871 = vmax.f32 %v3807, 0.0
  %v3872 = vmax.f32 %v3808, 0.0
  %v3873 = vmax.f32 %v3809, 0.0
  %v3874 = vmax.f32 %v3810, 0.0
  %v3875 = vmax.f32 %v3811, 0.0
  %v3876 = vmax.f32 %v3812, 0.0
  %v3877 = vmax.f32 %v3813, 0.0
  %v3878 = vmax.f32 %v3814, 0.0
  %v3879 = vmax.f32 %v3815, 0.0
  %v3880 = vmax.f32 %v3816, 0.0
  %v3881 = vmax.f32 %v3817, 0.0
  %v3882 = vmax.f32 %v3818, 0.0
  %v3883 = vmax.f32 %v3819, 0.0
  %v3884 = vmax.f32 %v3820, 0.0
  %v3885 = vmax.f32 %v3821, 0.0
  %v3886 = vmax.f32 %v3822, 0.0
  %v3887 = vmax.f32 %v3823, 0.0
  %v3888 = vmax.f32 %v3824, 0.0
  %v3889 = vmax.f32 %v3825, 0.0
  %v3890 = vmax.f32 %v3826, 0.0
  %v3891 = vmax.f32 %v3827, 0.0
  %v3892 = vmax.f32 %v3828, 0.0
  %v3893 = vmax.f32 %v3829, 0.0
  %v3894 = vmax.f32 %v3830, 0.0
  %v3895 = vmax.f32 %v3831, 0.0
  %v3896 = vmax.f32 %v3832, 0.0
  %v3897 = vmax.f32 %v3833, 0.0
  %v3898 = vmax.f32 %v3834, 0.0
  %v3899 = vmax.f32 %v3835, 0.0
  %v3900 = vmax.f32 %v3836, 0.0
  %v3901 = vmax.f32 %v3837, 0.0
  %v3902 = vmax.f32 %v3838, 0.0
  %v3903 = vmax.f32 %v3839, 0.0
  %v3904 = vmax.f32 %v3840, 0.0
  %v3905 = vmax.f32 %v3841, 0.0
  %v3906 = vmax.f32 %v3842, 0.0
  %v3907 = vmax.f32 %v3843, 0.0
  %v3908 = vmax.f32 %v3844, 0.0
  %v3909 = vmax.f32 %v3845, 0.0
  %v3910 = vmax.f32 %v3846, 0.0
  %v3911 = vmax.f32 %v3847, 0.0
  %v3912 = vmax.f32 %v3848, 0.0
  %v3913 = vmax.f32 %v3849, 0.0
  %v3914 = vmax.f32 %v3850, 0.0
  %v3915 = vmax.f32 %v3851, 0.0
  %v3916 = vmax.f32 %v3852, 0.0
  %v3917 = vmax.f32 %v3853, 0.0
  %v3918 = vmax.f32 %v3854, 0.0
  %vm3984 = vcmask 1040384
  %v3985 = vrot.slane 0.0, 7
  %v3986 = vsel %vm3984, %v3985, %v3985
  %v3987 = vrot.slane %v3855, 7
  %v3988 = vrot.slane %v3856, 7
  %v3989 = vsel %vm3984, %v3987, %v3988
  %v3990 = vrot.slane %v3857, 7
  %v3991 = vrot.slane %v3858, 7
  %v3992 = vsel %vm3984, %v3990, %v3991
  %v3993 = vrot.slane %v3859, 7
  %v3994 = vrot.slane %v3860, 7
  %v3995 = vsel %vm3984, %v3993, %v3994
  %v3996 = vrot.slane %v3861, 7
  %v3997 = vrot.slane %v3862, 7
  %v3998 = vsel %vm3984, %v3996, %v3997
  %v3999 = vrot.slane %v3863, 7
  %v4000 = vrot.slane %v3864, 7
  %v4001 = vsel %vm3984, %v3999, %v4000
  %v4002 = vrot.slane %v3865, 7
  %v4003 = vrot.slane %v3866, 7
  %v4004 = vsel %vm3984, %v4002, %v4003
  %v4005 = vrot.slane %v3867, 7
  %v4006 = vrot.slane %v3868, 7
  %v4007 = vsel %vm3984, %v4005, %v4006
  %v4008 = vrot.slane %v3869, 7
  %v4009 = vrot.slane %v3870, 7
  %v4010 = vsel %vm3984, %v4008, %v4009
  %v4011 = vrot.slane %v3871, 7
  %v4012 = vrot.slane %v3872, 7
  %v4013 = vsel %vm3984, %v4011, %v4012
  %v4014 = vrot.slane %v3873, 7
  %v4015 = vrot.slane %v3874, 7
  %v4016 = vsel %vm3984, %v4014, %v4015
  %v4017 = vrot.slane %v3875, 7
  %v4018 = vrot.slane %v3876, 7
  %v4019 = vsel %vm3984, %v4017, %v4018
  %v4020 = vrot.slane %v3877, 7
  %v4021 = vrot.slane %v3878, 7
  %v4022 = vsel %vm3984, %v4020, %v4021
  %v4023 = vrot.slane %v3879, 7
  %v4024 = vrot.slane %v3880, 7
  %v4025 = vsel %vm3984, %v4023, %v4024
  %v4026 = vrot.slane %v3881, 7
  %v4027 = vrot.slane %v3882, 7
  %v4028 = vsel %vm3984, %v4026, %v4027
  %v4029 = vrot.slane %v3883, 7
  %v4030 = vrot.slane %v3884, 7
  %v4031 = vsel %vm3984, %v4029, %v4030
  %v4032 = vrot.slane %v3885, 7
  %v4033 = vrot.slane %v3886, 7
  %v4034 = vsel %vm3984, %v4032, %v4033
  %v4035 = vrot.slane %v3887, 7
  %v4036 = vrot.slane %v3888, 7
  %v4037 = vsel %vm3984, %v4035, %v4036
  %v4038 = vrot.slane %v3889, 7
  %v4039 = vrot.slane %v3890, 7
  %v4040 = vsel %vm3984, %v4038, %v4039
  %v4041 = vrot.slane %v3891, 7
  %v4042 = vrot.slane %v3892, 7
  %v4043 = vsel %vm3984, %v4041, %v4042
  %v4044 = vrot.slane %v3893, 7
  %v4045 = vrot.slane %v3894, 7
  %v4046 = vsel %vm3984, %v4044, %v4045
  %v4047 = vrot.slane %v3895, 7
  %v4048 = vrot.slane %v3896, 7
  %v4049 = vsel %vm3984, %v4047, %v4048
  %v4050 = vrot.slane %v3897, 7
  %v4051 = vrot.slane %v3898, 7
  %v4052 = vsel %vm3984, %v4050, %v4051
  %v4053 = vrot.slane %v3899, 7
  %v4054 = vrot.slane %v3900, 7
  %v4055 = vsel %vm3984, %v4053, %v4054
  %v4056 = vrot.slane %v3901, 7
  %v4057 = vrot.slane %v3902, 7
  %v4058 = vsel %vm3984, %v4056, %v4057
  %v4059 = vrot.slane %v3903, 7
  %v4060 = vrot.slane %v3904, 7
  %v4061 = vsel %vm3984, %v4059, %v4060
  %v4062 = vrot.slane %v3905, 7
  %v4063 = vrot.slane %v3906, 7
  %v4064 = vsel %vm3984, %v4062, %v4063
  %v4065 = vrot.slane %v3907, 7
  %v4066 = vrot.slane %v3908, 7
  %v4067 = vsel %vm3984, %v4065, %v4066
  %v4068 = vrot.slane %v3909, 7
  %v4069 = vrot.slane %v3910, 7
  %v4070 = vsel %vm3984, %v4068, %v4069
  %v4071 = vrot.slane %v3911, 7
  %v4072 = vrot.slane %v3912, 7
  %v4073 = vsel %vm3984, %v4071, %v4072
  %v4074 = vrot.slane %v3913, 7
  %v4075 = vrot.slane %v3914, 7
  %v4076 = vsel %vm3984, %v4074, %v4075
  %v4077 = vrot.slane %v3915, 7
  %v4078 = vrot.slane %v3916, 7
  %v4079 = vsel %vm3984, %v4077, %v4078
  %v4080 = vrot.slane %v3917, 7
  %v4081 = vrot.slane %v3918, 7
  %v4082 = vsel %vm3984, %v4080, %v4081
  %v4179 = vsel %vm3984, 0.0, %v3985
  %v4180 = vsel %vm3984, 0.0, %v3987
  %v4181 = vsel %vm3984, 0.0, %v3990
  %v4182 = vsel %vm3984, 0.0, %v3993
  %v4183 = vsel %vm3984, 0.0, %v3996
  %v4184 = vsel %vm3984, 0.0, %v3999
  %v4185 = vsel %vm3984, 0.0, %v4002
  %v4186 = vsel %vm3984, 0.0, %v4005
  %v4187 = vsel %vm3984, 0.0, %v4008
  %v4188 = vsel %vm3984, 0.0, %v4011
  %v4189 = vsel %vm3984, 0.0, %v4014
  %v4190 = vsel %vm3984, 0.0, %v4017
  %v4191 = vsel %vm3984, 0.0, %v4020
  %v4192 = vsel %vm3984, 0.0, %v4023
  %v4193 = vsel %vm3984, 0.0, %v4026
  %v4194 = vsel %vm3984, 0.0, %v4029
  %v4195 = vsel %vm3984, 0.0, %v4032
  %v4196 = vsel %vm3984, 0.0, %v4035
  %v4197 = vsel %vm3984, 0.0, %v4038
  %v4198 = vsel %vm3984, 0.0, %v4041
  %v4199 = vsel %vm3984, 0.0, %v4044
  %v4200 = vsel %vm3984, 0.0, %v4047
  %v4201 = vsel %vm3984, 0.0, %v4050
  %v4202 = vsel %vm3984, 0.0, %v4053
  %v4203 = vsel %vm3984, 0.0, %v4056
  %v4204 = vsel %vm3984, 0.0, %v4059
  %v4205 = vsel %vm3984, 0.0, %v4062
  %v4206 = vsel %vm3984, 0.0, %v4065
  %v4207 = vsel %vm3984, 0.0, %v4068
  %v4208 = vsel %vm3984, 0.0, %v4071
  %v4209 = vsel %vm3984, 0.0, %v4074
  %v4210 = vsel %vm3984, 0.0, %v4077
  %v4211 = vsel %vm3984, 0.0, %v4080
  %v4212 = vsel %vm3984, %v3985, 0.0
  %v4213 = vsel %vm3984, %v3988, 0.0
  %v4214 = vsel %vm3984, %v3991, 0.0
  %v4215 = vsel %vm3984, %v3994, 0.0
  %v4216 = vsel %vm3984, %v3997, 0.0
  %v4217 = vsel %vm3984, %v4000, 0.0
  %v4218 = vsel %vm3984, %v4003, 0.0
  %v4219 = vsel %vm3984, %v4006, 0.0
  %v4220 = vsel %vm3984, %v4009, 0.0
  %v4221 = vsel %vm3984, %v4012, 0.0
  %v4222 = vsel %vm3984, %v4015, 0.0
  %v4223 = vsel %vm3984, %v4018, 0.0
  %v4224 = vsel %vm3984, %v4021, 0.0
  %v4225 = vsel %vm3984, %v4024, 0.0
  %v4226 = vsel %vm3984, %v4027, 0.0
  %v4227 = vsel %vm3984, %v4030, 0.0
  %v4228 = vsel %vm3984, %v4033, 0.0
  %v4229 = vsel %vm3984, %v4036, 0.0
  %v4230 = vsel %vm3984, %v4039, 0.0
  %v4231 = vsel %vm3984, %v4042, 0.0
  %v4232 = vsel %vm3984, %v4045, 0.0
  %v4233 = vsel %vm3984, %v4048, 0.0
  %v4234 = vsel %vm3984, %v4051, 0.0
  %v4235 = vsel %vm3984, %v4054, 0.0
  %v4236 = vsel %vm3984, %v4057, 0.0
  %v4237 = vsel %vm3984, %v4060, 0.0
  %v4238 = vsel %vm3984, %v4063, 0.0
  %v4239 = vsel %vm3984, %v4066, 0.0
  %v4240 = vsel %vm3984, %v4069, 0.0
  %v4241 = vsel %vm3984, %v4072, 0.0
  %v4242 = vsel %vm3984, %v4075, 0.0
  %v4243 = vsel %vm3984, %v4078, 0.0
  %v4244 = vsel %vm3984, %v4081, 0.0
  %vm4307 = vcmask 1046528
  %v4308 = vrot.slane %v4179, 1
  %v4309 = vrot.slane %v3986, 1
  %v4310 = vsel %vm4307, %v4308, %v4309
  %v4311 = vrot.slane %v4212, 1
  %v4312 = vsel %vm4307, %v4309, %v4311
  %v4313 = vrot.slane %v4180, 1
  %v4314 = vrot.slane %v3989, 1
  %v4315 = vsel %vm4307, %v4313, %v4314
  %v4316 = vrot.slane %v4213, 1
  %v4317 = vsel %vm4307, %v4314, %v4316
  %v4318 = vrot.slane %v4181, 1
  %v4319 = vrot.slane %v3992, 1
  %v4320 = vsel %vm4307, %v4318, %v4319
  %v4321 = vrot.slane %v4214, 1
  %v4322 = vsel %vm4307, %v4319, %v4321
  %v4323 = vrot.slane %v4182, 1
  %v4324 = vrot.slane %v3995, 1
  %v4325 = vsel %vm4307, %v4323, %v4324
  %v4326 = vrot.slane %v4215, 1
  %v4327 = vsel %vm4307, %v4324, %v4326
  %v4328 = vrot.slane %v4183, 1
  %v4329 = vrot.slane %v3998, 1
  %v4330 = vsel %vm4307, %v4328, %v4329
  %v4331 = vrot.slane %v4216, 1
  %v4332 = vsel %vm4307, %v4329, %v4331
  %v4333 = vrot.slane %v4184, 1
  %v4334 = vrot.slane %v4001, 1
  %v4335 = vsel %vm4307, %v4333, %v4334
  %v4336 = vrot.slane %v4217, 1
  %v4337 = vsel %vm4307, %v4334, %v4336
  %v4338 = vrot.slane %v4185, 1
  %v4339 = vrot.slane %v4004, 1
  %v4340 = vsel %vm4307, %v4338, %v4339
  %v4341 = vrot.slane %v4218, 1
  %v4342 = vsel %vm4307, %v4339, %v4341
  %v4343 = vrot.slane %v4186, 1
  %v4344 = vrot.slane %v4007, 1
  %v4345 = vsel %vm4307, %v4343, %v4344
  %v4346 = vrot.slane %v4219, 1
  %v4347 = vsel %vm4307, %v4344, %v4346
  %v4348 = vrot.slane %v4187, 1
  %v4349 = vrot.slane %v4010, 1
  %v4350 = vsel %vm4307, %v4348, %v4349
  %v4351 = vrot.slane %v4220, 1
  %v4352 = vsel %vm4307, %v4349, %v4351
  %v4353 = vrot.slane %v4188, 1
  %v4354 = vrot.slane %v4013, 1
  %v4355 = vsel %vm4307, %v4353, %v4354
  %v4356 = vrot.slane %v4221, 1
  %v4357 = vsel %vm4307, %v4354, %v4356
  %v4358 = vrot.slane %v4189, 1
  %v4359 = vrot.slane %v4016, 1
  %v4360 = vsel %vm4307, %v4358, %v4359
  %v4361 = vrot.slane %v4222, 1
  %v4362 = vsel %vm4307, %v4359, %v4361
  %v4363 = vrot.slane %v4190, 1
  %v4364 = vrot.slane %v4019, 1
  %v4365 = vsel %vm4307, %v4363, %v4364
  %v4366 = vrot.slane %v4223, 1
  %v4367 = vsel %vm4307, %v4364, %v4366
  %v4368 = vrot.slane %v4191, 1
  %v4369 = vrot.slane %v4022, 1
  %v4370 = vsel %vm4307, %v4368, %v4369
  %v4371 = vrot.slane %v4224, 1
  %v4372 = vsel %vm4307, %v4369, %v4371
  %v4373 = vrot.slane %v4192, 1
  %v4374 = vrot.slane %v4025, 1
  %v4375 = vsel %vm4307, %v4373, %v4374
  %v4376 = vrot.slane %v4225, 1
  %v4377 = vsel %vm4307, %v4374, %v4376
  %v4378 = vrot.slane %v4193, 1
  %v4379 = vrot.slane %v4028, 1
  %v4380 = vsel %vm4307, %v4378, %v4379
  %v4381 = vrot.slane %v4226, 1
  %v4382 = vsel %vm4307, %v4379, %v4381
  %v4383 = vrot.slane %v4194, 1
  %v4384 = vrot.slane %v4031, 1
  %v4385 = vsel %vm4307, %v4383, %v4384
  %v4386 = vrot.slane %v4227, 1
  %v4387 = vsel %vm4307, %v4384, %v4386
  %v4388 = vrot.slane %v4196, 1
  %v4389 = vrot.slane %v4037, 1
  %v4390 = vsel %vm4307, %v4388, %v4389
  %v4391 = vrot.slane %v4229, 1
  %v4392 = vsel %vm4307, %v4389, %v4391
  %v4393 = vrot.slane %v4197, 1
  %v4394 = vrot.slane %v4040, 1
  %v4395 = vsel %vm4307, %v4393, %v4394
  %v4396 = vrot.slane %v4230, 1
  %v4397 = vsel %vm4307, %v4394, %v4396
  %v4398 = vrot.slane %v4198, 1
  %v4399 = vrot.slane %v4043, 1
  %v4400 = vsel %vm4307, %v4398, %v4399
  %v4401 = vrot.slane %v4231, 1
  %v4402 = vsel %vm4307, %v4399, %v4401
  %v4403 = vrot.slane %v4199, 1
  %v4404 = vrot.slane %v4046, 1
  %v4405 = vsel %vm4307, %v4403, %v4404
  %v4406 = vrot.slane %v4232, 1
  %v4407 = vsel %vm4307, %v4404, %v4406
  %v4408 = vrot.slane %v4200, 1
  %v4409 = vrot.slane %v4049, 1
  %v4410 = vsel %vm4307, %v4408, %v4409
  %v4411 = vrot.slane %v4233, 1
  %v4412 = vsel %vm4307, %v4409, %v4411
  %v4413 = vrot.slane %v4201, 1
  %v4414 = vrot.slane %v4052, 1
  %v4415 = vsel %vm4307, %v4413, %v4414
  %v4416 = vrot.slane %v4234, 1
  %v4417 = vsel %vm4307, %v4414, %v4416
  %v4418 = vrot.slane %v4202, 1
  %v4419 = vrot.slane %v4055, 1
  %v4420 = vsel %vm4307, %v4418, %v4419
  %v4421 = vrot.slane %v4235, 1
  %v4422 = vsel %vm4307, %v4419, %v4421
  %v4423 = vrot.slane %v4203, 1
  %v4424 = vrot.slane %v4058, 1
  %v4425 = vsel %vm4307, %v4423, %v4424
  %v4426 = vrot.slane %v4236, 1
  %v4427 = vsel %vm4307, %v4424, %v4426
  %v4428 = vrot.slane %v4204, 1
  %v4429 = vrot.slane %v4061, 1
  %v4430 = vsel %vm4307, %v4428, %v4429
  %v4431 = vrot.slane %v4237, 1
  %v4432 = vsel %vm4307, %v4429, %v4431
  %v4433 = vrot.slane %v4205, 1
  %v4434 = vrot.slane %v4064, 1
  %v4435 = vsel %vm4307, %v4433, %v4434
  %v4436 = vrot.slane %v4238, 1
  %v4437 = vsel %vm4307, %v4434, %v4436
  %v4438 = vrot.slane %v4206, 1
  %v4439 = vrot.slane %v4067, 1
  %v4440 = vsel %vm4307, %v4438, %v4439
  %v4441 = vrot.slane %v4239, 1
  %v4442 = vsel %vm4307, %v4439, %v4441
  %v4443 = vrot.slane %v4207, 1
  %v4444 = vrot.slane %v4070, 1
  %v4445 = vsel %vm4307, %v4443, %v4444
  %v4446 = vrot.slane %v4240, 1
  %v4447 = vsel %vm4307, %v4444, %v4446
  %v4448 = vrot.slane %v4208, 1
  %v4449 = vrot.slane %v4073, 1
  %v4450 = vsel %vm4307, %v4448, %v4449
  %v4451 = vrot.slane %v4241, 1
  %v4452 = vsel %vm4307, %v4449, %v4451
  %v4453 = vrot.slane %v4209, 1
  %v4454 = vrot.slane %v4076, 1
  %v4455 = vsel %vm4307, %v4453, %v4454
  %v4456 = vrot.slane %v4242, 1
  %v4457 = vsel %vm4307, %v4454, %v4456
  %v4458 = vrot.slane %v4210, 1
  %v4459 = vrot.slane %v4079, 1
  %v4460 = vsel %vm4307, %v4458, %v4459
  %v4461 = vrot.slane %v4243, 1
  %v4462 = vsel %vm4307, %v4459, %v4461
  %vm4463 = vcmask 1045504
  %v4464 = vrot.slane %v4179, 2
  %v4465 = vrot.slane %v3986, 2
  %v4466 = vsel %vm4463, %v4464, %v4465
  %v4467 = vrot.slane %v4212, 2
  %v4468 = vsel %vm4463, %v4465, %v4467
  %v4469 = vrot.slane %v4180, 2
  %v4470 = vrot.slane %v3989, 2
  %v4471 = vsel %vm4463, %v4469, %v4470
  %v4472 = vrot.slane %v4213, 2
  %v4473 = vsel %vm4463, %v4470, %v4472
  %v4474 = vrot.slane %v4181, 2
  %v4475 = vrot.slane %v3992, 2
  %v4476 = vsel %vm4463, %v4474, %v4475
  %v4477 = vrot.slane %v4214, 2
  %v4478 = vsel %vm4463, %v4475, %v4477
  %v4479 = vrot.slane %v4182, 2
  %v4480 = vrot.slane %v3995, 2
  %v4481 = vsel %vm4463, %v4479, %v4480
  %v4482 = vrot.slane %v4215, 2
  %v4483 = vsel %vm4463, %v4480, %v4482
  %v4484 = vrot.slane %v4183, 2
  %v4485 = vrot.slane %v3998, 2
  %v4486 = vsel %vm4463, %v4484, %v4485
  %v4487 = vrot.slane %v4216, 2
  %v4488 = vsel %vm4463, %v4485, %v4487
  %v4489 = vrot.slane %v4184, 2
  %v4490 = vrot.slane %v4001, 2
  %v4491 = vsel %vm4463, %v4489, %v4490
  %v4492 = vrot.slane %v4217, 2
  %v4493 = vsel %vm4463, %v4490, %v4492
  %v4494 = vrot.slane %v4185, 2
  %v4495 = vrot.slane %v4004, 2
  %v4496 = vsel %vm4463, %v4494, %v4495
  %v4497 = vrot.slane %v4218, 2
  %v4498 = vsel %vm4463, %v4495, %v4497
  %v4499 = vrot.slane %v4186, 2
  %v4500 = vrot.slane %v4007, 2
  %v4501 = vsel %vm4463, %v4499, %v4500
  %v4502 = vrot.slane %v4219, 2
  %v4503 = vsel %vm4463, %v4500, %v4502
  %v4504 = vrot.slane %v4187, 2
  %v4505 = vrot.slane %v4010, 2
  %v4506 = vsel %vm4463, %v4504, %v4505
  %v4507 = vrot.slane %v4220, 2
  %v4508 = vsel %vm4463, %v4505, %v4507
  %v4509 = vrot.slane %v4188, 2
  %v4510 = vrot.slane %v4013, 2
  %v4511 = vsel %vm4463, %v4509, %v4510
  %v4512 = vrot.slane %v4221, 2
  %v4513 = vsel %vm4463, %v4510, %v4512
  %v4514 = vrot.slane %v4189, 2
  %v4515 = vrot.slane %v4016, 2
  %v4516 = vsel %vm4463, %v4514, %v4515
  %v4517 = vrot.slane %v4222, 2
  %v4518 = vsel %vm4463, %v4515, %v4517
  %v4519 = vrot.slane %v4190, 2
  %v4520 = vrot.slane %v4019, 2
  %v4521 = vsel %vm4463, %v4519, %v4520
  %v4522 = vrot.slane %v4223, 2
  %v4523 = vsel %vm4463, %v4520, %v4522
  %v4524 = vrot.slane %v4191, 2
  %v4525 = vrot.slane %v4022, 2
  %v4526 = vsel %vm4463, %v4524, %v4525
  %v4527 = vrot.slane %v4224, 2
  %v4528 = vsel %vm4463, %v4525, %v4527
  %v4529 = vrot.slane %v4192, 2
  %v4530 = vrot.slane %v4025, 2
  %v4531 = vsel %vm4463, %v4529, %v4530
  %v4532 = vrot.slane %v4225, 2
  %v4533 = vsel %vm4463, %v4530, %v4532
  %v4534 = vrot.slane %v4193, 2
  %v4535 = vrot.slane %v4028, 2
  %v4536 = vsel %vm4463, %v4534, %v4535
  %v4537 = vrot.slane %v4226, 2
  %v4538 = vsel %vm4463, %v4535, %v4537
  %v4539 = vrot.slane %v4194, 2
  %v4540 = vrot.slane %v4031, 2
  %v4541 = vsel %vm4463, %v4539, %v4540
  %v4542 = vrot.slane %v4227, 2
  %v4543 = vsel %vm4463, %v4540, %v4542
  %v4544 = vrot.slane %v4196, 2
  %v4545 = vrot.slane %v4037, 2
  %v4546 = vsel %vm4463, %v4544, %v4545
  %v4547 = vrot.slane %v4229, 2
  %v4548 = vsel %vm4463, %v4545, %v4547
  %v4549 = vrot.slane %v4197, 2
  %v4550 = vrot.slane %v4040, 2
  %v4551 = vsel %vm4463, %v4549, %v4550
  %v4552 = vrot.slane %v4230, 2
  %v4553 = vsel %vm4463, %v4550, %v4552
  %v4554 = vrot.slane %v4198, 2
  %v4555 = vrot.slane %v4043, 2
  %v4556 = vsel %vm4463, %v4554, %v4555
  %v4557 = vrot.slane %v4231, 2
  %v4558 = vsel %vm4463, %v4555, %v4557
  %v4559 = vrot.slane %v4199, 2
  %v4560 = vrot.slane %v4046, 2
  %v4561 = vsel %vm4463, %v4559, %v4560
  %v4562 = vrot.slane %v4232, 2
  %v4563 = vsel %vm4463, %v4560, %v4562
  %v4564 = vrot.slane %v4200, 2
  %v4565 = vrot.slane %v4049, 2
  %v4566 = vsel %vm4463, %v4564, %v4565
  %v4567 = vrot.slane %v4233, 2
  %v4568 = vsel %vm4463, %v4565, %v4567
  %v4569 = vrot.slane %v4201, 2
  %v4570 = vrot.slane %v4052, 2
  %v4571 = vsel %vm4463, %v4569, %v4570
  %v4572 = vrot.slane %v4234, 2
  %v4573 = vsel %vm4463, %v4570, %v4572
  %v4574 = vrot.slane %v4202, 2
  %v4575 = vrot.slane %v4055, 2
  %v4576 = vsel %vm4463, %v4574, %v4575
  %v4577 = vrot.slane %v4235, 2
  %v4578 = vsel %vm4463, %v4575, %v4577
  %v4579 = vrot.slane %v4203, 2
  %v4580 = vrot.slane %v4058, 2
  %v4581 = vsel %vm4463, %v4579, %v4580
  %v4582 = vrot.slane %v4236, 2
  %v4583 = vsel %vm4463, %v4580, %v4582
  %v4584 = vrot.slane %v4204, 2
  %v4585 = vrot.slane %v4061, 2
  %v4586 = vsel %vm4463, %v4584, %v4585
  %v4587 = vrot.slane %v4237, 2
  %v4588 = vsel %vm4463, %v4585, %v4587
  %v4589 = vrot.slane %v4205, 2
  %v4590 = vrot.slane %v4064, 2
  %v4591 = vsel %vm4463, %v4589, %v4590
  %v4592 = vrot.slane %v4238, 2
  %v4593 = vsel %vm4463, %v4590, %v4592
  %v4594 = vrot.slane %v4206, 2
  %v4595 = vrot.slane %v4067, 2
  %v4596 = vsel %vm4463, %v4594, %v4595
  %v4597 = vrot.slane %v4239, 2
  %v4598 = vsel %vm4463, %v4595, %v4597
  %v4599 = vrot.slane %v4207, 2
  %v4600 = vrot.slane %v4070, 2
  %v4601 = vsel %vm4463, %v4599, %v4600
  %v4602 = vrot.slane %v4240, 2
  %v4603 = vsel %vm4463, %v4600, %v4602
  %v4604 = vrot.slane %v4208, 2
  %v4605 = vrot.slane %v4073, 2
  %v4606 = vsel %vm4463, %v4604, %v4605
  %v4607 = vrot.slane %v4241, 2
  %v4608 = vsel %vm4463, %v4605, %v4607
  %v4609 = vrot.slane %v4209, 2
  %v4610 = vrot.slane %v4076, 2
  %v4611 = vsel %vm4463, %v4609, %v4610
  %v4612 = vrot.slane %v4242, 2
  %v4613 = vsel %vm4463, %v4610, %v4612
  %v4614 = vrot.slane %v4210, 2
  %v4615 = vrot.slane %v4079, 2
  %v4616 = vsel %vm4463, %v4614, %v4615
  %v4617 = vrot.slane %v4243, 2
  %v4618 = vsel %vm4463, %v4615, %v4617
  %v4623 = vrot.slane %v4195, 1
  %v4624 = vrot.slane %v4034, 1
  %v4625 = vsel %vm4307, %v4623, %v4624
  %v4626 = vrot.slane %v4228, 1
  %v4627 = vsel %vm4307, %v4624, %v4626
  %v4628 = vrot.slane %v4211, 1
  %v4629 = vrot.slane %v4082, 1
  %v4630 = vsel %vm4307, %v4628, %v4629
  %v4631 = vrot.slane %v4244, 1
  %v4632 = vsel %vm4307, %v4629, %v4631
  %v4697 = vrot.slane %v4195, 2
  %v4698 = vrot.slane %v4034, 2
  %v4699 = vsel %vm4463, %v4697, %v4698
  %v4700 = vrot.slane %v4228, 2
  %v4701 = vsel %vm4463, %v4698, %v4700
  %v4702 = vrot.slane %v4211, 2
  %v4703 = vrot.slane %v4082, 2
  %v4704 = vsel %vm4463, %v4702, %v4703
  %v4705 = vrot.slane %v4244, 2
  %v4706 = vsel %vm4463, %v4703, %v4705
  %4769 = vrot.lane.b32.xlu0 %v4310, 32
  %v4770 = vpop.permute.xlu0 %4769
  %4771 = vrot.lane.b32.xlu0 %v4312, 32
  %v4772 = vpop.permute.xlu0 %4771
  %4773 = vrot.lane.b32.xlu0 %v4315, 32
  %v4774 = vpop.permute.xlu0 %4773
  %4775 = vrot.lane.b32.xlu0 %v4317, 32
  %v4776 = vpop.permute.xlu0 %4775
  %4777 = vrot.lane.b32.xlu0 %v4320, 32
  %v4778 = vpop.permute.xlu0 %4777
  %4779 = vrot.lane.b32.xlu0 %v4322, 32
  %v4780 = vpop.permute.xlu0 %4779
  %4781 = vrot.lane.b32.xlu0 %v4325, 32
  %v4782 = vpop.permute.xlu0 %4781
  %4783 = vrot.lane.b32.xlu0 %v4327, 32
  %v4784 = vpop.permute.xlu0 %4783
  %4785 = vrot.lane.b32.xlu0 %v4330, 32
  %v4786 = vpop.permute.xlu0 %4785
  %4787 = vrot.lane.b32.xlu0 %v4332, 32
  %v4788 = vpop.permute.xlu0 %4787
  %4789 = vrot.lane.b32.xlu0 %v4335, 32
  %v4790 = vpop.permute.xlu0 %4789
  %4791 = vrot.lane.b32.xlu0 %v4337, 32
  %v4792 = vpop.permute.xlu0 %4791
  %4793 = vrot.lane.b32.xlu0 %v4340, 32
  %v4794 = vpop.permute.xlu0 %4793
  %4795 = vrot.lane.b32.xlu0 %v4342, 32
  %v4796 = vpop.permute.xlu0 %4795
  %4797 = vrot.lane.b32.xlu0 %v4345, 32
  %v4798 = vpop.permute.xlu0 %4797
  %4799 = vrot.lane.b32.xlu0 %v4347, 32
  %v4800 = vpop.permute.xlu0 %4799
  %4801 = vrot.lane.b32.xlu0 %v4350, 32
  %v4802 = vpop.permute.xlu0 %4801
  %4803 = vrot.lane.b32.xlu0 %v4352, 32
  %v4804 = vpop.permute.xlu0 %4803
  %4805 = vrot.lane.b32.xlu0 %v4355, 32
  %v4806 = vpop.permute.xlu0 %4805
  %4807 = vrot.lane.b32.xlu0 %v4357, 32
  %v4808 = vpop.permute.xlu0 %4807
  %4809 = vrot.lane.b32.xlu0 %v4360, 32
  %v4810 = vpop.permute.xlu0 %4809
  %4811 = vrot.lane.b32.xlu0 %v4362, 32
  %v4812 = vpop.permute.xlu0 %4811
  %4813 = vrot.lane.b32.xlu0 %v4365, 32
  %v4814 = vpop.permute.xlu0 %4813
  %4815 = vrot.lane.b32.xlu0 %v4367, 32
  %v4816 = vpop.permute.xlu0 %4815
  %4817 = vrot.lane.b32.xlu0 %v4370, 32
  %v4818 = vpop.permute.xlu0 %4817
  %4819 = vrot.lane.b32.xlu0 %v4372, 32
  %v4820 = vpop.permute.xlu0 %4819
  %4821 = vrot.lane.b32.xlu0 %v4375, 32
  %v4822 = vpop.permute.xlu0 %4821
  %4823 = vrot.lane.b32.xlu0 %v4377, 32
  %v4824 = vpop.permute.xlu0 %4823
  %4825 = vrot.lane.b32.xlu0 %v4380, 32
  %v4826 = vpop.permute.xlu0 %4825
  %4827 = vrot.lane.b32.xlu0 %v4382, 32
  %v4828 = vpop.permute.xlu0 %4827
  %4829 = vrot.lane.b32.xlu0 %v4385, 32
  %v4830 = vpop.permute.xlu0 %4829
  %4831 = vrot.lane.b32.xlu0 %v4387, 32
  %v4832 = vpop.permute.xlu0 %4831
  %4833 = vrot.lane.b32.xlu0 %v4390, 32
  %v4834 = vpop.permute.xlu0 %4833
  %4835 = vrot.lane.b32.xlu0 %v4392, 32
  %v4836 = vpop.permute.xlu0 %4835
  %4837 = vrot.lane.b32.xlu0 %v4395, 32
  %v4838 = vpop.permute.xlu0 %4837
  %4839 = vrot.lane.b32.xlu0 %v4397, 32
  %v4840 = vpop.permute.xlu0 %4839
  %4841 = vrot.lane.b32.xlu0 %v4400, 32
  %v4842 = vpop.permute.xlu0 %4841
  %4843 = vrot.lane.b32.xlu0 %v4402, 32
  %v4844 = vpop.permute.xlu0 %4843
  %4845 = vrot.lane.b32.xlu0 %v4405, 32
  %v4846 = vpop.permute.xlu0 %4845
  %4847 = vrot.lane.b32.xlu0 %v4407, 32
  %v4848 = vpop.permute.xlu0 %4847
  %4849 = vrot.lane.b32.xlu0 %v4410, 32
  %v4850 = vpop.permute.xlu0 %4849
  %4851 = vrot.lane.b32.xlu0 %v4412, 32
  %v4852 = vpop.permute.xlu0 %4851
  %4853 = vrot.lane.b32.xlu0 %v4415, 32
  %v4854 = vpop.permute.xlu0 %4853
  %4855 = vrot.lane.b32.xlu0 %v4417, 32
  %v4856 = vpop.permute.xlu0 %4855
  %4857 = vrot.lane.b32.xlu0 %v4420, 32
  %v4858 = vpop.permute.xlu0 %4857
  %4859 = vrot.lane.b32.xlu0 %v4422, 32
  %v4860 = vpop.permute.xlu0 %4859
  %4861 = vrot.lane.b32.xlu0 %v4425, 32
  %v4862 = vpop.permute.xlu0 %4861
  %4863 = vrot.lane.b32.xlu0 %v4427, 32
  %v4864 = vpop.permute.xlu0 %4863
  %4865 = vrot.lane.b32.xlu0 %v4430, 32
  %v4866 = vpop.permute.xlu0 %4865
  %4867 = vrot.lane.b32.xlu0 %v4432, 32
  %v4868 = vpop.permute.xlu0 %4867
  %4869 = vrot.lane.b32.xlu0 %v4435, 32
  %v4870 = vpop.permute.xlu0 %4869
  %4871 = vrot.lane.b32.xlu0 %v4437, 32
  %v4872 = vpop.permute.xlu0 %4871
  %4873 = vrot.lane.b32.xlu0 %v4440, 32
  %v4874 = vpop.permute.xlu0 %4873
  %4875 = vrot.lane.b32.xlu0 %v4442, 32
  %v4876 = vpop.permute.xlu0 %4875
  %4877 = vrot.lane.b32.xlu0 %v4445, 32
  %v4878 = vpop.permute.xlu0 %4877
  %4879 = vrot.lane.b32.xlu0 %v4447, 32
  %v4880 = vpop.permute.xlu0 %4879
  %4881 = vrot.lane.b32.xlu0 %v4450, 32
  %v4882 = vpop.permute.xlu0 %4881
  %4883 = vrot.lane.b32.xlu0 %v4452, 32
  %v4884 = vpop.permute.xlu0 %4883
  %4885 = vrot.lane.b32.xlu0 %v4455, 32
  %v4886 = vpop.permute.xlu0 %4885
  %4887 = vrot.lane.b32.xlu0 %v4457, 32
  %v4888 = vpop.permute.xlu0 %4887
  %4889 = vrot.lane.b32.xlu0 %v4460, 32
  %v4890 = vpop.permute.xlu0 %4889
  %4891 = vrot.lane.b32.xlu0 %v4462, 32
  %v4892 = vpop.permute.xlu0 %4891
  %4955 = vrot.lane.b32.xlu0 %v4466, 64
  %v4956 = vpop.permute.xlu0 %4955
  %4957 = vrot.lane.b32.xlu0 %v4468, 64
  %v4958 = vpop.permute.xlu0 %4957
  %4959 = vrot.lane.b32.xlu0 %v4471, 64
  %v4960 = vpop.permute.xlu0 %4959
  %4961 = vrot.lane.b32.xlu0 %v4473, 64
  %v4962 = vpop.permute.xlu0 %4961
  %4963 = vrot.lane.b32.xlu0 %v4476, 64
  %v4964 = vpop.permute.xlu0 %4963
  %4965 = vrot.lane.b32.xlu0 %v4478, 64
  %v4966 = vpop.permute.xlu0 %4965
  %4967 = vrot.lane.b32.xlu0 %v4481, 64
  %v4968 = vpop.permute.xlu0 %4967
  %4969 = vrot.lane.b32.xlu0 %v4483, 64
  %v4970 = vpop.permute.xlu0 %4969
  %4971 = vrot.lane.b32.xlu0 %v4486, 64
  %v4972 = vpop.permute.xlu0 %4971
  %4973 = vrot.lane.b32.xlu0 %v4488, 64
  %v4974 = vpop.permute.xlu0 %4973
  %4975 = vrot.lane.b32.xlu0 %v4491, 64
  %v4976 = vpop.permute.xlu0 %4975
  %4977 = vrot.lane.b32.xlu0 %v4493, 64
  %v4978 = vpop.permute.xlu0 %4977
  %4979 = vrot.lane.b32.xlu0 %v4496, 64
  %v4980 = vpop.permute.xlu0 %4979
  %4981 = vrot.lane.b32.xlu0 %v4498, 64
  %v4982 = vpop.permute.xlu0 %4981
  %4983 = vrot.lane.b32.xlu0 %v4501, 64
  %v4984 = vpop.permute.xlu0 %4983
  %4985 = vrot.lane.b32.xlu0 %v4503, 64
  %v4986 = vpop.permute.xlu0 %4985
  %4987 = vrot.lane.b32.xlu0 %v4506, 64
  %v4988 = vpop.permute.xlu0 %4987
  %4989 = vrot.lane.b32.xlu0 %v4508, 64
  %v4990 = vpop.permute.xlu0 %4989
  %4991 = vrot.lane.b32.xlu0 %v4511, 64
  %v4992 = vpop.permute.xlu0 %4991
  %4993 = vrot.lane.b32.xlu0 %v4513, 64
  %v4994 = vpop.permute.xlu0 %4993
  %4995 = vrot.lane.b32.xlu0 %v4516, 64
  %v4996 = vpop.permute.xlu0 %4995
  %4997 = vrot.lane.b32.xlu0 %v4518, 64
  %v4998 = vpop.permute.xlu0 %4997
  %4999 = vrot.lane.b32.xlu0 %v4521, 64
  %v5000 = vpop.permute.xlu0 %4999
  %5001 = vrot.lane.b32.xlu0 %v4523, 64
  %v5002 = vpop.permute.xlu0 %5001
  %5003 = vrot.lane.b32.xlu0 %v4526, 64
  %v5004 = vpop.permute.xlu0 %5003
  %5005 = vrot.lane.b32.xlu0 %v4528, 64
  %v5006 = vpop.permute.xlu0 %5005
  %5007 = vrot.lane.b32.xlu0 %v4531, 64
  %v5008 = vpop.permute.xlu0 %5007
  %5009 = vrot.lane.b32.xlu0 %v4533, 64
  %v5010 = vpop.permute.xlu0 %5009
  %5011 = vrot.lane.b32.xlu0 %v4536, 64
  %v5012 = vpop.permute.xlu0 %5011
  %5013 = vrot.lane.b32.xlu0 %v4538, 64
  %v5014 = vpop.permute.xlu0 %5013
  %5015 = vrot.lane.b32.xlu0 %v4541, 64
  %v5016 = vpop.permute.xlu0 %5015
  %5017 = vrot.lane.b32.xlu0 %v4543, 64
  %v5018 = vpop.permute.xlu0 %5017
  %5019 = vrot.lane.b32.xlu0 %v4546, 64
  %v5020 = vpop.permute.xlu0 %5019
  %5021 = vrot.lane.b32.xlu0 %v4548, 64
  %v5022 = vpop.permute.xlu0 %5021
  %5023 = vrot.lane.b32.xlu0 %v4551, 64
  %v5024 = vpop.permute.xlu0 %5023
  %5025 = vrot.lane.b32.xlu0 %v4553, 64
  %v5026 = vpop.permute.xlu0 %5025
  %5027 = vrot.lane.b32.xlu0 %v4556, 64
  %v5028 = vpop.permute.xlu0 %5027
  %5029 = vrot.lane.b32.xlu0 %v4558, 64
  %v5030 = vpop.permute.xlu0 %5029
  %5031 = vrot.lane.b32.xlu0 %v4561, 64
  %v5032 = vpop.permute.xlu0 %5031
  %5033 = vrot.lane.b32.xlu0 %v4563, 64
  %v5034 = vpop.permute.xlu0 %5033
  %5035 = vrot.lane.b32.xlu0 %v4566, 64
  %v5036 = vpop.permute.xlu0 %5035
  %5037 = vrot.lane.b32.xlu0 %v4568, 64
  %v5038 = vpop.permute.xlu0 %5037
  %5039 = vrot.lane.b32.xlu0 %v4571, 64
  %v5040 = vpop.permute.xlu0 %5039
  %5041 = vrot.lane.b32.xlu0 %v4573, 64
  %v5042 = vpop.permute.xlu0 %5041
  %5043 = vrot.lane.b32.xlu0 %v4576, 64
  %v5044 = vpop.permute.xlu0 %5043
  %5045 = vrot.lane.b32.xlu0 %v4578, 64
  %v5046 = vpop.permute.xlu0 %5045
  %5047 = vrot.lane.b32.xlu0 %v4581, 64
  %v5048 = vpop.permute.xlu0 %5047
  %5049 = vrot.lane.b32.xlu0 %v4583, 64
  %v5050 = vpop.permute.xlu0 %5049
  %5051 = vrot.lane.b32.xlu0 %v4586, 64
  %v5052 = vpop.permute.xlu0 %5051
  %5053 = vrot.lane.b32.xlu0 %v4588, 64
  %v5054 = vpop.permute.xlu0 %5053
  %5055 = vrot.lane.b32.xlu0 %v4591, 64
  %v5056 = vpop.permute.xlu0 %5055
  %5057 = vrot.lane.b32.xlu0 %v4593, 64
  %v5058 = vpop.permute.xlu0 %5057
  %5059 = vrot.lane.b32.xlu0 %v4596, 64
  %v5060 = vpop.permute.xlu0 %5059
  %5061 = vrot.lane.b32.xlu0 %v4598, 64
  %v5062 = vpop.permute.xlu0 %5061
  %5063 = vrot.lane.b32.xlu0 %v4601, 64
  %v5064 = vpop.permute.xlu0 %5063
  %5065 = vrot.lane.b32.xlu0 %v4603, 64
  %v5066 = vpop.permute.xlu0 %5065
  %5067 = vrot.lane.b32.xlu0 %v4606, 64
  %v5068 = vpop.permute.xlu0 %5067
  %5069 = vrot.lane.b32.xlu0 %v4608, 64
  %v5070 = vpop.permute.xlu0 %5069
  %5071 = vrot.lane.b32.xlu0 %v4611, 64
  %v5072 = vpop.permute.xlu0 %5071
  %5073 = vrot.lane.b32.xlu0 %v4613, 64
  %v5074 = vpop.permute.xlu0 %5073
  %5075 = vrot.lane.b32.xlu0 %v4616, 64
  %v5076 = vpop.permute.xlu0 %5075
  %5077 = vrot.lane.b32.xlu0 %v4618, 64
  %v5078 = vpop.permute.xlu0 %5077
  %5141 = vrot.lane.b32.xlu0 %v4180, 96
  %v5142 = vpop.permute.xlu0 %5141
  %5143 = vrot.lane.b32.xlu0 %v3989, 96
  %v5144 = vpop.permute.xlu0 %5143
  %5145 = vrot.lane.b32.xlu0 %v4181, 96
  %v5146 = vpop.permute.xlu0 %5145
  %5147 = vrot.lane.b32.xlu0 %v3992, 96
  %v5148 = vpop.permute.xlu0 %5147
  %5149 = vrot.lane.b32.xlu0 %v4182, 96
  %v5150 = vpop.permute.xlu0 %5149
  %5151 = vrot.lane.b32.xlu0 %v3995, 96
  %v5152 = vpop.permute.xlu0 %5151
  %5153 = vrot.lane.b32.xlu0 %v4183, 96
  %v5154 = vpop.permute.xlu0 %5153
  %5155 = vrot.lane.b32.xlu0 %v3998, 96
  %v5156 = vpop.permute.xlu0 %5155
  %5157 = vrot.lane.b32.xlu0 %v4184, 96
  %v5158 = vpop.permute.xlu0 %5157
  %5159 = vrot.lane.b32.xlu0 %v4001, 96
  %v5160 = vpop.permute.xlu0 %5159
  %5161 = vrot.lane.b32.xlu0 %v4185, 96
  %v5162 = vpop.permute.xlu0 %5161
  %5163 = vrot.lane.b32.xlu0 %v4004, 96
  %v5164 = vpop.permute.xlu0 %5163
  %5165 = vrot.lane.b32.xlu0 %v4186, 96
  %v5166 = vpop.permute.xlu0 %5165
  %5167 = vrot.lane.b32.xlu0 %v4007, 96
  %v5168 = vpop.permute.xlu0 %5167
  %5169 = vrot.lane.b32.xlu0 %v4187, 96
  %v5170 = vpop.permute.xlu0 %5169
  %5171 = vrot.lane.b32.xlu0 %v4010, 96
  %v5172 = vpop.permute.xlu0 %5171
  %5173 = vrot.lane.b32.xlu0 %v4188, 96
  %v5174 = vpop.permute.xlu0 %5173
  %5175 = vrot.lane.b32.xlu0 %v4013, 96
  %v5176 = vpop.permute.xlu0 %5175
  %5177 = vrot.lane.b32.xlu0 %v4189, 96
  %v5178 = vpop.permute.xlu0 %5177
  %5179 = vrot.lane.b32.xlu0 %v4016, 96
  %v5180 = vpop.permute.xlu0 %5179
  %5181 = vrot.lane.b32.xlu0 %v4190, 96
  %v5182 = vpop.permute.xlu0 %5181
  %5183 = vrot.lane.b32.xlu0 %v4019, 96
  %v5184 = vpop.permute.xlu0 %5183
  %5185 = vrot.lane.b32.xlu0 %v4191, 96
  %v5186 = vpop.permute.xlu0 %5185
  %5187 = vrot.lane.b32.xlu0 %v4022, 96
  %v5188 = vpop.permute.xlu0 %5187
  %5189 = vrot.lane.b32.xlu0 %v4192, 96
  %v5190 = vpop.permute.xlu0 %5189
  %5191 = vrot.lane.b32.xlu0 %v4025, 96
  %v5192 = vpop.permute.xlu0 %5191
  %5193 = vrot.lane.b32.xlu0 %v4193, 96
  %v5194 = vpop.permute.xlu0 %5193
  %5195 = vrot.lane.b32.xlu0 %v4028, 96
  %v5196 = vpop.permute.xlu0 %5195
  %5197 = vrot.lane.b32.xlu0 %v4194, 96
  %v5198 = vpop.permute.xlu0 %5197
  %5199 = vrot.lane.b32.xlu0 %v4031, 96
  %v5200 = vpop.permute.xlu0 %5199
  %5201 = vrot.lane.b32.xlu0 %v4195, 96
  %v5202 = vpop.permute.xlu0 %5201
  %5203 = vrot.lane.b32.xlu0 %v4034, 96
  %v5204 = vpop.permute.xlu0 %5203
  %5205 = vrot.lane.b32.xlu0 %v4196, 96
  %v5206 = vpop.permute.xlu0 %5205
  %5207 = vrot.lane.b32.xlu0 %v4037, 96
  %v5208 = vpop.permute.xlu0 %5207
  %5209 = vrot.lane.b32.xlu0 %v4197, 96
  %v5210 = vpop.permute.xlu0 %5209
  %5211 = vrot.lane.b32.xlu0 %v4040, 96
  %v5212 = vpop.permute.xlu0 %5211
  %5213 = vrot.lane.b32.xlu0 %v4198, 96
  %v5214 = vpop.permute.xlu0 %5213
  %5215 = vrot.lane.b32.xlu0 %v4043, 96
  %v5216 = vpop.permute.xlu0 %5215
  %5217 = vrot.lane.b32.xlu0 %v4199, 96
  %v5218 = vpop.permute.xlu0 %5217
  %5219 = vrot.lane.b32.xlu0 %v4046, 96
  %v5220 = vpop.permute.xlu0 %5219
  %5221 = vrot.lane.b32.xlu0 %v4200, 96
  %v5222 = vpop.permute.xlu0 %5221
  %5223 = vrot.lane.b32.xlu0 %v4049, 96
  %v5224 = vpop.permute.xlu0 %5223
  %5225 = vrot.lane.b32.xlu0 %v4201, 96
  %v5226 = vpop.permute.xlu0 %5225
  %5227 = vrot.lane.b32.xlu0 %v4052, 96
  %v5228 = vpop.permute.xlu0 %5227
  %5229 = vrot.lane.b32.xlu0 %v4202, 96
  %v5230 = vpop.permute.xlu0 %5229
  %5231 = vrot.lane.b32.xlu0 %v4055, 96
  %v5232 = vpop.permute.xlu0 %5231
  %5233 = vrot.lane.b32.xlu0 %v4203, 96
  %v5234 = vpop.permute.xlu0 %5233
  %5235 = vrot.lane.b32.xlu0 %v4058, 96
  %v5236 = vpop.permute.xlu0 %5235
  %5237 = vrot.lane.b32.xlu0 %v4204, 96
  %v5238 = vpop.permute.xlu0 %5237
  %5239 = vrot.lane.b32.xlu0 %v4061, 96
  %v5240 = vpop.permute.xlu0 %5239
  %5241 = vrot.lane.b32.xlu0 %v4205, 96
  %v5242 = vpop.permute.xlu0 %5241
  %5243 = vrot.lane.b32.xlu0 %v4064, 96
  %v5244 = vpop.permute.xlu0 %5243
  %5245 = vrot.lane.b32.xlu0 %v4206, 96
  %v5246 = vpop.permute.xlu0 %5245
  %5247 = vrot.lane.b32.xlu0 %v4067, 96
  %v5248 = vpop.permute.xlu0 %5247
  %5249 = vrot.lane.b32.xlu0 %v4207, 96
  %v5250 = vpop.permute.xlu0 %5249
  %5251 = vrot.lane.b32.xlu0 %v4070, 96
  %v5252 = vpop.permute.xlu0 %5251
  %5253 = vrot.lane.b32.xlu0 %v4208, 96
  %v5254 = vpop.permute.xlu0 %5253
  %5255 = vrot.lane.b32.xlu0 %v4073, 96
  %v5256 = vpop.permute.xlu0 %5255
  %5257 = vrot.lane.b32.xlu0 %v4209, 96
  %v5258 = vpop.permute.xlu0 %5257
  %5259 = vrot.lane.b32.xlu0 %v4076, 96
  %v5260 = vpop.permute.xlu0 %5259
  %5261 = vrot.lane.b32.xlu0 %v4210, 96
  %v5262 = vpop.permute.xlu0 %5261
  %5263 = vrot.lane.b32.xlu0 %v4079, 96
  %v5264 = vpop.permute.xlu0 %5263
  %5265 = vrot.lane.b32.xlu0 %v4211, 96
  %v5266 = vpop.permute.xlu0 %5265
  %5267 = vrot.lane.b32.xlu0 %v4082, 96
  %v5268 = vpop.permute.xlu0 %5267
  %5333 = vrot.lane.b32.xlu0 %v4471, 32
  %v5334 = vpop.permute.xlu0 %5333
  %5335 = vrot.lane.b32.xlu0 %v4473, 32
  %v5336 = vpop.permute.xlu0 %5335
  %5337 = vrot.lane.b32.xlu0 %v4476, 32
  %v5338 = vpop.permute.xlu0 %5337
  %5339 = vrot.lane.b32.xlu0 %v4478, 32
  %v5340 = vpop.permute.xlu0 %5339
  %5341 = vrot.lane.b32.xlu0 %v4481, 32
  %v5342 = vpop.permute.xlu0 %5341
  %5343 = vrot.lane.b32.xlu0 %v4483, 32
  %v5344 = vpop.permute.xlu0 %5343
  %5345 = vrot.lane.b32.xlu0 %v4486, 32
  %v5346 = vpop.permute.xlu0 %5345
  %5347 = vrot.lane.b32.xlu0 %v4488, 32
  %v5348 = vpop.permute.xlu0 %5347
  %5349 = vrot.lane.b32.xlu0 %v4491, 32
  %v5350 = vpop.permute.xlu0 %5349
  %5351 = vrot.lane.b32.xlu0 %v4493, 32
  %v5352 = vpop.permute.xlu0 %5351
  %5353 = vrot.lane.b32.xlu0 %v4496, 32
  %v5354 = vpop.permute.xlu0 %5353
  %5355 = vrot.lane.b32.xlu0 %v4498, 32
  %v5356 = vpop.permute.xlu0 %5355
  %5357 = vrot.lane.b32.xlu0 %v4501, 32
  %v5358 = vpop.permute.xlu0 %5357
  %5359 = vrot.lane.b32.xlu0 %v4503, 32
  %v5360 = vpop.permute.xlu0 %5359
  %5361 = vrot.lane.b32.xlu0 %v4506, 32
  %v5362 = vpop.permute.xlu0 %5361
  %5363 = vrot.lane.b32.xlu0 %v4508, 32
  %v5364 = vpop.permute.xlu0 %5363
  %5365 = vrot.lane.b32.xlu0 %v4511, 32
  %v5366 = vpop.permute.xlu0 %5365
  %5367 = vrot.lane.b32.xlu0 %v4513, 32
  %v5368 = vpop.permute.xlu0 %5367
  %5369 = vrot.lane.b32.xlu0 %v4516, 32
  %v5370 = vpop.permute.xlu0 %5369
  %5371 = vrot.lane.b32.xlu0 %v4518, 32
  %v5372 = vpop.permute.xlu0 %5371
  %5373 = vrot.lane.b32.xlu0 %v4521, 32
  %v5374 = vpop.permute.xlu0 %5373
  %5375 = vrot.lane.b32.xlu0 %v4523, 32
  %v5376 = vpop.permute.xlu0 %5375
  %5377 = vrot.lane.b32.xlu0 %v4526, 32
  %v5378 = vpop.permute.xlu0 %5377
  %5379 = vrot.lane.b32.xlu0 %v4528, 32
  %v5380 = vpop.permute.xlu0 %5379
  %5381 = vrot.lane.b32.xlu0 %v4531, 32
  %v5382 = vpop.permute.xlu0 %5381
  %5383 = vrot.lane.b32.xlu0 %v4533, 32
  %v5384 = vpop.permute.xlu0 %5383
  %5385 = vrot.lane.b32.xlu0 %v4536, 32
  %v5386 = vpop.permute.xlu0 %5385
  %5387 = vrot.lane.b32.xlu0 %v4538, 32
  %v5388 = vpop.permute.xlu0 %5387
  %5389 = vrot.lane.b32.xlu0 %v4541, 32
  %v5390 = vpop.permute.xlu0 %5389
  %5391 = vrot.lane.b32.xlu0 %v4543, 32
  %v5392 = vpop.permute.xlu0 %5391
  %5393 = vrot.lane.b32.xlu0 %v4699, 32
  %v5394 = vpop.permute.xlu0 %5393
  %5395 = vrot.lane.b32.xlu0 %v4701, 32
  %v5396 = vpop.permute.xlu0 %5395
  %5397 = vrot.lane.b32.xlu0 %v4546, 32
  %v5398 = vpop.permute.xlu0 %5397
  %5399 = vrot.lane.b32.xlu0 %v4548, 32
  %v5400 = vpop.permute.xlu0 %5399
  %5401 = vrot.lane.b32.xlu0 %v4551, 32
  %v5402 = vpop.permute.xlu0 %5401
  %5403 = vrot.lane.b32.xlu0 %v4553, 32
  %v5404 = vpop.permute.xlu0 %5403
  %5405 = vrot.lane.b32.xlu0 %v4556, 32
  %v5406 = vpop.permute.xlu0 %5405
  %5407 = vrot.lane.b32.xlu0 %v4558, 32
  %v5408 = vpop.permute.xlu0 %5407
  %5409 = vrot.lane.b32.xlu0 %v4561, 32
  %v5410 = vpop.permute.xlu0 %5409
  %5411 = vrot.lane.b32.xlu0 %v4563, 32
  %v5412 = vpop.permute.xlu0 %5411
  %5413 = vrot.lane.b32.xlu0 %v4566, 32
  %v5414 = vpop.permute.xlu0 %5413
  %5415 = vrot.lane.b32.xlu0 %v4568, 32
  %v5416 = vpop.permute.xlu0 %5415
  %5417 = vrot.lane.b32.xlu0 %v4571, 32
  %v5418 = vpop.permute.xlu0 %5417
  %5419 = vrot.lane.b32.xlu0 %v4573, 32
  %v5420 = vpop.permute.xlu0 %5419
  %5421 = vrot.lane.b32.xlu0 %v4576, 32
  %v5422 = vpop.permute.xlu0 %5421
  %5423 = vrot.lane.b32.xlu0 %v4578, 32
  %v5424 = vpop.permute.xlu0 %5423
  %5425 = vrot.lane.b32.xlu0 %v4581, 32
  %v5426 = vpop.permute.xlu0 %5425
  %5427 = vrot.lane.b32.xlu0 %v4583, 32
  %v5428 = vpop.permute.xlu0 %5427
  %5429 = vrot.lane.b32.xlu0 %v4586, 32
  %v5430 = vpop.permute.xlu0 %5429
  %5431 = vrot.lane.b32.xlu0 %v4588, 32
  %v5432 = vpop.permute.xlu0 %5431
  %5433 = vrot.lane.b32.xlu0 %v4591, 32
  %v5434 = vpop.permute.xlu0 %5433
  %5435 = vrot.lane.b32.xlu0 %v4593, 32
  %v5436 = vpop.permute.xlu0 %5435
  %5437 = vrot.lane.b32.xlu0 %v4596, 32
  %v5438 = vpop.permute.xlu0 %5437
  %5439 = vrot.lane.b32.xlu0 %v4598, 32
  %v5440 = vpop.permute.xlu0 %5439
  %5441 = vrot.lane.b32.xlu0 %v4601, 32
  %v5442 = vpop.permute.xlu0 %5441
  %5443 = vrot.lane.b32.xlu0 %v4603, 32
  %v5444 = vpop.permute.xlu0 %5443
  %5445 = vrot.lane.b32.xlu0 %v4606, 32
  %v5446 = vpop.permute.xlu0 %5445
  %5447 = vrot.lane.b32.xlu0 %v4608, 32
  %v5448 = vpop.permute.xlu0 %5447
  %5449 = vrot.lane.b32.xlu0 %v4611, 32
  %v5450 = vpop.permute.xlu0 %5449
  %5451 = vrot.lane.b32.xlu0 %v4613, 32
  %v5452 = vpop.permute.xlu0 %5451
  %5453 = vrot.lane.b32.xlu0 %v4616, 32
  %v5454 = vpop.permute.xlu0 %5453
  %5455 = vrot.lane.b32.xlu0 %v4618, 32
  %v5456 = vpop.permute.xlu0 %5455
  %5457 = vrot.lane.b32.xlu0 %v4704, 32
  %v5458 = vpop.permute.xlu0 %5457
  %5459 = vrot.lane.b32.xlu0 %v4706, 32
  %v5460 = vpop.permute.xlu0 %5459
  %5525 = vrot.lane.b32.xlu0 %v4181, 64
  %v5526 = vpop.permute.xlu0 %5525
  %5527 = vrot.lane.b32.xlu0 %v3992, 64
  %v5528 = vpop.permute.xlu0 %5527
  %5529 = vrot.lane.b32.xlu0 %v4182, 64
  %v5530 = vpop.permute.xlu0 %5529
  %5531 = vrot.lane.b32.xlu0 %v3995, 64
  %v5532 = vpop.permute.xlu0 %5531
  %5533 = vrot.lane.b32.xlu0 %v4183, 64
  %v5534 = vpop.permute.xlu0 %5533
  %5535 = vrot.lane.b32.xlu0 %v3998, 64
  %v5536 = vpop.permute.xlu0 %5535
  %5537 = vrot.lane.b32.xlu0 %v4184, 64
  %v5538 = vpop.permute.xlu0 %5537
  %5539 = vrot.lane.b32.xlu0 %v4001, 64
  %v5540 = vpop.permute.xlu0 %5539
  %5541 = vrot.lane.b32.xlu0 %v4185, 64
  %v5542 = vpop.permute.xlu0 %5541
  %5543 = vrot.lane.b32.xlu0 %v4004, 64
  %v5544 = vpop.permute.xlu0 %5543
  %5545 = vrot.lane.b32.xlu0 %v4186, 64
  %v5546 = vpop.permute.xlu0 %5545
  %5547 = vrot.lane.b32.xlu0 %v4007, 64
  %v5548 = vpop.permute.xlu0 %5547
  %5549 = vrot.lane.b32.xlu0 %v4187, 64
  %v5550 = vpop.permute.xlu0 %5549
  %5551 = vrot.lane.b32.xlu0 %v4010, 64
  %v5552 = vpop.permute.xlu0 %5551
  %5553 = vrot.lane.b32.xlu0 %v4188, 64
  %v5554 = vpop.permute.xlu0 %5553
  %5555 = vrot.lane.b32.xlu0 %v4013, 64
  %v5556 = vpop.permute.xlu0 %5555
  %5557 = vrot.lane.b32.xlu0 %v4189, 64
  %v5558 = vpop.permute.xlu0 %5557
  %5559 = vrot.lane.b32.xlu0 %v4016, 64
  %v5560 = vpop.permute.xlu0 %5559
  %5561 = vrot.lane.b32.xlu0 %v4190, 64
  %v5562 = vpop.permute.xlu0 %5561
  %5563 = vrot.lane.b32.xlu0 %v4019, 64
  %v5564 = vpop.permute.xlu0 %5563
  %5565 = vrot.lane.b32.xlu0 %v4191, 64
  %v5566 = vpop.permute.xlu0 %5565
  %5567 = vrot.lane.b32.xlu0 %v4022, 64
  %v5568 = vpop.permute.xlu0 %5567
  %5569 = vrot.lane.b32.xlu0 %v4192, 64
  %v5570 = vpop.permute.xlu0 %5569
  %5571 = vrot.lane.b32.xlu0 %v4025, 64
  %v5572 = vpop.permute.xlu0 %5571
  %5573 = vrot.lane.b32.xlu0 %v4193, 64
  %v5574 = vpop.permute.xlu0 %5573
  %5575 = vrot.lane.b32.xlu0 %v4028, 64
  %v5576 = vpop.permute.xlu0 %5575
  %5577 = vrot.lane.b32.xlu0 %v4194, 64
  %v5578 = vpop.permute.xlu0 %5577
  %5579 = vrot.lane.b32.xlu0 %v4031, 64
  %v5580 = vpop.permute.xlu0 %5579
  %5581 = vrot.lane.b32.xlu0 %v4195, 64
  %v5582 = vpop.permute.xlu0 %5581
  %5583 = vrot.lane.b32.xlu0 %v4034, 64
  %v5584 = vpop.permute.xlu0 %5583
  %5585 = vrot.lane.b32.xlu0 %v4179, 64
  %v5586 = vpop.permute.xlu0 %5585
  %5587 = vrot.lane.b32.xlu0 %v3986, 64
  %v5588 = vpop.permute.xlu0 %5587
  %5589 = vrot.lane.b32.xlu0 %v4197, 64
  %v5590 = vpop.permute.xlu0 %5589
  %5591 = vrot.lane.b32.xlu0 %v4040, 64
  %v5592 = vpop.permute.xlu0 %5591
  %5593 = vrot.lane.b32.xlu0 %v4198, 64
  %v5594 = vpop.permute.xlu0 %5593
  %5595 = vrot.lane.b32.xlu0 %v4043, 64
  %v5596 = vpop.permute.xlu0 %5595
  %5597 = vrot.lane.b32.xlu0 %v4199, 64
  %v5598 = vpop.permute.xlu0 %5597
  %5599 = vrot.lane.b32.xlu0 %v4046, 64
  %v5600 = vpop.permute.xlu0 %5599
  %5601 = vrot.lane.b32.xlu0 %v4200, 64
  %v5602 = vpop.permute.xlu0 %5601
  %5603 = vrot.lane.b32.xlu0 %v4049, 64
  %v5604 = vpop.permute.xlu0 %5603
  %5605 = vrot.lane.b32.xlu0 %v4201, 64
  %v5606 = vpop.permute.xlu0 %5605
  %5607 = vrot.lane.b32.xlu0 %v4052, 64
  %v5608 = vpop.permute.xlu0 %5607
  %5609 = vrot.lane.b32.xlu0 %v4202, 64
  %v5610 = vpop.permute.xlu0 %5609
  %5611 = vrot.lane.b32.xlu0 %v4055, 64
  %v5612 = vpop.permute.xlu0 %5611
  %5613 = vrot.lane.b32.xlu0 %v4203, 64
  %v5614 = vpop.permute.xlu0 %5613
  %5615 = vrot.lane.b32.xlu0 %v4058, 64
  %v5616 = vpop.permute.xlu0 %5615
  %5617 = vrot.lane.b32.xlu0 %v4204, 64
  %v5618 = vpop.permute.xlu0 %5617
  %5619 = vrot.lane.b32.xlu0 %v4061, 64
  %v5620 = vpop.permute.xlu0 %5619
  %5621 = vrot.lane.b32.xlu0 %v4205, 64
  %v5622 = vpop.permute.xlu0 %5621
  %5623 = vrot.lane.b32.xlu0 %v4064, 64
  %v5624 = vpop.permute.xlu0 %5623
  %5625 = vrot.lane.b32.xlu0 %v4206, 64
  %v5626 = vpop.permute.xlu0 %5625
  %5627 = vrot.lane.b32.xlu0 %v4067, 64
  %v5628 = vpop.permute.xlu0 %5627
  %5629 = vrot.lane.b32.xlu0 %v4207, 64
  %v5630 = vpop.permute.xlu0 %5629
  %5631 = vrot.lane.b32.xlu0 %v4070, 64
  %v5632 = vpop.permute.xlu0 %5631
  %5633 = vrot.lane.b32.xlu0 %v4208, 64
  %v5634 = vpop.permute.xlu0 %5633
  %5635 = vrot.lane.b32.xlu0 %v4073, 64
  %v5636 = vpop.permute.xlu0 %5635
  %5637 = vrot.lane.b32.xlu0 %v4209, 64
  %v5638 = vpop.permute.xlu0 %5637
  %5639 = vrot.lane.b32.xlu0 %v4076, 64
  %v5640 = vpop.permute.xlu0 %5639
  %5641 = vrot.lane.b32.xlu0 %v4210, 64
  %v5642 = vpop.permute.xlu0 %5641
  %5643 = vrot.lane.b32.xlu0 %v4079, 64
  %v5644 = vpop.permute.xlu0 %5643
  %5645 = vrot.lane.b32.xlu0 %v4211, 64
  %v5646 = vpop.permute.xlu0 %5645
  %5647 = vrot.lane.b32.xlu0 %v4082, 64
  %v5648 = vpop.permute.xlu0 %5647
  %5711 = vrot.lane.b32.xlu0 %v4320, 96
  %v5712 = vpop.permute.xlu0 %5711
  %5713 = vrot.lane.b32.xlu0 %v4322, 96
  %v5714 = vpop.permute.xlu0 %5713
  %5715 = vrot.lane.b32.xlu0 %v4325, 96
  %v5716 = vpop.permute.xlu0 %5715
  %5717 = vrot.lane.b32.xlu0 %v4327, 96
  %v5718 = vpop.permute.xlu0 %5717
  %5719 = vrot.lane.b32.xlu0 %v4330, 96
  %v5720 = vpop.permute.xlu0 %5719
  %5721 = vrot.lane.b32.xlu0 %v4332, 96
  %v5722 = vpop.permute.xlu0 %5721
  %5723 = vrot.lane.b32.xlu0 %v4335, 96
  %v5724 = vpop.permute.xlu0 %5723
  %5725 = vrot.lane.b32.xlu0 %v4337, 96
  %v5726 = vpop.permute.xlu0 %5725
  %5727 = vrot.lane.b32.xlu0 %v4340, 96
  %v5728 = vpop.permute.xlu0 %5727
  %5729 = vrot.lane.b32.xlu0 %v4342, 96
  %v5730 = vpop.permute.xlu0 %5729
  %5731 = vrot.lane.b32.xlu0 %v4345, 96
  %v5732 = vpop.permute.xlu0 %5731
  %5733 = vrot.lane.b32.xlu0 %v4347, 96
  %v5734 = vpop.permute.xlu0 %5733
  %5735 = vrot.lane.b32.xlu0 %v4350, 96
  %v5736 = vpop.permute.xlu0 %5735
  %5737 = vrot.lane.b32.xlu0 %v4352, 96
  %v5738 = vpop.permute.xlu0 %5737
  %5739 = vrot.lane.b32.xlu0 %v4355, 96
  %v5740 = vpop.permute.xlu0 %5739
  %5741 = vrot.lane.b32.xlu0 %v4357, 96
  %v5742 = vpop.permute.xlu0 %5741
  %5743 = vrot.lane.b32.xlu0 %v4360, 96
  %v5744 = vpop.permute.xlu0 %5743
  %5745 = vrot.lane.b32.xlu0 %v4362, 96
  %v5746 = vpop.permute.xlu0 %5745
  %5747 = vrot.lane.b32.xlu0 %v4365, 96
  %v5748 = vpop.permute.xlu0 %5747
  %5749 = vrot.lane.b32.xlu0 %v4367, 96
  %v5750 = vpop.permute.xlu0 %5749
  %5751 = vrot.lane.b32.xlu0 %v4370, 96
  %v5752 = vpop.permute.xlu0 %5751
  %5753 = vrot.lane.b32.xlu0 %v4372, 96
  %v5754 = vpop.permute.xlu0 %5753
  %5755 = vrot.lane.b32.xlu0 %v4375, 96
  %v5756 = vpop.permute.xlu0 %5755
  %5757 = vrot.lane.b32.xlu0 %v4377, 96
  %v5758 = vpop.permute.xlu0 %5757
  %5759 = vrot.lane.b32.xlu0 %v4380, 96
  %v5760 = vpop.permute.xlu0 %5759
  %5761 = vrot.lane.b32.xlu0 %v4382, 96
  %v5762 = vpop.permute.xlu0 %5761
  %5763 = vrot.lane.b32.xlu0 %v4385, 96
  %v5764 = vpop.permute.xlu0 %5763
  %5765 = vrot.lane.b32.xlu0 %v4387, 96
  %v5766 = vpop.permute.xlu0 %5765
  %5767 = vrot.lane.b32.xlu0 %v4625, 96
  %v5768 = vpop.permute.xlu0 %5767
  %5769 = vrot.lane.b32.xlu0 %v4627, 96
  %v5770 = vpop.permute.xlu0 %5769
  %5771 = vrot.lane.b32.xlu0 %v4310, 96
  %v5772 = vpop.permute.xlu0 %5771
  %5773 = vrot.lane.b32.xlu0 %v4312, 96
  %v5774 = vpop.permute.xlu0 %5773
  %5775 = vrot.lane.b32.xlu0 %v4395, 96
  %v5776 = vpop.permute.xlu0 %5775
  %5777 = vrot.lane.b32.xlu0 %v4397, 96
  %v5778 = vpop.permute.xlu0 %5777
  %5779 = vrot.lane.b32.xlu0 %v4400, 96
  %v5780 = vpop.permute.xlu0 %5779
  %5781 = vrot.lane.b32.xlu0 %v4402, 96
  %v5782 = vpop.permute.xlu0 %5781
  %5783 = vrot.lane.b32.xlu0 %v4405, 96
  %v5784 = vpop.permute.xlu0 %5783
  %5785 = vrot.lane.b32.xlu0 %v4407, 96
  %v5786 = vpop.permute.xlu0 %5785
  %5787 = vrot.lane.b32.xlu0 %v4410, 96
  %v5788 = vpop.permute.xlu0 %5787
  %5789 = vrot.lane.b32.xlu0 %v4412, 96
  %v5790 = vpop.permute.xlu0 %5789
  %5791 = vrot.lane.b32.xlu0 %v4415, 96
  %v5792 = vpop.permute.xlu0 %5791
  %5793 = vrot.lane.b32.xlu0 %v4417, 96
  %v5794 = vpop.permute.xlu0 %5793
  %5795 = vrot.lane.b32.xlu0 %v4420, 96
  %v5796 = vpop.permute.xlu0 %5795
  %5797 = vrot.lane.b32.xlu0 %v4422, 96
  %v5798 = vpop.permute.xlu0 %5797
  %5799 = vrot.lane.b32.xlu0 %v4425, 96
  %v5800 = vpop.permute.xlu0 %5799
  %5801 = vrot.lane.b32.xlu0 %v4427, 96
  %v5802 = vpop.permute.xlu0 %5801
  %5803 = vrot.lane.b32.xlu0 %v4430, 96
  %v5804 = vpop.permute.xlu0 %5803
  %5805 = vrot.lane.b32.xlu0 %v4432, 96
  %v5806 = vpop.permute.xlu0 %5805
  %5807 = vrot.lane.b32.xlu0 %v4435, 96
  %v5808 = vpop.permute.xlu0 %5807
  %5809 = vrot.lane.b32.xlu0 %v4437, 96
  %v5810 = vpop.permute.xlu0 %5809
  %5811 = vrot.lane.b32.xlu0 %v4440, 96
  %v5812 = vpop.permute.xlu0 %5811
  %5813 = vrot.lane.b32.xlu0 %v4442, 96
  %v5814 = vpop.permute.xlu0 %5813
  %5815 = vrot.lane.b32.xlu0 %v4445, 96
  %v5816 = vpop.permute.xlu0 %5815
  %5817 = vrot.lane.b32.xlu0 %v4447, 96
  %v5818 = vpop.permute.xlu0 %5817
  %5819 = vrot.lane.b32.xlu0 %v4450, 96
  %v5820 = vpop.permute.xlu0 %5819
  %5821 = vrot.lane.b32.xlu0 %v4452, 96
  %v5822 = vpop.permute.xlu0 %5821
  %5823 = vrot.lane.b32.xlu0 %v4455, 96
  %v5824 = vpop.permute.xlu0 %5823
  %5825 = vrot.lane.b32.xlu0 %v4457, 96
  %v5826 = vpop.permute.xlu0 %5825
  %5827 = vrot.lane.b32.xlu0 %v4460, 96
  %v5828 = vpop.permute.xlu0 %5827
  %5829 = vrot.lane.b32.xlu0 %v4462, 96
  %v5830 = vpop.permute.xlu0 %5829
  %5831 = vrot.lane.b32.xlu0 %v4630, 96
  %v5832 = vpop.permute.xlu0 %5831
  %5833 = vrot.lane.b32.xlu0 %v4632, 96
  %v5834 = vpop.permute.xlu0 %5833
  %v5897 = vsel %vm2141, %v4179, %v4770
  %v5898 = vsel %vm2141, %v3986, %v4772
  %v5899 = vsel %vm2141, %v4180, %v4774
  %v5900 = vsel %vm2141, %v3989, %v4776
  %v5901 = vsel %vm2141, %v4181, %v4778
  %v5902 = vsel %vm2141, %v3992, %v4780
  %v5903 = vsel %vm2141, %v4182, %v4782
  %v5904 = vsel %vm2141, %v3995, %v4784
  %v5905 = vsel %vm2141, %v4183, %v4786
  %v5906 = vsel %vm2141, %v3998, %v4788
  %v5907 = vsel %vm2141, %v4184, %v4790
  %v5908 = vsel %vm2141, %v4001, %v4792
  %v5909 = vsel %vm2141, %v4185, %v4794
  %v5910 = vsel %vm2141, %v4004, %v4796
  %v5911 = vsel %vm2141, %v4186, %v4798
  %v5912 = vsel %vm2141, %v4007, %v4800
  %v5913 = vsel %vm2141, %v4187, %v4802
  %v5914 = vsel %vm2141, %v4010, %v4804
  %v5915 = vsel %vm2141, %v4188, %v4806
  %v5916 = vsel %vm2141, %v4013, %v4808
  %v5917 = vsel %vm2141, %v4189, %v4810
  %v5918 = vsel %vm2141, %v4016, %v4812
  %v5919 = vsel %vm2141, %v4190, %v4814
  %v5920 = vsel %vm2141, %v4019, %v4816
  %v5921 = vsel %vm2141, %v4191, %v4818
  %v5922 = vsel %vm2141, %v4022, %v4820
  %v5923 = vsel %vm2141, %v4192, %v4822
  %v5924 = vsel %vm2141, %v4025, %v4824
  %v5925 = vsel %vm2141, %v4193, %v4826
  %v5926 = vsel %vm2141, %v4028, %v4828
  %v5927 = vsel %vm2141, %v4194, %v4830
  %v5928 = vsel %vm2141, %v4031, %v4832
  %v5929 = vsel %vm2141, %v4196, %v4834
  %v5930 = vsel %vm2141, %v4037, %v4836
  %v5931 = vsel %vm2141, %v4197, %v4838
  %v5932 = vsel %vm2141, %v4040, %v4840
  %v5933 = vsel %vm2141, %v4198, %v4842
  %v5934 = vsel %vm2141, %v4043, %v4844
  %v5935 = vsel %vm2141, %v4199, %v4846
  %v5936 = vsel %vm2141, %v4046, %v4848
  %v5937 = vsel %vm2141, %v4200, %v4850
  %v5938 = vsel %vm2141, %v4049, %v4852
  %v5939 = vsel %vm2141, %v4201, %v4854
  %v5940 = vsel %vm2141, %v4052, %v4856
  %v5941 = vsel %vm2141, %v4202, %v4858
  %v5942 = vsel %vm2141, %v4055, %v4860
  %v5943 = vsel %vm2141, %v4203, %v4862
  %v5944 = vsel %vm2141, %v4058, %v4864
  %v5945 = vsel %vm2141, %v4204, %v4866
  %v5946 = vsel %vm2141, %v4061, %v4868
  %v5947 = vsel %vm2141, %v4205, %v4870
  %v5948 = vsel %vm2141, %v4064, %v4872
  %v5949 = vsel %vm2141, %v4206, %v4874
  %v5950 = vsel %vm2141, %v4067, %v4876
  %v5951 = vsel %vm2141, %v4207, %v4878
  %v5952 = vsel %vm2141, %v4070, %v4880
  %v5953 = vsel %vm2141, %v4208, %v4882
  %v5954 = vsel %vm2141, %v4073, %v4884
  %v5955 = vsel %vm2141, %v4209, %v4886
  %v5956 = vsel %vm2141, %v4076, %v4888
  %v5957 = vsel %vm2141, %v4210, %v4890
  %v5958 = vsel %vm2141, %v4079, %v4892
  %v5959 = vsel %vm2206, %v5897, %v4956
  %v5960 = vsel %vm2206, %v5898, %v4958
  %v5961 = vsel %vm2206, %v5899, %v4960
  %v5962 = vsel %vm2206, %v5900, %v4962
  %v5963 = vsel %vm2206, %v5901, %v4964
  %v5964 = vsel %vm2206, %v5902, %v4966
  %v5965 = vsel %vm2206, %v5903, %v4968
  %v5966 = vsel %vm2206, %v5904, %v4970
  %v5967 = vsel %vm2206, %v5905, %v4972
  %v5968 = vsel %vm2206, %v5906, %v4974
  %v5969 = vsel %vm2206, %v5907, %v4976
  %v5970 = vsel %vm2206, %v5908, %v4978
  %v5971 = vsel %vm2206, %v5909, %v4980
  %v5972 = vsel %vm2206, %v5910, %v4982
  %v5973 = vsel %vm2206, %v5911, %v4984
  %v5974 = vsel %vm2206, %v5912, %v4986
  %v5975 = vsel %vm2206, %v5913, %v4988
  %v5976 = vsel %vm2206, %v5914, %v4990
  %v5977 = vsel %vm2206, %v5915, %v4992
  %v5978 = vsel %vm2206, %v5916, %v4994
  %v5979 = vsel %vm2206, %v5917, %v4996
  %v5980 = vsel %vm2206, %v5918, %v4998
  %v5981 = vsel %vm2206, %v5919, %v5000
  %v5982 = vsel %vm2206, %v5920, %v5002
  %v5983 = vsel %vm2206, %v5921, %v5004
  %v5984 = vsel %vm2206, %v5922, %v5006
  %v5985 = vsel %vm2206, %v5923, %v5008
  %v5986 = vsel %vm2206, %v5924, %v5010
  %v5987 = vsel %vm2206, %v5925, %v5012
  %v5988 = vsel %vm2206, %v5926, %v5014
  %v5989 = vsel %vm2206, %v5927, %v5016
  %v5990 = vsel %vm2206, %v5928, %v5018
  %v5991 = vsel %vm2206, %v5929, %v5020
  %v5992 = vsel %vm2206, %v5930, %v5022
  %v5993 = vsel %vm2206, %v5931, %v5024
  %v5994 = vsel %vm2206, %v5932, %v5026
  %v5995 = vsel %vm2206, %v5933, %v5028
  %v5996 = vsel %vm2206, %v5934, %v5030
  %v5997 = vsel %vm2206, %v5935, %v5032
  %v5998 = vsel %vm2206, %v5936, %v5034
  %v5999 = vsel %vm2206, %v5937, %v5036
  %v6000 = vsel %vm2206, %v5938, %v5038
  %v6001 = vsel %vm2206, %v5939, %v5040
  %v6002 = vsel %vm2206, %v5940, %v5042
  %v6003 = vsel %vm2206, %v5941, %v5044
  %v6004 = vsel %vm2206, %v5942, %v5046
  %v6005 = vsel %vm2206, %v5943, %v5048
  %v6006 = vsel %vm2206, %v5944, %v5050
  %v6007 = vsel %vm2206, %v5945, %v5052
  %v6008 = vsel %vm2206, %v5946, %v5054
  %v6009 = vsel %vm2206, %v5947, %v5056
  %v6010 = vsel %vm2206, %v5948, %v5058
  %v6011 = vsel %vm2206, %v5949, %v5060
  %v6012 = vsel %vm2206, %v5950, %v5062
  %v6013 = vsel %vm2206, %v5951, %v5064
  %v6014 = vsel %vm2206, %v5952, %v5066
  %v6015 = vsel %vm2206, %v5953, %v5068
  %v6016 = vsel %vm2206, %v5954, %v5070
  %v6017 = vsel %vm2206, %v5955, %v5072
  %v6018 = vsel %vm2206, %v5956, %v5074
  %v6019 = vsel %vm2206, %v5957, %v5076
  %v6020 = vsel %vm2206, %v5958, %v5078
  %v6021 = vsel %vm2271, %v5959, %v5142
  %v6022 = vsel %vm2271, %v5960, %v5144
  %v6023 = vsel %vm2271, %v5961, %v5146
  %v6024 = vsel %vm2271, %v5962, %v5148
  %v6025 = vsel %vm2271, %v5963, %v5150
  %v6026 = vsel %vm2271, %v5964, %v5152
  %v6027 = vsel %vm2271, %v5965, %v5154
  %v6028 = vsel %vm2271, %v5966, %v5156
  %v6029 = vsel %vm2271, %v5967, %v5158
  %v6030 = vsel %vm2271, %v5968, %v5160
  %v6031 = vsel %vm2271, %v5969, %v5162
  %v6032 = vsel %vm2271, %v5970, %v5164
  %v6033 = vsel %vm2271, %v5971, %v5166
  %v6034 = vsel %vm2271, %v5972, %v5168
  %v6035 = vsel %vm2271, %v5973, %v5170
  %v6036 = vsel %vm2271, %v5974, %v5172
  %v6037 = vsel %vm2271, %v5975, %v5174
  %v6038 = vsel %vm2271, %v5976, %v5176
  %v6039 = vsel %vm2271, %v5977, %v5178
  %v6040 = vsel %vm2271, %v5978, %v5180
  %v6041 = vsel %vm2271, %v5979, %v5182
  %v6042 = vsel %vm2271, %v5980, %v5184
  %v6043 = vsel %vm2271, %v5981, %v5186
  %v6044 = vsel %vm2271, %v5982, %v5188
  %v6045 = vsel %vm2271, %v5983, %v5190
  %v6046 = vsel %vm2271, %v5984, %v5192
  %v6047 = vsel %vm2271, %v5985, %v5194
  %v6048 = vsel %vm2271, %v5986, %v5196
  %v6049 = vsel %vm2271, %v5987, %v5198
  %v6050 = vsel %vm2271, %v5988, %v5200
  %v6051 = vsel %vm2271, %v5989, %v5202
  %v6052 = vsel %vm2271, %v5990, %v5204
  %v6053 = vsel %vm2271, %v5959, %v5206
  %v6054 = vsel %vm2271, %v5960, %v5208
  %v6055 = vsel %vm2271, %v5991, %v5210
  %v6056 = vsel %vm2271, %v5992, %v5212
  %v6057 = vsel %vm2271, %v5993, %v5214
  %v6058 = vsel %vm2271, %v5994, %v5216
  %v6059 = vsel %vm2271, %v5995, %v5218
  %v6060 = vsel %vm2271, %v5996, %v5220
  %v6061 = vsel %vm2271, %v5997, %v5222
  %v6062 = vsel %vm2271, %v5998, %v5224
  %v6063 = vsel %vm2271, %v5999, %v5226
  %v6064 = vsel %vm2271, %v6000, %v5228
  %v6065 = vsel %vm2271, %v6001, %v5230
  %v6066 = vsel %vm2271, %v6002, %v5232
  %v6067 = vsel %vm2271, %v6003, %v5234
  %v6068 = vsel %vm2271, %v6004, %v5236
  %v6069 = vsel %vm2271, %v6005, %v5238
  %v6070 = vsel %vm2271, %v6006, %v5240
  %v6071 = vsel %vm2271, %v6007, %v5242
  %v6072 = vsel %vm2271, %v6008, %v5244
  %v6073 = vsel %vm2271, %v6009, %v5246
  %v6074 = vsel %vm2271, %v6010, %v5248
  %v6075 = vsel %vm2271, %v6011, %v5250
  %v6076 = vsel %vm2271, %v6012, %v5252
  %v6077 = vsel %vm2271, %v6013, %v5254
  %v6078 = vsel %vm2271, %v6014, %v5256
  %v6079 = vsel %vm2271, %v6015, %v5258
  %v6080 = vsel %vm2271, %v6016, %v5260
  %v6081 = vsel %vm2271, %v6017, %v5262
  %v6082 = vsel %vm2271, %v6018, %v5264
  %v6083 = vsel %vm2271, %v6019, %v5266
  %v6084 = vsel %vm2271, %v6020, %v5268
  %v6085 = vsel %vm2141, %v4315, %v5334
  %v6086 = vsel %vm2141, %v4317, %v5336
  %v6087 = vsel %vm2141, %v4320, %v5338
  %v6088 = vsel %vm2141, %v4322, %v5340
  %v6089 = vsel %vm2141, %v4325, %v5342
  %v6090 = vsel %vm2141, %v4327, %v5344
  %v6091 = vsel %vm2141, %v4330, %v5346
  %v6092 = vsel %vm2141, %v4332, %v5348
  %v6093 = vsel %vm2141, %v4335, %v5350
  %v6094 = vsel %vm2141, %v4337, %v5352
  %v6095 = vsel %vm2141, %v4340, %v5354
  %v6096 = vsel %vm2141, %v4342, %v5356
  %v6097 = vsel %vm2141, %v4345, %v5358
  %v6098 = vsel %vm2141, %v4347, %v5360
  %v6099 = vsel %vm2141, %v4350, %v5362
  %v6100 = vsel %vm2141, %v4352, %v5364
  %v6101 = vsel %vm2141, %v4355, %v5366
  %v6102 = vsel %vm2141, %v4357, %v5368
  %v6103 = vsel %vm2141, %v4360, %v5370
  %v6104 = vsel %vm2141, %v4362, %v5372
  %v6105 = vsel %vm2141, %v4365, %v5374
  %v6106 = vsel %vm2141, %v4367, %v5376
  %v6107 = vsel %vm2141, %v4370, %v5378
  %v6108 = vsel %vm2141, %v4372, %v5380
  %v6109 = vsel %vm2141, %v4375, %v5382
  %v6110 = vsel %vm2141, %v4377, %v5384
  %v6111 = vsel %vm2141, %v4380, %v5386
  %v6112 = vsel %vm2141, %v4382, %v5388
  %v6113 = vsel %vm2141, %v4385, %v5390
  %v6114 = vsel %vm2141, %v4387, %v5392
  %v6115 = vsel %vm2141, %v4625, %v5394
  %v6116 = vsel %vm2141, %v4627, %v5396
  %v6117 = vsel %vm2141, %v4390, %v5398
  %v6118 = vsel %vm2141, %v4392, %v5400
  %v6119 = vsel %vm2141, %v4395, %v5402
  %v6120 = vsel %vm2141, %v4397, %v5404
  %v6121 = vsel %vm2141, %v4400, %v5406
  %v6122 = vsel %vm2141, %v4402, %v5408
  %v6123 = vsel %vm2141, %v4405, %v5410
  %v6124 = vsel %vm2141, %v4407, %v5412
  %v6125 = vsel %vm2141, %v4410, %v5414
  %v6126 = vsel %vm2141, %v4412, %v5416
  %v6127 = vsel %vm2141, %v4415, %v5418
  %v6128 = vsel %vm2141, %v4417, %v5420
  %v6129 = vsel %vm2141, %v4420, %v5422
  %v6130 = vsel %vm2141, %v4422, %v5424
  %v6131 = vsel %vm2141, %v4425, %v5426
  %v6132 = vsel %vm2141, %v4427, %v5428
  %v6133 = vsel %vm2141, %v4430, %v5430
  %v6134 = vsel %vm2141, %v4432, %v5432
  %v6135 = vsel %vm2141, %v4435, %v5434
  %v6136 = vsel %vm2141, %v4437, %v5436
  %v6137 = vsel %vm2141, %v4440, %v5438
  %v6138 = vsel %vm2141, %v4442, %v5440
  %v6139 = vsel %vm2141, %v4445, %v5442
  %v6140 = vsel %vm2141, %v4447, %v5444
  %v6141 = vsel %vm2141, %v4450, %v5446
  %v6142 = vsel %vm2141, %v4452, %v5448
  %v6143 = vsel %vm2141, %v4455, %v5450
  %v6144 = vsel %vm2141, %v4457, %v5452
  %v6145 = vsel %vm2141, %v4460, %v5454
  %v6146 = vsel %vm2141, %v4462, %v5456
  %v6147 = vsel %vm2141, %v4630, %v5458
  %v6148 = vsel %vm2141, %v4632, %v5460
  %v6149 = vsel %vm2206, %v6085, %v5526
  %v6150 = vsel %vm2206, %v6086, %v5528
  %v6151 = vsel %vm2206, %v6087, %v5530
  %v6152 = vsel %vm2206, %v6088, %v5532
  %v6153 = vsel %vm2206, %v6089, %v5534
  %v6154 = vsel %vm2206, %v6090, %v5536
  %v6155 = vsel %vm2206, %v6091, %v5538
  %v6156 = vsel %vm2206, %v6092, %v5540
  %v6157 = vsel %vm2206, %v6093, %v5542
  %v6158 = vsel %vm2206, %v6094, %v5544
  %v6159 = vsel %vm2206, %v6095, %v5546
  %v6160 = vsel %vm2206, %v6096, %v5548
  %v6161 = vsel %vm2206, %v6097, %v5550
  %v6162 = vsel %vm2206, %v6098, %v5552
  %v6163 = vsel %vm2206, %v6099, %v5554
  %v6164 = vsel %vm2206, %v6100, %v5556
  %v6165 = vsel %vm2206, %v6101, %v5558
  %v6166 = vsel %vm2206, %v6102, %v5560
  %v6167 = vsel %vm2206, %v6103, %v5562
  %v6168 = vsel %vm2206, %v6104, %v5564
  %v6169 = vsel %vm2206, %v6105, %v5566
  %v6170 = vsel %vm2206, %v6106, %v5568
  %v6171 = vsel %vm2206, %v6107, %v5570
  %v6172 = vsel %vm2206, %v6108, %v5572
  %v6173 = vsel %vm2206, %v6109, %v5574
  %v6174 = vsel %vm2206, %v6110, %v5576
  %v6175 = vsel %vm2206, %v6111, %v5578
  %v6176 = vsel %vm2206, %v6112, %v5580
  %v6177 = vsel %vm2206, %v6113, %v5582
  %v6178 = vsel %vm2206, %v6114, %v5584
  %v6179 = vsel %vm2206, %v6115, %v5586
  %v6180 = vsel %vm2206, %v6116, %v5588
  %v6181 = vsel %vm2206, %v6117, %v5590
  %v6182 = vsel %vm2206, %v6118, %v5592
  %v6183 = vsel %vm2206, %v6119, %v5594
  %v6184 = vsel %vm2206, %v6120, %v5596
  %v6185 = vsel %vm2206, %v6121, %v5598
  %v6186 = vsel %vm2206, %v6122, %v5600
  %v6187 = vsel %vm2206, %v6123, %v5602
  %v6188 = vsel %vm2206, %v6124, %v5604
  %v6189 = vsel %vm2206, %v6125, %v5606
  %v6190 = vsel %vm2206, %v6126, %v5608
  %v6191 = vsel %vm2206, %v6127, %v5610
  %v6192 = vsel %vm2206, %v6128, %v5612
  %v6193 = vsel %vm2206, %v6129, %v5614
  %v6194 = vsel %vm2206, %v6130, %v5616
  %v6195 = vsel %vm2206, %v6131, %v5618
  %v6196 = vsel %vm2206, %v6132, %v5620
  %v6197 = vsel %vm2206, %v6133, %v5622
  %v6198 = vsel %vm2206, %v6134, %v5624
  %v6199 = vsel %vm2206, %v6135, %v5626
  %v6200 = vsel %vm2206, %v6136, %v5628
  %v6201 = vsel %vm2206, %v6137, %v5630
  %v6202 = vsel %vm2206, %v6138, %v5632
  %v6203 = vsel %vm2206, %v6139, %v5634
  %v6204 = vsel %vm2206, %v6140, %v5636
  %v6205 = vsel %vm2206, %v6141, %v5638
  %v6206 = vsel %vm2206, %v6142, %v5640
  %v6207 = vsel %vm2206, %v6143, %v5642
  %v6208 = vsel %vm2206, %v6144, %v5644
  %v6209 = vsel %vm2206, %v6145, %v5646
  %v6210 = vsel %vm2206, %v6146, %v5648
  %v6211 = vsel %vm2206, %v6147, %v5586
  %v6212 = vsel %vm2206, %v6148, %v5588
  %v6213 = vsel %vm2271, %v6149, %v5712
  %v6214 = vsel %vm2271, %v6150, %v5714
  %v6215 = vsel %vm2271, %v6151, %v5716
  %v6216 = vsel %vm2271, %v6152, %v5718
  %v6217 = vsel %vm2271, %v6153, %v5720
  %v6218 = vsel %vm2271, %v6154, %v5722
  %v6219 = vsel %vm2271, %v6155, %v5724
  %v6220 = vsel %vm2271, %v6156, %v5726
  %v6221 = vsel %vm2271, %v6157, %v5728
  %v6222 = vsel %vm2271, %v6158, %v5730
  %v6223 = vsel %vm2271, %v6159, %v5732
  %v6224 = vsel %vm2271, %v6160, %v5734
  %v6225 = vsel %vm2271, %v6161, %v5736
  %v6226 = vsel %vm2271, %v6162, %v5738
  %v6227 = vsel %vm2271, %v6163, %v5740
  %v6228 = vsel %vm2271, %v6164, %v5742
  %v6229 = vsel %vm2271, %v6165, %v5744
  %v6230 = vsel %vm2271, %v6166, %v5746
  %v6231 = vsel %vm2271, %v6167, %v5748
  %v6232 = vsel %vm2271, %v6168, %v5750
  %v6233 = vsel %vm2271, %v6169, %v5752
  %v6234 = vsel %vm2271, %v6170, %v5754
  %v6235 = vsel %vm2271, %v6171, %v5756
  %v6236 = vsel %vm2271, %v6172, %v5758
  %v6237 = vsel %vm2271, %v6173, %v5760
  %v6238 = vsel %vm2271, %v6174, %v5762
  %v6239 = vsel %vm2271, %v6175, %v5764
  %v6240 = vsel %vm2271, %v6176, %v5766
  %v6241 = vsel %vm2271, %v6177, %v5768
  %v6242 = vsel %vm2271, %v6178, %v5770
  %v6243 = vsel %vm2271, %v6179, %v5772
  %v6244 = vsel %vm2271, %v6180, %v5774
  %v6245 = vsel %vm2271, %v6181, %v5776
  %v6246 = vsel %vm2271, %v6182, %v5778
  %v6247 = vsel %vm2271, %v6183, %v5780
  %v6248 = vsel %vm2271, %v6184, %v5782
  %v6249 = vsel %vm2271, %v6185, %v5784
  %v6250 = vsel %vm2271, %v6186, %v5786
  %v6251 = vsel %vm2271, %v6187, %v5788
  %v6252 = vsel %vm2271, %v6188, %v5790
  %v6253 = vsel %vm2271, %v6189, %v5792
  %v6254 = vsel %vm2271, %v6190, %v5794
  %v6255 = vsel %vm2271, %v6191, %v5796
  %v6256 = vsel %vm2271, %v6192, %v5798
  %v6257 = vsel %vm2271, %v6193, %v5800
  %v6258 = vsel %vm2271, %v6194, %v5802
  %v6259 = vsel %vm2271, %v6195, %v5804
  %v6260 = vsel %vm2271, %v6196, %v5806
  %v6261 = vsel %vm2271, %v6197, %v5808
  %v6262 = vsel %vm2271, %v6198, %v5810
  %v6263 = vsel %vm2271, %v6199, %v5812
  %v6264 = vsel %vm2271, %v6200, %v5814
  %v6265 = vsel %vm2271, %v6201, %v5816
  %v6266 = vsel %vm2271, %v6202, %v5818
  %v6267 = vsel %vm2271, %v6203, %v5820
  %v6268 = vsel %vm2271, %v6204, %v5822
  %v6269 = vsel %vm2271, %v6205, %v5824
  %v6270 = vsel %vm2271, %v6206, %v5826
  %v6271 = vsel %vm2271, %v6207, %v5828
  %v6272 = vsel %vm2271, %v6208, %v5830
  %v6273 = vsel %vm2271, %v6209, %v5832
  %v6274 = vsel %vm2271, %v6210, %v5834
  %v6275 = vsel %vm2271, %v6211, %v5772
  %v6276 = vsel %vm2271, %v6212, %v5774
  %v6277 = vpack.c.bf16 %v6022, %v6021
  %v6278 = vpack.c.bf16 %v6214, %v6213
  %v6279 = vpack.c.bf16 %v4478, %v4476
  %v6280 = vpack.c.bf16 %v6024, %v6023
  %v6281 = vpack.c.bf16 %v6216, %v6215
  %v6282 = vpack.c.bf16 %v4483, %v4481
  %v6283 = vpack.c.bf16 %v6026, %v6025
  %v6284 = vpack.c.bf16 %v6218, %v6217
  %v6285 = vpack.c.bf16 %v4488, %v4486
  %v6286 = vpack.c.bf16 %v6028, %v6027
  %v6287 = vpack.c.bf16 %v6220, %v6219
  %v6288 = vpack.c.bf16 %v4493, %v4491
  %v6289 = vpack.c.bf16 %v6030, %v6029
  %v6290 = vpack.c.bf16 %v6222, %v6221
  %v6291 = vpack.c.bf16 %v4498, %v4496
  %v6292 = vpack.c.bf16 %v6032, %v6031
  %v6293 = vpack.c.bf16 %v6224, %v6223
  %v6294 = vpack.c.bf16 %v4503, %v4501
  %v6295 = vpack.c.bf16 %v6034, %v6033
  %v6296 = vpack.c.bf16 %v6226, %v6225
  %v6297 = vpack.c.bf16 %v4508, %v4506
  %v6298 = vpack.c.bf16 %v6036, %v6035
  %v6299 = vpack.c.bf16 %v6228, %v6227
  %v6300 = vpack.c.bf16 %v4513, %v4511
  %v6301 = vpack.c.bf16 %v6038, %v6037
  %v6302 = vpack.c.bf16 %v6230, %v6229
  %v6303 = vpack.c.bf16 %v4518, %v4516
  %v6304 = vpack.c.bf16 %v6040, %v6039
  %v6305 = vpack.c.bf16 %v6232, %v6231
  %v6306 = vpack.c.bf16 %v4523, %v4521
  %v6307 = vpack.c.bf16 %v6042, %v6041
  %v6308 = vpack.c.bf16 %v6234, %v6233
  %v6309 = vpack.c.bf16 %v4528, %v4526
  %v6310 = vpack.c.bf16 %v6044, %v6043
  %v6311 = vpack.c.bf16 %v6236, %v6235
  %v6312 = vpack.c.bf16 %v4533, %v4531
  %v6313 = vpack.c.bf16 %v6046, %v6045
  %v6314 = vpack.c.bf16 %v6238, %v6237
  %v6315 = vpack.c.bf16 %v4538, %v4536
  %v6316 = vpack.c.bf16 %v6048, %v6047
  %v6317 = vpack.c.bf16 %v6240, %v6239
  %v6318 = vpack.c.bf16 %v4543, %v4541
  %v6319 = vpack.c.bf16 %v6050, %v6049
  %v6320 = vpack.c.bf16 %v6242, %v6241
  %v6321 = vpack.c.bf16 %v4701, %v4699
  %v6322 = vpack.c.bf16 %v6052, %v6051
  %v6323 = vpack.c.bf16 %v6244, %v6243
  %v6324 = vpack.c.bf16 %v4468, %v4466
  %v6325 = vpack.c.bf16 %v6054, %v6053
  %v6326 = vpack.c.bf16 %v6246, %v6245
  %v6327 = vpack.c.bf16 %v4553, %v4551
  %v6328 = vpack.c.bf16 %v6056, %v6055
  %v6329 = vpack.c.bf16 %v6248, %v6247
  %v6330 = vpack.c.bf16 %v4558, %v4556
  %v6331 = vpack.c.bf16 %v6058, %v6057
  %v6332 = vpack.c.bf16 %v6250, %v6249
  %v6333 = vpack.c.bf16 %v4563, %v4561
  %v6334 = vpack.c.bf16 %v6060, %v6059
  %v6335 = vpack.c.bf16 %v6252, %v6251
  %v6336 = vpack.c.bf16 %v4568, %v4566
  %v6337 = vpack.c.bf16 %v6062, %v6061
  %v6338 = vpack.c.bf16 %v6254, %v6253
  %v6339 = vpack.c.bf16 %v4573, %v4571
  %v6340 = vpack.c.bf16 %v6064, %v6063
  %v6341 = vpack.c.bf16 %v6256, %v6255
  %v6342 = vpack.c.bf16 %v4578, %v4576
  %v6343 = vpack.c.bf16 %v6066, %v6065
  %v6344 = vpack.c.bf16 %v6258, %v6257
  %v6345 = vpack.c.bf16 %v4583, %v4581
  %v6346 = vpack.c.bf16 %v6068, %v6067
  %v6347 = vpack.c.bf16 %v6260, %v6259
  %v6348 = vpack.c.bf16 %v4588, %v4586
  %v6349 = vpack.c.bf16 %v6070, %v6069
  %v6350 = vpack.c.bf16 %v6262, %v6261
  %v6351 = vpack.c.bf16 %v4593, %v4591
  %v6352 = vpack.c.bf16 %v6072, %v6071
  %v6353 = vpack.c.bf16 %v6264, %v6263
  %v6354 = vpack.c.bf16 %v4598, %v4596
  %v6355 = vpack.c.bf16 %v6074, %v6073
  %v6356 = vpack.c.bf16 %v6266, %v6265
  %v6357 = vpack.c.bf16 %v4603, %v4601
  %v6358 = vpack.c.bf16 %v6076, %v6075
  %v6359 = vpack.c.bf16 %v6268, %v6267
  %v6360 = vpack.c.bf16 %v4608, %v4606
  %v6361 = vpack.c.bf16 %v6078, %v6077
  %v6362 = vpack.c.bf16 %v6270, %v6269
  %v6363 = vpack.c.bf16 %v4613, %v4611
  %v6364 = vpack.c.bf16 %v6080, %v6079
  %v6365 = vpack.c.bf16 %v6272, %v6271
  %v6366 = vpack.c.bf16 %v4618, %v4616
  %v6367 = vpack.c.bf16 %v6082, %v6081
  %v6368 = vpack.c.bf16 %v6274, %v6273
  %v6369 = vpack.c.bf16 %v4706, %v4704
  %v6370 = vpack.c.bf16 %v6084, %v6083
  %v6371 = vpack.c.bf16 %v6276, %v6275
  %v6372 = vld [vmem:[%s4] sm:$0xf]
  %v6373 = vld [vmem:[%s4 + $0x4] sm:$0xf]
  %v6374 = vld [vmem:[%s4 + $0x8] sm:$0xf]
  %v6375 = vld [vmem:[%s4 + $0xc] sm:$0xf]
  %v6376 = vld [vmem:[%s4 + $0x10] sm:$0xf]
  %v6377 = vld [vmem:[%s4 + $0x14] sm:$0xf]
  %v6378 = vld [vmem:[%s4 + $0x18] sm:$0xf]
  %v6379 = vld [vmem:[%s4 + $0x1c] sm:$0xf]
  %v6380 = vld [vmem:[%s4 + $0x20] sm:$0xf]
  %v6381 = vld [vmem:[%s4 + $0x24] sm:$0xf]
  %v6382 = vld [vmem:[%s4 + $0x28] sm:$0xf]
  %v6383 = vld [vmem:[%s4 + $0x2c] sm:$0xf]
  %v6384 = vld [vmem:[%s4 + $0x30] sm:$0xf]
  %v6385 = vld [vmem:[%s4 + $0x34] sm:$0xf]
  %v6386 = vld [vmem:[%s4 + $0x38] sm:$0xf]
  %v6387 = vld [vmem:[%s4 + $0x3c] sm:$0xf]
  %v6388 = vld [vmem:[%s4 + $0x40] sm:$0xf]
  %v6389 = vld [vmem:[%s4 + $0x44] sm:$0xf]
  %v6390 = vld [vmem:[%s4 + $0x48] sm:$0xf]
  %v6391 = vld [vmem:[%s4 + $0x4c] sm:$0xf]
  %v6392 = vld [vmem:[%s4 + $0x50] sm:$0xf]
  %v6393 = vld [vmem:[%s4 + $0x54] sm:$0xf]
  %v6394 = vld [vmem:[%s4 + $0x58] sm:$0xf]
  %v6395 = vld [vmem:[%s4 + $0x5c] sm:$0xf]
  %v6396 = vld [vmem:[%s4 + $0x60] sm:$0xf]
  %v6397 = vld [vmem:[%s4 + $0x64] sm:$0xf]
  %v6398 = vld [vmem:[%s4 + $0x68] sm:$0xf]
  %v6399 = vld [vmem:[%s4 + $0x6c] sm:$0xf]
  %v6400 = vld [vmem:[%s4 + $0x70] sm:$0xf]
  %v6401 = vld [vmem:[%s4 + $0x74] sm:$0xf]
  %v6402 = vld [vmem:[%s4 + $0x78] sm:$0xf]
  %v6403 = vld [vmem:[%s4 + $0x7c] sm:$0xf]
  %v6404 = vld [vmem:[%s4 + $0x80] sm:$0xf]
  %v6405 = vld [vmem:[%s4 + $0x84] sm:$0xf]
  %v6406 = vld [vmem:[%s4 + $0x88] sm:$0xf]
  %v6407 = vld [vmem:[%s4 + $0x8c] sm:$0xf]
  %v6444 = vunpack.c.l.b16 %v6372
  %v6445 = vunpack.c.l.b16 %v6373
  %v6446 = vunpack.c.l.b16 %v6374
  %v6447 = vunpack.c.l.b16 %v6375
  %v6448 = vunpack.c.l.b16 %v6376
  %v6449 = vunpack.c.l.b16 %v6377
  %v6450 = vunpack.c.l.b16 %v6378
  %v6451 = vunpack.c.l.b16 %v6379
  %v6452 = vunpack.c.l.b16 %v6380
  %v6453 = vunpack.c.l.b16 %v6381
  %v6454 = vunpack.c.l.b16 %v6382
  %v6455 = vunpack.c.l.b16 %v6383
  %v6456 = vunpack.c.l.b16 %v6384
  %v6457 = vunpack.c.l.b16 %v6385
  %v6458 = vunpack.c.l.b16 %v6386
  %v6459 = vunpack.c.l.b16 %v6387
  %v6460 = vunpack.c.l.b16 %v6388
  %v6461 = vunpack.c.l.b16 %v6389
  %v6462 = vunpack.c.l.b16 %v6390
  %v6463 = vunpack.c.l.b16 %v6391
  %v6464 = vunpack.c.l.b16 %v6392
  %v6465 = vunpack.c.l.b16 %v6393
  %v6466 = vunpack.c.l.b16 %v6394
  %v6467 = vunpack.c.l.b16 %v6395
  %v6468 = vunpack.c.l.b16 %v6396
  %v6469 = vunpack.c.l.b16 %v6397
  %v6470 = vunpack.c.l.b16 %v6398
  %v6471 = vunpack.c.l.b16 %v6399
  %v6472 = vunpack.c.l.b16 %v6400
  %v6473 = vunpack.c.l.b16 %v6401
  %v6474 = vunpack.c.l.b16 %v6402
  %v6475 = vunpack.c.l.b16 %v6403
  %v6476 = vunpack.c.l.b16 %v6404
  %v6477 = vunpack.c.l.b16 %v6405
  %v6478 = vunpack.c.l.b16 %v6406
  %v6479 = vunpack.c.l.b16 %v6407
  %v6480 = vpack.c.b16 %v6445, %v6444
  %v6481 = vpack.c.b16 %v6447, %v6446
  %v6482 = vpack.c.b16 %v6449, %v6448
  %v6483 = vpack.c.b16 %v6451, %v6450
  %v6484 = vpack.c.b16 %v6453, %v6452
  %v6485 = vpack.c.b16 %v6455, %v6454
  %v6486 = vpack.c.b16 %v6457, %v6456
  %v6487 = vpack.c.b16 %v6459, %v6458
  %v6488 = vpack.c.b16 %v6461, %v6460
  %v6489 = vpack.c.b16 %v6463, %v6462
  %v6490 = vpack.c.b16 %v6465, %v6464
  %v6491 = vpack.c.b16 %v6467, %v6466
  %v6492 = vpack.c.b16 %v6469, %v6468
  %v6493 = vpack.c.b16 %v6471, %v6470
  %v6494 = vpack.c.b16 %v6473, %v6472
  %v6495 = vpack.c.b16 %v6475, %v6474
  %v6496 = vpack.c.b16 %v6477, %v6476
  %v6497 = vpack.c.b16 %v6479, %v6478
  %v6517 = vsel %vm2141, %v6279, 0
  %v6520 = vsel %vm2141, %v6282, 0
  %v6523 = vsel %vm2141, %v6285, 0
  %v6526 = vsel %vm2141, %v6288, 0
  %v6529 = vsel %vm2141, %v6291, 0
  %v6532 = vsel %vm2141, %v6294, 0
  %v6535 = vsel %vm2141, %v6297, 0
  %v6538 = vsel %vm2141, %v6300, 0
  %v6541 = vsel %vm2141, %v6303, 0
  %v6544 = vsel %vm2141, %v6306, 0
  %v6547 = vsel %vm2141, %v6309, 0
  %v6550 = vsel %vm2141, %v6312, 0
  %v6553 = vsel %vm2141, %v6315, 0
  %v6556 = vsel %vm2141, %v6318, 0
  %v6559 = vsel %vm2141, %v6321, 0
  %v6562 = vsel %vm2141, %v6324, 0
  %v6565 = vsel %vm2141, %v6327, 0
  %v6568 = vsel %vm2141, %v6330, 0
  %v6571 = vsel %vm2141, %v6333, 0
  %v6574 = vsel %vm2141, %v6336, 0
  %v6577 = vsel %vm2141, %v6339, 0
  %v6580 = vsel %vm2141, %v6342, 0
  %v6583 = vsel %vm2141, %v6345, 0
  %v6586 = vsel %vm2141, %v6348, 0
  %v6589 = vsel %vm2141, %v6351, 0
  %v6592 = vsel %vm2141, %v6354, 0
  %v6595 = vsel %vm2141, %v6357, 0
  %v6598 = vsel %vm2141, %v6360, 0
  %v6601 = vsel %vm2141, %v6363, 0
  %v6604 = vsel %vm2141, %v6366, 0
  %v6607 = vsel %vm2141, %v6369, 0
  %6609 = vmatpush.bf16.msra.mxu0 %v6487
  %6610 = vmatpush.bf16.msra.mxu0 %v6486
  %6611 = vmatpush.bf16.msra.mxu0 %v6485
  %6612 = vmatpush.bf16.msra.mxu0 %v6484
  %6613 = vmatpush.bf16.msra.mxu0 %v6483
  %6614 = vmatpush.bf16.msra.mxu0 %v6482
  %6615 = vmatpush.bf16.msra.mxu0 %v6481
  %6616 = vmatpush.bf16.msra.mxu0 %v6480
  %6617 = vmatmul.bf16.gmra.mxu0 %v6277
  %v6618 = vpop.f32.mrf.mxu0
  %v6619 = vadd.f32 0.0, %v6618
  %v6620 = vpop.f32.mrf.mxu0
  %v6621 = vadd.f32 0.0, %v6620
  %6622 = vmatmul.bf16.gmra.mxu0 %v6280
  %v6623 = vpop.f32.mrf.mxu0
  %v6624 = vadd.f32 0.0, %v6623
  %v6625 = vpop.f32.mrf.mxu0
  %v6626 = vadd.f32 0.0, %v6625
  %6627 = vmatmul.bf16.gmra.mxu0 %v6283
  %v6628 = vpop.f32.mrf.mxu0
  %v6629 = vadd.f32 0.0, %v6628
  %v6630 = vpop.f32.mrf.mxu0
  %v6631 = vadd.f32 0.0, %v6630
  %6632 = vmatmul.bf16.gmra.mxu0 %v6286
  %v6633 = vpop.f32.mrf.mxu0
  %v6634 = vadd.f32 0.0, %v6633
  %v6635 = vpop.f32.mrf.mxu0
  %v6636 = vadd.f32 0.0, %v6635
  %6637 = vmatmul.bf16.gmra.mxu0 %v6289
  %v6638 = vpop.f32.mrf.mxu0
  %v6639 = vadd.f32 0.0, %v6638
  %v6640 = vpop.f32.mrf.mxu0
  %v6641 = vadd.f32 0.0, %v6640
  %6642 = vmatmul.bf16.gmra.mxu0 %v6292
  %v6643 = vpop.f32.mrf.mxu0
  %v6644 = vadd.f32 0.0, %v6643
  %v6645 = vpop.f32.mrf.mxu0
  %v6646 = vadd.f32 0.0, %v6645
  %6647 = vmatmul.bf16.gmra.mxu0 %v6295
  %v6648 = vpop.f32.mrf.mxu0
  %v6649 = vadd.f32 0.0, %v6648
  %v6650 = vpop.f32.mrf.mxu0
  %v6651 = vadd.f32 0.0, %v6650
  %6652 = vmatmul.bf16.gmra.mxu0 %v6298
  %v6653 = vpop.f32.mrf.mxu0
  %v6654 = vadd.f32 0.0, %v6653
  %v6655 = vpop.f32.mrf.mxu0
  %v6656 = vadd.f32 0.0, %v6655
  %6657 = vmatmul.bf16.gmra.mxu0 %v6301
  %v6658 = vpop.f32.mrf.mxu0
  %v6659 = vadd.f32 0.0, %v6658
  %v6660 = vpop.f32.mrf.mxu0
  %v6661 = vadd.f32 0.0, %v6660
  %6662 = vmatmul.bf16.gmra.mxu0 %v6304
  %v6663 = vpop.f32.mrf.mxu0
  %v6664 = vadd.f32 0.0, %v6663
  %v6665 = vpop.f32.mrf.mxu0
  %v6666 = vadd.f32 0.0, %v6665
  %6667 = vmatmul.bf16.gmra.mxu0 %v6307
  %v6668 = vpop.f32.mrf.mxu0
  %v6669 = vadd.f32 0.0, %v6668
  %v6670 = vpop.f32.mrf.mxu0
  %v6671 = vadd.f32 0.0, %v6670
  %6672 = vmatmul.bf16.gmra.mxu0 %v6310
  %v6673 = vpop.f32.mrf.mxu0
  %v6674 = vadd.f32 0.0, %v6673
  %v6675 = vpop.f32.mrf.mxu0
  %v6676 = vadd.f32 0.0, %v6675
  %6677 = vmatmul.bf16.gmra.mxu0 %v6313
  %v6678 = vpop.f32.mrf.mxu0
  %v6679 = vadd.f32 0.0, %v6678
  %v6680 = vpop.f32.mrf.mxu0
  %v6681 = vadd.f32 0.0, %v6680
  %6682 = vmatmul.bf16.gmra.mxu0 %v6316
  %v6683 = vpop.f32.mrf.mxu0
  %v6684 = vadd.f32 0.0, %v6683
  %v6685 = vpop.f32.mrf.mxu0
  %v6686 = vadd.f32 0.0, %v6685
  %6687 = vmatmul.bf16.gmra.mxu0 %v6319
  %v6688 = vpop.f32.mrf.mxu0
  %v6689 = vadd.f32 0.0, %v6688
  %v6690 = vpop.f32.mrf.mxu0
  %v6691 = vadd.f32 0.0, %v6690
  %6692 = vmatmul.bf16.gmra.mxu0 %v6322
  %v6693 = vpop.f32.mrf.mxu0
  %v6694 = vadd.f32 0.0, %v6693
  %v6695 = vpop.f32.mrf.mxu0
  %v6696 = vadd.f32 0.0, %v6695
  %6697 = vmatmul.bf16.gmra.mxu0 %v6325
  %v6698 = vpop.f32.mrf.mxu0
  %v6699 = vadd.f32 0.0, %v6698
  %v6700 = vpop.f32.mrf.mxu0
  %v6701 = vadd.f32 0.0, %v6700
  %6702 = vmatmul.bf16.gmra.mxu0 %v6328
  %v6703 = vpop.f32.mrf.mxu0
  %v6704 = vadd.f32 0.0, %v6703
  %v6705 = vpop.f32.mrf.mxu0
  %v6706 = vadd.f32 0.0, %v6705
  %6707 = vmatmul.bf16.gmra.mxu0 %v6331
  %v6708 = vpop.f32.mrf.mxu0
  %v6709 = vadd.f32 0.0, %v6708
  %v6710 = vpop.f32.mrf.mxu0
  %v6711 = vadd.f32 0.0, %v6710
  %6712 = vmatmul.bf16.gmra.mxu0 %v6334
  %v6713 = vpop.f32.mrf.mxu0
  %v6714 = vadd.f32 0.0, %v6713
  %v6715 = vpop.f32.mrf.mxu0
  %v6716 = vadd.f32 0.0, %v6715
  %6717 = vmatmul.bf16.gmra.mxu0 %v6337
  %v6718 = vpop.f32.mrf.mxu0
  %v6719 = vadd.f32 0.0, %v6718
  %v6720 = vpop.f32.mrf.mxu0
  %v6721 = vadd.f32 0.0, %v6720
  %6722 = vmatmul.bf16.gmra.mxu0 %v6340
  %v6723 = vpop.f32.mrf.mxu0
  %v6724 = vadd.f32 0.0, %v6723
  %v6725 = vpop.f32.mrf.mxu0
  %v6726 = vadd.f32 0.0, %v6725
  %6727 = vmatmul.bf16.gmra.mxu0 %v6343
  %v6728 = vpop.f32.mrf.mxu0
  %v6729 = vadd.f32 0.0, %v6728
  %v6730 = vpop.f32.mrf.mxu0
  %v6731 = vadd.f32 0.0, %v6730
  %6732 = vmatmul.bf16.gmra.mxu0 %v6346
  %v6733 = vpop.f32.mrf.mxu0
  %v6734 = vadd.f32 0.0, %v6733
  %v6735 = vpop.f32.mrf.mxu0
  %v6736 = vadd.f32 0.0, %v6735
  %6737 = vmatmul.bf16.gmra.mxu0 %v6349
  %v6738 = vpop.f32.mrf.mxu0
  %v6739 = vadd.f32 0.0, %v6738
  %v6740 = vpop.f32.mrf.mxu0
  %v6741 = vadd.f32 0.0, %v6740
  %6742 = vmatmul.bf16.gmra.mxu0 %v6352
  %v6743 = vpop.f32.mrf.mxu0
  %v6744 = vadd.f32 0.0, %v6743
  %v6745 = vpop.f32.mrf.mxu0
  %v6746 = vadd.f32 0.0, %v6745
  %6747 = vmatmul.bf16.gmra.mxu0 %v6355
  %v6748 = vpop.f32.mrf.mxu0
  %v6749 = vadd.f32 0.0, %v6748
  %v6750 = vpop.f32.mrf.mxu0
  %v6751 = vadd.f32 0.0, %v6750
  %6752 = vmatmul.bf16.gmra.mxu0 %v6358
  %v6753 = vpop.f32.mrf.mxu0
  %v6754 = vadd.f32 0.0, %v6753
  %v6755 = vpop.f32.mrf.mxu0
  %v6756 = vadd.f32 0.0, %v6755
  %6757 = vmatmul.bf16.gmra.mxu0 %v6361
  %v6758 = vpop.f32.mrf.mxu0
  %v6759 = vadd.f32 0.0, %v6758
  %v6760 = vpop.f32.mrf.mxu0
  %v6761 = vadd.f32 0.0, %v6760
  %6762 = vmatmul.bf16.gmra.mxu0 %v6364
  %v6763 = vpop.f32.mrf.mxu0
  %v6764 = vadd.f32 0.0, %v6763
  %v6765 = vpop.f32.mrf.mxu0
  %v6766 = vadd.f32 0.0, %v6765
  %6767 = vmatmul.bf16.gmra.mxu0 %v6367
  %v6768 = vpop.f32.mrf.mxu0
  %v6769 = vadd.f32 0.0, %v6768
  %v6770 = vpop.f32.mrf.mxu0
  %v6771 = vadd.f32 0.0, %v6770
  %6772 = vmatmul.bf16.gmra.mxu0 %v6370
  %v6773 = vpop.f32.mrf.mxu0
  %v6774 = vadd.f32 0.0, %v6773
  %v6775 = vpop.f32.mrf.mxu0
  %v6776 = vadd.f32 0.0, %v6775
  %6777 = vdwg.mxu0
  %6778 = vmatpush.bf16.msra.mxu0 %v6495
  %6779 = vmatpush.bf16.msra.mxu0 %v6494
  %6780 = vmatpush.bf16.msra.mxu0 %v6493
  %6781 = vmatpush.bf16.msra.mxu0 %v6492
  %6782 = vmatpush.bf16.msra.mxu0 %v6491
  %6783 = vmatpush.bf16.msra.mxu0 %v6490
  %6784 = vmatpush.bf16.msra.mxu0 %v6489
  %6785 = vmatpush.bf16.msra.mxu0 %v6488
  %6786 = vmatmul.bf16.gmra.mxu0 %v6278
  %v6787 = vpop.f32.mrf.mxu0
  %v6788 = vadd.f32 %v6619, %v6787
  %v6789 = vpop.f32.mrf.mxu0
  %v6790 = vadd.f32 %v6621, %v6789
  %6791 = vmatmul.bf16.gmra.mxu0 %v6281
  %v6792 = vpop.f32.mrf.mxu0
  %v6793 = vadd.f32 %v6624, %v6792
  %v6794 = vpop.f32.mrf.mxu0
  %v6795 = vadd.f32 %v6626, %v6794
  %6796 = vmatmul.bf16.gmra.mxu0 %v6284
  %v6797 = vpop.f32.mrf.mxu0
  %v6798 = vadd.f32 %v6629, %v6797
  %v6799 = vpop.f32.mrf.mxu0
  %v6800 = vadd.f32 %v6631, %v6799
  %6801 = vmatmul.bf16.gmra.mxu0 %v6287
  %v6802 = vpop.f32.mrf.mxu0
  %v6803 = vadd.f32 %v6634, %v6802
  %v6804 = vpop.f32.mrf.mxu0
  %v6805 = vadd.f32 %v6636, %v6804
  %6806 = vmatmul.bf16.gmra.mxu0 %v6290
  %v6807 = vpop.f32.mrf.mxu0
  %v6808 = vadd.f32 %v6639, %v6807
  %v6809 = vpop.f32.mrf.mxu0
  %v6810 = vadd.f32 %v6641, %v6809
  %6811 = vmatmul.bf16.gmra.mxu0 %v6293
  %v6812 = vpop.f32.mrf.mxu0
  %v6813 = vadd.f32 %v6644, %v6812
  %v6814 = vpop.f32.mrf.mxu0
  %v6815 = vadd.f32 %v6646, %v6814
  %6816 = vmatmul.bf16.gmra.mxu0 %v6296
  %v6817 = vpop.f32.mrf.mxu0
  %v6818 = vadd.f32 %v6649, %v6817
  %v6819 = vpop.f32.mrf.mxu0
  %v6820 = vadd.f32 %v6651, %v6819
  %6821 = vmatmul.bf16.gmra.mxu0 %v6299
  %v6822 = vpop.f32.mrf.mxu0
  %v6823 = vadd.f32 %v6654, %v6822
  %v6824 = vpop.f32.mrf.mxu0
  %v6825 = vadd.f32 %v6656, %v6824
  %6826 = vmatmul.bf16.gmra.mxu0 %v6302
  %v6827 = vpop.f32.mrf.mxu0
  %v6828 = vadd.f32 %v6659, %v6827
  %v6829 = vpop.f32.mrf.mxu0
  %v6830 = vadd.f32 %v6661, %v6829
  %6831 = vmatmul.bf16.gmra.mxu0 %v6305
  %v6832 = vpop.f32.mrf.mxu0
  %v6833 = vadd.f32 %v6664, %v6832
  %v6834 = vpop.f32.mrf.mxu0
  %v6835 = vadd.f32 %v6666, %v6834
  %6836 = vmatmul.bf16.gmra.mxu0 %v6308
  %v6837 = vpop.f32.mrf.mxu0
  %v6838 = vadd.f32 %v6669, %v6837
  %v6839 = vpop.f32.mrf.mxu0
  %v6840 = vadd.f32 %v6671, %v6839
  %6841 = vmatmul.bf16.gmra.mxu0 %v6311
  %v6842 = vpop.f32.mrf.mxu0
  %v6843 = vadd.f32 %v6674, %v6842
  %v6844 = vpop.f32.mrf.mxu0
  %v6845 = vadd.f32 %v6676, %v6844
  %6846 = vmatmul.bf16.gmra.mxu0 %v6314
  %v6847 = vpop.f32.mrf.mxu0
  %v6848 = vadd.f32 %v6679, %v6847
  %v6849 = vpop.f32.mrf.mxu0
  %v6850 = vadd.f32 %v6681, %v6849
  %6851 = vmatmul.bf16.gmra.mxu0 %v6317
  %v6852 = vpop.f32.mrf.mxu0
  %v6853 = vadd.f32 %v6684, %v6852
  %v6854 = vpop.f32.mrf.mxu0
  %v6855 = vadd.f32 %v6686, %v6854
  %6856 = vmatmul.bf16.gmra.mxu0 %v6320
  %v6857 = vpop.f32.mrf.mxu0
  %v6858 = vadd.f32 %v6689, %v6857
  %v6859 = vpop.f32.mrf.mxu0
  %v6860 = vadd.f32 %v6691, %v6859
  %6861 = vmatmul.bf16.gmra.mxu0 %v6323
  %v6862 = vpop.f32.mrf.mxu0
  %v6863 = vadd.f32 %v6694, %v6862
  %v6864 = vpop.f32.mrf.mxu0
  %v6865 = vadd.f32 %v6696, %v6864
  %6866 = vmatmul.bf16.gmra.mxu0 %v6326
  %v6867 = vpop.f32.mrf.mxu0
  %v6868 = vadd.f32 %v6699, %v6867
  %v6869 = vpop.f32.mrf.mxu0
  %v6870 = vadd.f32 %v6701, %v6869
  %6871 = vmatmul.bf16.gmra.mxu0 %v6329
  %v6872 = vpop.f32.mrf.mxu0
  %v6873 = vadd.f32 %v6704, %v6872
  %v6874 = vpop.f32.mrf.mxu0
  %v6875 = vadd.f32 %v6706, %v6874
  %6876 = vmatmul.bf16.gmra.mxu0 %v6332
  %v6877 = vpop.f32.mrf.mxu0
  %v6878 = vadd.f32 %v6709, %v6877
  %v6879 = vpop.f32.mrf.mxu0
  %v6880 = vadd.f32 %v6711, %v6879
  %6881 = vmatmul.bf16.gmra.mxu0 %v6335
  %v6882 = vpop.f32.mrf.mxu0
  %v6883 = vadd.f32 %v6714, %v6882
  %v6884 = vpop.f32.mrf.mxu0
  %v6885 = vadd.f32 %v6716, %v6884
  %6886 = vmatmul.bf16.gmra.mxu0 %v6338
  %v6887 = vpop.f32.mrf.mxu0
  %v6888 = vadd.f32 %v6719, %v6887
  %v6889 = vpop.f32.mrf.mxu0
  %v6890 = vadd.f32 %v6721, %v6889
  %6891 = vmatmul.bf16.gmra.mxu0 %v6341
  %v6892 = vpop.f32.mrf.mxu0
  %v6893 = vadd.f32 %v6724, %v6892
  %v6894 = vpop.f32.mrf.mxu0
  %v6895 = vadd.f32 %v6726, %v6894
  %6896 = vmatmul.bf16.gmra.mxu0 %v6344
  %v6897 = vpop.f32.mrf.mxu0
  %v6898 = vadd.f32 %v6729, %v6897
  %v6899 = vpop.f32.mrf.mxu0
  %v6900 = vadd.f32 %v6731, %v6899
  %6901 = vmatmul.bf16.gmra.mxu0 %v6347
  %v6902 = vpop.f32.mrf.mxu0
  %v6903 = vadd.f32 %v6734, %v6902
  %v6904 = vpop.f32.mrf.mxu0
  %v6905 = vadd.f32 %v6736, %v6904
  %6906 = vmatmul.bf16.gmra.mxu0 %v6350
  %v6907 = vpop.f32.mrf.mxu0
  %v6908 = vadd.f32 %v6739, %v6907
  %v6909 = vpop.f32.mrf.mxu0
  %v6910 = vadd.f32 %v6741, %v6909
  %6911 = vmatmul.bf16.gmra.mxu0 %v6353
  %v6912 = vpop.f32.mrf.mxu0
  %v6913 = vadd.f32 %v6744, %v6912
  %v6914 = vpop.f32.mrf.mxu0
  %v6915 = vadd.f32 %v6746, %v6914
  %6916 = vmatmul.bf16.gmra.mxu0 %v6356
  %v6917 = vpop.f32.mrf.mxu0
  %v6918 = vadd.f32 %v6749, %v6917
  %v6919 = vpop.f32.mrf.mxu0
  %v6920 = vadd.f32 %v6751, %v6919
  %6921 = vmatmul.bf16.gmra.mxu0 %v6359
  %v6922 = vpop.f32.mrf.mxu0
  %v6923 = vadd.f32 %v6754, %v6922
  %v6924 = vpop.f32.mrf.mxu0
  %v6925 = vadd.f32 %v6756, %v6924
  %6926 = vmatmul.bf16.gmra.mxu0 %v6362
  %v6927 = vpop.f32.mrf.mxu0
  %v6928 = vadd.f32 %v6759, %v6927
  %v6929 = vpop.f32.mrf.mxu0
  %v6930 = vadd.f32 %v6761, %v6929
  %6931 = vmatmul.bf16.gmra.mxu0 %v6365
  %v6932 = vpop.f32.mrf.mxu0
  %v6933 = vadd.f32 %v6764, %v6932
  %v6934 = vpop.f32.mrf.mxu0
  %v6935 = vadd.f32 %v6766, %v6934
  %6936 = vmatmul.bf16.gmra.mxu0 %v6368
  %v6937 = vpop.f32.mrf.mxu0
  %v6938 = vadd.f32 %v6769, %v6937
  %v6939 = vpop.f32.mrf.mxu0
  %v6940 = vadd.f32 %v6771, %v6939
  %6941 = vmatmul.bf16.gmra.mxu0 %v6371
  %v6942 = vpop.f32.mrf.mxu0
  %v6943 = vadd.f32 %v6774, %v6942
  %v6944 = vpop.f32.mrf.mxu0
  %v6945 = vadd.f32 %v6776, %v6944
  %6946 = vdwg.mxu0
  %6947 = vmatpush.bf16.msra.mxu0 0
  %6948 = vmatpush.bf16.msra.mxu0 0
  %6949 = vmatpush.bf16.msra.mxu0 0
  %6950 = vmatpush.bf16.msra.mxu0 0
  %6951 = vmatpush.bf16.msra.mxu0 0
  %6952 = vmatpush.bf16.msra.mxu0 0
  %6953 = vmatpush.bf16.msra.mxu0 %v6497
  %6954 = vmatpush.bf16.msra.mxu0 %v6496
  %6955 = vmatmul.bf16.gmra.mxu0 %v6517
  %v6956 = vpop.f32.mrf.mxu0
  %v6957 = vadd.f32 %v6788, %v6956
  %v6958 = vpop.f32.mrf.mxu0
  %v6959 = vadd.f32 %v6790, %v6958
  %6960 = vmatmul.bf16.gmra.mxu0 %v6520
  %v6961 = vpop.f32.mrf.mxu0
  %v6962 = vadd.f32 %v6793, %v6961
  %v6963 = vpop.f32.mrf.mxu0
  %v6964 = vadd.f32 %v6795, %v6963
  %6965 = vmatmul.bf16.gmra.mxu0 %v6523
  %v6966 = vpop.f32.mrf.mxu0
  %v6967 = vadd.f32 %v6798, %v6966
  %v6968 = vpop.f32.mrf.mxu0
  %v6969 = vadd.f32 %v6800, %v6968
  %6970 = vmatmul.bf16.gmra.mxu0 %v6526
  %v6971 = vpop.f32.mrf.mxu0
  %v6972 = vadd.f32 %v6803, %v6971
  %v6973 = vpop.f32.mrf.mxu0
  %v6974 = vadd.f32 %v6805, %v6973
  %6975 = vmatmul.bf16.gmra.mxu0 %v6529
  %v6976 = vpop.f32.mrf.mxu0
  %v6977 = vadd.f32 %v6808, %v6976
  %v6978 = vpop.f32.mrf.mxu0
  %v6979 = vadd.f32 %v6810, %v6978
  %6980 = vmatmul.bf16.gmra.mxu0 %v6532
  %v6981 = vpop.f32.mrf.mxu0
  %v6982 = vadd.f32 %v6813, %v6981
  %v6983 = vpop.f32.mrf.mxu0
  %v6984 = vadd.f32 %v6815, %v6983
  %6985 = vmatmul.bf16.gmra.mxu0 %v6535
  %v6986 = vpop.f32.mrf.mxu0
  %v6987 = vadd.f32 %v6818, %v6986
  %v6988 = vpop.f32.mrf.mxu0
  %v6989 = vadd.f32 %v6820, %v6988
  %6990 = vmatmul.bf16.gmra.mxu0 %v6538
  %v6991 = vpop.f32.mrf.mxu0
  %v6992 = vadd.f32 %v6823, %v6991
  %v6993 = vpop.f32.mrf.mxu0
  %v6994 = vadd.f32 %v6825, %v6993
  %6995 = vmatmul.bf16.gmra.mxu0 %v6541
  %v6996 = vpop.f32.mrf.mxu0
  %v6997 = vadd.f32 %v6828, %v6996
  %v6998 = vpop.f32.mrf.mxu0
  %v6999 = vadd.f32 %v6830, %v6998
  %7000 = vmatmul.bf16.gmra.mxu0 %v6544
  %v7001 = vpop.f32.mrf.mxu0
  %v7002 = vadd.f32 %v6833, %v7001
  %v7003 = vpop.f32.mrf.mxu0
  %v7004 = vadd.f32 %v6835, %v7003
  %7005 = vmatmul.bf16.gmra.mxu0 %v6547
  %v7006 = vpop.f32.mrf.mxu0
  %v7007 = vadd.f32 %v6838, %v7006
  %v7008 = vpop.f32.mrf.mxu0
  %v7009 = vadd.f32 %v6840, %v7008
  %7010 = vmatmul.bf16.gmra.mxu0 %v6550
  %v7011 = vpop.f32.mrf.mxu0
  %v7012 = vadd.f32 %v6843, %v7011
  %v7013 = vpop.f32.mrf.mxu0
  %v7014 = vadd.f32 %v6845, %v7013
  %7015 = vmatmul.bf16.gmra.mxu0 %v6553
  %v7016 = vpop.f32.mrf.mxu0
  %v7017 = vadd.f32 %v6848, %v7016
  %v7018 = vpop.f32.mrf.mxu0
  %v7019 = vadd.f32 %v6850, %v7018
  %7020 = vmatmul.bf16.gmra.mxu0 %v6556
  %v7021 = vpop.f32.mrf.mxu0
  %v7022 = vadd.f32 %v6853, %v7021
  %v7023 = vpop.f32.mrf.mxu0
  %v7024 = vadd.f32 %v6855, %v7023
  %7025 = vmatmul.bf16.gmra.mxu0 %v6559
  %v7026 = vpop.f32.mrf.mxu0
  %v7027 = vadd.f32 %v6858, %v7026
  %v7028 = vpop.f32.mrf.mxu0
  %v7029 = vadd.f32 %v6860, %v7028
  %7030 = vmatmul.bf16.gmra.mxu0 %v6562
  %v7031 = vpop.f32.mrf.mxu0
  %v7032 = vadd.f32 %v6863, %v7031
  %v7033 = vpop.f32.mrf.mxu0
  %v7034 = vadd.f32 %v6865, %v7033
  %7035 = vmatmul.bf16.gmra.mxu0 %v6565
  %v7036 = vpop.f32.mrf.mxu0
  %v7037 = vadd.f32 %v6868, %v7036
  %v7038 = vpop.f32.mrf.mxu0
  %v7039 = vadd.f32 %v6870, %v7038
  %7040 = vmatmul.bf16.gmra.mxu0 %v6568
  %v7041 = vpop.f32.mrf.mxu0
  %v7042 = vadd.f32 %v6873, %v7041
  %v7043 = vpop.f32.mrf.mxu0
  %v7044 = vadd.f32 %v6875, %v7043
  %7045 = vmatmul.bf16.gmra.mxu0 %v6571
  %v7046 = vpop.f32.mrf.mxu0
  %v7047 = vadd.f32 %v6878, %v7046
  %v7048 = vpop.f32.mrf.mxu0
  %v7049 = vadd.f32 %v6880, %v7048
  %7050 = vmatmul.bf16.gmra.mxu0 %v6574
  %v7051 = vpop.f32.mrf.mxu0
  %v7052 = vadd.f32 %v6883, %v7051
  %v7053 = vpop.f32.mrf.mxu0
  %v7054 = vadd.f32 %v6885, %v7053
  %7055 = vmatmul.bf16.gmra.mxu0 %v6577
  %v7056 = vpop.f32.mrf.mxu0
  %v7057 = vadd.f32 %v6888, %v7056
  %v7058 = vpop.f32.mrf.mxu0
  %v7059 = vadd.f32 %v6890, %v7058
  %7060 = vmatmul.bf16.gmra.mxu0 %v6580
  %v7061 = vpop.f32.mrf.mxu0
  %v7062 = vadd.f32 %v6893, %v7061
  %v7063 = vpop.f32.mrf.mxu0
  %v7064 = vadd.f32 %v6895, %v7063
  %7065 = vmatmul.bf16.gmra.mxu0 %v6583
  %v7066 = vpop.f32.mrf.mxu0
  %v7067 = vadd.f32 %v6898, %v7066
  %v7068 = vpop.f32.mrf.mxu0
  %v7069 = vadd.f32 %v6900, %v7068
  %7070 = vmatmul.bf16.gmra.mxu0 %v6586
  %v7071 = vpop.f32.mrf.mxu0
  %v7072 = vadd.f32 %v6903, %v7071
  %v7073 = vpop.f32.mrf.mxu0
  %v7074 = vadd.f32 %v6905, %v7073
  %7075 = vmatmul.bf16.gmra.mxu0 %v6589
  %v7076 = vpop.f32.mrf.mxu0
  %v7077 = vadd.f32 %v6908, %v7076
  %v7078 = vpop.f32.mrf.mxu0
  %v7079 = vadd.f32 %v6910, %v7078
  %7080 = vmatmul.bf16.gmra.mxu0 %v6592
  %v7081 = vpop.f32.mrf.mxu0
  %v7082 = vadd.f32 %v6913, %v7081
  %v7083 = vpop.f32.mrf.mxu0
  %v7084 = vadd.f32 %v6915, %v7083
  %7085 = vmatmul.bf16.gmra.mxu0 %v6595
  %v7086 = vpop.f32.mrf.mxu0
  %v7087 = vadd.f32 %v6918, %v7086
  %v7088 = vpop.f32.mrf.mxu0
  %v7089 = vadd.f32 %v6920, %v7088
  %7090 = vmatmul.bf16.gmra.mxu0 %v6598
  %v7091 = vpop.f32.mrf.mxu0
  %v7092 = vadd.f32 %v6923, %v7091
  %v7093 = vpop.f32.mrf.mxu0
  %v7094 = vadd.f32 %v6925, %v7093
  %7095 = vmatmul.bf16.gmra.mxu0 %v6601
  %v7096 = vpop.f32.mrf.mxu0
  %v7097 = vadd.f32 %v6928, %v7096
  %v7098 = vpop.f32.mrf.mxu0
  %v7099 = vadd.f32 %v6930, %v7098
  %7100 = vmatmul.bf16.gmra.mxu0 %v6604
  %v7101 = vpop.f32.mrf.mxu0
  %v7102 = vadd.f32 %v6933, %v7101
  %v7103 = vpop.f32.mrf.mxu0
  %v7104 = vadd.f32 %v6935, %v7103
  %7105 = vmatmul.bf16.gmra.mxu0 %v6607
  %v7106 = vpop.f32.mrf.mxu0
  %v7107 = vadd.f32 %v6938, %v7106
  %v7108 = vpop.f32.mrf.mxu0
  %v7109 = vadd.f32 %v6940, %v7108
  %7110 = vmatmul.bf16.gmra.mxu0 %v6562
  %v7111 = vpop.f32.mrf.mxu0
  %v7112 = vadd.f32 %v6943, %v7111
  %v7113 = vpop.f32.mrf.mxu0
  %v7114 = vadd.f32 %v6945, %v7113
  %7115 = vdwg.mxu0
  %v7116 = vsel %vm2141, %v6957, 0.0
  %v7117 = vsel %vm2141, %v6959, 0.0
  %v7118 = vadd.f32 %v7116, %v7117
  %v7119 = vsel %vm2141, %v6962, 0.0
  %v7120 = vadd.f32 %v7118, %v7119
  %v7121 = vsel %vm2141, %v6964, 0.0
  %v7122 = vadd.f32 %v7120, %v7121
  %v7123 = vsel %vm2141, %v6967, 0.0
  %v7124 = vadd.f32 %v7122, %v7123
  %v7125 = vsel %vm2141, %v6969, 0.0
  %v7126 = vadd.f32 %v7124, %v7125
  %v7127 = vsel %vm2141, %v6972, 0.0
  %v7128 = vadd.f32 %v7126, %v7127
  %v7129 = vsel %vm2141, %v6974, 0.0
  %v7130 = vadd.f32 %v7128, %v7129
  %v7131 = vsel %vm2141, %v6977, 0.0
  %v7132 = vadd.f32 %v7130, %v7131
  %v7133 = vsel %vm2141, %v6979, 0.0
  %v7134 = vadd.f32 %v7132, %v7133
  %v7135 = vsel %vm2141, %v6982, 0.0
  %v7136 = vadd.f32 %v7134, %v7135
  %v7137 = vsel %vm2141, %v6984, 0.0
  %v7138 = vadd.f32 %v7136, %v7137
  %v7139 = vsel %vm2141, %v6987, 0.0
  %v7140 = vadd.f32 %v7138, %v7139
  %v7141 = vsel %vm2141, %v6989, 0.0
  %v7142 = vadd.f32 %v7140, %v7141
  %v7143 = vsel %vm2141, %v6992, 0.0
  %v7144 = vadd.f32 %v7142, %v7143
  %v7145 = vsel %vm2141, %v6994, 0.0
  %v7146 = vadd.f32 %v7144, %v7145
  %v7147 = vsel %vm2141, %v6997, 0.0
  %v7148 = vadd.f32 %v7146, %v7147
  %v7149 = vsel %vm2141, %v6999, 0.0
  %v7150 = vadd.f32 %v7148, %v7149
  %v7151 = vsel %vm2141, %v7002, 0.0
  %v7152 = vadd.f32 %v7150, %v7151
  %v7153 = vsel %vm2141, %v7004, 0.0
  %v7154 = vadd.f32 %v7152, %v7153
  %v7155 = vsel %vm2141, %v7007, 0.0
  %v7156 = vadd.f32 %v7154, %v7155
  %v7157 = vsel %vm2141, %v7009, 0.0
  %v7158 = vadd.f32 %v7156, %v7157
  %v7159 = vsel %vm2141, %v7012, 0.0
  %v7160 = vadd.f32 %v7158, %v7159
  %v7161 = vsel %vm2141, %v7014, 0.0
  %v7162 = vadd.f32 %v7160, %v7161
  %v7163 = vsel %vm2141, %v7017, 0.0
  %v7164 = vadd.f32 %v7162, %v7163
  %v7165 = vsel %vm2141, %v7019, 0.0
  %v7166 = vadd.f32 %v7164, %v7165
  %v7167 = vsel %vm2141, %v7022, 0.0
  %v7168 = vadd.f32 %v7166, %v7167
  %v7169 = vsel %vm2141, %v7024, 0.0
  %v7170 = vadd.f32 %v7168, %v7169
  %v7171 = vsel %vm2141, %v7027, 0.0
  %v7172 = vadd.f32 %v7170, %v7171
  %v7173 = vsel %vm2141, %v7029, 0.0
  %v7174 = vadd.f32 %v7172, %v7173
  %v7175 = vsel %vm2141, %v7032, 0.0
  %v7176 = vadd.f32 %v7174, %v7175
  %v7177 = vsel %vm2141, %v7034, 0.0
  %v7178 = vadd.f32 %v7176, %v7177
  %v7179 = vsel %vm2141, %v7037, 0.0
  %v7180 = vadd.f32 %v7178, %v7179
  %v7181 = vsel %vm2141, %v7039, 0.0
  %v7182 = vadd.f32 %v7180, %v7181
  %v7183 = vsel %vm2141, %v7042, 0.0
  %v7184 = vadd.f32 %v7182, %v7183
  %v7185 = vsel %vm2141, %v7044, 0.0
  %v7186 = vadd.f32 %v7184, %v7185
  %v7187 = vsel %vm2141, %v7047, 0.0
  %v7188 = vadd.f32 %v7186, %v7187
  %v7189 = vsel %vm2141, %v7049, 0.0
  %v7190 = vadd.f32 %v7188, %v7189
  %v7191 = vsel %vm2141, %v7052, 0.0
  %v7192 = vadd.f32 %v7190, %v7191
  %v7193 = vsel %vm2141, %v7054, 0.0
  %v7194 = vadd.f32 %v7192, %v7193
  %v7195 = vsel %vm2141, %v7057, 0.0
  %v7196 = vadd.f32 %v7194, %v7195
  %v7197 = vsel %vm2141, %v7059, 0.0
  %v7198 = vadd.f32 %v7196, %v7197
  %v7199 = vsel %vm2141, %v7062, 0.0
  %v7200 = vadd.f32 %v7198, %v7199
  %v7201 = vsel %vm2141, %v7064, 0.0
  %v7202 = vadd.f32 %v7200, %v7201
  %v7203 = vsel %vm2141, %v7067, 0.0
  %v7204 = vadd.f32 %v7202, %v7203
  %v7205 = vsel %vm2141, %v7069, 0.0
  %v7206 = vadd.f32 %v7204, %v7205
  %v7207 = vsel %vm2141, %v7072, 0.0
  %v7208 = vadd.f32 %v7206, %v7207
  %v7209 = vsel %vm2141, %v7074, 0.0
  %v7210 = vadd.f32 %v7208, %v7209
  %v7211 = vsel %vm2141, %v7077, 0.0
  %v7212 = vadd.f32 %v7210, %v7211
  %v7213 = vsel %vm2141, %v7079, 0.0
  %v7214 = vadd.f32 %v7212, %v7213
  %v7215 = vsel %vm2141, %v7082, 0.0
  %v7216 = vadd.f32 %v7214, %v7215
  %v7217 = vsel %vm2141, %v7084, 0.0
  %v7218 = vadd.f32 %v7216, %v7217
  %v7219 = vsel %vm2141, %v7087, 0.0
  %v7220 = vadd.f32 %v7218, %v7219
  %v7221 = vsel %vm2141, %v7089, 0.0
  %v7222 = vadd.f32 %v7220, %v7221
  %v7223 = vsel %vm2141, %v7092, 0.0
  %v7224 = vadd.f32 %v7222, %v7223
  %v7225 = vsel %vm2141, %v7094, 0.0
  %v7226 = vadd.f32 %v7224, %v7225
  %v7227 = vsel %vm2141, %v7097, 0.0
  %v7228 = vadd.f32 %v7226, %v7227
  %v7229 = vsel %vm2141, %v7099, 0.0
  %v7230 = vadd.f32 %v7228, %v7229
  %v7231 = vsel %vm2141, %v7102, 0.0
  %v7232 = vadd.f32 %v7230, %v7231
  %v7233 = vsel %vm2141, %v7104, 0.0
  %v7234 = vadd.f32 %v7232, %v7233
  %v7235 = vsel %vm2141, %v7107, 0.0
  %v7236 = vadd.f32 %v7234, %v7235
  %v7237 = vsel %vm2141, %v7109, 0.0
  %v7238 = vadd.f32 %v7236, %v7237
  %v7239 = vsel %vm2141, %v7112, 0.0
  %v7240 = vadd.f32 %v7238, %v7239
  %v7241 = vsel %vm2141, %v7114, 0.0
  %v7242 = vadd.f32 %v7240, %v7241
  %v7243 = vrot.slane %v7242, 4
  %v7244 = vadd.f32 %v7242, %v7243
  %v7245 = vrot.slane %v7244, 2
  %v7246 = vadd.f32 %v7244, %v7245
  %v7247 = vrot.slane %v7246, 1
  %v7248 = vadd.f32 %v7246, %v7247
  %v7249 = vmul.f32 %v7248, 0.001953125
  %v7250 = vmul.f32 %v6957, %v6957
  %v7251 = vmul.f32 %v6959, %v6959
  %v7252 = vmul.f32 %v6962, %v6962
  %v7253 = vmul.f32 %v6964, %v6964
  %v7254 = vmul.f32 %v6967, %v6967
  %v7255 = vmul.f32 %v6969, %v6969
  %v7256 = vmul.f32 %v6972, %v6972
  %v7257 = vmul.f32 %v6974, %v6974
  %v7258 = vmul.f32 %v6977, %v6977
  %v7259 = vmul.f32 %v6979, %v6979
  %v7260 = vmul.f32 %v6982, %v6982
  %v7261 = vmul.f32 %v6984, %v6984
  %v7262 = vmul.f32 %v6987, %v6987
  %v7263 = vmul.f32 %v6989, %v6989
  %v7264 = vmul.f32 %v6992, %v6992
  %v7265 = vmul.f32 %v6994, %v6994
  %v7266 = vmul.f32 %v6997, %v6997
  %v7267 = vmul.f32 %v6999, %v6999
  %v7268 = vmul.f32 %v7002, %v7002
  %v7269 = vmul.f32 %v7004, %v7004
  %v7270 = vmul.f32 %v7007, %v7007
  %v7271 = vmul.f32 %v7009, %v7009
  %v7272 = vmul.f32 %v7012, %v7012
  %v7273 = vmul.f32 %v7014, %v7014
  %v7274 = vmul.f32 %v7017, %v7017
  %v7275 = vmul.f32 %v7019, %v7019
  %v7276 = vmul.f32 %v7022, %v7022
  %v7277 = vmul.f32 %v7024, %v7024
  %v7278 = vmul.f32 %v7027, %v7027
  %v7279 = vmul.f32 %v7029, %v7029
  %v7280 = vmul.f32 %v7032, %v7032
  %v7281 = vmul.f32 %v7034, %v7034
  %v7282 = vmul.f32 %v7037, %v7037
  %v7283 = vmul.f32 %v7039, %v7039
  %v7284 = vmul.f32 %v7042, %v7042
  %v7285 = vmul.f32 %v7044, %v7044
  %v7286 = vmul.f32 %v7047, %v7047
  %v7287 = vmul.f32 %v7049, %v7049
  %v7288 = vmul.f32 %v7052, %v7052
  %v7289 = vmul.f32 %v7054, %v7054
  %v7290 = vmul.f32 %v7057, %v7057
  %v7291 = vmul.f32 %v7059, %v7059
  %v7292 = vmul.f32 %v7062, %v7062
  %v7293 = vmul.f32 %v7064, %v7064
  %v7294 = vmul.f32 %v7067, %v7067
  %v7295 = vmul.f32 %v7069, %v7069
  %v7296 = vmul.f32 %v7072, %v7072
  %v7297 = vmul.f32 %v7074, %v7074
  %v7298 = vmul.f32 %v7077, %v7077
  %v7299 = vmul.f32 %v7079, %v7079
  %v7300 = vmul.f32 %v7082, %v7082
  %v7301 = vmul.f32 %v7084, %v7084
  %v7302 = vmul.f32 %v7087, %v7087
  %v7303 = vmul.f32 %v7089, %v7089
  %v7304 = vmul.f32 %v7092, %v7092
  %v7305 = vmul.f32 %v7094, %v7094
  %v7306 = vmul.f32 %v7097, %v7097
  %v7307 = vmul.f32 %v7099, %v7099
  %v7308 = vmul.f32 %v7102, %v7102
  %v7309 = vmul.f32 %v7104, %v7104
  %v7310 = vmul.f32 %v7107, %v7107
  %v7311 = vmul.f32 %v7109, %v7109
  %v7312 = vmul.f32 %v7112, %v7112
  %v7313 = vmul.f32 %v7114, %v7114
  %v7314 = vsel %vm2141, %v7250, 0.0
  %v7315 = vsel %vm2141, %v7251, 0.0
  %v7316 = vadd.f32 %v7314, %v7315
  %v7317 = vsel %vm2141, %v7252, 0.0
  %v7318 = vadd.f32 %v7316, %v7317
  %v7319 = vsel %vm2141, %v7253, 0.0
  %v7320 = vadd.f32 %v7318, %v7319
  %v7321 = vsel %vm2141, %v7254, 0.0
  %v7322 = vadd.f32 %v7320, %v7321
  %v7323 = vsel %vm2141, %v7255, 0.0
  %v7324 = vadd.f32 %v7322, %v7323
  %v7325 = vsel %vm2141, %v7256, 0.0
  %v7326 = vadd.f32 %v7324, %v7325
  %v7327 = vsel %vm2141, %v7257, 0.0
  %v7328 = vadd.f32 %v7326, %v7327
  %v7329 = vsel %vm2141, %v7258, 0.0
  %v7330 = vadd.f32 %v7328, %v7329
  %v7331 = vsel %vm2141, %v7259, 0.0
  %v7332 = vadd.f32 %v7330, %v7331
  %v7333 = vsel %vm2141, %v7260, 0.0
  %v7334 = vadd.f32 %v7332, %v7333
  %v7335 = vsel %vm2141, %v7261, 0.0
  %v7336 = vadd.f32 %v7334, %v7335
  %v7337 = vsel %vm2141, %v7262, 0.0
  %v7338 = vadd.f32 %v7336, %v7337
  %v7339 = vsel %vm2141, %v7263, 0.0
  %v7340 = vadd.f32 %v7338, %v7339
  %v7341 = vsel %vm2141, %v7264, 0.0
  %v7342 = vadd.f32 %v7340, %v7341
  %v7343 = vsel %vm2141, %v7265, 0.0
  %v7344 = vadd.f32 %v7342, %v7343
  %v7345 = vsel %vm2141, %v7266, 0.0
  %v7346 = vadd.f32 %v7344, %v7345
  %v7347 = vsel %vm2141, %v7267, 0.0
  %v7348 = vadd.f32 %v7346, %v7347
  %v7349 = vsel %vm2141, %v7268, 0.0
  %v7350 = vadd.f32 %v7348, %v7349
  %v7351 = vsel %vm2141, %v7269, 0.0
  %v7352 = vadd.f32 %v7350, %v7351
  %v7353 = vsel %vm2141, %v7270, 0.0
  %v7354 = vadd.f32 %v7352, %v7353
  %v7355 = vsel %vm2141, %v7271, 0.0
  %v7356 = vadd.f32 %v7354, %v7355
  %v7357 = vsel %vm2141, %v7272, 0.0
  %v7358 = vadd.f32 %v7356, %v7357
  %v7359 = vsel %vm2141, %v7273, 0.0
  %v7360 = vadd.f32 %v7358, %v7359
  %v7361 = vsel %vm2141, %v7274, 0.0
  %v7362 = vadd.f32 %v7360, %v7361
  %v7363 = vsel %vm2141, %v7275, 0.0
  %v7364 = vadd.f32 %v7362, %v7363
  %v7365 = vsel %vm2141, %v7276, 0.0
  %v7366 = vadd.f32 %v7364, %v7365
  %v7367 = vsel %vm2141, %v7277, 0.0
  %v7368 = vadd.f32 %v7366, %v7367
  %v7369 = vsel %vm2141, %v7278, 0.0
  %v7370 = vadd.f32 %v7368, %v7369
  %v7371 = vsel %vm2141, %v7279, 0.0
  %v7372 = vadd.f32 %v7370, %v7371
  %v7373 = vsel %vm2141, %v7280, 0.0
  %v7374 = vadd.f32 %v7372, %v7373
  %v7375 = vsel %vm2141, %v7281, 0.0
  %v7376 = vadd.f32 %v7374, %v7375
  %v7377 = vsel %vm2141, %v7282, 0.0
  %v7378 = vadd.f32 %v7376, %v7377
  %v7379 = vsel %vm2141, %v7283, 0.0
  %v7380 = vadd.f32 %v7378, %v7379
  %v7381 = vsel %vm2141, %v7284, 0.0
  %v7382 = vadd.f32 %v7380, %v7381
  %v7383 = vsel %vm2141, %v7285, 0.0
  %v7384 = vadd.f32 %v7382, %v7383
  %v7385 = vsel %vm2141, %v7286, 0.0
  %v7386 = vadd.f32 %v7384, %v7385
  %v7387 = vsel %vm2141, %v7287, 0.0
  %v7388 = vadd.f32 %v7386, %v7387
  %v7389 = vsel %vm2141, %v7288, 0.0
  %v7390 = vadd.f32 %v7388, %v7389
  %v7391 = vsel %vm2141, %v7289, 0.0
  %v7392 = vadd.f32 %v7390, %v7391
  %v7393 = vsel %vm2141, %v7290, 0.0
  %v7394 = vadd.f32 %v7392, %v7393
  %v7395 = vsel %vm2141, %v7291, 0.0
  %v7396 = vadd.f32 %v7394, %v7395
  %v7397 = vsel %vm2141, %v7292, 0.0
  %v7398 = vadd.f32 %v7396, %v7397
  %v7399 = vsel %vm2141, %v7293, 0.0
  %v7400 = vadd.f32 %v7398, %v7399
  %v7401 = vsel %vm2141, %v7294, 0.0
  %v7402 = vadd.f32 %v7400, %v7401
  %v7403 = vsel %vm2141, %v7295, 0.0
  %v7404 = vadd.f32 %v7402, %v7403
  %v7405 = vsel %vm2141, %v7296, 0.0
  %v7406 = vadd.f32 %v7404, %v7405
  %v7407 = vsel %vm2141, %v7297, 0.0
  %v7408 = vadd.f32 %v7406, %v7407
  %v7409 = vsel %vm2141, %v7298, 0.0
  %v7410 = vadd.f32 %v7408, %v7409
  %v7411 = vsel %vm2141, %v7299, 0.0
  %v7412 = vadd.f32 %v7410, %v7411
  %v7413 = vsel %vm2141, %v7300, 0.0
  %v7414 = vadd.f32 %v7412, %v7413
  %v7415 = vsel %vm2141, %v7301, 0.0
  %v7416 = vadd.f32 %v7414, %v7415
  %v7417 = vsel %vm2141, %v7302, 0.0
  %v7418 = vadd.f32 %v7416, %v7417
  %v7419 = vsel %vm2141, %v7303, 0.0
  %v7420 = vadd.f32 %v7418, %v7419
  %v7421 = vsel %vm2141, %v7304, 0.0
  %v7422 = vadd.f32 %v7420, %v7421
  %v7423 = vsel %vm2141, %v7305, 0.0
  %v7424 = vadd.f32 %v7422, %v7423
  %v7425 = vsel %vm2141, %v7306, 0.0
  %v7426 = vadd.f32 %v7424, %v7425
  %v7427 = vsel %vm2141, %v7307, 0.0
  %v7428 = vadd.f32 %v7426, %v7427
  %v7429 = vsel %vm2141, %v7308, 0.0
  %v7430 = vadd.f32 %v7428, %v7429
  %v7431 = vsel %vm2141, %v7309, 0.0
  %v7432 = vadd.f32 %v7430, %v7431
  %v7433 = vsel %vm2141, %v7310, 0.0
  %v7434 = vadd.f32 %v7432, %v7433
  %v7435 = vsel %vm2141, %v7311, 0.0
  %v7436 = vadd.f32 %v7434, %v7435
  %v7437 = vsel %vm2141, %v7312, 0.0
  %v7438 = vadd.f32 %v7436, %v7437
  %v7439 = vsel %vm2141, %v7313, 0.0
  %v7440 = vadd.f32 %v7438, %v7439
  %v7441 = vrot.slane %v7440, 4
  %v7442 = vadd.f32 %v7440, %v7441
  %v7443 = vrot.slane %v7442, 2
  %v7444 = vadd.f32 %v7442, %v7443
  %v7445 = vrot.slane %v7444, 1
  %v7446 = vadd.f32 %v7444, %v7445
  %v7447 = vmul.f32 %v7446, 0.001953125
  %v7448 = vmul.f32 %v7249, %v7249
  %v7449 = vsub.f32 %v7447, %v7448
  %v7450 = vld [vmem:[%s5] sm:$0x1]
  %v7451 = vadd.f32 %v7449, 1e-05
  %v7452 = vrsqrt.pop %v7451
  %v7453 = vmul.f32 %v7452, %v7451
  %v7454 = vmul.f32 %v7453, %v7452
  %v7455 = vmul.f32 0.5, %v7454
  %v7456 = vsub.f32 1.5, %v7455
  %v7457 = vmul.f32 %v7452, %v7456
  %vm7458 = vweird.f32 %v7451
  %vm7459 = vweird.f32 %v7452
  %vm7460 = vmor %vm7458, %vm7459
  %v7461 = vsel %vm7460, %v7452, %v7457
  %v7462 = vmul.f32 %v7450, %v7461
  %v7463 = vld [vmem:[%s6] sm:$0x1]
  %v7464 = vmul.f32 %v7249, %v7462
  %v7465 = vsub.f32 %v7463, %v7464
  %v7467 = vperm.slane %v7462, 0
  %v7469 = vmul.f32 %v6957, %v7467
  %v7470 = vmul.f32 %v6959, %v7467
  %v7471 = vmul.f32 %v6962, %v7467
  %v7472 = vmul.f32 %v6964, %v7467
  %v7473 = vmul.f32 %v6967, %v7467
  %v7474 = vmul.f32 %v6969, %v7467
  %v7475 = vmul.f32 %v6972, %v7467
  %v7476 = vmul.f32 %v6974, %v7467
  %v7477 = vmul.f32 %v6977, %v7467
  %v7478 = vmul.f32 %v6979, %v7467
  %v7479 = vmul.f32 %v6982, %v7467
  %v7480 = vmul.f32 %v6984, %v7467
  %v7481 = vmul.f32 %v6987, %v7467
  %v7482 = vmul.f32 %v6989, %v7467
  %v7483 = vmul.f32 %v6992, %v7467
  %v7484 = vmul.f32 %v6994, %v7467
  %v7485 = vmul.f32 %v6997, %v7467
  %v7486 = vmul.f32 %v6999, %v7467
  %v7487 = vmul.f32 %v7002, %v7467
  %v7488 = vmul.f32 %v7004, %v7467
  %v7489 = vmul.f32 %v7007, %v7467
  %v7490 = vmul.f32 %v7009, %v7467
  %v7491 = vmul.f32 %v7012, %v7467
  %v7492 = vmul.f32 %v7014, %v7467
  %v7493 = vmul.f32 %v7017, %v7467
  %v7494 = vmul.f32 %v7019, %v7467
  %v7495 = vmul.f32 %v7022, %v7467
  %v7496 = vmul.f32 %v7024, %v7467
  %v7497 = vmul.f32 %v7027, %v7467
  %v7498 = vmul.f32 %v7029, %v7467
  %v7499 = vmul.f32 %v7032, %v7467
  %v7500 = vmul.f32 %v7034, %v7467
  %v7501 = vmul.f32 %v7037, %v7467
  %v7502 = vmul.f32 %v7039, %v7467
  %v7503 = vmul.f32 %v7042, %v7467
  %v7504 = vmul.f32 %v7044, %v7467
  %v7505 = vmul.f32 %v7047, %v7467
  %v7506 = vmul.f32 %v7049, %v7467
  %v7507 = vmul.f32 %v7052, %v7467
  %v7508 = vmul.f32 %v7054, %v7467
  %v7509 = vmul.f32 %v7057, %v7467
  %v7510 = vmul.f32 %v7059, %v7467
  %v7511 = vmul.f32 %v7062, %v7467
  %v7512 = vmul.f32 %v7064, %v7467
  %v7513 = vmul.f32 %v7067, %v7467
  %v7514 = vmul.f32 %v7069, %v7467
  %v7515 = vmul.f32 %v7072, %v7467
  %v7516 = vmul.f32 %v7074, %v7467
  %v7517 = vmul.f32 %v7077, %v7467
  %v7518 = vmul.f32 %v7079, %v7467
  %v7519 = vmul.f32 %v7082, %v7467
  %v7520 = vmul.f32 %v7084, %v7467
  %v7521 = vmul.f32 %v7087, %v7467
  %v7522 = vmul.f32 %v7089, %v7467
  %v7523 = vmul.f32 %v7092, %v7467
  %v7524 = vmul.f32 %v7094, %v7467
  %v7525 = vmul.f32 %v7097, %v7467
  %v7526 = vmul.f32 %v7099, %v7467
  %v7527 = vmul.f32 %v7102, %v7467
  %v7528 = vmul.f32 %v7104, %v7467
  %v7529 = vmul.f32 %v7107, %v7467
  %v7530 = vmul.f32 %v7109, %v7467
  %v7531 = vmul.f32 %v7112, %v7467
  %v7532 = vmul.f32 %v7114, %v7467
  %v7534 = vperm.slane %v7465, 0
  %v7536 = vadd.f32 %v7469, %v7534
  %v7537 = vadd.f32 %v7470, %v7534
  %v7538 = vadd.f32 %v7471, %v7534
  %v7539 = vadd.f32 %v7472, %v7534
  %v7540 = vadd.f32 %v7473, %v7534
  %v7541 = vadd.f32 %v7474, %v7534
  %v7542 = vadd.f32 %v7475, %v7534
  %v7543 = vadd.f32 %v7476, %v7534
  %v7544 = vadd.f32 %v7477, %v7534
  %v7545 = vadd.f32 %v7478, %v7534
  %v7546 = vadd.f32 %v7479, %v7534
  %v7547 = vadd.f32 %v7480, %v7534
  %v7548 = vadd.f32 %v7481, %v7534
  %v7549 = vadd.f32 %v7482, %v7534
  %v7550 = vadd.f32 %v7483, %v7534
  %v7551 = vadd.f32 %v7484, %v7534
  %v7552 = vadd.f32 %v7485, %v7534
  %v7553 = vadd.f32 %v7486, %v7534
  %v7554 = vadd.f32 %v7487, %v7534
  %v7555 = vadd.f32 %v7488, %v7534
  %v7556 = vadd.f32 %v7489, %v7534
  %v7557 = vadd.f32 %v7490, %v7534
  %v7558 = vadd.f32 %v7491, %v7534
  %v7559 = vadd.f32 %v7492, %v7534
  %v7560 = vadd.f32 %v7493, %v7534
  %v7561 = vadd.f32 %v7494, %v7534
  %v7562 = vadd.f32 %v7495, %v7534
  %v7563 = vadd.f32 %v7496, %v7534
  %v7564 = vadd.f32 %v7497, %v7534
  %v7565 = vadd.f32 %v7498, %v7534
  %v7566 = vadd.f32 %v7499, %v7534
  %v7567 = vadd.f32 %v7500, %v7534
  %v7568 = vadd.f32 %v7501, %v7534
  %v7569 = vadd.f32 %v7502, %v7534
  %v7570 = vadd.f32 %v7503, %v7534
  %v7571 = vadd.f32 %v7504, %v7534
  %v7572 = vadd.f32 %v7505, %v7534
  %v7573 = vadd.f32 %v7506, %v7534
  %v7574 = vadd.f32 %v7507, %v7534
  %v7575 = vadd.f32 %v7508, %v7534
  %v7576 = vadd.f32 %v7509, %v7534
  %v7577 = vadd.f32 %v7510, %v7534
  %v7578 = vadd.f32 %v7511, %v7534
  %v7579 = vadd.f32 %v7512, %v7534
  %v7580 = vadd.f32 %v7513, %v7534
  %v7581 = vadd.f32 %v7514, %v7534
  %v7582 = vadd.f32 %v7515, %v7534
  %v7583 = vadd.f32 %v7516, %v7534
  %v7584 = vadd.f32 %v7517, %v7534
  %v7585 = vadd.f32 %v7518, %v7534
  %v7586 = vadd.f32 %v7519, %v7534
  %v7587 = vadd.f32 %v7520, %v7534
  %v7588 = vadd.f32 %v7521, %v7534
  %v7589 = vadd.f32 %v7522, %v7534
  %v7590 = vadd.f32 %v7523, %v7534
  %v7591 = vadd.f32 %v7524, %v7534
  %v7592 = vadd.f32 %v7525, %v7534
  %v7593 = vadd.f32 %v7526, %v7534
  %v7594 = vadd.f32 %v7527, %v7534
  %v7595 = vadd.f32 %v7528, %v7534
  %v7596 = vadd.f32 %v7529, %v7534
  %v7597 = vadd.f32 %v7530, %v7534
  %v7598 = vadd.f32 %v7531, %v7534
  %v7599 = vadd.f32 %v7532, %v7534
  %v7600 = vadd.f32 %v7536, %v284
  %v7601 = vadd.f32 %v7537, %v285
  %v7602 = vadd.f32 %v7538, %v286
  %v7603 = vadd.f32 %v7539, %v287
  %v7604 = vadd.f32 %v7540, %v288
  %v7605 = vadd.f32 %v7541, %v289
  %v7606 = vadd.f32 %v7542, %v290
  %v7607 = vadd.f32 %v7543, %v291
  %v7608 = vadd.f32 %v7544, %v292
  %v7609 = vadd.f32 %v7545, %v293
  %v7610 = vadd.f32 %v7546, %v294
  %v7611 = vadd.f32 %v7547, %v295
  %v7612 = vadd.f32 %v7548, %v296
  %v7613 = vadd.f32 %v7549, %v297
  %v7614 = vadd.f32 %v7550, %v298
  %v7615 = vadd.f32 %v7551, %v299
  %v7616 = vadd.f32 %v7552, %v300
  %v7617 = vadd.f32 %v7553, %v301
  %v7618 = vadd.f32 %v7554, %v302
  %v7619 = vadd.f32 %v7555, %v303
  %v7620 = vadd.f32 %v7556, %v304
  %v7621 = vadd.f32 %v7557, %v305
  %v7622 = vadd.f32 %v7558, %v306
  %v7623 = vadd.f32 %v7559, %v307
  %v7624 = vadd.f32 %v7560, %v308
  %v7625 = vadd.f32 %v7561, %v309
  %v7626 = vadd.f32 %v7562, %v310
  %v7627 = vadd.f32 %v7563, %v311
  %v7628 = vadd.f32 %v7564, %v312
  %v7629 = vadd.f32 %v7565, %v313
  %v7630 = vadd.f32 %v7566, %v314
  %v7631 = vadd.f32 %v7567, %v315
  %v7632 = vadd.f32 %v7568, %v316
  %v7633 = vadd.f32 %v7569, %v317
  %v7634 = vadd.f32 %v7570, %v318
  %v7635 = vadd.f32 %v7571, %v319
  %v7636 = vadd.f32 %v7572, %v320
  %v7637 = vadd.f32 %v7573, %v321
  %v7638 = vadd.f32 %v7574, %v322
  %v7639 = vadd.f32 %v7575, %v323
  %v7640 = vadd.f32 %v7576, %v324
  %v7641 = vadd.f32 %v7577, %v325
  %v7642 = vadd.f32 %v7578, %v326
  %v7643 = vadd.f32 %v7579, %v327
  %v7644 = vadd.f32 %v7580, %v328
  %v7645 = vadd.f32 %v7581, %v329
  %v7646 = vadd.f32 %v7582, %v330
  %v7647 = vadd.f32 %v7583, %v331
  %v7648 = vadd.f32 %v7584, %v332
  %v7649 = vadd.f32 %v7585, %v333
  %v7650 = vadd.f32 %v7586, %v334
  %v7651 = vadd.f32 %v7587, %v335
  %v7652 = vadd.f32 %v7588, %v336
  %v7653 = vadd.f32 %v7589, %v337
  %v7654 = vadd.f32 %v7590, %v338
  %v7655 = vadd.f32 %v7591, %v339
  %v7656 = vadd.f32 %v7592, %v340
  %v7657 = vadd.f32 %v7593, %v341
  %v7658 = vadd.f32 %v7594, %v342
  %v7659 = vadd.f32 %v7595, %v343
  %v7660 = vadd.f32 %v7596, %v344
  %v7661 = vadd.f32 %v7597, %v345
  %v7662 = vadd.f32 %v7598, %v346
  %v7663 = vadd.f32 %v7599, %v347
  %v7664 = vmax.f32 %v7600, 0.0
  %v7665 = vmax.f32 %v7601, 0.0
  %v7666 = vmax.f32 %v7602, 0.0
  %v7667 = vmax.f32 %v7603, 0.0
  %v7668 = vmax.f32 %v7604, 0.0
  %v7669 = vmax.f32 %v7605, 0.0
  %v7670 = vmax.f32 %v7606, 0.0
  %v7671 = vmax.f32 %v7607, 0.0
  %v7672 = vmax.f32 %v7608, 0.0
  %v7673 = vmax.f32 %v7609, 0.0
  %v7674 = vmax.f32 %v7610, 0.0
  %v7675 = vmax.f32 %v7611, 0.0
  %v7676 = vmax.f32 %v7612, 0.0
  %v7677 = vmax.f32 %v7613, 0.0
  %v7678 = vmax.f32 %v7614, 0.0
  %v7679 = vmax.f32 %v7615, 0.0
  %v7680 = vmax.f32 %v7616, 0.0
  %v7681 = vmax.f32 %v7617, 0.0
  %v7682 = vmax.f32 %v7618, 0.0
  %v7683 = vmax.f32 %v7619, 0.0
  %v7684 = vmax.f32 %v7620, 0.0
  %v7685 = vmax.f32 %v7621, 0.0
  %v7686 = vmax.f32 %v7622, 0.0
  %v7687 = vmax.f32 %v7623, 0.0
  %v7688 = vmax.f32 %v7624, 0.0
  %v7689 = vmax.f32 %v7625, 0.0
  %v7690 = vmax.f32 %v7626, 0.0
  %v7691 = vmax.f32 %v7627, 0.0
  %v7692 = vmax.f32 %v7628, 0.0
  %v7693 = vmax.f32 %v7629, 0.0
  %v7694 = vmax.f32 %v7630, 0.0
  %v7695 = vmax.f32 %v7631, 0.0
  %v7696 = vmax.f32 %v7632, 0.0
  %v7697 = vmax.f32 %v7633, 0.0
  %v7698 = vmax.f32 %v7634, 0.0
  %v7699 = vmax.f32 %v7635, 0.0
  %v7700 = vmax.f32 %v7636, 0.0
  %v7701 = vmax.f32 %v7637, 0.0
  %v7702 = vmax.f32 %v7638, 0.0
  %v7703 = vmax.f32 %v7639, 0.0
  %v7704 = vmax.f32 %v7640, 0.0
  %v7705 = vmax.f32 %v7641, 0.0
  %v7706 = vmax.f32 %v7642, 0.0
  %v7707 = vmax.f32 %v7643, 0.0
  %v7708 = vmax.f32 %v7644, 0.0
  %v7709 = vmax.f32 %v7645, 0.0
  %v7710 = vmax.f32 %v7646, 0.0
  %v7711 = vmax.f32 %v7647, 0.0
  %v7712 = vmax.f32 %v7648, 0.0
  %v7713 = vmax.f32 %v7649, 0.0
  %v7714 = vmax.f32 %v7650, 0.0
  %v7715 = vmax.f32 %v7651, 0.0
  %v7716 = vmax.f32 %v7652, 0.0
  %v7717 = vmax.f32 %v7653, 0.0
  %v7718 = vmax.f32 %v7654, 0.0
  %v7719 = vmax.f32 %v7655, 0.0
  %v7720 = vmax.f32 %v7656, 0.0
  %v7721 = vmax.f32 %v7657, 0.0
  %v7722 = vmax.f32 %v7658, 0.0
  %v7723 = vmax.f32 %v7659, 0.0
  %v7724 = vmax.f32 %v7660, 0.0
  %v7725 = vmax.f32 %v7661, 0.0
  %v7726 = vmax.f32 %v7662, 0.0
  %v7727 = vmax.f32 %v7663, 0.0
  %7728 = vst.msk [vmem:[%s7] sm:$0xff] %vm2141, %v7664
  %7729 = vst.msk [vmem:[%s7 + $0x8] sm:$0xff] %vm2141, %v7665
  %7730 = vst.msk [vmem:[%s7 + $0x10] sm:$0xff] %vm2141, %v7666
  %7731 = vst.msk [vmem:[%s7 + $0x18] sm:$0xff] %vm2141, %v7667
  %7732 = vst.msk [vmem:[%s7 + $0x20] sm:$0xff] %vm2141, %v7668
  %7733 = vst.msk [vmem:[%s7 + $0x28] sm:$0xff] %vm2141, %v7669
  %7734 = vst.msk [vmem:[%s7 + $0x30] sm:$0xff] %vm2141, %v7670
  %7735 = vst.msk [vmem:[%s7 + $0x38] sm:$0xff] %vm2141, %v7671
  %7736 = vst.msk [vmem:[%s7 + $0x40] sm:$0xff] %vm2141, %v7672
  %7737 = vst.msk [vmem:[%s7 + $0x48] sm:$0xff] %vm2141, %v7673
  %7738 = vst.msk [vmem:[%s7 + $0x50] sm:$0xff] %vm2141, %v7674
  %7739 = vst.msk [vmem:[%s7 + $0x58] sm:$0xff] %vm2141, %v7675
  %7740 = vst.msk [vmem:[%s7 + $0x60] sm:$0xff] %vm2141, %v7676
  %7741 = vst.msk [vmem:[%s7 + $0x68] sm:$0xff] %vm2141, %v7677
  %7742 = vst.msk [vmem:[%s7 + $0x70] sm:$0xff] %vm2141, %v7678
  %7743 = vst.msk [vmem:[%s7 + $0x78] sm:$0xff] %vm2141, %v7679
  %7744 = vst.msk [vmem:[%s7 + $0x80] sm:$0xff] %vm2141, %v7680
  %7745 = vst.msk [vmem:[%s7 + $0x88] sm:$0xff] %vm2141, %v7681
  %7746 = vst.msk [vmem:[%s7 + $0x90] sm:$0xff] %vm2141, %v7682
  %7747 = vst.msk [vmem:[%s7 + $0x98] sm:$0xff] %vm2141, %v7683
  %7748 = vst.msk [vmem:[%s7 + $0xa0] sm:$0xff] %vm2141, %v7684
  %7749 = vst.msk [vmem:[%s7 + $0xa8] sm:$0xff] %vm2141, %v7685
  %7750 = vst.msk [vmem:[%s7 + $0xb0] sm:$0xff] %vm2141, %v7686
  %7751 = vst.msk [vmem:[%s7 + $0xb8] sm:$0xff] %vm2141, %v7687
  %7752 = vst.msk [vmem:[%s7 + $0xc0] sm:$0xff] %vm2141, %v7688
  %7753 = vst.msk [vmem:[%s7 + $0xc8] sm:$0xff] %vm2141, %v7689
  %7754 = vst.msk [vmem:[%s7 + $0xd0] sm:$0xff] %vm2141, %v7690
  %7755 = vst.msk [vmem:[%s7 + $0xd8] sm:$0xff] %vm2141, %v7691
  %7756 = vst.msk [vmem:[%s7 + $0xe0] sm:$0xff] %vm2141, %v7692
  %7757 = vst.msk [vmem:[%s7 + $0xe8] sm:$0xff] %vm2141, %v7693
  %7758 = vst.msk [vmem:[%s7 + $0xf0] sm:$0xff] %vm2141, %v7694
  %7759 = vst.msk [vmem:[%s7 + $0xf8] sm:$0xff] %vm2141, %v7695
  %7760 = vst.msk [vmem:[%s7 + $0x100] sm:$0xff] %vm2141, %v7696
  %7761 = vst.msk [vmem:[%s7 + $0x108] sm:$0xff] %vm2141, %v7697
  %7762 = vst.msk [vmem:[%s7 + $0x110] sm:$0xff] %vm2141, %v7698
  %7763 = vst.msk [vmem:[%s7 + $0x118] sm:$0xff] %vm2141, %v7699
  %7764 = vst.msk [vmem:[%s7 + $0x120] sm:$0xff] %vm2141, %v7700
  %7765 = vst.msk [vmem:[%s7 + $0x128] sm:$0xff] %vm2141, %v7701
  %7766 = vst.msk [vmem:[%s7 + $0x130] sm:$0xff] %vm2141, %v7702
  %7767 = vst.msk [vmem:[%s7 + $0x138] sm:$0xff] %vm2141, %v7703
  %7768 = vst.msk [vmem:[%s7 + $0x140] sm:$0xff] %vm2141, %v7704
  %7769 = vst.msk [vmem:[%s7 + $0x148] sm:$0xff] %vm2141, %v7705
  %7770 = vst.msk [vmem:[%s7 + $0x150] sm:$0xff] %vm2141, %v7706
  %7771 = vst.msk [vmem:[%s7 + $0x158] sm:$0xff] %vm2141, %v7707
  %7772 = vst.msk [vmem:[%s7 + $0x160] sm:$0xff] %vm2141, %v7708
  %7773 = vst.msk [vmem:[%s7 + $0x168] sm:$0xff] %vm2141, %v7709
  %7774 = vst.msk [vmem:[%s7 + $0x170] sm:$0xff] %vm2141, %v7710
  %7775 = vst.msk [vmem:[%s7 + $0x178] sm:$0xff] %vm2141, %v7711
  %7776 = vst.msk [vmem:[%s7 + $0x180] sm:$0xff] %vm2141, %v7712
  %7777 = vst.msk [vmem:[%s7 + $0x188] sm:$0xff] %vm2141, %v7713
  %7778 = vst.msk [vmem:[%s7 + $0x190] sm:$0xff] %vm2141, %v7714
  %7779 = vst.msk [vmem:[%s7 + $0x198] sm:$0xff] %vm2141, %v7715
  %7780 = vst.msk [vmem:[%s7 + $0x1a0] sm:$0xff] %vm2141, %v7716
  %7781 = vst.msk [vmem:[%s7 + $0x1a8] sm:$0xff] %vm2141, %v7717
  %7782 = vst.msk [vmem:[%s7 + $0x1b0] sm:$0xff] %vm2141, %v7718
  %7783 = vst.msk [vmem:[%s7 + $0x1b8] sm:$0xff] %vm2141, %v7719
  %7784 = vst.msk [vmem:[%s7 + $0x1c0] sm:$0xff] %vm2141, %v7720
  %7785 = vst.msk [vmem:[%s7 + $0x1c8] sm:$0xff] %vm2141, %v7721
  %7786 = vst.msk [vmem:[%s7 + $0x1d0] sm:$0xff] %vm2141, %v7722
  %7787 = vst.msk [vmem:[%s7 + $0x1d8] sm:$0xff] %vm2141, %v7723
  %7788 = vst.msk [vmem:[%s7 + $0x1e0] sm:$0xff] %vm2141, %v7724
  %7789 = vst.msk [vmem:[%s7 + $0x1e8] sm:$0xff] %vm2141, %v7725
  %7790 = vst.msk [vmem:[%s7 + $0x1f0] sm:$0xff] %vm2141, %v7726
  %7791 = vst.msk [vmem:[%s7 + $0x1f8] sm:$0xff] %vm2141, %v7727
  // Predicated region
  $region30: #{tpu_custom_call.1} parent=0 // pred_check
    _
  $region31: #{tpu_custom_call.1} parent=0 // pred_check_branch
    %7793 = sbr.rel (0) target = $region33
  $region32: #{tpu_custom_call.1} parent=0 // pred_region
    _
  $region33: #{tpu_custom_call.1} parent=0 // pred_fallthru
    _
  // Predicated region
  $region34: #{tpu_custom_call.1} parent=0 // pred_check
    _
  $region35: #{tpu_custom_call.1} parent=0 // pred_check_branch
    %7795 = sbr.rel (0) target = $region37
  $region36: #{tpu_custom_call.1} parent=0 // pred_region
    _
  $region37: #{tpu_custom_call.1} parent=0 // pred_fallthru
    _

</llo_original>
